<compile_context>
chip_gen: v5e
topology: v5e:2x2
jax: 0.10.0
libtpu: 0.0.40
codegen_flags: <defaults>
</compile_context>

<pallas_src>
import functools

import jax
import jax.numpy as jnp
from jax.experimental import pallas as pl
from jax.experimental.pallas import tpu as pltpu


_VMEM_LIMIT = 64 * 1024 * 1024


def _round_up(n, m):
    return -(-n // m) * m


def _matmul_tile(p, target=512):
    """Largest (8-aligned) row tile <= target."""
    return min(target, _round_up(max(p, 1), 8))


# ----------------------------------------------------------------------------
# Kernel 1: merged 1x1 conv  y = silu(x @ w + b)
# ----------------------------------------------------------------------------
def _conv1x1_silu_kernel(x_ref, w_ref, b_ref, o_ref):
    # x: (tile, Cin) bf16, w: (Cin, Cout) bf16, b: (1, Cout) f32
    y = jnp.dot(x_ref[...], w_ref[...], preferred_element_type=jnp.float32)
    y = y + b_ref[...]
    y = y * pl.reciprocal(1.0 + jnp.exp(-y), approx=True)   # SiLU, recip on EUP
    o_ref[...] = y.astype(o_ref.dtype)


def conv1x1_silu(x2d, w, b, out_dtype, target_tile=512):
    P, Cin = x2d.shape
    Cout = w.shape[1]
    tile = _matmul_tile(P, target_tile)
    Pp = _round_up(P, tile)
    if Pp != P:
        x2d = jnp.pad(x2d, ((0, Pp - P), (0, 0)))
    b2 = b.reshape(1, Cout).astype(jnp.float32)
    out = pl.pallas_call(
        _conv1x1_silu_kernel,
        out_shape=jax.ShapeDtypeStruct((Pp, Cout), out_dtype),
        grid_spec=pl.GridSpec(
            grid=(Pp // tile,),
            in_specs=[
                pl.BlockSpec((tile, Cin), lambda i: (i, 0)),
                pl.BlockSpec((Cin, Cout), lambda i: (0, 0)),
                pl.BlockSpec((1, Cout), lambda i: (0, 0)),
            ],
            out_specs=pl.BlockSpec((tile, Cout), lambda i: (i, 0)),
        ),
        compiler_params=pltpu.CompilerParams(
            dimension_semantics=("parallel",),
            vmem_limit_bytes=_VMEM_LIMIT),
    )(x2d, w, b2)
    return out[:P] if Pp != P else out


# ----------------------------------------------------------------------------
# Kernel 2: 3x3 same-padding conv + SiLU via 9 shifted matmuls (no im2col).
# Input is one zero-padded image flattened to (Pp, C); the shifted view for
# tap (dy, dx) is simply rows [dy*(W+2)+dx : dy*(W+2)+dx + H*(W+2)).
# The output lives on an H x (W+2) grid; the 2 garbage columns per image row
# are sliced off in the wrapper.
# ----------------------------------------------------------------------------
def _conv3x3_silu_kernel(x_ref, w_ref, b_ref, o_ref, *, wp2):
    rows, cout = o_ref.shape
    acc = jnp.zeros((rows, cout), jnp.float32)
    for dy in range(3):
        for dx in range(3):
            off = dy * wp2 + dx
            acc = acc + jnp.dot(x_ref[off:off + rows, :],
                                w_ref[dy * 3 + dx],
                                preferred_element_type=jnp.float32)
    y = acc + b_ref[...]
    y = y * pl.reciprocal(1.0 + jnp.exp(-y), approx=True)
    o_ref[...] = y.astype(o_ref.dtype)


def conv3x3_silu(x_nhwc, w9, b, out_dtype):
    N, H, W, C = x_nhwc.shape
    Cout = w9.shape[-1]
    Wp2 = W + 2
    rows = H * Wp2                            # computed rows per image
    full = (H + 2) * Wp2
    Pp = _round_up(full + 2, 8)               # +2 slack rows for shifted reads
    xp = jnp.pad(x_nhwc, ((0, 0), (1, 1), (1, 1), (0, 0)))
    xf = xp.reshape(N, full, C)
    xf = jnp.pad(xf, ((0, 0), (0, Pp - full), (0, 0)))
    b2 = b.reshape(1, Cout).astype(jnp.float32)
    kernel = functools.partial(_conv3x3_silu_kernel, wp2=Wp2)
    y = pl.pallas_call(
        kernel,
        out_shape=jax.ShapeDtypeStruct((N, rows, Cout), out_dtype),
        grid_spec=pl.GridSpec(
            grid=(N,),
            in_specs=[
                pl.BlockSpec((None, Pp, C), lambda n: (n, 0, 0)),
                pl.BlockSpec((9, C, Cout), lambda n: (0, 0, 0)),
                pl.BlockSpec((1, Cout), lambda n: (0, 0)),
            ],
            out_specs=pl.BlockSpec((None, rows, Cout), lambda n: (n, 0, 0)),
        ),
        compiler_params=pltpu.CompilerParams(
            dimension_semantics=("parallel",),
            vmem_limit_bytes=_VMEM_LIMIT),
    )(xf, w9, b2)
    return y.reshape(N, H, Wp2, Cout)[:, :, :W, :]


# ----------------------------------------------------------------------------
# Kernel 3: conv_out with the concat fused in — six partial matmuls.
# ----------------------------------------------------------------------------
def _concat_conv1x1_silu_kernel(x6, x5, x4, x3, x2, x1,
                                w6, w5, w4, w3, w2, w1, b_ref, o_ref):
    acc = jnp.zeros(o_ref.shape, jnp.float32)
    for xr, wr in ((x6, w6), (x5, w5), (x4, w4), (x3, w3), (x2, w2), (x1, w1)):
        acc = acc + jnp.dot(xr[...], wr[...], preferred_element_type=jnp.float32)
    y = acc + b_ref[...]
    y = y * pl.reciprocal(1.0 + jnp.exp(-y), approx=True)
    o_ref[...] = y.astype(o_ref.dtype)


def concat_conv1x1_silu(parts, weights, b, out_dtype, target_tile=512):
    P = parts[0].shape[0]
    Cout = weights[0].shape[1]
    tile = _matmul_tile(P, target_tile)
    Pp = _round_up(P, tile)
    if Pp != P:
        parts = [jnp.pad(p, ((0, Pp - P), (0, 0))) for p in parts]
    b2 = b.reshape(1, Cout).astype(jnp.float32)
    in_specs = (
        [pl.BlockSpec((tile, p.shape[1]), lambda i: (i, 0)) for p in parts]
        + [pl.BlockSpec(w.shape, lambda i: (0, 0)) for w in weights]
        + [pl.BlockSpec((1, Cout), lambda i: (0, 0))]
    )
    out = pl.pallas_call(
        _concat_conv1x1_silu_kernel,
        out_shape=jax.ShapeDtypeStruct((Pp, Cout), out_dtype),
        grid_spec=pl.GridSpec(
            grid=(Pp // tile,),
            in_specs=in_specs,
            out_specs=pl.BlockSpec((tile, Cout), lambda i: (i, 0)),
        ),
        compiler_params=pltpu.CompilerParams(
            dimension_semantics=("parallel",),
            vmem_limit_bytes=_VMEM_LIMIT),
    )(*parts, *weights, b2)
    return out[:P] if Pp != P else out


# ----------------------------------------------------------------------------
# Parameter setup: deterministic Conv+BN params, folded & laid out for matmul.
# Kernel sizes are STATIC (baked into the forward code), so the jitted forward
# never branches on traced values.
# ----------------------------------------------------------------------------
def _fold_conv_bn(key, cin, cout, k):
    k_w, k_g, k_b, k_m, k_v = jax.random.split(key, 5)
    conv_w = jax.random.normal(k_w, (cout, cin, k, k), jnp.float32) * 0.1
    gamma = jax.random.uniform(k_g, (cout,), jnp.float32, 0.5, 1.5)
    beta = jax.random.normal(k_b, (cout,), jnp.float32) * 0.1
    mean = jax.random.normal(k_m, (cout,), jnp.float32) * 0.1
    var = jax.random.uniform(k_v, (cout,), jnp.float32, 0.5, 1.5)
    eps = 1e-5
    scale = gamma / jnp.sqrt(var + eps)
    w_eff = conv_w * scale[:, None, None, None]        # [cout, cin, k, k]
    b_eff = beta - mean * scale
    return w_eff, b_eff


def init_elan_neck_params(key, in_channel):
    oc = in_channel // 2
    ic = oc // 2
    cc = in_channel * 2
    keys = jax.random.split(key, 7)
    w1, b1 = _fold_conv_bn(keys[0], in_channel, oc, 1)
    w2, b2 = _fold_conv_bn(keys[1], in_channel, oc, 1)
    w3, b3 = _fold_conv_bn(keys[2], oc, ic, 3)
    w4, b4 = _fold_conv_bn(keys[3], ic, ic, 3)
    w5, b5 = _fold_conv_bn(keys[4], ic, ic, 3)
    w6, b6 = _fold_conv_bn(keys[5], ic, ic, 3)
    wo, bo = _fold_conv_bn(keys[6], cc, oc, 1)

    bf16 = jnp.bfloat16

    def to_1x1(w):                         # [cout,cin,1,1] -> [cin,cout]
        return w[:, :, 0, 0].T

    def to_3x3(w):                         # [cout,cin,3,3] -> [9,cin,cout]
        return jnp.transpose(w, (2, 3, 1, 0)).reshape(9, w.shape[1], w.shape[0])

    # conv1 + conv2 merged along Cout.
    w12 = jnp.concatenate([to_1x1(w1), to_1x1(w2)], axis=1).astype(bf16)
    b12 = jnp.concatenate([b1, b2])

    # conv_out weight rows follow the concat order [x6,x5,x4,x3,x2,x1].
    wo_mm = to_1x1(wo)                     # [cc, oc]
    sizes = (ic, ic, ic, ic, oc, oc)
    offs = [0]
    for s in sizes:
        offs.append(offs[-1] + s)
    wos = tuple(wo_mm[offs[i]:offs[i + 1]].astype(bf16) for i in range(6))

    params = {
        "conv12": {"w": w12, "b": b12},
        "conv3": {"w": to_3x3(w3).astype(bf16), "b": b3},
        "conv4": {"w": to_3x3(w4).astype(bf16), "b": b4},
        "conv5": {"w": to_3x3(w5).astype(bf16), "b": b5},
        "conv6": {"w": to_3x3(w6).astype(bf16), "b": b6},
        "conv_out": {"ws": wos, "b": bo},
    }
    ref = {
        "conv1": (w1, b1), "conv2": (w2, b2), "conv3": (w3, b3),
        "conv4": (w4, b4), "conv5": (w5, b5), "conv6": (w6, b6),
        "conv_out": (wo, bo),
    }
    return params, ref


# ----------------------------------------------------------------------------
# Forward pass
# ----------------------------------------------------------------------------
@jax.jit
def elan_neck_forward(x_nchw, params):
    x = jnp.transpose(x_nchw, (0, 2, 3, 1)).astype(jnp.bfloat16)   # NHWC bf16
    N, H, W, Cin = x.shape
    P = N * H * W
    xf = x.reshape(P, Cin)

    # conv1 + conv2 in one kernel; split the halves.
    x12 = conv1x1_silu(xf, params["conv12"]["w"], params["conv12"]["b"],
                       out_dtype=jnp.bfloat16)
    oc = x12.shape[1] // 2
    x1f = x12[:, :oc]
    x2f = x12[:, oc:]
    x2 = x2f.reshape(N, H, W, oc)

    x3 = conv3x3_silu(x2, params["conv3"]["w"], params["conv3"]["b"], jnp.bfloat16)
    x4 = conv3x3_silu(x3, params["conv4"]["w"], params["conv4"]["b"], jnp.bfloat16)
    x5 = conv3x3_silu(x4, params["conv5"]["w"], params["conv5"]["b"], jnp.bfloat16)
    x6 = conv3x3_silu(x5, params["conv6"]["w"], params["conv6"]["b"], jnp.bfloat16)

    # concat fused into conv_out (torch.cat order: x6,x5,x4,x3,x2,x1).
    parts = [x6.reshape(P, -1), x5.reshape(P, -1), x4.reshape(P, -1),
             x3.reshape(P, -1), x2f, x1f]
    out_f = concat_conv1x1_silu(parts, params["conv_out"]["ws"],
                                params["conv_out"]["b"], out_dtype=jnp.float32)
    out = out_f.reshape(N, H, W, oc)
    return jnp.transpose(out, (0, 3, 1, 2))                        # NCHW


# ----------------------------------------------------------------------------
# Pure-JAX (XLA conv) reference for correctness checking.
# ----------------------------------------------------------------------------
def _ref_conv_silu(x, w, b, k):
    pad = "SAME" if k == 3 else "VALID"
    y = jax.lax.conv_general_dilated(
        x, w, window_strides=(1, 1), padding=pad,
        dimension_numbers=("NCHW", "OIHW", "NCHW"))
    y = y + b[None, :, None, None]
    return y * jax.nn.sigmoid(y)


def elan_neck_reference(x, ref):
    x1 = _ref_conv_silu(x, *ref["conv1"], 1)
    x2 = _ref_conv_silu(x, *ref["conv2"], 1)
    x3 = _ref_conv_silu(x2, *ref["conv3"], 3)
    x4 = _ref_conv_silu(x3, *ref["conv4"], 3)
    x5 = _ref_conv_silu(x4, *ref["conv5"], 3)
    x6 = _ref_conv_silu(x5, *ref["conv6"], 3)
    cat = jnp.concatenate([x6, x5, x4, x3, x2, x1], axis=1)
    return _ref_conv_silu(cat, *ref["conv_out"], 1)


if __name__ == "__main__":
    key = jax.random.PRNGKey(0)
    k_x, k_p = jax.random.split(key)

    in_channel = 16
    N, H, W = 2, 16, 16
    x = jax.random.normal(k_x, (N, in_channel, H, W), jnp.float32)   # NCHW

    params, ref = init_elan_neck_params(k_p, in_channel)

    out = jax.block_until_ready(elan_neck_forward(x, params))

    expected_shape = (N, in_channel // 2, H, W)
    assert out.shape == expected_shape, (out.shape, expected_shape)
    assert bool(jnp.all(jnp.isfinite(out)))

    ref_out = elan_neck_reference(x, ref)
    max_err = float(jnp.max(jnp.abs(out - ref_out)))
    assert max_err < 0.1, f"max abs error vs reference: {max_err}"

    print("KERNEL_OK")
</pallas_src>

<mosaic_0001>
module attributes {stable_mosaic.version = 11 : i64} {
  func.func @_conv1x1_silu_kernel(%arg0: i32, %arg1: memref<512x16xbf16, #tpu.memory_space<vmem>>, %arg2: memref<16x16xbf16, #tpu.memory_space<vmem>>, %arg3: memref<1x16xf32, #tpu.memory_space<vmem>>, %arg4: memref<512x16xbf16, #tpu.memory_space<vmem>>) attributes {dimension_semantics = [#tpu.dimension_semantics<parallel>], iteration_bounds = array<i64: 1>, scalar_prefetch = 0 : i64, scratch_operands = 0 : i64, tpu.core_type = #tpu.core_type<tc>, window_params = [{transform_indices = @transform_0, window_bounds = array<i64: 512, 16>}, {pipeline_mode = #tpu.pipeline_mode<synchronous>, transform_indices = @transform_1, window_bounds = array<i64: 16, 16>}, {pipeline_mode = #tpu.pipeline_mode<synchronous>, transform_indices = @transform_2, window_bounds = array<i64: 1, 16>}, {transform_indices = @transform_3, window_bounds = array<i64: 512, 16>}]} {
    %c0 = arith.constant 0 : index
    %c0_0 = arith.constant 0 : index
    %0 = vector.load %arg1[%c0, %c0_0] : memref<512x16xbf16, #tpu.memory_space<vmem>>, vector<512x16xbf16>
    %c0_1 = arith.constant 0 : index
    %c0_2 = arith.constant 0 : index
    %1 = vector.load %arg2[%c0_1, %c0_2] : memref<16x16xbf16, #tpu.memory_space<vmem>>, vector<16x16xbf16>
    %cst = arith.constant dense<0.000000e+00> : vector<512x16xf32>
    %2 = tpu.matmul %0, %1, %cst {dimension_numbers = #tpu.dot_dimension_numbers<[1], [0], [0], [1], [0, 0, 1, 1], [], []>} : vector<512x16xbf16>, vector<16x16xbf16>, vector<512x16xf32> -> vector<512x16xf32>
    %c0_3 = arith.constant 0 : index
    %c0_4 = arith.constant 0 : index
    %3 = vector.load %arg3[%c0_3, %c0_4] : memref<1x16xf32, #tpu.memory_space<vmem>>, vector<1x16xf32>
    %4 = vector.broadcast %3 : vector<1x16xf32> to vector<512x16xf32>
    %5 = arith.addf %2, %4 : vector<512x16xf32>
    %cst_5 = arith.constant 0.000000e+00 : f32
    %6 = vector.broadcast %cst_5 : f32 to vector<512x16xf32>
    %7 = arith.subf %6, %5 : vector<512x16xf32>
    %8 = math.exp %7 : vector<512x16xf32>
    %cst_6 = arith.constant 1.000000e+00 : f32
    %9 = vector.broadcast %cst_6 : f32 to vector<512x16xf32>
    %10 = arith.addf %9, %8 : vector<512x16xf32>
    %11 = tpu.reciprocal %10 {approx = true} : vector<512x16xf32> -> vector<512x16xf32>
    %12 = arith.mulf %5, %11 : vector<512x16xf32>
    %13 = arith.truncf %12 : vector<512x16xf32> to vector<512x16xbf16>
    %c0_7 = arith.constant 0 : index
    %c0_8 = arith.constant 0 : index
    %14 = vector.load %arg4[%c0_7, %c0_8] : memref<512x16xbf16, #tpu.memory_space<vmem>>, vector<512x16xbf16>
    tpu.vector_store %arg4[%c0_7, %c0_8], %13 {strides = array<i32>} : memref<512x16xbf16, #tpu.memory_space<vmem>>, vector<512x16xbf16>,
    return
  }
  func.func @transform_0(%arg0: i32) -> (i32, i32) {
    %c0_i32 = arith.constant 0 : i32
    %c0_i32_0 = arith.constant 0 : i32
    return %arg0, %c0_i32 : i32, i32
  }
  func.func @transform_1(%arg0: i32) -> (i32, i32) {
    %c0_i32 = arith.constant 0 : i32
    %c0_i32_0 = arith.constant 0 : i32
    %c0_i32_1 = arith.constant 0 : i32
    return %c0_i32, %c0_i32_0 : i32, i32
  }
  func.func @transform_2(%arg0: i32) -> (i32, i32) {
    %c0_i32 = arith.constant 0 : i32
    %c0_i32_0 = arith.constant 0 : i32
    %c0_i32_1 = arith.constant 0 : i32
    return %c0_i32, %c0_i32_0 : i32, i32
  }
  func.func @transform_3(%arg0: i32) -> (i32, i32) {
    %c0_i32 = arith.constant 0 : i32
    %c0_i32_0 = arith.constant 0 : i32
    return %arg0, %c0_i32 : i32, i32
  }
}

module attributes {stable_mosaic.version = 11 : i64} {
  func.func @_conv3x3_silu_kernel(%arg0: i32, %arg1: memref<1x328x8xbf16, #tpu.memory_space<vmem>>, %arg2: memref<9x8x4xbf16, #tpu.memory_space<vmem>>, %arg3: memref<1x4xf32, #tpu.memory_space<vmem>>, %arg4: memref<1x288x4xbf16, #tpu.memory_space<vmem>>) attributes {dimension_semantics = [#tpu.dimension_semantics<parallel>], iteration_bounds = array<i64: 2>, scalar_prefetch = 0 : i64, scratch_operands = 0 : i64, tpu.core_type = #tpu.core_type<tc>, window_params = [{transform_indices = @transform_0, window_bounds = array<i64: 1, 328, 8>}, {pipeline_mode = #tpu.pipeline_mode<synchronous>, transform_indices = @transform_1, window_bounds = array<i64: 9, 8, 4>}, {pipeline_mode = #tpu.pipeline_mode<synchronous>, transform_indices = @transform_2, window_bounds = array<i64: 1, 4>}, {transform_indices = @transform_3, window_bounds = array<i64: 1, 288, 4>}]} {
    %cst = arith.constant 0.000000e+00 : f32
    %0 = vector.broadcast %cst : f32 to vector<288x4xf32>
    %c0 = arith.constant 0 : index
    %c0_0 = arith.constant 0 : index
    %c0_1 = arith.constant 0 : index
    %1 = vector.load %arg1[%c0, %c0_0, %c0_1] : memref<1x328x8xbf16, #tpu.memory_space<vmem>>, vector<1x288x8xbf16>
    %2 = vector.shape_cast %1 : vector<1x288x8xbf16> to vector<288x8xbf16>
    %c0_2 = arith.constant 0 : index
    %c0_3 = arith.constant 0 : index
    %c0_4 = arith.constant 0 : index
    %3 = vector.load %arg2[%c0_2, %c0_3, %c0_4] : memref<9x8x4xbf16, #tpu.memory_space<vmem>>, vector<1x8x4xbf16>
    %4 = vector.shape_cast %3 : vector<1x8x4xbf16> to vector<8x4xbf16>
    %cst_5 = arith.constant dense<0.000000e+00> : vector<288x4xf32>
    %5 = tpu.matmul %2, %4, %cst_5 {dimension_numbers = #tpu.dot_dimension_numbers<[1], [0], [0], [1], [0, 0, 1, 1], [], []>} : vector<288x8xbf16>, vector<8x4xbf16>, vector<288x4xf32> -> vector<288x4xf32>
    %6 = arith.addf %0, %5 : vector<288x4xf32>
    %c0_6 = arith.constant 0 : index
    %c1 = arith.constant 1 : index
    %c0_7 = arith.constant 0 : index
    %7 = vector.load %arg1[%c0_6, %c1, %c0_7] : memref<1x328x8xbf16, #tpu.memory_space<vmem>>, vector<1x288x8xbf16>
    %8 = vector.shape_cast %7 : vector<1x288x8xbf16> to vector<288x8xbf16>
    %c1_8 = arith.constant 1 : index
    %c0_9 = arith.constant 0 : index
    %c0_10 = arith.constant 0 : index
    %9 = vector.load %arg2[%c1_8, %c0_9, %c0_10] : memref<9x8x4xbf16, #tpu.memory_space<vmem>>, vector<1x8x4xbf16>
    %10 = vector.shape_cast %9 : vector<1x8x4xbf16> to vector<8x4xbf16>
    %cst_11 = arith.constant dense<0.000000e+00> : vector<288x4xf32>
    %11 = tpu.matmul %8, %10, %cst_11 {dimension_numbers = #tpu.dot_dimension_numbers<[1], [0], [0], [1], [0, 0, 1, 1], [], []>} : vector<288x8xbf16>, vector<8x4xbf16>, vector<288x4xf32> -> vector<288x4xf32>
    %12 = arith.addf %6, %11 : vector<288x4xf32>
    %c0_12 = arith.constant 0 : index
    %c2 = arith.constant 2 : index
    %c0_13 = arith.constant 0 : index
    %13 = vector.load %arg1[%c0_12, %c2, %c0_13] : memref<1x328x8xbf16, #tpu.memory_space<vmem>>, vector<1x288x8xbf16>
    %14 = vector.shape_cast %13 : vector<1x288x8xbf16> to vector<288x8xbf16>
    %c2_14 = arith.constant 2 : index
    %c0_15 = arith.constant 0 : index
    %c0_16 = arith.constant 0 : index
    %15 = vector.load %arg2[%c2_14, %c0_15, %c0_16] : memref<9x8x4xbf16, #tpu.memory_space<vmem>>, vector<1x8x4xbf16>
    %16 = vector.shape_cast %15 : vector<1x8x4xbf16> to vector<8x4xbf16>
    %cst_17 = arith.constant dense<0.000000e+00> : vector<288x4xf32>
    %17 = tpu.matmul %14, %16, %cst_17 {dimension_numbers = #tpu.dot_dimension_numbers<[1], [0], [0], [1], [0, 0, 1, 1], [], []>} : vector<288x8xbf16>, vector<8x4xbf16>, vector<288x4xf32> -> vector<288x4xf32>
    %18 = arith.addf %12, %17 : vector<288x4xf32>
    %c0_18 = arith.constant 0 : index
    %c18 = arith.constant 18 : index
    %c0_19 = arith.constant 0 : index
    %19 = vector.load %arg1[%c0_18, %c18, %c0_19] : memref<1x328x8xbf16, #tpu.memory_space<vmem>>, vector<1x288x8xbf16>
    %20 = vector.shape_cast %19 : vector<1x288x8xbf16> to vector<288x8xbf16>
    %c3 = arith.constant 3 : index
    %c0_20 = arith.constant 0 : index
    %c0_21 = arith.constant 0 : index
    %21 = vector.load %arg2[%c3, %c0_20, %c0_21] : memref<9x8x4xbf16, #tpu.memory_space<vmem>>, vector<1x8x4xbf16>
    %22 = vector.shape_cast %21 : vector<1x8x4xbf16> to vector<8x4xbf16>
    %cst_22 = arith.constant dense<0.000000e+00> : vector<288x4xf32>
    %23 = tpu.matmul %20, %22, %cst_22 {dimension_numbers = #tpu.dot_dimension_numbers<[1], [0], [0], [1], [0, 0, 1, 1], [], []>} : vector<288x8xbf16>, vector<8x4xbf16>, vector<288x4xf32> -> vector<288x4xf32>
    %24 = arith.addf %18, %23 : vector<288x4xf32>
    %c0_23 = arith.constant 0 : index
    %c19 = arith.constant 19 : index
    %c0_24 = arith.constant 0 : index
    %25 = vector.load %arg1[%c0_23, %c19, %c0_24] : memref<1x328x8xbf16, #tpu.memory_space<vmem>>, vector<1x288x8xbf16>
    %26 = vector.shape_cast %25 : vector<1x288x8xbf16> to vector<288x8xbf16>
    %c4 = arith.constant 4 : index
    %c0_25 = arith.constant 0 : index
    %c0_26 = arith.constant 0 : index
    %27 = vector.load %arg2[%c4, %c0_25, %c0_26] : memref<9x8x4xbf16, #tpu.memory_space<vmem>>, vector<1x8x4xbf16>
    %28 = vector.shape_cast %27 : vector<1x8x4xbf16> to vector<8x4xbf16>
    %cst_27 = arith.constant dense<0.000000e+00> : vector<288x4xf32>
    %29 = tpu.matmul %26, %28, %cst_27 {dimension_numbers = #tpu.dot_dimension_numbers<[1], [0], [0], [1], [0, 0, 1, 1], [], []>} : vector<288x8xbf16>, vector<8x4xbf16>, vector<288x4xf32> -> vector<288x4xf32>
    %30 = arith.addf %24, %29 : vector<288x4xf32>
    %c0_28 = arith.constant 0 : index
    %c20 = arith.constant 20 : index
    %c0_29 = arith.constant 0 : index
    %31 = vector.load %arg1[%c0_28, %c20, %c0_29] : memref<1x328x8xbf16, #tpu.memory_space<vmem>>, vector<1x288x8xbf16>
    %32 = vector.shape_cast %31 : vector<1x288x8xbf16> to vector<288x8xbf16>
    %c5 = arith.constant 5 : index
    %c0_30 = arith.constant 0 : index
    %c0_31 = arith.constant 0 : index
    %33 = vector.load %arg2[%c5, %c0_30, %c0_31] : memref<9x8x4xbf16, #tpu.memory_space<vmem>>, vector<1x8x4xbf16>
    %34 = vector.shape_cast %33 : vector<1x8x4xbf16> to vector<8x4xbf16>
    %cst_32 = arith.constant dense<0.000000e+00> : vector<288x4xf32>
    %35 = tpu.matmul %32, %34, %cst_32 {dimension_numbers = #tpu.dot_dimension_numbers<[1], [0], [0], [1], [0, 0, 1, 1], [], []>} : vector<288x8xbf16>, vector<8x4xbf16>, vector<288x4xf32> -> vector<288x4xf32>
    %36 = arith.addf %30, %35 : vector<288x4xf32>
    %c0_33 = arith.constant 0 : index
    %c36 = arith.constant 36 : index
    %c0_34 = arith.constant 0 : index
    %37 = vector.load %arg1[%c0_33, %c36, %c0_34] : memref<1x328x8xbf16, #tpu.memory_space<vmem>>, vector<1x288x8xbf16>
    %38 = vector.shape_cast %37 : vector<1x288x8xbf16> to vector<288x8xbf16>
    %c6 = arith.constant 6 : index
    %c0_35 = arith.constant 0 : index
    %c0_36 = arith.constant 0 : index
    %39 = vector.load %arg2[%c6, %c0_35, %c0_36] : memref<9x8x4xbf16, #tpu.memory_space<vmem>>, vector<1x8x4xbf16>
    %40 = vector.shape_cast %39 : vector<1x8x4xbf16> to vector<8x4xbf16>
    %cst_37 = arith.constant dense<0.000000e+00> : vector<288x4xf32>
    %41 = tpu.matmul %38, %40, %cst_37 {dimension_numbers = #tpu.dot_dimension_numbers<[1], [0], [0], [1], [0, 0, 1, 1], [], []>} : vector<288x8xbf16>, vector<8x4xbf16>, vector<288x4xf32> -> vector<288x4xf32>
    %42 = arith.addf %36, %41 : vector<288x4xf32>
    %c0_38 = arith.constant 0 : index
    %c37 = arith.constant 37 : index
    %c0_39 = arith.constant 0 : index
    %43 = vector.load %arg1[%c0_38, %c37, %c0_39] : memref<1x328x8xbf16, #tpu.memory_space<vmem>>, vector<1x288x8xbf16>
    %44 = vector.shape_cast %43 : vector<1x288x8xbf16> to vector<288x8xbf16>
    %c7 = arith.constant 7 : index
    %c0_40 = arith.constant 0 : index
    %c0_41 = arith.constant 0 : index
    %45 = vector.load %arg2[%c7, %c0_40, %c0_41] : memref<9x8x4xbf16, #tpu.memory_space<vmem>>, vector<1x8x4xbf16>
    %46 = vector.shape_cast %45 : vector<1x8x4xbf16> to vector<8x4xbf16>
    %cst_42 = arith.constant dense<0.000000e+00> : vector<288x4xf32>
    %47 = tpu.matmul %44, %46, %cst_42 {dimension_numbers = #tpu.dot_dimension_numbers<[1], [0], [0], [1], [0, 0, 1, 1], [], []>} : vector<288x8xbf16>, vector<8x4xbf16>, vector<288x4xf32> -> vector<288x4xf32>
    %48 = arith.addf %42, %47 : vector<288x4xf32>
    %c0_43 = arith.constant 0 : index
    %c38 = arith.constant 38 : index
    %c0_44 = arith.constant 0 : index
    %49 = vector.load %arg1[%c0_43, %c38, %c0_44] : memref<1x328x8xbf16, #tpu.memory_space<vmem>>, vector<1x288x8xbf16>
    %50 = vector.shape_cast %49 : vector<1x288x8xbf16> to vector<288x8xbf16>
    %c8 = arith.constant 8 : index
    %c0_45 = arith.constant 0 : index
    %c0_46 = arith.constant 0 : index
    %51 = vector.load %arg2[%c8, %c0_45, %c0_46] : memref<9x8x4xbf16, #tpu.memory_space<vmem>>, vector<1x8x4xbf16>
    %52 = vector.shape_cast %51 : vector<1x8x4xbf16> to vector<8x4xbf16>
    %cst_47 = arith.constant dense<0.000000e+00> : vector<288x4xf32>
    %53 = tpu.matmul %50, %52, %cst_47 {dimension_numbers = #tpu.dot_dimension_numbers<[1], [0], [0], [1], [0, 0, 1, 1], [], []>} : vector<288x8xbf16>, vector<8x4xbf16>, vector<288x4xf32> -> vector<288x4xf32>
    %54 = arith.addf %48, %53 : vector<288x4xf32>
    %c0_48 = arith.constant 0 : index
    %c0_49 = arith.constant 0 : index
    %55 = vector.load %arg3[%c0_48, %c0_49] : memref<1x4xf32, #tpu.memory_space<vmem>>, vector<1x4xf32>
    %56 = vector.broadcast %55 : vector<1x4xf32> to vector<288x4xf32>
    %57 = arith.addf %54, %56 : vector<288x4xf32>
    %cst_50 = arith.constant 0.000000e+00 : f32
    %58 = vector.broadcast %cst_50 : f32 to vector<288x4xf32>
    %59 = arith.subf %58, %57 : vector<288x4xf32>
    %60 = math.exp %59 : vector<288x4xf32>
    %cst_51 = arith.constant 1.000000e+00 : f32
    %61 = vector.broadcast %cst_51 : f32 to vector<288x4xf32>
    %62 = arith.addf %61, %60 : vector<288x4xf32>
    %63 = tpu.reciprocal %62 {approx = true} : vector<288x4xf32> -> vector<288x4xf32>
    %64 = arith.mulf %57, %63 : vector<288x4xf32>
    %65 = arith.truncf %64 : vector<288x4xf32> to vector<288x4xbf16>
    %c0_52 = arith.constant 0 : index
    %c0_53 = arith.constant 0 : index
    %c0_54 = arith.constant 0 : index
    %66 = vector.load %arg4[%c0_52, %c0_53, %c0_54] : memref<1x288x4xbf16, #tpu.memory_space<vmem>>, vector<1x288x4xbf16>
    %67 = vector.shape_cast %66 : vector<1x288x4xbf16> to vector<288x4xbf16>
    %68 = vector.shape_cast %65 : vector<288x4xbf16> to vector<1x288x4xbf16>
    tpu.vector_store %arg4[%c0_52, %c0_53, %c0_54], %68 {strides = array<i32>} : memref<1x288x4xbf16, #tpu.memory_space<vmem>>, vector<1x288x4xbf16>,
    return
  }
  func.func @transform_0(%arg0: i32) -> (i32, i32, i32) {
    %c0_i32 = arith.constant 0 : i32
    %c0_i32_0 = arith.constant 0 : i32
    %c0_i32_1 = arith.constant 0 : i32
    return %arg0, %c0_i32, %c0_i32_0 : i32, i32, i32
  }
  func.func @transform_1(%arg0: i32) -> (i32, i32, i32) {
    %c0_i32 = arith.constant 0 : i32
    %c0_i32_0 = arith.constant 0 : i32
    %c0_i32_1 = arith.constant 0 : i32
    %c0_i32_2 = arith.constant 0 : i32
    return %c0_i32, %c0_i32_0, %c0_i32_1 : i32, i32, i32
  }
  func.func @transform_2(%arg0: i32) -> (i32, i32) {
    %c0_i32 = arith.constant 0 : i32
    %c0_i32_0 = arith.constant 0 : i32
    %c0_i32_1 = arith.constant 0 : i32
    return %c0_i32, %c0_i32_0 : i32, i32
  }
  func.func @transform_3(%arg0: i32) -> (i32, i32, i32) {
    %c0_i32 = arith.constant 0 : i32
    %c0_i32_0 = arith.constant 0 : i32
    %c0_i32_1 = arith.constant 0 : i32
    return %arg0, %c0_i32, %c0_i32_0 : i32, i32, i32
  }
}

module attributes {stable_mosaic.version = 11 : i64} {
  func.func @_conv3x3_silu_kernel(%arg0: i32, %arg1: memref<1x328x4xbf16, #tpu.memory_space<vmem>>, %arg2: memref<9x4x4xbf16, #tpu.memory_space<vmem>>, %arg3: memref<1x4xf32, #tpu.memory_space<vmem>>, %arg4: memref<1x288x4xbf16, #tpu.memory_space<vmem>>) attributes {dimension_semantics = [#tpu.dimension_semantics<parallel>], iteration_bounds = array<i64: 2>, scalar_prefetch = 0 : i64, scratch_operands = 0 : i64, tpu.core_type = #tpu.core_type<tc>, window_params = [{transform_indices = @transform_0, window_bounds = array<i64: 1, 328, 4>}, {pipeline_mode = #tpu.pipeline_mode<synchronous>, transform_indices = @transform_1, window_bounds = array<i64: 9, 4, 4>}, {pipeline_mode = #tpu.pipeline_mode<synchronous>, transform_indices = @transform_2, window_bounds = array<i64: 1, 4>}, {transform_indices = @transform_3, window_bounds = array<i64: 1, 288, 4>}]} {
    %cst = arith.constant 0.000000e+00 : f32
    %0 = vector.broadcast %cst : f32 to vector<288x4xf32>
    %c0 = arith.constant 0 : index
    %c0_0 = arith.constant 0 : index
    %c0_1 = arith.constant 0 : index
    %1 = vector.load %arg1[%c0, %c0_0, %c0_1] : memref<1x328x4xbf16, #tpu.memory_space<vmem>>, vector<1x288x4xbf16>
    %2 = vector.shape_cast %1 : vector<1x288x4xbf16> to vector<288x4xbf16>
    %c0_2 = arith.constant 0 : index
    %c0_3 = arith.constant 0 : index
    %c0_4 = arith.constant 0 : index
    %3 = vector.load %arg2[%c0_2, %c0_3, %c0_4] : memref<9x4x4xbf16, #tpu.memory_space<vmem>>, vector<1x4x4xbf16>
    %4 = vector.shape_cast %3 : vector<1x4x4xbf16> to vector<4x4xbf16>
    %cst_5 = arith.constant dense<0.000000e+00> : vector<288x4xf32>
    %5 = tpu.matmul %2, %4, %cst_5 {dimension_numbers = #tpu.dot_dimension_numbers<[1], [0], [0], [1], [0, 0, 1, 1], [], []>} : vector<288x4xbf16>, vector<4x4xbf16>, vector<288x4xf32> -> vector<288x4xf32>
    %6 = arith.addf %0, %5 : vector<288x4xf32>
    %c0_6 = arith.constant 0 : index
    %c1 = arith.constant 1 : index
    %c0_7 = arith.constant 0 : index
    %7 = vector.load %arg1[%c0_6, %c1, %c0_7] : memref<1x328x4xbf16, #tpu.memory_space<vmem>>, vector<1x288x4xbf16>
    %8 = vector.shape_cast %7 : vector<1x288x4xbf16> to vector<288x4xbf16>
    %c1_8 = arith.constant 1 : index
    %c0_9 = arith.constant 0 : index
    %c0_10 = arith.constant 0 : index
    %9 = vector.load %arg2[%c1_8, %c0_9, %c0_10] : memref<9x4x4xbf16, #tpu.memory_space<vmem>>, vector<1x4x4xbf16>
    %10 = vector.shape_cast %9 : vector<1x4x4xbf16> to vector<4x4xbf16>
    %cst_11 = arith.constant dense<0.000000e+00> : vector<288x4xf32>
    %11 = tpu.matmul %8, %10, %cst_11 {dimension_numbers = #tpu.dot_dimension_numbers<[1], [0], [0], [1], [0, 0, 1, 1], [], []>} : vector<288x4xbf16>, vector<4x4xbf16>, vector<288x4xf32> -> vector<288x4xf32>
    %12 = arith.addf %6, %11 : vector<288x4xf32>
    %c0_12 = arith.constant 0 : index
    %c2 = arith.constant 2 : index
    %c0_13 = arith.constant 0 : index
    %13 = vector.load %arg1[%c0_12, %c2, %c0_13] : memref<1x328x4xbf16, #tpu.memory_space<vmem>>, vector<1x288x4xbf16>
    %14 = vector.shape_cast %13 : vector<1x288x4xbf16> to vector<288x4xbf16>
    %c2_14 = arith.constant 2 : index
    %c0_15 = arith.constant 0 : index
    %c0_16 = arith.constant 0 : index
    %15 = vector.load %arg2[%c2_14, %c0_15, %c0_16] : memref<9x4x4xbf16, #tpu.memory_space<vmem>>, vector<1x4x4xbf16>
    %16 = vector.shape_cast %15 : vector<1x4x4xbf16> to vector<4x4xbf16>
    %cst_17 = arith.constant dense<0.000000e+00> : vector<288x4xf32>
    %17 = tpu.matmul %14, %16, %cst_17 {dimension_numbers = #tpu.dot_dimension_numbers<[1], [0], [0], [1], [0, 0, 1, 1], [], []>} : vector<288x4xbf16>, vector<4x4xbf16>, vector<288x4xf32> -> vector<288x4xf32>
    %18 = arith.addf %12, %17 : vector<288x4xf32>
    %c0_18 = arith.constant 0 : index
    %c18 = arith.constant 18 : index
    %c0_19 = arith.constant 0 : index
    %19 = vector.load %arg1[%c0_18, %c18, %c0_19] : memref<1x328x4xbf16, #tpu.memory_space<vmem>>, vector<1x288x4xbf16>
    %20 = vector.shape_cast %19 : vector<1x288x4xbf16> to vector<288x4xbf16>
    %c3 = arith.constant 3 : index
    %c0_20 = arith.constant 0 : index
    %c0_21 = arith.constant 0 : index
    %21 = vector.load %arg2[%c3, %c0_20, %c0_21] : memref<9x4x4xbf16, #tpu.memory_space<vmem>>, vector<1x4x4xbf16>
    %22 = vector.shape_cast %21 : vector<1x4x4xbf16> to vector<4x4xbf16>
    %cst_22 = arith.constant dense<0.000000e+00> : vector<288x4xf32>
    %23 = tpu.matmul %20, %22, %cst_22 {dimension_numbers = #tpu.dot_dimension_numbers<[1], [0], [0], [1], [0, 0, 1, 1], [], []>} : vector<288x4xbf16>, vector<4x4xbf16>, vector<288x4xf32> -> vector<288x4xf32>
    %24 = arith.addf %18, %23 : vector<288x4xf32>
    %c0_23 = arith.constant 0 : index
    %c19 = arith.constant 19 : index
    %c0_24 = arith.constant 0 : index
    %25 = vector.load %arg1[%c0_23, %c19, %c0_24] : memref<1x328x4xbf16, #tpu.memory_space<vmem>>, vector<1x288x4xbf16>
    %26 = vector.shape_cast %25 : vector<1x288x4xbf16> to vector<288x4xbf16>
    %c4 = arith.constant 4 : index
    %c0_25 = arith.constant 0 : index
    %c0_26 = arith.constant 0 : index
    %27 = vector.load %arg2[%c4, %c0_25, %c0_26] : memref<9x4x4xbf16, #tpu.memory_space<vmem>>, vector<1x4x4xbf16>
    %28 = vector.shape_cast %27 : vector<1x4x4xbf16> to vector<4x4xbf16>
    %cst_27 = arith.constant dense<0.000000e+00> : vector<288x4xf32>
    %29 = tpu.matmul %26, %28, %cst_27 {dimension_numbers = #tpu.dot_dimension_numbers<[1], [0], [0], [1], [0, 0, 1, 1], [], []>} : vector<288x4xbf16>, vector<4x4xbf16>, vector<288x4xf32> -> vector<288x4xf32>
    %30 = arith.addf %24, %29 : vector<288x4xf32>
    %c0_28 = arith.constant 0 : index
    %c20 = arith.constant 20 : index
    %c0_29 = arith.constant 0 : index
    %31 = vector.load %arg1[%c0_28, %c20, %c0_29] : memref<1x328x4xbf16, #tpu.memory_space<vmem>>, vector<1x288x4xbf16>
    %32 = vector.shape_cast %31 : vector<1x288x4xbf16> to vector<288x4xbf16>
    %c5 = arith.constant 5 : index
    %c0_30 = arith.constant 0 : index
    %c0_31 = arith.constant 0 : index
    %33 = vector.load %arg2[%c5, %c0_30, %c0_31] : memref<9x4x4xbf16, #tpu.memory_space<vmem>>, vector<1x4x4xbf16>
    %34 = vector.shape_cast %33 : vector<1x4x4xbf16> to vector<4x4xbf16>
    %cst_32 = arith.constant dense<0.000000e+00> : vector<288x4xf32>
    %35 = tpu.matmul %32, %34, %cst_32 {dimension_numbers = #tpu.dot_dimension_numbers<[1], [0], [0], [1], [0, 0, 1, 1], [], []>} : vector<288x4xbf16>, vector<4x4xbf16>, vector<288x4xf32> -> vector<288x4xf32>
    %36 = arith.addf %30, %35 : vector<288x4xf32>
    %c0_33 = arith.constant 0 : index
    %c36 = arith.constant 36 : index
    %c0_34 = arith.constant 0 : index
    %37 = vector.load %arg1[%c0_33, %c36, %c0_34] : memref<1x328x4xbf16, #tpu.memory_space<vmem>>, vector<1x288x4xbf16>
    %38 = vector.shape_cast %37 : vector<1x288x4xbf16> to vector<288x4xbf16>
    %c6 = arith.constant 6 : index
    %c0_35 = arith.constant 0 : index
    %c0_36 = arith.constant 0 : index
    %39 = vector.load %arg2[%c6, %c0_35, %c0_36] : memref<9x4x4xbf16, #tpu.memory_space<vmem>>, vector<1x4x4xbf16>
    %40 = vector.shape_cast %39 : vector<1x4x4xbf16> to vector<4x4xbf16>
    %cst_37 = arith.constant dense<0.000000e+00> : vector<288x4xf32>
    %41 = tpu.matmul %38, %40, %cst_37 {dimension_numbers = #tpu.dot_dimension_numbers<[1], [0], [0], [1], [0, 0, 1, 1], [], []>} : vector<288x4xbf16>, vector<4x4xbf16>, vector<288x4xf32> -> vector<288x4xf32>
    %42 = arith.addf %36, %41 : vector<288x4xf32>
    %c0_38 = arith.constant 0 : index
    %c37 = arith.constant 37 : index
    %c0_39 = arith.constant 0 : index
    %43 = vector.load %arg1[%c0_38, %c37, %c0_39] : memref<1x328x4xbf16, #tpu.memory_space<vmem>>, vector<1x288x4xbf16>
    %44 = vector.shape_cast %43 : vector<1x288x4xbf16> to vector<288x4xbf16>
    %c7 = arith.constant 7 : index
    %c0_40 = arith.constant 0 : index
    %c0_41 = arith.constant 0 : index
    %45 = vector.load %arg2[%c7, %c0_40, %c0_41] : memref<9x4x4xbf16, #tpu.memory_space<vmem>>, vector<1x4x4xbf16>
    %46 = vector.shape_cast %45 : vector<1x4x4xbf16> to vector<4x4xbf16>
    %cst_42 = arith.constant dense<0.000000e+00> : vector<288x4xf32>
    %47 = tpu.matmul %44, %46, %cst_42 {dimension_numbers = #tpu.dot_dimension_numbers<[1], [0], [0], [1], [0, 0, 1, 1], [], []>} : vector<288x4xbf16>, vector<4x4xbf16>, vector<288x4xf32> -> vector<288x4xf32>
    %48 = arith.addf %42, %47 : vector<288x4xf32>
    %c0_43 = arith.constant 0 : index
    %c38 = arith.constant 38 : index
    %c0_44 = arith.constant 0 : index
    %49 = vector.load %arg1[%c0_43, %c38, %c0_44] : memref<1x328x4xbf16, #tpu.memory_space<vmem>>, vector<1x288x4xbf16>
    %50 = vector.shape_cast %49 : vector<1x288x4xbf16> to vector<288x4xbf16>
    %c8 = arith.constant 8 : index
    %c0_45 = arith.constant 0 : index
    %c0_46 = arith.constant 0 : index
    %51 = vector.load %arg2[%c8, %c0_45, %c0_46] : memref<9x4x4xbf16, #tpu.memory_space<vmem>>, vector<1x4x4xbf16>
    %52 = vector.shape_cast %51 : vector<1x4x4xbf16> to vector<4x4xbf16>
    %cst_47 = arith.constant dense<0.000000e+00> : vector<288x4xf32>
    %53 = tpu.matmul %50, %52, %cst_47 {dimension_numbers = #tpu.dot_dimension_numbers<[1], [0], [0], [1], [0, 0, 1, 1], [], []>} : vector<288x4xbf16>, vector<4x4xbf16>, vector<288x4xf32> -> vector<288x4xf32>
    %54 = arith.addf %48, %53 : vector<288x4xf32>
    %c0_48 = arith.constant 0 : index
    %c0_49 = arith.constant 0 : index
    %55 = vector.load %arg3[%c0_48, %c0_49] : memref<1x4xf32, #tpu.memory_space<vmem>>, vector<1x4xf32>
    %56 = vector.broadcast %55 : vector<1x4xf32> to vector<288x4xf32>
    %57 = arith.addf %54, %56 : vector<288x4xf32>
    %cst_50 = arith.constant 0.000000e+00 : f32
    %58 = vector.broadcast %cst_50 : f32 to vector<288x4xf32>
    %59 = arith.subf %58, %57 : vector<288x4xf32>
    %60 = math.exp %59 : vector<288x4xf32>
    %cst_51 = arith.constant 1.000000e+00 : f32
    %61 = vector.broadcast %cst_51 : f32 to vector<288x4xf32>
    %62 = arith.addf %61, %60 : vector<288x4xf32>
    %63 = tpu.reciprocal %62 {approx = true} : vector<288x4xf32> -> vector<288x4xf32>
    %64 = arith.mulf %57, %63 : vector<288x4xf32>
    %65 = arith.truncf %64 : vector<288x4xf32> to vector<288x4xbf16>
    %c0_52 = arith.constant 0 : index
    %c0_53 = arith.constant 0 : index
    %c0_54 = arith.constant 0 : index
    %66 = vector.load %arg4[%c0_52, %c0_53, %c0_54] : memref<1x288x4xbf16, #tpu.memory_space<vmem>>, vector<1x288x4xbf16>
    %67 = vector.shape_cast %66 : vector<1x288x4xbf16> to vector<288x4xbf16>
    %68 = vector.shape_cast %65 : vector<288x4xbf16> to vector<1x288x4xbf16>
    tpu.vector_store %arg4[%c0_52, %c0_53, %c0_54], %68 {strides = array<i32>} : memref<1x288x4xbf16, #tpu.memory_space<vmem>>, vector<1x288x4xbf16>,
    return
  }
  func.func @transform_0(%arg0: i32) -> (i32, i32, i32) {
    %c0_i32 = arith.constant 0 : i32
    %c0_i32_0 = arith.constant 0 : i32
    %c0_i32_1 = arith.constant 0 : i32
    return %arg0, %c0_i32, %c0_i32_0 : i32, i32, i32
  }
  func.func @transform_1(%arg0: i32) -> (i32, i32, i32) {
    %c0_i32 = arith.constant 0 : i32
    %c0_i32_0 = arith.constant 0 : i32
    %c0_i32_1 = arith.constant 0 : i32
    %c0_i32_2 = arith.constant 0 : i32
    return %c0_i32, %c0_i32_0, %c0_i32_1 : i32, i32, i32
  }
  func.func @transform_2(%arg0: i32) -> (i32, i32) {
    %c0_i32 = arith.constant 0 : i32
    %c0_i32_0 = arith.constant 0 : i32
    %c0_i32_1 = arith.constant 0 : i32
    return %c0_i32, %c0_i32_0 : i32, i32
  }
  func.func @transform_3(%arg0: i32) -> (i32, i32, i32) {
    %c0_i32 = arith.constant 0 : i32
    %c0_i32_0 = arith.constant 0 : i32
    %c0_i32_1 = arith.constant 0 : i32
    return %arg0, %c0_i32, %c0_i32_0 : i32, i32, i32
  }
}

module attributes {stable_mosaic.version = 11 : i64} {
  func.func @_concat_conv1x1_silu_kernel(%arg0: i32, %arg1: memref<512x4xbf16, #tpu.memory_space<vmem>>, %arg2: memref<512x4xbf16, #tpu.memory_space<vmem>>, %arg3: memref<512x4xbf16, #tpu.memory_space<vmem>>, %arg4: memref<512x4xbf16, #tpu.memory_space<vmem>>, %arg5: memref<512x8xbf16, #tpu.memory_space<vmem>>, %arg6: memref<512x8xbf16, #tpu.memory_space<vmem>>, %arg7: memref<4x8xbf16, #tpu.memory_space<vmem>>, %arg8: memref<4x8xbf16, #tpu.memory_space<vmem>>, %arg9: memref<4x8xbf16, #tpu.memory_space<vmem>>, %arg10: memref<4x8xbf16, #tpu.memory_space<vmem>>, %arg11: memref<8x8xbf16, #tpu.memory_space<vmem>>, %arg12: memref<8x8xbf16, #tpu.memory_space<vmem>>, %arg13: memref<1x8xf32, #tpu.memory_space<vmem>>, %arg14: memref<512x8xf32, #tpu.memory_space<vmem>>) attributes {dimension_semantics = [#tpu.dimension_semantics<parallel>], iteration_bounds = array<i64: 1>, scalar_prefetch = 0 : i64, scratch_operands = 0 : i64, tpu.core_type = #tpu.core_type<tc>, window_params = [{transform_indices = @transform_0, window_bounds = array<i64: 512, 4>}, {transform_indices = @transform_1, window_bounds = array<i64: 512, 4>}, {transform_indices = @transform_2, window_bounds = array<i64: 512, 4>}, {transform_indices = @transform_3, window_bounds = array<i64: 512, 4>}, {transform_indices = @transform_4, window_bounds = array<i64: 512, 8>}, {transform_indices = @transform_5, window_bounds = array<i64: 512, 8>}, {pipeline_mode = #tpu.pipeline_mode<synchronous>, transform_indices = @transform_6, window_bounds = array<i64: 4, 8>}, {pipeline_mode = #tpu.pipeline_mode<synchronous>, transform_indices = @transform_7, window_bounds = array<i64: 4, 8>}, {pipeline_mode = #tpu.pipeline_mode<synchronous>, transform_indices = @transform_8, window_bounds = array<i64: 4, 8>}, {pipeline_mode = #tpu.pipeline_mode<synchronous>, transform_indices = @transform_9, window_bounds = array<i64: 4, 8>}, {pipeline_mode = #tpu.pipeline_mode<synchronous>, transform_indices = @transform_10, window_bounds = array<i64: 8, 8>}, {pipeline_mode = #tpu.pipeline_mode<synchronous>, transform_indices = @transform_11, window_bounds = array<i64: 8, 8>}, {pipeline_mode = #tpu.pipeline_mode<synchronous>, transform_indices = @transform_12, window_bounds = array<i64: 1, 8>}, {transform_indices = @transform_13, window_bounds = array<i64: 512, 8>}]} {
    %cst = arith.constant 0.000000e+00 : f32
    %0 = vector.broadcast %cst : f32 to vector<512x8xf32>
    %c0 = arith.constant 0 : index
    %c0_0 = arith.constant 0 : index
    %1 = vector.load %arg1[%c0, %c0_0] : memref<512x4xbf16, #tpu.memory_space<vmem>>, vector<512x4xbf16>
    %c0_1 = arith.constant 0 : index
    %c0_2 = arith.constant 0 : index
    %2 = vector.load %arg7[%c0_1, %c0_2] : memref<4x8xbf16, #tpu.memory_space<vmem>>, vector<4x8xbf16>
    %cst_3 = arith.constant dense<0.000000e+00> : vector<512x8xf32>
    %3 = tpu.matmul %1, %2, %cst_3 {dimension_numbers = #tpu.dot_dimension_numbers<[1], [0], [0], [1], [0, 0, 1, 1], [], []>} : vector<512x4xbf16>, vector<4x8xbf16>, vector<512x8xf32> -> vector<512x8xf32>
    %4 = arith.addf %0, %3 : vector<512x8xf32>
    %c0_4 = arith.constant 0 : index
    %c0_5 = arith.constant 0 : index
    %5 = vector.load %arg2[%c0_4, %c0_5] : memref<512x4xbf16, #tpu.memory_space<vmem>>, vector<512x4xbf16>
    %c0_6 = arith.constant 0 : index
    %c0_7 = arith.constant 0 : index
    %6 = vector.load %arg8[%c0_6, %c0_7] : memref<4x8xbf16, #tpu.memory_space<vmem>>, vector<4x8xbf16>
    %cst_8 = arith.constant dense<0.000000e+00> : vector<512x8xf32>
    %7 = tpu.matmul %5, %6, %cst_8 {dimension_numbers = #tpu.dot_dimension_numbers<[1], [0], [0], [1], [0, 0, 1, 1], [], []>} : vector<512x4xbf16>, vector<4x8xbf16>, vector<512x8xf32> -> vector<512x8xf32>
    %8 = arith.addf %4, %7 : vector<512x8xf32>
    %c0_9 = arith.constant 0 : index
    %c0_10 = arith.constant 0 : index
    %9 = vector.load %arg3[%c0_9, %c0_10] : memref<512x4xbf16, #tpu.memory_space<vmem>>, vector<512x4xbf16>
    %c0_11 = arith.constant 0 : index
    %c0_12 = arith.constant 0 : index
    %10 = vector.load %arg9[%c0_11, %c0_12] : memref<4x8xbf16, #tpu.memory_space<vmem>>, vector<4x8xbf16>
    %cst_13 = arith.constant dense<0.000000e+00> : vector<512x8xf32>
    %11 = tpu.matmul %9, %10, %cst_13 {dimension_numbers = #tpu.dot_dimension_numbers<[1], [0], [0], [1], [0, 0, 1, 1], [], []>} : vector<512x4xbf16>, vector<4x8xbf16>, vector<512x8xf32> -> vector<512x8xf32>
    %12 = arith.addf %8, %11 : vector<512x8xf32>
    %c0_14 = arith.constant 0 : index
    %c0_15 = arith.constant 0 : index
    %13 = vector.load %arg4[%c0_14, %c0_15] : memref<512x4xbf16, #tpu.memory_space<vmem>>, vector<512x4xbf16>
    %c0_16 = arith.constant 0 : index
    %c0_17 = arith.constant 0 : index
    %14 = vector.load %arg10[%c0_16, %c0_17] : memref<4x8xbf16, #tpu.memory_space<vmem>>, vector<4x8xbf16>
    %cst_18 = arith.constant dense<0.000000e+00> : vector<512x8xf32>
    %15 = tpu.matmul %13, %14, %cst_18 {dimension_numbers = #tpu.dot_dimension_numbers<[1], [0], [0], [1], [0, 0, 1, 1], [], []>} : vector<512x4xbf16>, vector<4x8xbf16>, vector<512x8xf32> -> vector<512x8xf32>
    %16 = arith.addf %12, %15 : vector<512x8xf32>
    %c0_19 = arith.constant 0 : index
    %c0_20 = arith.constant 0 : index
    %17 = vector.load %arg5[%c0_19, %c0_20] : memref<512x8xbf16, #tpu.memory_space<vmem>>, vector<512x8xbf16>
    %c0_21 = arith.constant 0 : index
    %c0_22 = arith.constant 0 : index
    %18 = vector.load %arg11[%c0_21, %c0_22] : memref<8x8xbf16, #tpu.memory_space<vmem>>, vector<8x8xbf16>
    %cst_23 = arith.constant dense<0.000000e+00> : vector<512x8xf32>
    %19 = tpu.matmul %17, %18, %cst_23 {dimension_numbers = #tpu.dot_dimension_numbers<[1], [0], [0], [1], [0, 0, 1, 1], [], []>} : vector<512x8xbf16>, vector<8x8xbf16>, vector<512x8xf32> -> vector<512x8xf32>
    %20 = arith.addf %16, %19 : vector<512x8xf32>
    %c0_24 = arith.constant 0 : index
    %c0_25 = arith.constant 0 : index
    %21 = vector.load %arg6[%c0_24, %c0_25] : memref<512x8xbf16, #tpu.memory_space<vmem>>, vector<512x8xbf16>
    %c0_26 = arith.constant 0 : index
    %c0_27 = arith.constant 0 : index
    %22 = vector.load %arg12[%c0_26, %c0_27] : memref<8x8xbf16, #tpu.memory_space<vmem>>, vector<8x8xbf16>
    %cst_28 = arith.constant dense<0.000000e+00> : vector<512x8xf32>
    %23 = tpu.matmul %21, %22, %cst_28 {dimension_numbers = #tpu.dot_dimension_numbers<[1], [0], [0], [1], [0, 0, 1, 1], [], []>} : vector<512x8xbf16>, vector<8x8xbf16>, vector<512x8xf32> -> vector<512x8xf32>
    %24 = arith.addf %20, %23 : vector<512x8xf32>
    %c0_29 = arith.constant 0 : index
    %c0_30 = arith.constant 0 : index
    %25 = vector.load %arg13[%c0_29, %c0_30] : memref<1x8xf32, #tpu.memory_space<vmem>>, vector<1x8xf32>
    %26 = vector.broadcast %25 : vector<1x8xf32> to vector<512x8xf32>
    %27 = arith.addf %24, %26 : vector<512x8xf32>
    %cst_31 = arith.constant 0.000000e+00 : f32
    %28 = vector.broadcast %cst_31 : f32 to vector<512x8xf32>
    %29 = arith.subf %28, %27 : vector<512x8xf32>
    %30 = math.exp %29 : vector<512x8xf32>
    %cst_32 = arith.constant 1.000000e+00 : f32
    %31 = vector.broadcast %cst_32 : f32 to vector<512x8xf32>
    %32 = arith.addf %31, %30 : vector<512x8xf32>
    %33 = tpu.reciprocal %32 {approx = true} : vector<512x8xf32> -> vector<512x8xf32>
    %34 = arith.mulf %27, %33 : vector<512x8xf32>
    %c0_33 = arith.constant 0 : index
    %c0_34 = arith.constant 0 : index
    %35 = vector.load %arg14[%c0_33, %c0_34] : memref<512x8xf32, #tpu.memory_space<vmem>>, vector<512x8xf32>
    tpu.vector_store %arg14[%c0_33, %c0_34], %34 {strides = array<i32>} : memref<512x8xf32, #tpu.memory_space<vmem>>, vector<512x8xf32>,
    return
  }
  func.func @transform_0(%arg0: i32) -> (i32, i32) {
    %c0_i32 = arith.constant 0 : i32
    %c0_i32_0 = arith.constant 0 : i32
    return %arg0, %c0_i32 : i32, i32
  }
  func.func @transform_1(%arg0: i32) -> (i32, i32) {
    %c0_i32 = arith.constant 0 : i32
    %c0_i32_0 = arith.constant 0 : i32
    return %arg0, %c0_i32 : i32, i32
  }
  func.func @transform_2(%arg0: i32) -> (i32, i32) {
    %c0_i32 = arith.constant 0 : i32
    %c0_i32_0 = arith.constant 0 : i32
    return %arg0, %c0_i32 : i32, i32
  }
  func.func @transform_3(%arg0: i32) -> (i32, i32) {
    %c0_i32 = arith.constant 0 : i32
    %c0_i32_0 = arith.constant 0 : i32
    return %arg0, %c0_i32 : i32, i32
  }
  func.func @transform_4(%arg0: i32) -> (i32, i32) {
    %c0_i32 = arith.constant 0 : i32
    %c0_i32_0 = arith.constant 0 : i32
    return %arg0, %c0_i32 : i32, i32
  }
  func.func @transform_5(%arg0: i32) -> (i32, i32) {
    %c0_i32 = arith.constant 0 : i32
    %c0_i32_0 = arith.constant 0 : i32
    return %arg0, %c0_i32 : i32, i32
  }
  func.func @transform_6(%arg0: i32) -> (i32, i32) {
    %c0_i32 = arith.constant 0 : i32
    %c0_i32_0 = arith.constant 0 : i32
    %c0_i32_1 = arith.constant 0 : i32
    return %c0_i32, %c0_i32_0 : i32, i32
  }
  func.func @transform_7(%arg0: i32) -> (i32, i32) {
    %c0_i32 = arith.constant 0 : i32
    %c0_i32_0 = arith.constant 0 : i32
    %c0_i32_1 = arith.constant 0 : i32
    return %c0_i32, %c0_i32_0 : i32, i32
  }
  func.func @transform_8(%arg0: i32) -> (i32, i32) {
    %c0_i32 = arith.constant 0 : i32
    %c0_i32_0 = arith.constant 0 : i32
    %c0_i32_1 = arith.constant 0 : i32
    return %c0_i32, %c0_i32_0 : i32, i32
  }
  func.func @transform_9(%arg0: i32) -> (i32, i32) {
    %c0_i32 = arith.constant 0 : i32
    %c0_i32_0 = arith.constant 0 : i32
    %c0_i32_1 = arith.constant 0 : i32
    return %c0_i32, %c0_i32_0 : i32, i32
  }
  func.func @transform_10(%arg0: i32) -> (i32, i32) {
    %c0_i32 = arith.constant 0 : i32
    %c0_i32_0 = arith.constant 0 : i32
    %c0_i32_1 = arith.constant 0 : i32
    return %c0_i32, %c0_i32_0 : i32, i32
  }
  func.func @transform_11(%arg0: i32) -> (i32, i32) {
    %c0_i32 = arith.constant 0 : i32
    %c0_i32_0 = arith.constant 0 : i32
    %c0_i32_1 = arith.constant 0 : i32
    return %c0_i32, %c0_i32_0 : i32, i32
  }
  func.func @transform_12(%arg0: i32) -> (i32, i32) {
    %c0_i32 = arith.constant 0 : i32
    %c0_i32_0 = arith.constant 0 : i32
    %c0_i32_1 = arith.constant 0 : i32
    return %c0_i32, %c0_i32_0 : i32, i32
  }
  func.func @transform_13(%arg0: i32) -> (i32, i32) {
    %c0_i32 = arith.constant 0 : i32
    %c0_i32_0 = arith.constant 0 : i32
    return %arg0, %c0_i32 : i32, i32
  }
}

</mosaic_0001>

<llo_original>
// kernel: elan_neck_forward.6
$region0: #{elan_neck_forward.6}
  #allocation0 [shape = 'u32[]', space=smem, size = 0x4, offset = 0x4, fixed_abs, tag = 'smem constant byte address 0x4 - core index']
  #allocation1 [shape = 'u32[72,128]{1,0:T(1,128)}', space=vmem, size = 0x9000, scoped, tag = 'internal scratch']
  %s0 = inlined_call_operand.vmem [shape: bf16[512,16], index: 0, kind: input, shape index: {}]
  %s1 = inlined_call_operand.vmem [shape: bf16[16,16], index: 1, kind: input, shape index: {}]
  %s2 = inlined_call_operand.vmem [shape: f32[1,16], index: 2, kind: input, shape index: {}]
  %s3 = inlined_call_operand.vmem [shape: bf16[512,16], index: 3, kind: output, shape index: {}]
  %s4 = sld [smem:[#allocation0]]
  $region22: #{elan_neck_forward.6} parent=0
    _
  %s6 = ssub.s32 1, %s4
  %s7 = scalar_select 0, %s6, %s4
  // Predicated region
  $region2: #{elan_neck_forward.6} parent=0 // pred_check
    _
  $region3: #{elan_neck_forward.6} parent=0 // pred_check_branch
    %9 = sbr.rel (0) target = $region5
  $region4: #{elan_neck_forward.6} parent=0 // pred_region
    _
  $region5: #{elan_neck_forward.6} parent=0 // pred_fallthru
    _
  // Predicated region
  $region6: #{elan_neck_forward.6} parent=0 // pred_check
    _
  $region7: #{elan_neck_forward.6} parent=0 // pred_check_branch
    %11 = sbr.rel (0) target = $region9
  $region8: #{elan_neck_forward.6} parent=0 // pred_region
    _
  $region9: #{elan_neck_forward.6} parent=0 // pred_fallthru
    _
  // Predicated region
  $region10: #{elan_neck_forward.6} parent=0 // pred_check
    _
  $region11: #{elan_neck_forward.6} parent=0 // pred_check_branch
    %13 = sbr.rel (0) target = $region13
  $region12: #{elan_neck_forward.6} parent=0 // pred_region
    _
  $region13: #{elan_neck_forward.6} parent=0 // pred_fallthru
    _
  %v15 = vld [vmem:[%s0] sm:$0xf]
  %v16 = vld [vmem:[%s0 + $0x4] sm:$0xf]
  %v17 = vld [vmem:[%s0 + $0x8] sm:$0xf]
  %v18 = vld [vmem:[%s0 + $0xc] sm:$0xf]
  %v19 = vld [vmem:[%s0 + $0x10] sm:$0xf]
  %v20 = vld [vmem:[%s0 + $0x14] sm:$0xf]
  %v21 = vld [vmem:[%s0 + $0x18] sm:$0xf]
  %v22 = vld [vmem:[%s0 + $0x1c] sm:$0xf]
  %v23 = vld [vmem:[%s0 + $0x20] sm:$0xf]
  %v24 = vld [vmem:[%s0 + $0x24] sm:$0xf]
  %v25 = vld [vmem:[%s0 + $0x28] sm:$0xf]
  %v26 = vld [vmem:[%s0 + $0x2c] sm:$0xf]
  %v27 = vld [vmem:[%s0 + $0x30] sm:$0xf]
  %v28 = vld [vmem:[%s0 + $0x34] sm:$0xf]
  %v29 = vld [vmem:[%s0 + $0x38] sm:$0xf]
  %v30 = vld [vmem:[%s0 + $0x3c] sm:$0xf]
  %v31 = vld [vmem:[%s0 + $0x40] sm:$0xf]
  %v32 = vld [vmem:[%s0 + $0x44] sm:$0xf]
  %v33 = vld [vmem:[%s0 + $0x48] sm:$0xf]
  %v34 = vld [vmem:[%s0 + $0x4c] sm:$0xf]
  %v35 = vld [vmem:[%s0 + $0x50] sm:$0xf]
  %v36 = vld [vmem:[%s0 + $0x54] sm:$0xf]
  %v37 = vld [vmem:[%s0 + $0x58] sm:$0xf]
  %v38 = vld [vmem:[%s0 + $0x5c] sm:$0xf]
  %v39 = vld [vmem:[%s0 + $0x60] sm:$0xf]
  %v40 = vld [vmem:[%s0 + $0x64] sm:$0xf]
  %v41 = vld [vmem:[%s0 + $0x68] sm:$0xf]
  %v42 = vld [vmem:[%s0 + $0x6c] sm:$0xf]
  %v43 = vld [vmem:[%s0 + $0x70] sm:$0xf]
  %v44 = vld [vmem:[%s0 + $0x74] sm:$0xf]
  %v45 = vld [vmem:[%s0 + $0x78] sm:$0xf]
  %v46 = vld [vmem:[%s0 + $0x7c] sm:$0xf]
  %v47 = vld [vmem:[%s0 + $0x80] sm:$0xf]
  %v48 = vld [vmem:[%s0 + $0x84] sm:$0xf]
  %v49 = vld [vmem:[%s0 + $0x88] sm:$0xf]
  %v50 = vld [vmem:[%s0 + $0x8c] sm:$0xf]
  %v51 = vld [vmem:[%s0 + $0x90] sm:$0xf]
  %v52 = vld [vmem:[%s0 + $0x94] sm:$0xf]
  %v53 = vld [vmem:[%s0 + $0x98] sm:$0xf]
  %v54 = vld [vmem:[%s0 + $0x9c] sm:$0xf]
  %v55 = vld [vmem:[%s0 + $0xa0] sm:$0xf]
  %v56 = vld [vmem:[%s0 + $0xa4] sm:$0xf]
  %v57 = vld [vmem:[%s0 + $0xa8] sm:$0xf]
  %v58 = vld [vmem:[%s0 + $0xac] sm:$0xf]
  %v59 = vld [vmem:[%s0 + $0xb0] sm:$0xf]
  %v60 = vld [vmem:[%s0 + $0xb4] sm:$0xf]
  %v61 = vld [vmem:[%s0 + $0xb8] sm:$0xf]
  %v62 = vld [vmem:[%s0 + $0xbc] sm:$0xf]
  %v63 = vld [vmem:[%s0 + $0xc0] sm:$0xf]
  %v64 = vld [vmem:[%s0 + $0xc4] sm:$0xf]
  %v65 = vld [vmem:[%s0 + $0xc8] sm:$0xf]
  %v66 = vld [vmem:[%s0 + $0xcc] sm:$0xf]
  %v67 = vld [vmem:[%s0 + $0xd0] sm:$0xf]
  %v68 = vld [vmem:[%s0 + $0xd4] sm:$0xf]
  %v69 = vld [vmem:[%s0 + $0xd8] sm:$0xf]
  %v70 = vld [vmem:[%s0 + $0xdc] sm:$0xf]
  %v71 = vld [vmem:[%s0 + $0xe0] sm:$0xf]
  %v72 = vld [vmem:[%s0 + $0xe4] sm:$0xf]
  %v73 = vld [vmem:[%s0 + $0xe8] sm:$0xf]
  %v74 = vld [vmem:[%s0 + $0xec] sm:$0xf]
  %v75 = vld [vmem:[%s0 + $0xf0] sm:$0xf]
  %v76 = vld [vmem:[%s0 + $0xf4] sm:$0xf]
  %v77 = vld [vmem:[%s0 + $0xf8] sm:$0xf]
  %v78 = vld [vmem:[%s0 + $0xfc] sm:$0xf]
  %v79 = vld [vmem:[%s1] sm:$0xf]
  %v80 = vld [vmem:[%s1 + $0x4] sm:$0xf]
  %v81 = vld [vmem:[%s2] sm:$0x1]
  %v83 = vperm.slane %v81, 0
  %v149 = vunpack.c.l.b16 %v15
  %v150 = vunpack.c.l.b16 %v16
  %v151 = vunpack.c.l.b16 %v17
  %v152 = vunpack.c.l.b16 %v18
  %v153 = vunpack.c.l.b16 %v19
  %v154 = vunpack.c.l.b16 %v20
  %v155 = vunpack.c.l.b16 %v21
  %v156 = vunpack.c.l.b16 %v22
  %v157 = vunpack.c.l.b16 %v23
  %v158 = vunpack.c.l.b16 %v24
  %v159 = vunpack.c.l.b16 %v25
  %v160 = vunpack.c.l.b16 %v26
  %v161 = vunpack.c.l.b16 %v27
  %v162 = vunpack.c.l.b16 %v28
  %v163 = vunpack.c.l.b16 %v29
  %v164 = vunpack.c.l.b16 %v30
  %v165 = vunpack.c.l.b16 %v31
  %v166 = vunpack.c.l.b16 %v32
  %v167 = vunpack.c.l.b16 %v33
  %v168 = vunpack.c.l.b16 %v34
  %v169 = vunpack.c.l.b16 %v35
  %v170 = vunpack.c.l.b16 %v36
  %v171 = vunpack.c.l.b16 %v37
  %v172 = vunpack.c.l.b16 %v38
  %v173 = vunpack.c.l.b16 %v39
  %v174 = vunpack.c.l.b16 %v40
  %v175 = vunpack.c.l.b16 %v41
  %v176 = vunpack.c.l.b16 %v42
  %v177 = vunpack.c.l.b16 %v43
  %v178 = vunpack.c.l.b16 %v44
  %v179 = vunpack.c.l.b16 %v45
  %v180 = vunpack.c.l.b16 %v46
  %v181 = vunpack.c.l.b16 %v47
  %v182 = vunpack.c.l.b16 %v48
  %v183 = vunpack.c.l.b16 %v49
  %v184 = vunpack.c.l.b16 %v50
  %v185 = vunpack.c.l.b16 %v51
  %v186 = vunpack.c.l.b16 %v52
  %v187 = vunpack.c.l.b16 %v53
  %v188 = vunpack.c.l.b16 %v54
  %v189 = vunpack.c.l.b16 %v55
  %v190 = vunpack.c.l.b16 %v56
  %v191 = vunpack.c.l.b16 %v57
  %v192 = vunpack.c.l.b16 %v58
  %v193 = vunpack.c.l.b16 %v59
  %v194 = vunpack.c.l.b16 %v60
  %v195 = vunpack.c.l.b16 %v61
  %v196 = vunpack.c.l.b16 %v62
  %v197 = vunpack.c.l.b16 %v63
  %v198 = vunpack.c.l.b16 %v64
  %v199 = vunpack.c.l.b16 %v65
  %v200 = vunpack.c.l.b16 %v66
  %v201 = vunpack.c.l.b16 %v67
  %v202 = vunpack.c.l.b16 %v68
  %v203 = vunpack.c.l.b16 %v69
  %v204 = vunpack.c.l.b16 %v70
  %v205 = vunpack.c.l.b16 %v71
  %v206 = vunpack.c.l.b16 %v72
  %v207 = vunpack.c.l.b16 %v73
  %v208 = vunpack.c.l.b16 %v74
  %v209 = vunpack.c.l.b16 %v75
  %v210 = vunpack.c.l.b16 %v76
  %v211 = vunpack.c.l.b16 %v77
  %v212 = vunpack.c.l.b16 %v78
  %v213 = vpack.c.b16 %v150, %v149
  %v214 = vpack.c.b16 %v152, %v151
  %v215 = vpack.c.b16 %v154, %v153
  %v216 = vpack.c.b16 %v156, %v155
  %v217 = vpack.c.b16 %v158, %v157
  %v218 = vpack.c.b16 %v160, %v159
  %v219 = vpack.c.b16 %v162, %v161
  %v220 = vpack.c.b16 %v164, %v163
  %v221 = vpack.c.b16 %v166, %v165
  %v222 = vpack.c.b16 %v168, %v167
  %v223 = vpack.c.b16 %v170, %v169
  %v224 = vpack.c.b16 %v172, %v171
  %v225 = vpack.c.b16 %v174, %v173
  %v226 = vpack.c.b16 %v176, %v175
  %v227 = vpack.c.b16 %v178, %v177
  %v228 = vpack.c.b16 %v180, %v179
  %v229 = vpack.c.b16 %v182, %v181
  %v230 = vpack.c.b16 %v184, %v183
  %v231 = vpack.c.b16 %v186, %v185
  %v232 = vpack.c.b16 %v188, %v187
  %v233 = vpack.c.b16 %v190, %v189
  %v234 = vpack.c.b16 %v192, %v191
  %v235 = vpack.c.b16 %v194, %v193
  %v236 = vpack.c.b16 %v196, %v195
  %v237 = vpack.c.b16 %v198, %v197
  %v238 = vpack.c.b16 %v200, %v199
  %v239 = vpack.c.b16 %v202, %v201
  %v240 = vpack.c.b16 %v204, %v203
  %v241 = vpack.c.b16 %v206, %v205
  %v242 = vpack.c.b16 %v208, %v207
  %v243 = vpack.c.b16 %v210, %v209
  %v244 = vpack.c.b16 %v212, %v211
  %v247 = vunpack.c.l.b16 %v79
  %v248 = vunpack.c.l.b16 %v80
  %v249 = vpack.c.b16 %v248, %v247
  %vm251 = vcmask 130048
  %v253 = vsel %vm251, %v213, 0
  %v256 = vsel %vm251, %v214, 0
  %v259 = vsel %vm251, %v215, 0
  %v262 = vsel %vm251, %v216, 0
  %v265 = vsel %vm251, %v217, 0
  %v268 = vsel %vm251, %v218, 0
  %v271 = vsel %vm251, %v219, 0
  %v274 = vsel %vm251, %v220, 0
  %v277 = vsel %vm251, %v221, 0
  %v280 = vsel %vm251, %v222, 0
  %v283 = vsel %vm251, %v223, 0
  %v286 = vsel %vm251, %v224, 0
  %v289 = vsel %vm251, %v225, 0
  %v292 = vsel %vm251, %v226, 0
  %v295 = vsel %vm251, %v227, 0
  %v298 = vsel %vm251, %v228, 0
  %v301 = vsel %vm251, %v229, 0
  %v304 = vsel %vm251, %v230, 0
  %v307 = vsel %vm251, %v231, 0
  %v310 = vsel %vm251, %v232, 0
  %v313 = vsel %vm251, %v233, 0
  %v316 = vsel %vm251, %v234, 0
  %v319 = vsel %vm251, %v235, 0
  %v322 = vsel %vm251, %v236, 0
  %v325 = vsel %vm251, %v237, 0
  %v328 = vsel %vm251, %v238, 0
  %v331 = vsel %vm251, %v239, 0
  %v334 = vsel %vm251, %v240, 0
  %v337 = vsel %vm251, %v241, 0
  %v340 = vsel %vm251, %v242, 0
  %v343 = vsel %vm251, %v243, 0
  %v346 = vsel %vm251, %v244, 0
  %348 = vmatpush.bf16.msra.mxu0 0
  %349 = vmatpush.bf16.msra.mxu0 0
  %350 = vmatpush.bf16.msra.mxu0 0
  %351 = vmatpush.bf16.msra.mxu0 0
  %352 = vmatpush.bf16.msra.mxu0 0
  %353 = vmatpush.bf16.msra.mxu0 0
  %354 = vmatpush.bf16.msra.mxu0 0
  %355 = vmatpush.bf16.msra.mxu0 %v249
  %356 = vmatmul.bf16.gmra.mxu0 %v253
  %v357 = vpop.f32.mrf.mxu0
  %v358 = vadd.f32 %v83, %v357
  %v359 = vpop.f32.mrf.mxu0
  %v360 = vadd.f32 %v83, %v359
  %361 = vmatmul.bf16.gmra.mxu0 %v256
  %v362 = vpop.f32.mrf.mxu0
  %v363 = vadd.f32 %v83, %v362
  %v364 = vpop.f32.mrf.mxu0
  %v365 = vadd.f32 %v83, %v364
  %366 = vmatmul.bf16.gmra.mxu0 %v259
  %v367 = vpop.f32.mrf.mxu0
  %v368 = vadd.f32 %v83, %v367
  %v369 = vpop.f32.mrf.mxu0
  %v370 = vadd.f32 %v83, %v369
  %371 = vmatmul.bf16.gmra.mxu0 %v262
  %v372 = vpop.f32.mrf.mxu0
  %v373 = vadd.f32 %v83, %v372
  %v374 = vpop.f32.mrf.mxu0
  %v375 = vadd.f32 %v83, %v374
  %376 = vmatmul.bf16.gmra.mxu0 %v265
  %v377 = vpop.f32.mrf.mxu0
  %v378 = vadd.f32 %v83, %v377
  %v379 = vpop.f32.mrf.mxu0
  %v380 = vadd.f32 %v83, %v379
  %381 = vmatmul.bf16.gmra.mxu0 %v268
  %v382 = vpop.f32.mrf.mxu0
  %v383 = vadd.f32 %v83, %v382
  %v384 = vpop.f32.mrf.mxu0
  %v385 = vadd.f32 %v83, %v384
  %386 = vmatmul.bf16.gmra.mxu0 %v271
  %v387 = vpop.f32.mrf.mxu0
  %v388 = vadd.f32 %v83, %v387
  %v389 = vpop.f32.mrf.mxu0
  %v390 = vadd.f32 %v83, %v389
  %391 = vmatmul.bf16.gmra.mxu0 %v274
  %v392 = vpop.f32.mrf.mxu0
  %v393 = vadd.f32 %v83, %v392
  %v394 = vpop.f32.mrf.mxu0
  %v395 = vadd.f32 %v83, %v394
  %396 = vmatmul.bf16.gmra.mxu0 %v277
  %v397 = vpop.f32.mrf.mxu0
  %v398 = vadd.f32 %v83, %v397
  %v399 = vpop.f32.mrf.mxu0
  %v400 = vadd.f32 %v83, %v399
  %401 = vmatmul.bf16.gmra.mxu0 %v280
  %v402 = vpop.f32.mrf.mxu0
  %v403 = vadd.f32 %v83, %v402
  %v404 = vpop.f32.mrf.mxu0
  %v405 = vadd.f32 %v83, %v404
  %406 = vmatmul.bf16.gmra.mxu0 %v283
  %v407 = vpop.f32.mrf.mxu0
  %v408 = vadd.f32 %v83, %v407
  %v409 = vpop.f32.mrf.mxu0
  %v410 = vadd.f32 %v83, %v409
  %411 = vmatmul.bf16.gmra.mxu0 %v286
  %v412 = vpop.f32.mrf.mxu0
  %v413 = vadd.f32 %v83, %v412
  %v414 = vpop.f32.mrf.mxu0
  %v415 = vadd.f32 %v83, %v414
  %416 = vmatmul.bf16.gmra.mxu0 %v289
  %v417 = vpop.f32.mrf.mxu0
  %v418 = vadd.f32 %v83, %v417
  %v419 = vpop.f32.mrf.mxu0
  %v420 = vadd.f32 %v83, %v419
  %421 = vmatmul.bf16.gmra.mxu0 %v292
  %v422 = vpop.f32.mrf.mxu0
  %v423 = vadd.f32 %v83, %v422
  %v424 = vpop.f32.mrf.mxu0
  %v425 = vadd.f32 %v83, %v424
  %426 = vmatmul.bf16.gmra.mxu0 %v295
  %v427 = vpop.f32.mrf.mxu0
  %v428 = vadd.f32 %v83, %v427
  %v429 = vpop.f32.mrf.mxu0
  %v430 = vadd.f32 %v83, %v429
  %431 = vmatmul.bf16.gmra.mxu0 %v298
  %v432 = vpop.f32.mrf.mxu0
  %v433 = vadd.f32 %v83, %v432
  %v434 = vpop.f32.mrf.mxu0
  %v435 = vadd.f32 %v83, %v434
  %436 = vmatmul.bf16.gmra.mxu0 %v301
  %v437 = vpop.f32.mrf.mxu0
  %v438 = vadd.f32 %v83, %v437
  %v439 = vpop.f32.mrf.mxu0
  %v440 = vadd.f32 %v83, %v439
  %441 = vmatmul.bf16.gmra.mxu0 %v304
  %v442 = vpop.f32.mrf.mxu0
  %v443 = vadd.f32 %v83, %v442
  %v444 = vpop.f32.mrf.mxu0
  %v445 = vadd.f32 %v83, %v444
  %446 = vmatmul.bf16.gmra.mxu0 %v307
  %v447 = vpop.f32.mrf.mxu0
  %v448 = vadd.f32 %v83, %v447
  %v449 = vpop.f32.mrf.mxu0
  %v450 = vadd.f32 %v83, %v449
  %451 = vmatmul.bf16.gmra.mxu0 %v310
  %v452 = vpop.f32.mrf.mxu0
  %v453 = vadd.f32 %v83, %v452
  %v454 = vpop.f32.mrf.mxu0
  %v455 = vadd.f32 %v83, %v454
  %456 = vmatmul.bf16.gmra.mxu0 %v313
  %v457 = vpop.f32.mrf.mxu0
  %v458 = vadd.f32 %v83, %v457
  %v459 = vpop.f32.mrf.mxu0
  %v460 = vadd.f32 %v83, %v459
  %461 = vmatmul.bf16.gmra.mxu0 %v316
  %v462 = vpop.f32.mrf.mxu0
  %v463 = vadd.f32 %v83, %v462
  %v464 = vpop.f32.mrf.mxu0
  %v465 = vadd.f32 %v83, %v464
  %466 = vmatmul.bf16.gmra.mxu0 %v319
  %v467 = vpop.f32.mrf.mxu0
  %v468 = vadd.f32 %v83, %v467
  %v469 = vpop.f32.mrf.mxu0
  %v470 = vadd.f32 %v83, %v469
  %471 = vmatmul.bf16.gmra.mxu0 %v322
  %v472 = vpop.f32.mrf.mxu0
  %v473 = vadd.f32 %v83, %v472
  %v474 = vpop.f32.mrf.mxu0
  %v475 = vadd.f32 %v83, %v474
  %476 = vmatmul.bf16.gmra.mxu0 %v325
  %v477 = vpop.f32.mrf.mxu0
  %v478 = vadd.f32 %v83, %v477
  %v479 = vpop.f32.mrf.mxu0
  %v480 = vadd.f32 %v83, %v479
  %481 = vmatmul.bf16.gmra.mxu0 %v328
  %v482 = vpop.f32.mrf.mxu0
  %v483 = vadd.f32 %v83, %v482
  %v484 = vpop.f32.mrf.mxu0
  %v485 = vadd.f32 %v83, %v484
  %486 = vmatmul.bf16.gmra.mxu0 %v331
  %v487 = vpop.f32.mrf.mxu0
  %v488 = vadd.f32 %v83, %v487
  %v489 = vpop.f32.mrf.mxu0
  %v490 = vadd.f32 %v83, %v489
  %491 = vmatmul.bf16.gmra.mxu0 %v334
  %v492 = vpop.f32.mrf.mxu0
  %v493 = vadd.f32 %v83, %v492
  %v494 = vpop.f32.mrf.mxu0
  %v495 = vadd.f32 %v83, %v494
  %496 = vmatmul.bf16.gmra.mxu0 %v337
  %v497 = vpop.f32.mrf.mxu0
  %v498 = vadd.f32 %v83, %v497
  %v499 = vpop.f32.mrf.mxu0
  %v500 = vadd.f32 %v83, %v499
  %501 = vmatmul.bf16.gmra.mxu0 %v340
  %v502 = vpop.f32.mrf.mxu0
  %v503 = vadd.f32 %v83, %v502
  %v504 = vpop.f32.mrf.mxu0
  %v505 = vadd.f32 %v83, %v504
  %506 = vmatmul.bf16.gmra.mxu0 %v343
  %v507 = vpop.f32.mrf.mxu0
  %v508 = vadd.f32 %v83, %v507
  %v509 = vpop.f32.mrf.mxu0
  %v510 = vadd.f32 %v83, %v509
  %511 = vmatmul.bf16.gmra.mxu0 %v346
  %v512 = vpop.f32.mrf.mxu0
  %v513 = vadd.f32 %v83, %v512
  %v514 = vpop.f32.mrf.mxu0
  %v515 = vadd.f32 %v83, %v514
  %516 = vdwg.mxu0
  %v517 = vsub.f32 0.0, %v358
  %v518 = vsub.f32 0.0, %v360
  %v519 = vsub.f32 0.0, %v363
  %v520 = vsub.f32 0.0, %v365
  %v521 = vsub.f32 0.0, %v368
  %v522 = vsub.f32 0.0, %v370
  %v523 = vsub.f32 0.0, %v373
  %v524 = vsub.f32 0.0, %v375
  %v525 = vsub.f32 0.0, %v378
  %v526 = vsub.f32 0.0, %v380
  %v527 = vsub.f32 0.0, %v383
  %v528 = vsub.f32 0.0, %v385
  %v529 = vsub.f32 0.0, %v388
  %v530 = vsub.f32 0.0, %v390
  %v531 = vsub.f32 0.0, %v393
  %v532 = vsub.f32 0.0, %v395
  %v533 = vsub.f32 0.0, %v398
  %v534 = vsub.f32 0.0, %v400
  %v535 = vsub.f32 0.0, %v403
  %v536 = vsub.f32 0.0, %v405
  %v537 = vsub.f32 0.0, %v408
  %v538 = vsub.f32 0.0, %v410
  %v539 = vsub.f32 0.0, %v413
  %v540 = vsub.f32 0.0, %v415
  %v541 = vsub.f32 0.0, %v418
  %v542 = vsub.f32 0.0, %v420
  %v543 = vsub.f32 0.0, %v423
  %v544 = vsub.f32 0.0, %v425
  %v545 = vsub.f32 0.0, %v428
  %v546 = vsub.f32 0.0, %v430
  %v547 = vsub.f32 0.0, %v433
  %v548 = vsub.f32 0.0, %v435
  %v549 = vsub.f32 0.0, %v438
  %v550 = vsub.f32 0.0, %v440
  %v551 = vsub.f32 0.0, %v443
  %v552 = vsub.f32 0.0, %v445
  %v553 = vsub.f32 0.0, %v448
  %v554 = vsub.f32 0.0, %v450
  %v555 = vsub.f32 0.0, %v453
  %v556 = vsub.f32 0.0, %v455
  %v557 = vsub.f32 0.0, %v458
  %v558 = vsub.f32 0.0, %v460
  %v559 = vsub.f32 0.0, %v463
  %v560 = vsub.f32 0.0, %v465
  %v561 = vsub.f32 0.0, %v468
  %v562 = vsub.f32 0.0, %v470
  %v563 = vsub.f32 0.0, %v473
  %v564 = vsub.f32 0.0, %v475
  %v565 = vsub.f32 0.0, %v478
  %v566 = vsub.f32 0.0, %v480
  %v567 = vsub.f32 0.0, %v483
  %v568 = vsub.f32 0.0, %v485
  %v569 = vsub.f32 0.0, %v488
  %v570 = vsub.f32 0.0, %v490
  %v571 = vsub.f32 0.0, %v493
  %v572 = vsub.f32 0.0, %v495
  %v573 = vsub.f32 0.0, %v498
  %v574 = vsub.f32 0.0, %v500
  %v575 = vsub.f32 0.0, %v503
  %v576 = vsub.f32 0.0, %v505
  %v577 = vsub.f32 0.0, %v508
  %v578 = vsub.f32 0.0, %v510
  %v579 = vsub.f32 0.0, %v513
  %v580 = vsub.f32 0.0, %v515
  %v581 = vmul.f32 %v517, 1.442695
  %v582 = vpow.pop %v581
  %v583 = vmul.f32 %v518, 1.442695
  %v584 = vpow.pop %v583
  %v585 = vmul.f32 %v519, 1.442695
  %v586 = vpow.pop %v585
  %v587 = vmul.f32 %v520, 1.442695
  %v588 = vpow.pop %v587
  %v589 = vmul.f32 %v521, 1.442695
  %v590 = vpow.pop %v589
  %v591 = vmul.f32 %v522, 1.442695
  %v592 = vpow.pop %v591
  %v593 = vmul.f32 %v523, 1.442695
  %v594 = vpow.pop %v593
  %v595 = vmul.f32 %v524, 1.442695
  %v596 = vpow.pop %v595
  %v597 = vmul.f32 %v525, 1.442695
  %v598 = vpow.pop %v597
  %v599 = vmul.f32 %v526, 1.442695
  %v600 = vpow.pop %v599
  %v601 = vmul.f32 %v527, 1.442695
  %v602 = vpow.pop %v601
  %v603 = vmul.f32 %v528, 1.442695
  %v604 = vpow.pop %v603
  %v605 = vmul.f32 %v529, 1.442695
  %v606 = vpow.pop %v605
  %v607 = vmul.f32 %v530, 1.442695
  %v608 = vpow.pop %v607
  %v609 = vmul.f32 %v531, 1.442695
  %v610 = vpow.pop %v609
  %v611 = vmul.f32 %v532, 1.442695
  %v612 = vpow.pop %v611
  %v613 = vmul.f32 %v533, 1.442695
  %v614 = vpow.pop %v613
  %v615 = vmul.f32 %v534, 1.442695
  %v616 = vpow.pop %v615
  %v617 = vmul.f32 %v535, 1.442695
  %v618 = vpow.pop %v617
  %v619 = vmul.f32 %v536, 1.442695
  %v620 = vpow.pop %v619
  %v621 = vmul.f32 %v537, 1.442695
  %v622 = vpow.pop %v621
  %v623 = vmul.f32 %v538, 1.442695
  %v624 = vpow.pop %v623
  %v625 = vmul.f32 %v539, 1.442695
  %v626 = vpow.pop %v625
  %v627 = vmul.f32 %v540, 1.442695
  %v628 = vpow.pop %v627
  %v629 = vmul.f32 %v541, 1.442695
  %v630 = vpow.pop %v629
  %v631 = vmul.f32 %v542, 1.442695
  %v632 = vpow.pop %v631
  %v633 = vmul.f32 %v543, 1.442695
  %v634 = vpow.pop %v633
  %v635 = vmul.f32 %v544, 1.442695
  %v636 = vpow.pop %v635
  %v637 = vmul.f32 %v545, 1.442695
  %v638 = vpow.pop %v637
  %v639 = vmul.f32 %v546, 1.442695
  %v640 = vpow.pop %v639
  %v641 = vmul.f32 %v547, 1.442695
  %v642 = vpow.pop %v641
  %v643 = vmul.f32 %v548, 1.442695
  %v644 = vpow.pop %v643
  %v645 = vmul.f32 %v549, 1.442695
  %v646 = vpow.pop %v645
  %v647 = vmul.f32 %v550, 1.442695
  %v648 = vpow.pop %v647
  %v649 = vmul.f32 %v551, 1.442695
  %v650 = vpow.pop %v649
  %v651 = vmul.f32 %v552, 1.442695
  %v652 = vpow.pop %v651
  %v653 = vmul.f32 %v553, 1.442695
  %v654 = vpow.pop %v653
  %v655 = vmul.f32 %v554, 1.442695
  %v656 = vpow.pop %v655
  %v657 = vmul.f32 %v555, 1.442695
  %v658 = vpow.pop %v657
  %v659 = vmul.f32 %v556, 1.442695
  %v660 = vpow.pop %v659
  %v661 = vmul.f32 %v557, 1.442695
  %v662 = vpow.pop %v661
  %v663 = vmul.f32 %v558, 1.442695
  %v664 = vpow.pop %v663
  %v665 = vmul.f32 %v559, 1.442695
  %v666 = vpow.pop %v665
  %v667 = vmul.f32 %v560, 1.442695
  %v668 = vpow.pop %v667
  %v669 = vmul.f32 %v561, 1.442695
  %v670 = vpow.pop %v669
  %v671 = vmul.f32 %v562, 1.442695
  %v672 = vpow.pop %v671
  %v673 = vmul.f32 %v563, 1.442695
  %v674 = vpow.pop %v673
  %v675 = vmul.f32 %v564, 1.442695
  %v676 = vpow.pop %v675
  %v677 = vmul.f32 %v565, 1.442695
  %v678 = vpow.pop %v677
  %v679 = vmul.f32 %v566, 1.442695
  %v680 = vpow.pop %v679
  %v681 = vmul.f32 %v567, 1.442695
  %v682 = vpow.pop %v681
  %v683 = vmul.f32 %v568, 1.442695
  %v684 = vpow.pop %v683
  %v685 = vmul.f32 %v569, 1.442695
  %v686 = vpow.pop %v685
  %v687 = vmul.f32 %v570, 1.442695
  %v688 = vpow.pop %v687
  %v689 = vmul.f32 %v571, 1.442695
  %v690 = vpow.pop %v689
  %v691 = vmul.f32 %v572, 1.442695
  %v692 = vpow.pop %v691
  %v693 = vmul.f32 %v573, 1.442695
  %v694 = vpow.pop %v693
  %v695 = vmul.f32 %v574, 1.442695
  %v696 = vpow.pop %v695
  %v697 = vmul.f32 %v575, 1.442695
  %v698 = vpow.pop %v697
  %v699 = vmul.f32 %v576, 1.442695
  %v700 = vpow.pop %v699
  %v701 = vmul.f32 %v577, 1.442695
  %v702 = vpow.pop %v701
  %v703 = vmul.f32 %v578, 1.442695
  %v704 = vpow.pop %v703
  %v705 = vmul.f32 %v579, 1.442695
  %v706 = vpow.pop %v705
  %v707 = vmul.f32 %v580, 1.442695
  %v708 = vpow.pop %v707
  %v709 = vadd.f32 %v582, 1.0
  %v710 = vadd.f32 %v584, 1.0
  %v711 = vadd.f32 %v586, 1.0
  %v712 = vadd.f32 %v588, 1.0
  %v713 = vadd.f32 %v590, 1.0
  %v714 = vadd.f32 %v592, 1.0
  %v715 = vadd.f32 %v594, 1.0
  %v716 = vadd.f32 %v596, 1.0
  %v717 = vadd.f32 %v598, 1.0
  %v718 = vadd.f32 %v600, 1.0
  %v719 = vadd.f32 %v602, 1.0
  %v720 = vadd.f32 %v604, 1.0
  %v721 = vadd.f32 %v606, 1.0
  %v722 = vadd.f32 %v608, 1.0
  %v723 = vadd.f32 %v610, 1.0
  %v724 = vadd.f32 %v612, 1.0
  %v725 = vadd.f32 %v614, 1.0
  %v726 = vadd.f32 %v616, 1.0
  %v727 = vadd.f32 %v618, 1.0
  %v728 = vadd.f32 %v620, 1.0
  %v729 = vadd.f32 %v622, 1.0
  %v730 = vadd.f32 %v624, 1.0
  %v731 = vadd.f32 %v626, 1.0
  %v732 = vadd.f32 %v628, 1.0
  %v733 = vadd.f32 %v630, 1.0
  %v734 = vadd.f32 %v632, 1.0
  %v735 = vadd.f32 %v634, 1.0
  %v736 = vadd.f32 %v636, 1.0
  %v737 = vadd.f32 %v638, 1.0
  %v738 = vadd.f32 %v640, 1.0
  %v739 = vadd.f32 %v642, 1.0
  %v740 = vadd.f32 %v644, 1.0
  %v741 = vadd.f32 %v646, 1.0
  %v742 = vadd.f32 %v648, 1.0
  %v743 = vadd.f32 %v650, 1.0
  %v744 = vadd.f32 %v652, 1.0
  %v745 = vadd.f32 %v654, 1.0
  %v746 = vadd.f32 %v656, 1.0
  %v747 = vadd.f32 %v658, 1.0
  %v748 = vadd.f32 %v660, 1.0
  %v749 = vadd.f32 %v662, 1.0
  %v750 = vadd.f32 %v664, 1.0
  %v751 = vadd.f32 %v666, 1.0
  %v752 = vadd.f32 %v668, 1.0
  %v753 = vadd.f32 %v670, 1.0
  %v754 = vadd.f32 %v672, 1.0
  %v755 = vadd.f32 %v674, 1.0
  %v756 = vadd.f32 %v676, 1.0
  %v757 = vadd.f32 %v678, 1.0
  %v758 = vadd.f32 %v680, 1.0
  %v759 = vadd.f32 %v682, 1.0
  %v760 = vadd.f32 %v684, 1.0
  %v761 = vadd.f32 %v686, 1.0
  %v762 = vadd.f32 %v688, 1.0
  %v763 = vadd.f32 %v690, 1.0
  %v764 = vadd.f32 %v692, 1.0
  %v765 = vadd.f32 %v694, 1.0
  %v766 = vadd.f32 %v696, 1.0
  %v767 = vadd.f32 %v698, 1.0
  %v768 = vadd.f32 %v700, 1.0
  %v769 = vadd.f32 %v702, 1.0
  %v770 = vadd.f32 %v704, 1.0
  %v771 = vadd.f32 %v706, 1.0
  %v772 = vadd.f32 %v708, 1.0
  %v773 = vrcp.pop %v709
  %v774 = vrcp.pop %v710
  %v775 = vrcp.pop %v711
  %v776 = vrcp.pop %v712
  %v777 = vrcp.pop %v713
  %v778 = vrcp.pop %v714
  %v779 = vrcp.pop %v715
  %v780 = vrcp.pop %v716
  %v781 = vrcp.pop %v717
  %v782 = vrcp.pop %v718
  %v783 = vrcp.pop %v719
  %v784 = vrcp.pop %v720
  %v785 = vrcp.pop %v721
  %v786 = vrcp.pop %v722
  %v787 = vrcp.pop %v723
  %v788 = vrcp.pop %v724
  %v789 = vrcp.pop %v725
  %v790 = vrcp.pop %v726
  %v791 = vrcp.pop %v727
  %v792 = vrcp.pop %v728
  %v793 = vrcp.pop %v729
  %v794 = vrcp.pop %v730
  %v795 = vrcp.pop %v731
  %v796 = vrcp.pop %v732
  %v797 = vrcp.pop %v733
  %v798 = vrcp.pop %v734
  %v799 = vrcp.pop %v735
  %v800 = vrcp.pop %v736
  %v801 = vrcp.pop %v737
  %v802 = vrcp.pop %v738
  %v803 = vrcp.pop %v739
  %v804 = vrcp.pop %v740
  %v805 = vrcp.pop %v741
  %v806 = vrcp.pop %v742
  %v807 = vrcp.pop %v743
  %v808 = vrcp.pop %v744
  %v809 = vrcp.pop %v745
  %v810 = vrcp.pop %v746
  %v811 = vrcp.pop %v747
  %v812 = vrcp.pop %v748
  %v813 = vrcp.pop %v749
  %v814 = vrcp.pop %v750
  %v815 = vrcp.pop %v751
  %v816 = vrcp.pop %v752
  %v817 = vrcp.pop %v753
  %v818 = vrcp.pop %v754
  %v819 = vrcp.pop %v755
  %v820 = vrcp.pop %v756
  %v821 = vrcp.pop %v757
  %v822 = vrcp.pop %v758
  %v823 = vrcp.pop %v759
  %v824 = vrcp.pop %v760
  %v825 = vrcp.pop %v761
  %v826 = vrcp.pop %v762
  %v827 = vrcp.pop %v763
  %v828 = vrcp.pop %v764
  %v829 = vrcp.pop %v765
  %v830 = vrcp.pop %v766
  %v831 = vrcp.pop %v767
  %v832 = vrcp.pop %v768
  %v833 = vrcp.pop %v769
  %v834 = vrcp.pop %v770
  %v835 = vrcp.pop %v771
  %v836 = vrcp.pop %v772
  %v837 = vmul.f32 %v358, %v773
  %v838 = vmul.f32 %v360, %v774
  %v839 = vmul.f32 %v363, %v775
  %v840 = vmul.f32 %v365, %v776
  %v841 = vmul.f32 %v368, %v777
  %v842 = vmul.f32 %v370, %v778
  %v843 = vmul.f32 %v373, %v779
  %v844 = vmul.f32 %v375, %v780
  %v845 = vmul.f32 %v378, %v781
  %v846 = vmul.f32 %v380, %v782
  %v847 = vmul.f32 %v383, %v783
  %v848 = vmul.f32 %v385, %v784
  %v849 = vmul.f32 %v388, %v785
  %v850 = vmul.f32 %v390, %v786
  %v851 = vmul.f32 %v393, %v787
  %v852 = vmul.f32 %v395, %v788
  %v853 = vmul.f32 %v398, %v789
  %v854 = vmul.f32 %v400, %v790
  %v855 = vmul.f32 %v403, %v791
  %v856 = vmul.f32 %v405, %v792
  %v857 = vmul.f32 %v408, %v793
  %v858 = vmul.f32 %v410, %v794
  %v859 = vmul.f32 %v413, %v795
  %v860 = vmul.f32 %v415, %v796
  %v861 = vmul.f32 %v418, %v797
  %v862 = vmul.f32 %v420, %v798
  %v863 = vmul.f32 %v423, %v799
  %v864 = vmul.f32 %v425, %v800
  %v865 = vmul.f32 %v428, %v801
  %v866 = vmul.f32 %v430, %v802
  %v867 = vmul.f32 %v433, %v803
  %v868 = vmul.f32 %v435, %v804
  %v869 = vmul.f32 %v438, %v805
  %v870 = vmul.f32 %v440, %v806
  %v871 = vmul.f32 %v443, %v807
  %v872 = vmul.f32 %v445, %v808
  %v873 = vmul.f32 %v448, %v809
  %v874 = vmul.f32 %v450, %v810
  %v875 = vmul.f32 %v453, %v811
  %v876 = vmul.f32 %v455, %v812
  %v877 = vmul.f32 %v458, %v813
  %v878 = vmul.f32 %v460, %v814
  %v879 = vmul.f32 %v463, %v815
  %v880 = vmul.f32 %v465, %v816
  %v881 = vmul.f32 %v468, %v817
  %v882 = vmul.f32 %v470, %v818
  %v883 = vmul.f32 %v473, %v819
  %v884 = vmul.f32 %v475, %v820
  %v885 = vmul.f32 %v478, %v821
  %v886 = vmul.f32 %v480, %v822
  %v887 = vmul.f32 %v483, %v823
  %v888 = vmul.f32 %v485, %v824
  %v889 = vmul.f32 %v488, %v825
  %v890 = vmul.f32 %v490, %v826
  %v891 = vmul.f32 %v493, %v827
  %v892 = vmul.f32 %v495, %v828
  %v893 = vmul.f32 %v498, %v829
  %v894 = vmul.f32 %v500, %v830
  %v895 = vmul.f32 %v503, %v831
  %v896 = vmul.f32 %v505, %v832
  %v897 = vmul.f32 %v508, %v833
  %v898 = vmul.f32 %v510, %v834
  %v899 = vmul.f32 %v513, %v835
  %v900 = vmul.f32 %v515, %v836
  %v901 = vpack.c.bf16 %v837, %v837
  %v902 = vpack.c.bf16 %v838, %v838
  %v903 = vpack.c.bf16 %v839, %v839
  %v904 = vpack.c.bf16 %v840, %v840
  %v905 = vpack.c.bf16 %v841, %v841
  %v906 = vpack.c.bf16 %v842, %v842
  %v907 = vpack.c.bf16 %v843, %v843
  %v908 = vpack.c.bf16 %v844, %v844
  %v909 = vpack.c.bf16 %v845, %v845
  %v910 = vpack.c.bf16 %v846, %v846
  %v911 = vpack.c.bf16 %v847, %v847
  %v912 = vpack.c.bf16 %v848, %v848
  %v913 = vpack.c.bf16 %v849, %v849
  %v914 = vpack.c.bf16 %v850, %v850
  %v915 = vpack.c.bf16 %v851, %v851
  %v916 = vpack.c.bf16 %v852, %v852
  %v917 = vpack.c.bf16 %v853, %v853
  %v918 = vpack.c.bf16 %v854, %v854
  %v919 = vpack.c.bf16 %v855, %v855
  %v920 = vpack.c.bf16 %v856, %v856
  %v921 = vpack.c.bf16 %v857, %v857
  %v922 = vpack.c.bf16 %v858, %v858
  %v923 = vpack.c.bf16 %v859, %v859
  %v924 = vpack.c.bf16 %v860, %v860
  %v925 = vpack.c.bf16 %v861, %v861
  %v926 = vpack.c.bf16 %v862, %v862
  %v927 = vpack.c.bf16 %v863, %v863
  %v928 = vpack.c.bf16 %v864, %v864
  %v929 = vpack.c.bf16 %v865, %v865
  %v930 = vpack.c.bf16 %v866, %v866
  %v931 = vpack.c.bf16 %v867, %v867
  %v932 = vpack.c.bf16 %v868, %v868
  %v933 = vpack.c.bf16 %v869, %v869
  %v934 = vpack.c.bf16 %v870, %v870
  %v935 = vpack.c.bf16 %v871, %v871
  %v936 = vpack.c.bf16 %v872, %v872
  %v937 = vpack.c.bf16 %v873, %v873
  %v938 = vpack.c.bf16 %v874, %v874
  %v939 = vpack.c.bf16 %v875, %v875
  %v940 = vpack.c.bf16 %v876, %v876
  %v941 = vpack.c.bf16 %v877, %v877
  %v942 = vpack.c.bf16 %v878, %v878
  %v943 = vpack.c.bf16 %v879, %v879
  %v944 = vpack.c.bf16 %v880, %v880
  %v945 = vpack.c.bf16 %v881, %v881
  %v946 = vpack.c.bf16 %v882, %v882
  %v947 = vpack.c.bf16 %v883, %v883
  %v948 = vpack.c.bf16 %v884, %v884
  %v949 = vpack.c.bf16 %v885, %v885
  %v950 = vpack.c.bf16 %v886, %v886
  %v951 = vpack.c.bf16 %v887, %v887
  %v952 = vpack.c.bf16 %v888, %v888
  %v953 = vpack.c.bf16 %v889, %v889
  %v954 = vpack.c.bf16 %v890, %v890
  %v955 = vpack.c.bf16 %v891, %v891
  %v956 = vpack.c.bf16 %v892, %v892
  %v957 = vpack.c.bf16 %v893, %v893
  %v958 = vpack.c.bf16 %v894, %v894
  %v959 = vpack.c.bf16 %v895, %v895
  %v960 = vpack.c.bf16 %v896, %v896
  %v961 = vpack.c.bf16 %v897, %v897
  %v962 = vpack.c.bf16 %v898, %v898
  %v963 = vpack.c.bf16 %v899, %v899
  %v964 = vpack.c.bf16 %v900, %v900
  %vm965 = vcmask 125952
  %966 = vst.msk [vmem:[%s3] sm:$0xf] %vm965, %v901
  %967 = vst.msk [vmem:[%s3 + $0x4] sm:$0xf] %vm965, %v902
  %968 = vst.msk [vmem:[%s3 + $0x8] sm:$0xf] %vm965, %v903
  %969 = vst.msk [vmem:[%s3 + $0xc] sm:$0xf] %vm965, %v904
  %970 = vst.msk [vmem:[%s3 + $0x10] sm:$0xf] %vm965, %v905
  %971 = vst.msk [vmem:[%s3 + $0x14] sm:$0xf] %vm965, %v906
  %972 = vst.msk [vmem:[%s3 + $0x18] sm:$0xf] %vm965, %v907
  %973 = vst.msk [vmem:[%s3 + $0x1c] sm:$0xf] %vm965, %v908
  %974 = vst.msk [vmem:[%s3 + $0x20] sm:$0xf] %vm965, %v909
  %975 = vst.msk [vmem:[%s3 + $0x24] sm:$0xf] %vm965, %v910
  %976 = vst.msk [vmem:[%s3 + $0x28] sm:$0xf] %vm965, %v911
  %977 = vst.msk [vmem:[%s3 + $0x2c] sm:$0xf] %vm965, %v912
  %978 = vst.msk [vmem:[%s3 + $0x30] sm:$0xf] %vm965, %v913
  %979 = vst.msk [vmem:[%s3 + $0x34] sm:$0xf] %vm965, %v914
  %980 = vst.msk [vmem:[%s3 + $0x38] sm:$0xf] %vm965, %v915
  %981 = vst.msk [vmem:[%s3 + $0x3c] sm:$0xf] %vm965, %v916
  %982 = vst.msk [vmem:[%s3 + $0x40] sm:$0xf] %vm965, %v917
  %983 = vst.msk [vmem:[%s3 + $0x44] sm:$0xf] %vm965, %v918
  %984 = vst.msk [vmem:[%s3 + $0x48] sm:$0xf] %vm965, %v919
  %985 = vst.msk [vmem:[%s3 + $0x4c] sm:$0xf] %vm965, %v920
  %986 = vst.msk [vmem:[%s3 + $0x50] sm:$0xf] %vm965, %v921
  %987 = vst.msk [vmem:[%s3 + $0x54] sm:$0xf] %vm965, %v922
  %988 = vst.msk [vmem:[%s3 + $0x58] sm:$0xf] %vm965, %v923
  %989 = vst.msk [vmem:[%s3 + $0x5c] sm:$0xf] %vm965, %v924
  %990 = vst.msk [vmem:[%s3 + $0x60] sm:$0xf] %vm965, %v925
  %991 = vst.msk [vmem:[%s3 + $0x64] sm:$0xf] %vm965, %v926
  %992 = vst.msk [vmem:[%s3 + $0x68] sm:$0xf] %vm965, %v927
  %993 = vst.msk [vmem:[%s3 + $0x6c] sm:$0xf] %vm965, %v928
  %994 = vst.msk [vmem:[%s3 + $0x70] sm:$0xf] %vm965, %v929
  %995 = vst.msk [vmem:[%s3 + $0x74] sm:$0xf] %vm965, %v930
  %996 = vst.msk [vmem:[%s3 + $0x78] sm:$0xf] %vm965, %v931
  %997 = vst.msk [vmem:[%s3 + $0x7c] sm:$0xf] %vm965, %v932
  %998 = vst.msk [vmem:[%s3 + $0x80] sm:$0xf] %vm965, %v933
  %999 = vst.msk [vmem:[%s3 + $0x84] sm:$0xf] %vm965, %v934
  %1000 = vst.msk [vmem:[%s3 + $0x88] sm:$0xf] %vm965, %v935
  %1001 = vst.msk [vmem:[%s3 + $0x8c] sm:$0xf] %vm965, %v936
  %1002 = vst.msk [vmem:[%s3 + $0x90] sm:$0xf] %vm965, %v937
  %1003 = vst.msk [vmem:[%s3 + $0x94] sm:$0xf] %vm965, %v938
  %1004 = vst.msk [vmem:[%s3 + $0x98] sm:$0xf] %vm965, %v939
  %1005 = vst.msk [vmem:[%s3 + $0x9c] sm:$0xf] %vm965, %v940
  %1006 = vst.msk [vmem:[%s3 + $0xa0] sm:$0xf] %vm965, %v941
  %1007 = vst.msk [vmem:[%s3 + $0xa4] sm:$0xf] %vm965, %v942
  %1008 = vst.msk [vmem:[%s3 + $0xa8] sm:$0xf] %vm965, %v943
  %1009 = vst.msk [vmem:[%s3 + $0xac] sm:$0xf] %vm965, %v944
  %1010 = vst.msk [vmem:[%s3 + $0xb0] sm:$0xf] %vm965, %v945
  %1011 = vst.msk [vmem:[%s3 + $0xb4] sm:$0xf] %vm965, %v946
  %1012 = vst.msk [vmem:[%s3 + $0xb8] sm:$0xf] %vm965, %v947
  %1013 = vst.msk [vmem:[%s3 + $0xbc] sm:$0xf] %vm965, %v948
  %1014 = vst.msk [vmem:[%s3 + $0xc0] sm:$0xf] %vm965, %v949
  %1015 = vst.msk [vmem:[%s3 + $0xc4] sm:$0xf] %vm965, %v950
  %1016 = vst.msk [vmem:[%s3 + $0xc8] sm:$0xf] %vm965, %v951
  %1017 = vst.msk [vmem:[%s3 + $0xcc] sm:$0xf] %vm965, %v952
  %1018 = vst.msk [vmem:[%s3 + $0xd0] sm:$0xf] %vm965, %v953
  %1019 = vst.msk [vmem:[%s3 + $0xd4] sm:$0xf] %vm965, %v954
  %1020 = vst.msk [vmem:[%s3 + $0xd8] sm:$0xf] %vm965, %v955
  %1021 = vst.msk [vmem:[%s3 + $0xdc] sm:$0xf] %vm965, %v956
  %1022 = vst.msk [vmem:[%s3 + $0xe0] sm:$0xf] %vm965, %v957
  %1023 = vst.msk [vmem:[%s3 + $0xe4] sm:$0xf] %vm965, %v958
  %1024 = vst.msk [vmem:[%s3 + $0xe8] sm:$0xf] %vm965, %v959
  %1025 = vst.msk [vmem:[%s3 + $0xec] sm:$0xf] %vm965, %v960
  %1026 = vst.msk [vmem:[%s3 + $0xf0] sm:$0xf] %vm965, %v961
  %1027 = vst.msk [vmem:[%s3 + $0xf4] sm:$0xf] %vm965, %v962
  %1028 = vst.msk [vmem:[%s3 + $0xf8] sm:$0xf] %vm965, %v963
  %1029 = vst.msk [vmem:[%s3 + $0xfc] sm:$0xf] %vm965, %v964
  // Predicated region
  $region14: #{elan_neck_forward.6} parent=0 // pred_check
    _
  $region15: #{elan_neck_forward.6} parent=0 // pred_check_branch
    %1031 = sbr.rel (0) target = $region17
  $region16: #{elan_neck_forward.6} parent=0 // pred_region
    _
  $region17: #{elan_neck_forward.6} parent=0 // pred_fallthru
    _
  // Predicated region
  $region18: #{elan_neck_forward.6} parent=0 // pred_check
    _
  $region19: #{elan_neck_forward.6} parent=0 // pred_check_branch
    %1033 = sbr.rel (0) target = $region21
  $region20: #{elan_neck_forward.6} parent=0 // pred_region
    _
  $region21: #{elan_neck_forward.6} parent=0 // pred_fallthru
    _

// kernel: elan_neck_forward.7
$region0: #{elan_neck_forward.7}
  #allocation0 [shape = 'u32[]', space=smem, size = 0x4, offset = 0x4, fixed_abs, tag = 'smem constant byte address 0x4 - core index']
  #allocation1 [shape = 'u32[72,128]{1,0:T(1,128)}', space=vmem, size = 0x9000, scoped, tag = 'internal scratch']
  %s0 = inlined_call_operand.vmem [shape: bf16[2,328,8], index: 0, kind: input, shape index: {}]
  %s1 = inlined_call_operand.vmem [shape: bf16[9,8,4], index: 1, kind: input, shape index: {}]
  %s2 = inlined_call_operand.vmem [shape: f32[1,4], index: 2, kind: input, shape index: {}]
  %s3 = inlined_call_operand.vmem [shape: bf16[2,288,4], index: 3, kind: output, shape index: {}]
  %s4 = sld [smem:[#allocation0]]
  $region45: #{elan_neck_forward.7} parent=0
    _
  %s6 = ssub.s32 1, %s4
  %s7 = scalar_select 0, %s6, %s4
  loop: start=0, step=1, limit=4
  $region2: #{elan_neck_forward.7} parent=0 // loop_pre_header
    _
  $region3: #{elan_neck_forward.7} parent=0 // loop_header
    %s9 = sphi 0, %s13
    %p10 = scmp.ge.s32.totalorder %s9, 4
    %s19 = sphi 0, %s21
    %s22 = sphi 0, %s19
    %s23 = sphi 0, %s22
    %s39 = sphi 0, %s23
    %s43 = sphi 0, %s43
    %s45 = sphi 0, %s43
    %s46 = sphi 0, %s45
    %s60 = sphi 0, %s46
    %s64 = sphi 0, %s64
    %s66 = sphi 0, %s64
    %s67 = sphi 0, %s66
    %s81 = sphi 0, %s67
    %s87 = sphi 0, %s89
    %s90 = sphi 0, %s87
    %s91 = sphi 0, %s90
    %s107 = sphi 0, %s91
  $region4: #{elan_neck_forward.7} parent=0 // loop_header_branch
    %12 = sbr.rel (%p10) target = $region8
  $region5: #{elan_neck_forward.7} parent=0 // loop_body
    %s14 = ssub.s32 %s9, 1
    %s15 = ssub.s32 %s9, 2
    %s16 = sadd.s32 %s9, 1
    %s17 = ssub.s32 %s9, %s16
    %p18 = scmp.eq.s32.totalorder %s17, 0
    %s20 = sadd.s32 %s19, 1
    %s21 = scalar_select %p18, %s19, %s20
    %p24 = pneg %p18
    %p25 = scmp.eq.s32.totalorder %s9, 1
    %p26 = por %p24, %p25
    %p27 = scmp.ne.s32.totalorder %s19, %s22
    %p28 = scmp.eq.s32.totalorder %s9, 0
    %p29 = por %p27, %p28
    %p30 = scmp.ne.s32.totalorder %s19, %s22
    %p31 = scmp.eq.s32.totalorder %s14, 1
    %p32 = por %p30, %p31
    %p33 = scmp.ne.s32.totalorder %s22, %s23
    %p34 = scmp.eq.s32.totalorder %s14, 0
    %p35 = por %p33, %p34
    %p36 = scmp.ne.s32.totalorder %s22, %s23
    %p37 = scmp.eq.s32.totalorder %s15, 1
    %p38 = por %p36, %p37
    %p40 = scmp.ne.s32.totalorder %s23, %s39
    %p41 = scmp.eq.s32.totalorder %s15, 0
    %p42 = por %p40, %p41
    %s44 = sadd.s32 %s43, 1
    %p47 = scmp.eq.s32.totalorder %s9, 1
    %p48 = scmp.ne.s32.totalorder %s43, %s45
    %p49 = scmp.eq.s32.totalorder %s9, 0
    %p50 = por %p48, %p49
    %p51 = scmp.ne.s32.totalorder %s43, %s45
    %p52 = scmp.eq.s32.totalorder %s14, 1
    %p53 = por %p51, %p52
    %p54 = scmp.ne.s32.totalorder %s45, %s46
    %p55 = scmp.eq.s32.totalorder %s14, 0
    %p56 = por %p54, %p55
    %p57 = scmp.ne.s32.totalorder %s45, %s46
    %p58 = scmp.eq.s32.totalorder %s15, 1
    %p59 = por %p57, %p58
    %p61 = scmp.ne.s32.totalorder %s46, %s60
    %p62 = scmp.eq.s32.totalorder %s15, 0
    %p63 = por %p61, %p62
    %s65 = sadd.s32 %s64, 1
    %p68 = scmp.eq.s32.totalorder %s9, 1
    %p69 = scmp.ne.s32.totalorder %s64, %s66
    %p70 = scmp.eq.s32.totalorder %s9, 0
    %p71 = por %p69, %p70
    %p72 = scmp.ne.s32.totalorder %s64, %s66
    %p73 = scmp.eq.s32.totalorder %s14, 1
    %p74 = por %p72, %p73
    %p75 = scmp.ne.s32.totalorder %s66, %s67
    %p76 = scmp.eq.s32.totalorder %s14, 0
    %p77 = por %p75, %p76
    %p78 = scmp.ne.s32.totalorder %s66, %s67
    %p79 = scmp.eq.s32.totalorder %s15, 1
    %p80 = por %p78, %p79
    %p82 = scmp.ne.s32.totalorder %s67, %s81
    %p83 = scmp.eq.s32.totalorder %s15, 0
    %p84 = por %p82, %p83
    %s85 = ssub.s32 %s9, %s16
    %p86 = scmp.eq.s32.totalorder %s85, 0
    %s88 = sadd.s32 %s87, 1
    %s89 = scalar_select %p86, %s87, %s88
    %p92 = pneg %p86
    %p93 = scmp.eq.s32.totalorder %s9, 1
    %p94 = por %p92, %p93
    %p95 = scmp.ne.s32.totalorder %s87, %s90
    %p96 = scmp.eq.s32.totalorder %s9, 0
    %p97 = por %p95, %p96
    %p98 = scmp.ne.s32.totalorder %s87, %s90
    %p99 = scmp.eq.s32.totalorder %s14, 1
    %p100 = por %p98, %p99
    %p101 = scmp.ne.s32.totalorder %s90, %s91
    %p102 = scmp.eq.s32.totalorder %s14, 0
    %p103 = por %p101, %p102
    %p104 = scmp.ne.s32.totalorder %s90, %s91
    %p105 = scmp.eq.s32.totalorder %s15, 1
    %p106 = por %p104, %p105
    %p108 = scmp.ne.s32.totalorder %s91, %s107
    %p109 = scmp.eq.s32.totalorder %s15, 0
    %p110 = por %p108, %p109
    %p111 = scmp.le.s32.totalorder 1, %s9
    %p112 = scmp.lt.s32.totalorder %s9, 3
    %p113 = pnand %p111, %p112
    %p114 = pneg %p113
    // Predicated region
    $region9: #{elan_neck_forward.7} parent=5 // pred_check
      _
    $region10: #{elan_neck_forward.7} parent=5 // pred_check_branch
      %116 = sbr.rel (%p113) target = $region12
    $region11: #{elan_neck_forward.7} parent=5 // pred_region
      %s117 = ssub.s32 %s9, 1
      // Predicated region
      $region13: #{elan_neck_forward.7} parent=11 // pred_check
        %p118 = pneg %p56
      $region14: #{elan_neck_forward.7} parent=11 // pred_check_branch
        %120 = sbr.rel (%p118) target = $region16
      $region15: #{elan_neck_forward.7} parent=11 // pred_region
        _
      $region16: #{elan_neck_forward.7} parent=11 // pred_fallthru
        _
      // Predicated region
      $region17: #{elan_neck_forward.7} parent=11 // pred_check
        %p121 = pneg %p77
      $region18: #{elan_neck_forward.7} parent=11 // pred_check_branch
        %123 = sbr.rel (%p121) target = $region20
      $region19: #{elan_neck_forward.7} parent=11 // pred_region
        _
      $region20: #{elan_neck_forward.7} parent=11 // pred_fallthru
        _
    $region12: #{elan_neck_forward.7} parent=5 // pred_fallthru
      _
    %p124 = scmp.lt.s32.totalorder %s9, 2
    // Predicated region
    $region21: #{elan_neck_forward.7} parent=5 // pred_check
      %p125 = pneg %p124
    $region22: #{elan_neck_forward.7} parent=5 // pred_check_branch
      %127 = sbr.rel (%p125) target = $region24
    $region23: #{elan_neck_forward.7} parent=5 // pred_region
      // Predicated region
      $region25: #{elan_neck_forward.7} parent=23 // pred_check
        %p128 = pneg %p29
      $region26: #{elan_neck_forward.7} parent=23 // pred_check_branch
        %130 = sbr.rel (%p128) target = $region28
      $region27: #{elan_neck_forward.7} parent=23 // pred_region
        %p131 = scmp.lt.s32.totalorder %s9, 1
        %s132 = scalar_select %p131, %s9, 1
        %s133 = smul.addr %s132, 41
        %s134 = smul.addr %s133, 4
        %s135 = scalar_lea.vmem %s0, %s134
      $region28: #{elan_neck_forward.7} parent=23 // pred_fallthru
        _
    $region24: #{elan_neck_forward.7} parent=5 // pred_fallthru
      _
    %p136 = scmp.le.s32.totalorder 1, %s9
    %p137 = scmp.lt.s32.totalorder %s9, 3
    %p138 = pnand %p136, %p137
    %p139 = pneg %p138
    // Predicated region
    $region29: #{elan_neck_forward.7} parent=5 // pred_check
      _
    $region30: #{elan_neck_forward.7} parent=5 // pred_check_branch
      %141 = sbr.rel (%p138) target = $region32
    $region31: #{elan_neck_forward.7} parent=5 // pred_region
      %s142 = ssub.s32 %s9, 1
      %p143 = scmp.lt.s32.totalorder %s14, 1
      %s144 = scalar_select %p143, %s14, 1
      %s145 = smul.addr %s144, 41
      %s146 = smul.addr %s145, 4
      %s147 = scalar_lea.vmem %s0, %s146
      %p148 = pneg %p35
      %p149 = pneg %p32
      %p150 = pneg %p56
      %p151 = pneg %p53
      %p152 = pneg %p77
      %p153 = pneg %p74
      %p154 = pneg %p103
      %p155 = pneg %p100
      %p156 = scmp.lt.s32.totalorder %s14, 1
      %s157 = scalar_select %p156, %s14, 1
      %s158 = smul.addr %s157, 36
      %s159 = smul.addr %s158, 4
      %s160 = scalar_lea.vmem %s3, %s159
      %p161 = scmp.lt.s32.totalorder %s14, 1
      %s162 = scalar_select %p161, %s14, 1
      %s163 = smul.addr %s162, 41
      %s164 = smul.addr %s163, 4
      %s165 = scalar_lea.vmem %s0, %s164
      %p166 = scmp.lt.s32.totalorder %s14, 1
      %s167 = scalar_select %p166, %s14, 1
      %s168 = smul.addr %s167, 36
      %s169 = smul.addr %s168, 4
      %s170 = scalar_lea.vmem %s3, %s169
      %v172 = vld [vmem:[%s165] sm:$0xf]
      %v173 = vld [vmem:[%s165 + $0x4] sm:$0xf]
      %v174 = vld [vmem:[%s165 + $0x8] sm:$0xf]
      %v175 = vld [vmem:[%s165 + $0xc] sm:$0xf]
      %v176 = vld [vmem:[%s165 + $0x10] sm:$0xf]
      %v177 = vld [vmem:[%s165 + $0x14] sm:$0xf]
      %v178 = vld [vmem:[%s165 + $0x18] sm:$0xf]
      %v179 = vld [vmem:[%s165 + $0x1c] sm:$0xf]
      %v180 = vld [vmem:[%s165 + $0x20] sm:$0xf]
      %v181 = vld [vmem:[%s165 + $0x24] sm:$0xf]
      %v182 = vld [vmem:[%s165 + $0x28] sm:$0xf]
      %v183 = vld [vmem:[%s165 + $0x2c] sm:$0xf]
      %v184 = vld [vmem:[%s165 + $0x30] sm:$0xf]
      %v185 = vld [vmem:[%s165 + $0x34] sm:$0xf]
      %v186 = vld [vmem:[%s165 + $0x38] sm:$0xf]
      %v187 = vld [vmem:[%s165 + $0x3c] sm:$0xf]
      %v188 = vld [vmem:[%s165 + $0x40] sm:$0xf]
      %v189 = vld [vmem:[%s165 + $0x44] sm:$0xf]
      %v190 = vld [vmem:[%s165 + $0x48] sm:$0xf]
      %v191 = vld [vmem:[%s165 + $0x4c] sm:$0xf]
      %v192 = vld [vmem:[%s165 + $0x50] sm:$0xf]
      %v193 = vld [vmem:[%s165 + $0x54] sm:$0xf]
      %v194 = vld [vmem:[%s165 + $0x58] sm:$0xf]
      %v195 = vld [vmem:[%s165 + $0x5c] sm:$0xf]
      %v196 = vld [vmem:[%s165 + $0x60] sm:$0xf]
      %v197 = vld [vmem:[%s165 + $0x64] sm:$0xf]
      %v198 = vld [vmem:[%s165 + $0x68] sm:$0xf]
      %v199 = vld [vmem:[%s165 + $0x6c] sm:$0xf]
      %v200 = vld [vmem:[%s165 + $0x70] sm:$0xf]
      %v201 = vld [vmem:[%s165 + $0x74] sm:$0xf]
      %v202 = vld [vmem:[%s165 + $0x78] sm:$0xf]
      %v203 = vld [vmem:[%s165 + $0x7c] sm:$0xf]
      %v204 = vld [vmem:[%s165 + $0x80] sm:$0xf]
      %v205 = vld [vmem:[%s165 + $0x84] sm:$0xf]
      %v206 = vld [vmem:[%s165 + $0x88] sm:$0xf]
      %v207 = vld [vmem:[%s165 + $0x8c] sm:$0xf]
      %v208 = vld [vmem:[%s1] sm:$0xf]
      %v209 = vld [vmem:[%s165 + $0x90] sm:$0x1]
      %s210 = scalar_lea.vmem %s1, 4
      %v211 = vld [vmem:[%s210] sm:$0xf]
      %v249 = vunpack.c.l.b16 %v172
      %v250 = vunpack.c.l.b16 %v173
      %v251 = vunpack.c.l.b16 %v174
      %v252 = vunpack.c.l.b16 %v175
      %v253 = vunpack.c.l.b16 %v176
      %v254 = vunpack.c.l.b16 %v177
      %v255 = vunpack.c.l.b16 %v178
      %v256 = vunpack.c.l.b16 %v179
      %v257 = vunpack.c.l.b16 %v180
      %v258 = vunpack.c.l.b16 %v181
      %v259 = vunpack.c.l.b16 %v182
      %v260 = vunpack.c.l.b16 %v183
      %v261 = vunpack.c.l.b16 %v184
      %v262 = vunpack.c.l.b16 %v185
      %v263 = vunpack.c.l.b16 %v186
      %v264 = vunpack.c.l.b16 %v187
      %v265 = vunpack.c.l.b16 %v188
      %v266 = vunpack.c.l.b16 %v189
      %v267 = vunpack.c.l.b16 %v190
      %v268 = vunpack.c.l.b16 %v191
      %v269 = vunpack.c.l.b16 %v192
      %v270 = vunpack.c.l.b16 %v193
      %v271 = vunpack.c.l.b16 %v194
      %v272 = vunpack.c.l.b16 %v195
      %v273 = vunpack.c.l.b16 %v196
      %v274 = vunpack.c.l.b16 %v197
      %v275 = vunpack.c.l.b16 %v198
      %v276 = vunpack.c.l.b16 %v199
      %v277 = vunpack.c.l.b16 %v200
      %v278 = vunpack.c.l.b16 %v201
      %v279 = vunpack.c.l.b16 %v202
      %v280 = vunpack.c.l.b16 %v203
      %v281 = vunpack.c.l.b16 %v204
      %v282 = vunpack.c.l.b16 %v205
      %v283 = vunpack.c.l.b16 %v206
      %v284 = vunpack.c.l.b16 %v207
      %v285 = vunpack.c.l.b16 %v209
      %v286 = vpack.c.b16 %v250, %v249
      %v287 = vpack.c.b16 %v252, %v251
      %v288 = vpack.c.b16 %v254, %v253
      %v289 = vpack.c.b16 %v256, %v255
      %v290 = vpack.c.b16 %v258, %v257
      %v291 = vpack.c.b16 %v260, %v259
      %v292 = vpack.c.b16 %v262, %v261
      %v293 = vpack.c.b16 %v264, %v263
      %v294 = vpack.c.b16 %v266, %v265
      %v295 = vpack.c.b16 %v268, %v267
      %v296 = vpack.c.b16 %v270, %v269
      %v297 = vpack.c.b16 %v272, %v271
      %v298 = vpack.c.b16 %v274, %v273
      %v299 = vpack.c.b16 %v276, %v275
      %v300 = vpack.c.b16 %v278, %v277
      %v301 = vpack.c.b16 %v280, %v279
      %v302 = vpack.c.b16 %v282, %v281
      %v303 = vpack.c.b16 %v284, %v283
      %v304 = vpack.c.b16 %v285, %v285
      %vm305 = vsmask.f32 7424
      %v307 = vshrl.u32 %v286, 16
      %v309 = vshll.u32 %v286, 16
      %v311 = vrot.slane %v309, 1
      %v312 = vor.u32 %v307, %v311
      %v314 = vshll.u32 %v287, 16
      %v316 = vrot.slane %v314, 1
      %v317 = vsel %vm305, %v312, %v316
      %v318 = vshrl.u32 %v287, 16
      %v320 = vor.u32 %v318, %v316
      %v322 = vshll.u32 %v288, 16
      %v324 = vrot.slane %v322, 1
      %v325 = vsel %vm305, %v320, %v324
      %v326 = vshrl.u32 %v288, 16
      %v328 = vor.u32 %v326, %v324
      %v330 = vshll.u32 %v289, 16
      %v332 = vrot.slane %v330, 1
      %v333 = vsel %vm305, %v328, %v332
      %v334 = vshrl.u32 %v289, 16
      %v336 = vor.u32 %v334, %v332
      %v338 = vshll.u32 %v290, 16
      %v340 = vrot.slane %v338, 1
      %v341 = vsel %vm305, %v336, %v340
      %v342 = vshrl.u32 %v290, 16
      %v344 = vor.u32 %v342, %v340
      %v346 = vshll.u32 %v291, 16
      %v348 = vrot.slane %v346, 1
      %v349 = vsel %vm305, %v344, %v348
      %v350 = vshrl.u32 %v291, 16
      %v352 = vor.u32 %v350, %v348
      %v354 = vshll.u32 %v292, 16
      %v356 = vrot.slane %v354, 1
      %v357 = vsel %vm305, %v352, %v356
      %v358 = vshrl.u32 %v292, 16
      %v360 = vor.u32 %v358, %v356
      %v362 = vshll.u32 %v293, 16
      %v364 = vrot.slane %v362, 1
      %v365 = vsel %vm305, %v360, %v364
      %v366 = vshrl.u32 %v293, 16
      %v368 = vor.u32 %v366, %v364
      %v370 = vshll.u32 %v294, 16
      %v372 = vrot.slane %v370, 1
      %v373 = vsel %vm305, %v368, %v372
      %v374 = vshrl.u32 %v294, 16
      %v376 = vor.u32 %v374, %v372
      %v378 = vshll.u32 %v295, 16
      %v380 = vrot.slane %v378, 1
      %v381 = vsel %vm305, %v376, %v380
      %v382 = vshrl.u32 %v295, 16
      %v384 = vor.u32 %v382, %v380
      %v386 = vshll.u32 %v296, 16
      %v388 = vrot.slane %v386, 1
      %v389 = vsel %vm305, %v384, %v388
      %v390 = vshrl.u32 %v296, 16
      %v392 = vor.u32 %v390, %v388
      %v394 = vshll.u32 %v297, 16
      %v396 = vrot.slane %v394, 1
      %v397 = vsel %vm305, %v392, %v396
      %v398 = vshrl.u32 %v297, 16
      %v400 = vor.u32 %v398, %v396
      %v402 = vshll.u32 %v298, 16
      %v404 = vrot.slane %v402, 1
      %v405 = vsel %vm305, %v400, %v404
      %v406 = vshrl.u32 %v298, 16
      %v408 = vor.u32 %v406, %v404
      %v410 = vshll.u32 %v299, 16
      %v412 = vrot.slane %v410, 1
      %v413 = vsel %vm305, %v408, %v412
      %v414 = vshrl.u32 %v299, 16
      %v416 = vor.u32 %v414, %v412
      %v418 = vshll.u32 %v300, 16
      %v420 = vrot.slane %v418, 1
      %v421 = vsel %vm305, %v416, %v420
      %v422 = vshrl.u32 %v300, 16
      %v424 = vor.u32 %v422, %v420
      %v426 = vshll.u32 %v301, 16
      %v428 = vrot.slane %v426, 1
      %v429 = vsel %vm305, %v424, %v428
      %v430 = vshrl.u32 %v301, 16
      %v432 = vor.u32 %v430, %v428
      %v434 = vshll.u32 %v302, 16
      %v436 = vrot.slane %v434, 1
      %v437 = vsel %vm305, %v432, %v436
      %v438 = vshrl.u32 %v302, 16
      %v440 = vor.u32 %v438, %v436
      %v442 = vshll.u32 %v303, 16
      %v444 = vrot.slane %v442, 1
      %v445 = vsel %vm305, %v440, %v444
      %v446 = vshrl.u32 %v303, 16
      %v448 = vor.u32 %v446, %v444
      %v450 = vshll.u32 %v304, 16
      %v452 = vrot.slane %v450, 1
      %v453 = vsel %vm305, %v448, %v452
      %vm454 = vcmask 64512
      %v456 = vsel %vm454, %v317, 0
      %v459 = vsel %vm454, %v325, 0
      %v462 = vsel %vm454, %v333, 0
      %v465 = vsel %vm454, %v341, 0
      %v468 = vsel %vm454, %v349, 0
      %v471 = vsel %vm454, %v357, 0
      %v474 = vsel %vm454, %v365, 0
      %v477 = vsel %vm454, %v373, 0
      %v480 = vsel %vm454, %v381, 0
      %v483 = vsel %vm454, %v389, 0
      %v486 = vsel %vm454, %v397, 0
      %v489 = vsel %vm454, %v405, 0
      %v492 = vsel %vm454, %v413, 0
      %v495 = vsel %vm454, %v421, 0
      %v498 = vsel %vm454, %v429, 0
      %v501 = vsel %vm454, %v437, 0
      %v504 = vsel %vm454, %v445, 0
      %v507 = vsel %vm454, %v453, 0
      %vm509 = vcmask 1043456
      %v511 = vsel %vm509, %v211, 0
      %513 = vmatpush.bf16.msra.mxu0 0
      %514 = vmatpush.bf16.msra.mxu0 0
      %515 = vmatpush.bf16.msra.mxu0 0
      %516 = vmatpush.bf16.msra.mxu0 0
      %517 = vmatpush.bf16.msra.mxu0 0
      %518 = vmatpush.bf16.msra.mxu0 0
      %519 = vmatpush.bf16.msra.mxu0 0
      %520 = vmatpush.bf16.msra.mxu0 %v511
      %521 = vmatmul.bf16.gmra.mxu0 %v456
      %v522 = vpop.f32.mrf.mxu0
      %v523 = vadd.f32 0.0, %v522
      %v524 = vpop.f32.mrf.mxu0
      %v525 = vadd.f32 0.0, %v524
      %526 = vmatmul.bf16.gmra.mxu0 %v459
      %v527 = vpop.f32.mrf.mxu0
      %v528 = vadd.f32 0.0, %v527
      %v529 = vpop.f32.mrf.mxu0
      %v530 = vadd.f32 0.0, %v529
      %531 = vmatmul.bf16.gmra.mxu0 %v462
      %v532 = vpop.f32.mrf.mxu0
      %v533 = vadd.f32 0.0, %v532
      %v534 = vpop.f32.mrf.mxu0
      %v535 = vadd.f32 0.0, %v534
      %536 = vmatmul.bf16.gmra.mxu0 %v465
      %v537 = vpop.f32.mrf.mxu0
      %v538 = vadd.f32 0.0, %v537
      %v539 = vpop.f32.mrf.mxu0
      %v540 = vadd.f32 0.0, %v539
      %541 = vmatmul.bf16.gmra.mxu0 %v468
      %v542 = vpop.f32.mrf.mxu0
      %v543 = vadd.f32 0.0, %v542
      %v544 = vpop.f32.mrf.mxu0
      %v545 = vadd.f32 0.0, %v544
      %546 = vmatmul.bf16.gmra.mxu0 %v471
      %v547 = vpop.f32.mrf.mxu0
      %v548 = vadd.f32 0.0, %v547
      %v549 = vpop.f32.mrf.mxu0
      %v550 = vadd.f32 0.0, %v549
      %551 = vmatmul.bf16.gmra.mxu0 %v474
      %v552 = vpop.f32.mrf.mxu0
      %v553 = vadd.f32 0.0, %v552
      %v554 = vpop.f32.mrf.mxu0
      %v555 = vadd.f32 0.0, %v554
      %556 = vmatmul.bf16.gmra.mxu0 %v477
      %v557 = vpop.f32.mrf.mxu0
      %v558 = vadd.f32 0.0, %v557
      %v559 = vpop.f32.mrf.mxu0
      %v560 = vadd.f32 0.0, %v559
      %561 = vmatmul.bf16.gmra.mxu0 %v480
      %v562 = vpop.f32.mrf.mxu0
      %v563 = vadd.f32 0.0, %v562
      %v564 = vpop.f32.mrf.mxu0
      %v565 = vadd.f32 0.0, %v564
      %566 = vmatmul.bf16.gmra.mxu0 %v483
      %v567 = vpop.f32.mrf.mxu0
      %v568 = vadd.f32 0.0, %v567
      %v569 = vpop.f32.mrf.mxu0
      %v570 = vadd.f32 0.0, %v569
      %571 = vmatmul.bf16.gmra.mxu0 %v486
      %v572 = vpop.f32.mrf.mxu0
      %v573 = vadd.f32 0.0, %v572
      %v574 = vpop.f32.mrf.mxu0
      %v575 = vadd.f32 0.0, %v574
      %576 = vmatmul.bf16.gmra.mxu0 %v489
      %v577 = vpop.f32.mrf.mxu0
      %v578 = vadd.f32 0.0, %v577
      %v579 = vpop.f32.mrf.mxu0
      %v580 = vadd.f32 0.0, %v579
      %581 = vmatmul.bf16.gmra.mxu0 %v492
      %v582 = vpop.f32.mrf.mxu0
      %v583 = vadd.f32 0.0, %v582
      %v584 = vpop.f32.mrf.mxu0
      %v585 = vadd.f32 0.0, %v584
      %586 = vmatmul.bf16.gmra.mxu0 %v495
      %v587 = vpop.f32.mrf.mxu0
      %v588 = vadd.f32 0.0, %v587
      %v589 = vpop.f32.mrf.mxu0
      %v590 = vadd.f32 0.0, %v589
      %591 = vmatmul.bf16.gmra.mxu0 %v498
      %v592 = vpop.f32.mrf.mxu0
      %v593 = vadd.f32 0.0, %v592
      %v594 = vpop.f32.mrf.mxu0
      %v595 = vadd.f32 0.0, %v594
      %596 = vmatmul.bf16.gmra.mxu0 %v501
      %v597 = vpop.f32.mrf.mxu0
      %v598 = vadd.f32 0.0, %v597
      %v599 = vpop.f32.mrf.mxu0
      %v600 = vadd.f32 0.0, %v599
      %601 = vmatmul.bf16.gmra.mxu0 %v504
      %v602 = vpop.f32.mrf.mxu0
      %v603 = vadd.f32 0.0, %v602
      %v604 = vpop.f32.mrf.mxu0
      %v605 = vadd.f32 0.0, %v604
      %606 = vmatmul.bf16.gmra.mxu0 %v507
      %v607 = vpop.f32.mrf.mxu0
      %v608 = vadd.f32 0.0, %v607
      %v609 = vpop.f32.mrf.mxu0
      %v610 = vadd.f32 0.0, %v609
      %611 = vdwg.mxu0
      %v612 = vsel %vm454, %v286, 0
      %v614 = vsel %vm454, %v287, 0
      %v616 = vsel %vm454, %v288, 0
      %v618 = vsel %vm454, %v289, 0
      %v620 = vsel %vm454, %v290, 0
      %v622 = vsel %vm454, %v291, 0
      %v624 = vsel %vm454, %v292, 0
      %v626 = vsel %vm454, %v293, 0
      %v628 = vsel %vm454, %v294, 0
      %v630 = vsel %vm454, %v295, 0
      %v632 = vsel %vm454, %v296, 0
      %v634 = vsel %vm454, %v297, 0
      %v636 = vsel %vm454, %v298, 0
      %v638 = vsel %vm454, %v299, 0
      %v640 = vsel %vm454, %v300, 0
      %v642 = vsel %vm454, %v301, 0
      %v644 = vsel %vm454, %v302, 0
      %v646 = vsel %vm454, %v303, 0
      %v649 = vsel %vm509, %v208, 0
      %651 = vmatpush.bf16.msra.mxu0 0
      %652 = vmatpush.bf16.msra.mxu0 0
      %653 = vmatpush.bf16.msra.mxu0 0
      %654 = vmatpush.bf16.msra.mxu0 0
      %655 = vmatpush.bf16.msra.mxu0 0
      %656 = vmatpush.bf16.msra.mxu0 0
      %657 = vmatpush.bf16.msra.mxu0 0
      %658 = vmatpush.bf16.msra.mxu0 %v649
      %659 = vmatmul.bf16.gmra.mxu0 %v612
      %v660 = vpop.f32.mrf.mxu0
      %v661 = vadd.f32 %v523, %v660
      %v662 = vpop.f32.mrf.mxu0
      %v663 = vadd.f32 %v525, %v662
      %664 = vmatmul.bf16.gmra.mxu0 %v614
      %v665 = vpop.f32.mrf.mxu0
      %v666 = vadd.f32 %v528, %v665
      %v667 = vpop.f32.mrf.mxu0
      %v668 = vadd.f32 %v530, %v667
      %669 = vmatmul.bf16.gmra.mxu0 %v616
      %v670 = vpop.f32.mrf.mxu0
      %v671 = vadd.f32 %v533, %v670
      %v672 = vpop.f32.mrf.mxu0
      %v673 = vadd.f32 %v535, %v672
      %674 = vmatmul.bf16.gmra.mxu0 %v618
      %v675 = vpop.f32.mrf.mxu0
      %v676 = vadd.f32 %v538, %v675
      %v677 = vpop.f32.mrf.mxu0
      %v678 = vadd.f32 %v540, %v677
      %679 = vmatmul.bf16.gmra.mxu0 %v620
      %v680 = vpop.f32.mrf.mxu0
      %v681 = vadd.f32 %v543, %v680
      %v682 = vpop.f32.mrf.mxu0
      %v683 = vadd.f32 %v545, %v682
      %684 = vmatmul.bf16.gmra.mxu0 %v622
      %v685 = vpop.f32.mrf.mxu0
      %v686 = vadd.f32 %v548, %v685
      %v687 = vpop.f32.mrf.mxu0
      %v688 = vadd.f32 %v550, %v687
      %689 = vmatmul.bf16.gmra.mxu0 %v624
      %v690 = vpop.f32.mrf.mxu0
      %v691 = vadd.f32 %v553, %v690
      %v692 = vpop.f32.mrf.mxu0
      %v693 = vadd.f32 %v555, %v692
      %694 = vmatmul.bf16.gmra.mxu0 %v626
      %v695 = vpop.f32.mrf.mxu0
      %v696 = vadd.f32 %v558, %v695
      %v697 = vpop.f32.mrf.mxu0
      %v698 = vadd.f32 %v560, %v697
      %699 = vmatmul.bf16.gmra.mxu0 %v628
      %v700 = vpop.f32.mrf.mxu0
      %v701 = vadd.f32 %v563, %v700
      %v702 = vpop.f32.mrf.mxu0
      %v703 = vadd.f32 %v565, %v702
      %704 = vmatmul.bf16.gmra.mxu0 %v630
      %v705 = vpop.f32.mrf.mxu0
      %v706 = vadd.f32 %v568, %v705
      %v707 = vpop.f32.mrf.mxu0
      %v708 = vadd.f32 %v570, %v707
      %709 = vmatmul.bf16.gmra.mxu0 %v632
      %v710 = vpop.f32.mrf.mxu0
      %v711 = vadd.f32 %v573, %v710
      %v712 = vpop.f32.mrf.mxu0
      %v713 = vadd.f32 %v575, %v712
      %714 = vmatmul.bf16.gmra.mxu0 %v634
      %v715 = vpop.f32.mrf.mxu0
      %v716 = vadd.f32 %v578, %v715
      %v717 = vpop.f32.mrf.mxu0
      %v718 = vadd.f32 %v580, %v717
      %719 = vmatmul.bf16.gmra.mxu0 %v636
      %v720 = vpop.f32.mrf.mxu0
      %v721 = vadd.f32 %v583, %v720
      %v722 = vpop.f32.mrf.mxu0
      %v723 = vadd.f32 %v585, %v722
      %724 = vmatmul.bf16.gmra.mxu0 %v638
      %v725 = vpop.f32.mrf.mxu0
      %v726 = vadd.f32 %v588, %v725
      %v727 = vpop.f32.mrf.mxu0
      %v728 = vadd.f32 %v590, %v727
      %729 = vmatmul.bf16.gmra.mxu0 %v640
      %v730 = vpop.f32.mrf.mxu0
      %v731 = vadd.f32 %v593, %v730
      %v732 = vpop.f32.mrf.mxu0
      %v733 = vadd.f32 %v595, %v732
      %734 = vmatmul.bf16.gmra.mxu0 %v642
      %v735 = vpop.f32.mrf.mxu0
      %v736 = vadd.f32 %v598, %v735
      %v737 = vpop.f32.mrf.mxu0
      %v738 = vadd.f32 %v600, %v737
      %739 = vmatmul.bf16.gmra.mxu0 %v644
      %v740 = vpop.f32.mrf.mxu0
      %v741 = vadd.f32 %v603, %v740
      %v742 = vpop.f32.mrf.mxu0
      %v743 = vadd.f32 %v605, %v742
      %744 = vmatmul.bf16.gmra.mxu0 %v646
      %v745 = vpop.f32.mrf.mxu0
      %v746 = vadd.f32 %v608, %v745
      %v747 = vpop.f32.mrf.mxu0
      %v748 = vadd.f32 %v610, %v747
      %749 = vdwg.mxu0
      %v750 = vld [vmem:[%s165] sm:$0xe]
      %s751 = scalar_lea.vmem %s1, 8
      %v752 = vld [vmem:[%s751] sm:$0xf]
      %v754 = vunpack.c.l.b16 %v750
      %v755 = vpack.c.b16 %v250, %v754
      %vm756 = vcmask 1046528
      %v757 = vrot.slane %v755, 1
      %v758 = vrot.slane %v287, 1
      %v759 = vsel %vm756, %v757, %v758
      %v760 = vrot.slane %v288, 1
      %v761 = vsel %vm756, %v758, %v760
      %v762 = vrot.slane %v289, 1
      %v763 = vsel %vm756, %v760, %v762
      %v764 = vrot.slane %v290, 1
      %v765 = vsel %vm756, %v762, %v764
      %v766 = vrot.slane %v291, 1
      %v767 = vsel %vm756, %v764, %v766
      %v768 = vrot.slane %v292, 1
      %v769 = vsel %vm756, %v766, %v768
      %v770 = vrot.slane %v293, 1
      %v771 = vsel %vm756, %v768, %v770
      %v772 = vrot.slane %v294, 1
      %v773 = vsel %vm756, %v770, %v772
      %v774 = vrot.slane %v295, 1
      %v775 = vsel %vm756, %v772, %v774
      %v776 = vrot.slane %v296, 1
      %v777 = vsel %vm756, %v774, %v776
      %v778 = vrot.slane %v297, 1
      %v779 = vsel %vm756, %v776, %v778
      %v780 = vrot.slane %v298, 1
      %v781 = vsel %vm756, %v778, %v780
      %v782 = vrot.slane %v299, 1
      %v783 = vsel %vm756, %v780, %v782
      %v784 = vrot.slane %v300, 1
      %v785 = vsel %vm756, %v782, %v784
      %v786 = vrot.slane %v301, 1
      %v787 = vsel %vm756, %v784, %v786
      %v788 = vrot.slane %v302, 1
      %v789 = vsel %vm756, %v786, %v788
      %v790 = vrot.slane %v303, 1
      %v791 = vsel %vm756, %v788, %v790
      %v792 = vrot.slane %v304, 1
      %v793 = vsel %vm756, %v790, %v792
      %v795 = vsel %vm454, %v759, 0
      %v798 = vsel %vm454, %v761, 0
      %v801 = vsel %vm454, %v763, 0
      %v804 = vsel %vm454, %v765, 0
      %v807 = vsel %vm454, %v767, 0
      %v810 = vsel %vm454, %v769, 0
      %v813 = vsel %vm454, %v771, 0
      %v816 = vsel %vm454, %v773, 0
      %v819 = vsel %vm454, %v775, 0
      %v822 = vsel %vm454, %v777, 0
      %v825 = vsel %vm454, %v779, 0
      %v828 = vsel %vm454, %v781, 0
      %v831 = vsel %vm454, %v783, 0
      %v834 = vsel %vm454, %v785, 0
      %v837 = vsel %vm454, %v787, 0
      %v840 = vsel %vm454, %v789, 0
      %v843 = vsel %vm454, %v791, 0
      %v846 = vsel %vm454, %v793, 0
      %v849 = vsel %vm509, %v752, 0
      %851 = vmatpush.bf16.msra.mxu0 0
      %852 = vmatpush.bf16.msra.mxu0 0
      %853 = vmatpush.bf16.msra.mxu0 0
      %854 = vmatpush.bf16.msra.mxu0 0
      %855 = vmatpush.bf16.msra.mxu0 0
      %856 = vmatpush.bf16.msra.mxu0 0
      %857 = vmatpush.bf16.msra.mxu0 0
      %858 = vmatpush.bf16.msra.mxu0 %v849
      %859 = vmatmul.bf16.gmra.mxu0 %v795
      %v860 = vpop.f32.mrf.mxu0
      %v861 = vadd.f32 0.0, %v860
      %v862 = vpop.f32.mrf.mxu0
      %v863 = vadd.f32 0.0, %v862
      %864 = vmatmul.bf16.gmra.mxu0 %v798
      %v865 = vpop.f32.mrf.mxu0
      %v866 = vadd.f32 0.0, %v865
      %v867 = vpop.f32.mrf.mxu0
      %v868 = vadd.f32 0.0, %v867
      %869 = vmatmul.bf16.gmra.mxu0 %v801
      %v870 = vpop.f32.mrf.mxu0
      %v871 = vadd.f32 0.0, %v870
      %v872 = vpop.f32.mrf.mxu0
      %v873 = vadd.f32 0.0, %v872
      %874 = vmatmul.bf16.gmra.mxu0 %v804
      %v875 = vpop.f32.mrf.mxu0
      %v876 = vadd.f32 0.0, %v875
      %v877 = vpop.f32.mrf.mxu0
      %v878 = vadd.f32 0.0, %v877
      %879 = vmatmul.bf16.gmra.mxu0 %v807
      %v880 = vpop.f32.mrf.mxu0
      %v881 = vadd.f32 0.0, %v880
      %v882 = vpop.f32.mrf.mxu0
      %v883 = vadd.f32 0.0, %v882
      %884 = vmatmul.bf16.gmra.mxu0 %v810
      %v885 = vpop.f32.mrf.mxu0
      %v886 = vadd.f32 0.0, %v885
      %v887 = vpop.f32.mrf.mxu0
      %v888 = vadd.f32 0.0, %v887
      %889 = vmatmul.bf16.gmra.mxu0 %v813
      %v890 = vpop.f32.mrf.mxu0
      %v891 = vadd.f32 0.0, %v890
      %v892 = vpop.f32.mrf.mxu0
      %v893 = vadd.f32 0.0, %v892
      %894 = vmatmul.bf16.gmra.mxu0 %v816
      %v895 = vpop.f32.mrf.mxu0
      %v896 = vadd.f32 0.0, %v895
      %v897 = vpop.f32.mrf.mxu0
      %v898 = vadd.f32 0.0, %v897
      %899 = vmatmul.bf16.gmra.mxu0 %v819
      %v900 = vpop.f32.mrf.mxu0
      %v901 = vadd.f32 0.0, %v900
      %v902 = vpop.f32.mrf.mxu0
      %v903 = vadd.f32 0.0, %v902
      %904 = vmatmul.bf16.gmra.mxu0 %v822
      %v905 = vpop.f32.mrf.mxu0
      %v906 = vadd.f32 0.0, %v905
      %v907 = vpop.f32.mrf.mxu0
      %v908 = vadd.f32 0.0, %v907
      %909 = vmatmul.bf16.gmra.mxu0 %v825
      %v910 = vpop.f32.mrf.mxu0
      %v911 = vadd.f32 0.0, %v910
      %v912 = vpop.f32.mrf.mxu0
      %v913 = vadd.f32 0.0, %v912
      %914 = vmatmul.bf16.gmra.mxu0 %v828
      %v915 = vpop.f32.mrf.mxu0
      %v916 = vadd.f32 0.0, %v915
      %v917 = vpop.f32.mrf.mxu0
      %v918 = vadd.f32 0.0, %v917
      %919 = vmatmul.bf16.gmra.mxu0 %v831
      %v920 = vpop.f32.mrf.mxu0
      %v921 = vadd.f32 0.0, %v920
      %v922 = vpop.f32.mrf.mxu0
      %v923 = vadd.f32 0.0, %v922
      %924 = vmatmul.bf16.gmra.mxu0 %v834
      %v925 = vpop.f32.mrf.mxu0
      %v926 = vadd.f32 0.0, %v925
      %v927 = vpop.f32.mrf.mxu0
      %v928 = vadd.f32 0.0, %v927
      %929 = vmatmul.bf16.gmra.mxu0 %v837
      %v930 = vpop.f32.mrf.mxu0
      %v931 = vadd.f32 0.0, %v930
      %v932 = vpop.f32.mrf.mxu0
      %v933 = vadd.f32 0.0, %v932
      %934 = vmatmul.bf16.gmra.mxu0 %v840
      %v935 = vpop.f32.mrf.mxu0
      %v936 = vadd.f32 0.0, %v935
      %v937 = vpop.f32.mrf.mxu0
      %v938 = vadd.f32 0.0, %v937
      %939 = vmatmul.bf16.gmra.mxu0 %v843
      %v940 = vpop.f32.mrf.mxu0
      %v941 = vadd.f32 0.0, %v940
      %v942 = vpop.f32.mrf.mxu0
      %v943 = vadd.f32 0.0, %v942
      %944 = vmatmul.bf16.gmra.mxu0 %v846
      %v945 = vpop.f32.mrf.mxu0
      %v946 = vadd.f32 0.0, %v945
      %v947 = vpop.f32.mrf.mxu0
      %v948 = vadd.f32 0.0, %v947
      %949 = vdwg.mxu0
      %v950 = vadd.f32 %v661, %v861
      %v951 = vadd.f32 %v663, %v863
      %v952 = vadd.f32 %v666, %v866
      %v953 = vadd.f32 %v668, %v868
      %v954 = vadd.f32 %v671, %v871
      %v955 = vadd.f32 %v673, %v873
      %v956 = vadd.f32 %v676, %v876
      %v957 = vadd.f32 %v678, %v878
      %v958 = vadd.f32 %v681, %v881
      %v959 = vadd.f32 %v683, %v883
      %v960 = vadd.f32 %v686, %v886
      %v961 = vadd.f32 %v688, %v888
      %v962 = vadd.f32 %v691, %v891
      %v963 = vadd.f32 %v693, %v893
      %v964 = vadd.f32 %v696, %v896
      %v965 = vadd.f32 %v698, %v898
      %v966 = vadd.f32 %v701, %v901
      %v967 = vadd.f32 %v703, %v903
      %v968 = vadd.f32 %v706, %v906
      %v969 = vadd.f32 %v708, %v908
      %v970 = vadd.f32 %v711, %v911
      %v971 = vadd.f32 %v713, %v913
      %v972 = vadd.f32 %v716, %v916
      %v973 = vadd.f32 %v718, %v918
      %v974 = vadd.f32 %v721, %v921
      %v975 = vadd.f32 %v723, %v923
      %v976 = vadd.f32 %v726, %v926
      %v977 = vadd.f32 %v728, %v928
      %v978 = vadd.f32 %v731, %v931
      %v979 = vadd.f32 %v733, %v933
      %v980 = vadd.f32 %v736, %v936
      %v981 = vadd.f32 %v738, %v938
      %v982 = vadd.f32 %v741, %v941
      %v983 = vadd.f32 %v743, %v943
      %v984 = vadd.f32 %v746, %v946
      %v985 = vadd.f32 %v748, %v948
      %v986 = vld [vmem:[%s165 + $0x8] sm:$0xe]
      %v987 = vld [vmem:[%s165 + $0xc] sm:$0xf]
      %v988 = vld [vmem:[%s165 + $0x10] sm:$0xf]
      %v989 = vld [vmem:[%s165 + $0x14] sm:$0xf]
      %v990 = vld [vmem:[%s165 + $0x18] sm:$0xf]
      %v991 = vld [vmem:[%s165 + $0x1c] sm:$0xf]
      %v992 = vld [vmem:[%s165 + $0x20] sm:$0xf]
      %v993 = vld [vmem:[%s165 + $0x24] sm:$0xf]
      %v994 = vld [vmem:[%s165 + $0x28] sm:$0xf]
      %v995 = vld [vmem:[%s165 + $0x2c] sm:$0xf]
      %v996 = vld [vmem:[%s165 + $0x30] sm:$0xf]
      %v997 = vld [vmem:[%s165 + $0x34] sm:$0xf]
      %v998 = vld [vmem:[%s165 + $0x38] sm:$0xf]
      %v999 = vld [vmem:[%s165 + $0x3c] sm:$0xf]
      %v1000 = vld [vmem:[%s165 + $0x40] sm:$0xf]
      %v1001 = vld [vmem:[%s165 + $0x44] sm:$0xf]
      %v1002 = vld [vmem:[%s165 + $0x48] sm:$0xf]
      %v1003 = vld [vmem:[%s165 + $0x4c] sm:$0xf]
      %v1004 = vld [vmem:[%s165 + $0x50] sm:$0xf]
      %v1005 = vld [vmem:[%s165 + $0x54] sm:$0xf]
      %v1006 = vld [vmem:[%s165 + $0x58] sm:$0xf]
      %v1007 = vld [vmem:[%s165 + $0x5c] sm:$0xf]
      %v1008 = vld [vmem:[%s165 + $0x60] sm:$0xf]
      %v1009 = vld [vmem:[%s165 + $0x64] sm:$0xf]
      %v1010 = vld [vmem:[%s165 + $0x68] sm:$0xf]
      %v1011 = vld [vmem:[%s165 + $0x6c] sm:$0xf]
      %v1012 = vld [vmem:[%s165 + $0x70] sm:$0xf]
      %v1013 = vld [vmem:[%s165 + $0x74] sm:$0xf]
      %v1014 = vld [vmem:[%s165 + $0x78] sm:$0xf]
      %v1015 = vld [vmem:[%s165 + $0x7c] sm:$0xf]
      %v1016 = vld [vmem:[%s165 + $0x80] sm:$0xf]
      %v1017 = vld [vmem:[%s165 + $0x84] sm:$0xf]
      %v1018 = vld [vmem:[%s165 + $0x88] sm:$0xf]
      %v1019 = vld [vmem:[%s165 + $0x8c] sm:$0xf]
      %v1020 = vld [vmem:[%s165 + $0x90] sm:$0xf]
      %v1021 = vld [vmem:[%s165 + $0x94] sm:$0xf]
      %v1022 = vld [vmem:[%s165 + $0x98] sm:$0x1]
      %s1023 = scalar_lea.vmem %s1, 12
      %v1024 = vld [vmem:[%s1023] sm:$0xf]
      %v1062 = vunpack.c.l.b16 %v986
      %v1063 = vunpack.c.l.b16 %v987
      %v1064 = vunpack.c.l.b16 %v988
      %v1065 = vunpack.c.l.b16 %v989
      %v1066 = vunpack.c.l.b16 %v990
      %v1067 = vunpack.c.l.b16 %v991
      %v1068 = vunpack.c.l.b16 %v992
      %v1069 = vunpack.c.l.b16 %v993
      %v1070 = vunpack.c.l.b16 %v994
      %v1071 = vunpack.c.l.b16 %v995
      %v1072 = vunpack.c.l.b16 %v996
      %v1073 = vunpack.c.l.b16 %v997
      %v1074 = vunpack.c.l.b16 %v998
      %v1075 = vunpack.c.l.b16 %v999
      %v1076 = vunpack.c.l.b16 %v1000
      %v1077 = vunpack.c.l.b16 %v1001
      %v1078 = vunpack.c.l.b16 %v1002
      %v1079 = vunpack.c.l.b16 %v1003
      %v1080 = vunpack.c.l.b16 %v1004
      %v1081 = vunpack.c.l.b16 %v1005
      %v1082 = vunpack.c.l.b16 %v1006
      %v1083 = vunpack.c.l.b16 %v1007
      %v1084 = vunpack.c.l.b16 %v1008
      %v1085 = vunpack.c.l.b16 %v1009
      %v1086 = vunpack.c.l.b16 %v1010
      %v1087 = vunpack.c.l.b16 %v1011
      %v1088 = vunpack.c.l.b16 %v1012
      %v1089 = vunpack.c.l.b16 %v1013
      %v1090 = vunpack.c.l.b16 %v1014
      %v1091 = vunpack.c.l.b16 %v1015
      %v1092 = vunpack.c.l.b16 %v1016
      %v1093 = vunpack.c.l.b16 %v1017
      %v1094 = vunpack.c.l.b16 %v1018
      %v1095 = vunpack.c.l.b16 %v1019
      %v1096 = vunpack.c.l.b16 %v1020
      %v1097 = vunpack.c.l.b16 %v1021
      %v1098 = vunpack.c.l.b16 %v1022
      %v1099 = vpack.c.b16 %v1063, %v1062
      %v1100 = vpack.c.b16 %v1065, %v1064
      %v1101 = vpack.c.b16 %v1067, %v1066
      %v1102 = vpack.c.b16 %v1069, %v1068
      %v1103 = vpack.c.b16 %v1071, %v1070
      %v1104 = vpack.c.b16 %v1073, %v1072
      %v1105 = vpack.c.b16 %v1075, %v1074
      %v1106 = vpack.c.b16 %v1077, %v1076
      %v1107 = vpack.c.b16 %v1079, %v1078
      %v1108 = vpack.c.b16 %v1081, %v1080
      %v1109 = vpack.c.b16 %v1083, %v1082
      %v1110 = vpack.c.b16 %v1085, %v1084
      %v1111 = vpack.c.b16 %v1087, %v1086
      %v1112 = vpack.c.b16 %v1089, %v1088
      %v1113 = vpack.c.b16 %v1091, %v1090
      %v1114 = vpack.c.b16 %v1093, %v1092
      %v1115 = vpack.c.b16 %v1095, %v1094
      %v1116 = vpack.c.b16 %v1097, %v1096
      %v1117 = vpack.c.b16 %v1098, %v1098
      %v1118 = vrot.slane %v1099, 1
      %v1119 = vrot.slane %v1100, 1
      %v1120 = vsel %vm756, %v1118, %v1119
      %v1121 = vrot.slane %v1101, 1
      %v1122 = vsel %vm756, %v1119, %v1121
      %v1123 = vrot.slane %v1102, 1
      %v1124 = vsel %vm756, %v1121, %v1123
      %v1125 = vrot.slane %v1103, 1
      %v1126 = vsel %vm756, %v1123, %v1125
      %v1127 = vrot.slane %v1104, 1
      %v1128 = vsel %vm756, %v1125, %v1127
      %v1129 = vrot.slane %v1105, 1
      %v1130 = vsel %vm756, %v1127, %v1129
      %v1131 = vrot.slane %v1106, 1
      %v1132 = vsel %vm756, %v1129, %v1131
      %v1133 = vrot.slane %v1107, 1
      %v1134 = vsel %vm756, %v1131, %v1133
      %v1135 = vrot.slane %v1108, 1
      %v1136 = vsel %vm756, %v1133, %v1135
      %v1137 = vrot.slane %v1109, 1
      %v1138 = vsel %vm756, %v1135, %v1137
      %v1139 = vrot.slane %v1110, 1
      %v1140 = vsel %vm756, %v1137, %v1139
      %v1141 = vrot.slane %v1111, 1
      %v1142 = vsel %vm756, %v1139, %v1141
      %v1143 = vrot.slane %v1112, 1
      %v1144 = vsel %vm756, %v1141, %v1143
      %v1145 = vrot.slane %v1113, 1
      %v1146 = vsel %vm756, %v1143, %v1145
      %v1147 = vrot.slane %v1114, 1
      %v1148 = vsel %vm756, %v1145, %v1147
      %v1149 = vrot.slane %v1115, 1
      %v1150 = vsel %vm756, %v1147, %v1149
      %v1151 = vrot.slane %v1116, 1
      %v1152 = vsel %vm756, %v1149, %v1151
      %v1153 = vrot.slane %v1117, 1
      %v1154 = vsel %vm756, %v1151, %v1153
      %v1156 = vsel %vm454, %v1120, 0
      %v1159 = vsel %vm454, %v1122, 0
      %v1162 = vsel %vm454, %v1124, 0
      %v1165 = vsel %vm454, %v1126, 0
      %v1168 = vsel %vm454, %v1128, 0
      %v1171 = vsel %vm454, %v1130, 0
      %v1174 = vsel %vm454, %v1132, 0
      %v1177 = vsel %vm454, %v1134, 0
      %v1180 = vsel %vm454, %v1136, 0
      %v1183 = vsel %vm454, %v1138, 0
      %v1186 = vsel %vm454, %v1140, 0
      %v1189 = vsel %vm454, %v1142, 0
      %v1192 = vsel %vm454, %v1144, 0
      %v1195 = vsel %vm454, %v1146, 0
      %v1198 = vsel %vm454, %v1148, 0
      %v1201 = vsel %vm454, %v1150, 0
      %v1204 = vsel %vm454, %v1152, 0
      %v1207 = vsel %vm454, %v1154, 0
      %v1210 = vsel %vm509, %v1024, 0
      %1212 = vmatpush.bf16.msra.mxu0 0
      %1213 = vmatpush.bf16.msra.mxu0 0
      %1214 = vmatpush.bf16.msra.mxu0 0
      %1215 = vmatpush.bf16.msra.mxu0 0
      %1216 = vmatpush.bf16.msra.mxu0 0
      %1217 = vmatpush.bf16.msra.mxu0 0
      %1218 = vmatpush.bf16.msra.mxu0 0
      %1219 = vmatpush.bf16.msra.mxu0 %v1210
      %1220 = vmatmul.bf16.gmra.mxu0 %v1156
      %v1221 = vpop.f32.mrf.mxu0
      %v1222 = vadd.f32 0.0, %v1221
      %v1223 = vpop.f32.mrf.mxu0
      %v1224 = vadd.f32 0.0, %v1223
      %1225 = vmatmul.bf16.gmra.mxu0 %v1159
      %v1226 = vpop.f32.mrf.mxu0
      %v1227 = vadd.f32 0.0, %v1226
      %v1228 = vpop.f32.mrf.mxu0
      %v1229 = vadd.f32 0.0, %v1228
      %1230 = vmatmul.bf16.gmra.mxu0 %v1162
      %v1231 = vpop.f32.mrf.mxu0
      %v1232 = vadd.f32 0.0, %v1231
      %v1233 = vpop.f32.mrf.mxu0
      %v1234 = vadd.f32 0.0, %v1233
      %1235 = vmatmul.bf16.gmra.mxu0 %v1165
      %v1236 = vpop.f32.mrf.mxu0
      %v1237 = vadd.f32 0.0, %v1236
      %v1238 = vpop.f32.mrf.mxu0
      %v1239 = vadd.f32 0.0, %v1238
      %1240 = vmatmul.bf16.gmra.mxu0 %v1168
      %v1241 = vpop.f32.mrf.mxu0
      %v1242 = vadd.f32 0.0, %v1241
      %v1243 = vpop.f32.mrf.mxu0
      %v1244 = vadd.f32 0.0, %v1243
      %1245 = vmatmul.bf16.gmra.mxu0 %v1171
      %v1246 = vpop.f32.mrf.mxu0
      %v1247 = vadd.f32 0.0, %v1246
      %v1248 = vpop.f32.mrf.mxu0
      %v1249 = vadd.f32 0.0, %v1248
      %1250 = vmatmul.bf16.gmra.mxu0 %v1174
      %v1251 = vpop.f32.mrf.mxu0
      %v1252 = vadd.f32 0.0, %v1251
      %v1253 = vpop.f32.mrf.mxu0
      %v1254 = vadd.f32 0.0, %v1253
      %1255 = vmatmul.bf16.gmra.mxu0 %v1177
      %v1256 = vpop.f32.mrf.mxu0
      %v1257 = vadd.f32 0.0, %v1256
      %v1258 = vpop.f32.mrf.mxu0
      %v1259 = vadd.f32 0.0, %v1258
      %1260 = vmatmul.bf16.gmra.mxu0 %v1180
      %v1261 = vpop.f32.mrf.mxu0
      %v1262 = vadd.f32 0.0, %v1261
      %v1263 = vpop.f32.mrf.mxu0
      %v1264 = vadd.f32 0.0, %v1263
      %1265 = vmatmul.bf16.gmra.mxu0 %v1183
      %v1266 = vpop.f32.mrf.mxu0
      %v1267 = vadd.f32 0.0, %v1266
      %v1268 = vpop.f32.mrf.mxu0
      %v1269 = vadd.f32 0.0, %v1268
      %1270 = vmatmul.bf16.gmra.mxu0 %v1186
      %v1271 = vpop.f32.mrf.mxu0
      %v1272 = vadd.f32 0.0, %v1271
      %v1273 = vpop.f32.mrf.mxu0
      %v1274 = vadd.f32 0.0, %v1273
      %1275 = vmatmul.bf16.gmra.mxu0 %v1189
      %v1276 = vpop.f32.mrf.mxu0
      %v1277 = vadd.f32 0.0, %v1276
      %v1278 = vpop.f32.mrf.mxu0
      %v1279 = vadd.f32 0.0, %v1278
      %1280 = vmatmul.bf16.gmra.mxu0 %v1192
      %v1281 = vpop.f32.mrf.mxu0
      %v1282 = vadd.f32 0.0, %v1281
      %v1283 = vpop.f32.mrf.mxu0
      %v1284 = vadd.f32 0.0, %v1283
      %1285 = vmatmul.bf16.gmra.mxu0 %v1195
      %v1286 = vpop.f32.mrf.mxu0
      %v1287 = vadd.f32 0.0, %v1286
      %v1288 = vpop.f32.mrf.mxu0
      %v1289 = vadd.f32 0.0, %v1288
      %1290 = vmatmul.bf16.gmra.mxu0 %v1198
      %v1291 = vpop.f32.mrf.mxu0
      %v1292 = vadd.f32 0.0, %v1291
      %v1293 = vpop.f32.mrf.mxu0
      %v1294 = vadd.f32 0.0, %v1293
      %1295 = vmatmul.bf16.gmra.mxu0 %v1201
      %v1296 = vpop.f32.mrf.mxu0
      %v1297 = vadd.f32 0.0, %v1296
      %v1298 = vpop.f32.mrf.mxu0
      %v1299 = vadd.f32 0.0, %v1298
      %1300 = vmatmul.bf16.gmra.mxu0 %v1204
      %v1301 = vpop.f32.mrf.mxu0
      %v1302 = vadd.f32 0.0, %v1301
      %v1303 = vpop.f32.mrf.mxu0
      %v1304 = vadd.f32 0.0, %v1303
      %1305 = vmatmul.bf16.gmra.mxu0 %v1207
      %v1306 = vpop.f32.mrf.mxu0
      %v1307 = vadd.f32 0.0, %v1306
      %v1308 = vpop.f32.mrf.mxu0
      %v1309 = vadd.f32 0.0, %v1308
      %1310 = vdwg.mxu0
      %v1311 = vadd.f32 %v950, %v1222
      %v1312 = vadd.f32 %v951, %v1224
      %v1313 = vadd.f32 %v952, %v1227
      %v1314 = vadd.f32 %v953, %v1229
      %v1315 = vadd.f32 %v954, %v1232
      %v1316 = vadd.f32 %v955, %v1234
      %v1317 = vadd.f32 %v956, %v1237
      %v1318 = vadd.f32 %v957, %v1239
      %v1319 = vadd.f32 %v958, %v1242
      %v1320 = vadd.f32 %v959, %v1244
      %v1321 = vadd.f32 %v960, %v1247
      %v1322 = vadd.f32 %v961, %v1249
      %v1323 = vadd.f32 %v962, %v1252
      %v1324 = vadd.f32 %v963, %v1254
      %v1325 = vadd.f32 %v964, %v1257
      %v1326 = vadd.f32 %v965, %v1259
      %v1327 = vadd.f32 %v966, %v1262
      %v1328 = vadd.f32 %v967, %v1264
      %v1329 = vadd.f32 %v968, %v1267
      %v1330 = vadd.f32 %v969, %v1269
      %v1331 = vadd.f32 %v970, %v1272
      %v1332 = vadd.f32 %v971, %v1274
      %v1333 = vadd.f32 %v972, %v1277
      %v1334 = vadd.f32 %v973, %v1279
      %v1335 = vadd.f32 %v974, %v1282
      %v1336 = vadd.f32 %v975, %v1284
      %v1337 = vadd.f32 %v976, %v1287
      %v1338 = vadd.f32 %v977, %v1289
      %v1339 = vadd.f32 %v978, %v1292
      %v1340 = vadd.f32 %v979, %v1294
      %v1341 = vadd.f32 %v980, %v1297
      %v1342 = vadd.f32 %v981, %v1299
      %v1343 = vadd.f32 %v982, %v1302
      %v1344 = vadd.f32 %v983, %v1304
      %v1345 = vadd.f32 %v984, %v1307
      %v1346 = vadd.f32 %v985, %v1309
      %v1347 = vld [vmem:[%s165 + $0x98] sm:$0x3]
      %s1348 = scalar_lea.vmem %s1, 16
      %v1349 = vld [vmem:[%s1348] sm:$0xf]
      %v1351 = vunpack.c.l.b16 %v1347
      %v1352 = vpack.c.b16 %v1351, %v1351
      %vm1353 = vsmask.f32 6400
      %v1355 = vshrl.u32 %v1099, 16
      %v1357 = vrot.slane %v1355, 1
      %v1358 = vshll.u32 %v1099, 16
      %v1360 = vrot.slane %v1358, 2
      %v1361 = vor.u32 %v1357, %v1360
      %v1363 = vshrl.u32 %v1100, 16
      %v1365 = vrot.slane %v1363, 1
      %v1366 = vshll.u32 %v1100, 16
      %v1368 = vrot.slane %v1366, 2
      %v1369 = vor.u32 %v1365, %v1368
      %v1370 = vsel %vm1353, %v1361, %v1369
      %v1372 = vshrl.u32 %v1101, 16
      %v1374 = vrot.slane %v1372, 1
      %v1375 = vshll.u32 %v1101, 16
      %v1377 = vrot.slane %v1375, 2
      %v1378 = vor.u32 %v1374, %v1377
      %v1379 = vsel %vm1353, %v1369, %v1378
      %v1381 = vshrl.u32 %v1102, 16
      %v1383 = vrot.slane %v1381, 1
      %v1384 = vshll.u32 %v1102, 16
      %v1386 = vrot.slane %v1384, 2
      %v1387 = vor.u32 %v1383, %v1386
      %v1388 = vsel %vm1353, %v1378, %v1387
      %v1390 = vshrl.u32 %v1103, 16
      %v1392 = vrot.slane %v1390, 1
      %v1393 = vshll.u32 %v1103, 16
      %v1395 = vrot.slane %v1393, 2
      %v1396 = vor.u32 %v1392, %v1395
      %v1397 = vsel %vm1353, %v1387, %v1396
      %v1399 = vshrl.u32 %v1104, 16
      %v1401 = vrot.slane %v1399, 1
      %v1402 = vshll.u32 %v1104, 16
      %v1404 = vrot.slane %v1402, 2
      %v1405 = vor.u32 %v1401, %v1404
      %v1406 = vsel %vm1353, %v1396, %v1405
      %v1408 = vshrl.u32 %v1105, 16
      %v1410 = vrot.slane %v1408, 1
      %v1411 = vshll.u32 %v1105, 16
      %v1413 = vrot.slane %v1411, 2
      %v1414 = vor.u32 %v1410, %v1413
      %v1415 = vsel %vm1353, %v1405, %v1414
      %v1417 = vshrl.u32 %v1106, 16
      %v1419 = vrot.slane %v1417, 1
      %v1420 = vshll.u32 %v1106, 16
      %v1422 = vrot.slane %v1420, 2
      %v1423 = vor.u32 %v1419, %v1422
      %v1424 = vsel %vm1353, %v1414, %v1423
      %v1426 = vshrl.u32 %v1107, 16
      %v1428 = vrot.slane %v1426, 1
      %v1429 = vshll.u32 %v1107, 16
      %v1431 = vrot.slane %v1429, 2
      %v1432 = vor.u32 %v1428, %v1431
      %v1433 = vsel %vm1353, %v1423, %v1432
      %v1435 = vshrl.u32 %v1108, 16
      %v1437 = vrot.slane %v1435, 1
      %v1438 = vshll.u32 %v1108, 16
      %v1440 = vrot.slane %v1438, 2
      %v1441 = vor.u32 %v1437, %v1440
      %v1442 = vsel %vm1353, %v1432, %v1441
      %v1444 = vshrl.u32 %v1109, 16
      %v1446 = vrot.slane %v1444, 1
      %v1447 = vshll.u32 %v1109, 16
      %v1449 = vrot.slane %v1447, 2
      %v1450 = vor.u32 %v1446, %v1449
      %v1451 = vsel %vm1353, %v1441, %v1450
      %v1453 = vshrl.u32 %v1110, 16
      %v1455 = vrot.slane %v1453, 1
      %v1456 = vshll.u32 %v1110, 16
      %v1458 = vrot.slane %v1456, 2
      %v1459 = vor.u32 %v1455, %v1458
      %v1460 = vsel %vm1353, %v1450, %v1459
      %v1462 = vshrl.u32 %v1111, 16
      %v1464 = vrot.slane %v1462, 1
      %v1465 = vshll.u32 %v1111, 16
      %v1467 = vrot.slane %v1465, 2
      %v1468 = vor.u32 %v1464, %v1467
      %v1469 = vsel %vm1353, %v1459, %v1468
      %v1471 = vshrl.u32 %v1112, 16
      %v1473 = vrot.slane %v1471, 1
      %v1474 = vshll.u32 %v1112, 16
      %v1476 = vrot.slane %v1474, 2
      %v1477 = vor.u32 %v1473, %v1476
      %v1478 = vsel %vm1353, %v1468, %v1477
      %v1480 = vshrl.u32 %v1113, 16
      %v1482 = vrot.slane %v1480, 1
      %v1483 = vshll.u32 %v1113, 16
      %v1485 = vrot.slane %v1483, 2
      %v1486 = vor.u32 %v1482, %v1485
      %v1487 = vsel %vm1353, %v1477, %v1486
      %v1489 = vshrl.u32 %v1114, 16
      %v1491 = vrot.slane %v1489, 1
      %v1492 = vshll.u32 %v1114, 16
      %v1494 = vrot.slane %v1492, 2
      %v1495 = vor.u32 %v1491, %v1494
      %v1496 = vsel %vm1353, %v1486, %v1495
      %v1498 = vshrl.u32 %v1115, 16
      %v1500 = vrot.slane %v1498, 1
      %v1501 = vshll.u32 %v1115, 16
      %v1503 = vrot.slane %v1501, 2
      %v1504 = vor.u32 %v1500, %v1503
      %v1505 = vsel %vm1353, %v1495, %v1504
      %v1507 = vshrl.u32 %v1116, 16
      %v1509 = vrot.slane %v1507, 1
      %v1510 = vshll.u32 %v1116, 16
      %v1512 = vrot.slane %v1510, 2
      %v1513 = vor.u32 %v1509, %v1512
      %v1514 = vsel %vm1353, %v1504, %v1513
      %v1516 = vshrl.u32 %v1352, 16
      %v1518 = vrot.slane %v1516, 1
      %v1519 = vshll.u32 %v1352, 16
      %v1521 = vrot.slane %v1519, 2
      %v1522 = vor.u32 %v1518, %v1521
      %v1523 = vsel %vm1353, %v1513, %v1522
      %v1525 = vsel %vm454, %v1370, 0
      %v1528 = vsel %vm454, %v1379, 0
      %v1531 = vsel %vm454, %v1388, 0
      %v1534 = vsel %vm454, %v1397, 0
      %v1537 = vsel %vm454, %v1406, 0
      %v1540 = vsel %vm454, %v1415, 0
      %v1543 = vsel %vm454, %v1424, 0
      %v1546 = vsel %vm454, %v1433, 0
      %v1549 = vsel %vm454, %v1442, 0
      %v1552 = vsel %vm454, %v1451, 0
      %v1555 = vsel %vm454, %v1460, 0
      %v1558 = vsel %vm454, %v1469, 0
      %v1561 = vsel %vm454, %v1478, 0
      %v1564 = vsel %vm454, %v1487, 0
      %v1567 = vsel %vm454, %v1496, 0
      %v1570 = vsel %vm454, %v1505, 0
      %v1573 = vsel %vm454, %v1514, 0
      %v1576 = vsel %vm454, %v1523, 0
      %v1579 = vsel %vm509, %v1349, 0
      %1581 = vmatpush.bf16.msra.mxu0 0
      %1582 = vmatpush.bf16.msra.mxu0 0
      %1583 = vmatpush.bf16.msra.mxu0 0
      %1584 = vmatpush.bf16.msra.mxu0 0
      %1585 = vmatpush.bf16.msra.mxu0 0
      %1586 = vmatpush.bf16.msra.mxu0 0
      %1587 = vmatpush.bf16.msra.mxu0 0
      %1588 = vmatpush.bf16.msra.mxu0 %v1579
      %1589 = vmatmul.bf16.gmra.mxu0 %v1525
      %v1590 = vpop.f32.mrf.mxu0
      %v1591 = vadd.f32 0.0, %v1590
      %v1592 = vpop.f32.mrf.mxu0
      %v1593 = vadd.f32 0.0, %v1592
      %1594 = vmatmul.bf16.gmra.mxu0 %v1528
      %v1595 = vpop.f32.mrf.mxu0
      %v1596 = vadd.f32 0.0, %v1595
      %v1597 = vpop.f32.mrf.mxu0
      %v1598 = vadd.f32 0.0, %v1597
      %1599 = vmatmul.bf16.gmra.mxu0 %v1531
      %v1600 = vpop.f32.mrf.mxu0
      %v1601 = vadd.f32 0.0, %v1600
      %v1602 = vpop.f32.mrf.mxu0
      %v1603 = vadd.f32 0.0, %v1602
      %1604 = vmatmul.bf16.gmra.mxu0 %v1534
      %v1605 = vpop.f32.mrf.mxu0
      %v1606 = vadd.f32 0.0, %v1605
      %v1607 = vpop.f32.mrf.mxu0
      %v1608 = vadd.f32 0.0, %v1607
      %1609 = vmatmul.bf16.gmra.mxu0 %v1537
      %v1610 = vpop.f32.mrf.mxu0
      %v1611 = vadd.f32 0.0, %v1610
      %v1612 = vpop.f32.mrf.mxu0
      %v1613 = vadd.f32 0.0, %v1612
      %1614 = vmatmul.bf16.gmra.mxu0 %v1540
      %v1615 = vpop.f32.mrf.mxu0
      %v1616 = vadd.f32 0.0, %v1615
      %v1617 = vpop.f32.mrf.mxu0
      %v1618 = vadd.f32 0.0, %v1617
      %1619 = vmatmul.bf16.gmra.mxu0 %v1543
      %v1620 = vpop.f32.mrf.mxu0
      %v1621 = vadd.f32 0.0, %v1620
      %v1622 = vpop.f32.mrf.mxu0
      %v1623 = vadd.f32 0.0, %v1622
      %1624 = vmatmul.bf16.gmra.mxu0 %v1546
      %v1625 = vpop.f32.mrf.mxu0
      %v1626 = vadd.f32 0.0, %v1625
      %v1627 = vpop.f32.mrf.mxu0
      %v1628 = vadd.f32 0.0, %v1627
      %1629 = vmatmul.bf16.gmra.mxu0 %v1549
      %v1630 = vpop.f32.mrf.mxu0
      %v1631 = vadd.f32 0.0, %v1630
      %v1632 = vpop.f32.mrf.mxu0
      %v1633 = vadd.f32 0.0, %v1632
      %1634 = vmatmul.bf16.gmra.mxu0 %v1552
      %v1635 = vpop.f32.mrf.mxu0
      %v1636 = vadd.f32 0.0, %v1635
      %v1637 = vpop.f32.mrf.mxu0
      %v1638 = vadd.f32 0.0, %v1637
      %1639 = vmatmul.bf16.gmra.mxu0 %v1555
      %v1640 = vpop.f32.mrf.mxu0
      %v1641 = vadd.f32 0.0, %v1640
      %v1642 = vpop.f32.mrf.mxu0
      %v1643 = vadd.f32 0.0, %v1642
      %1644 = vmatmul.bf16.gmra.mxu0 %v1558
      %v1645 = vpop.f32.mrf.mxu0
      %v1646 = vadd.f32 0.0, %v1645
      %v1647 = vpop.f32.mrf.mxu0
      %v1648 = vadd.f32 0.0, %v1647
      %1649 = vmatmul.bf16.gmra.mxu0 %v1561
      %v1650 = vpop.f32.mrf.mxu0
      %v1651 = vadd.f32 0.0, %v1650
      %v1652 = vpop.f32.mrf.mxu0
      %v1653 = vadd.f32 0.0, %v1652
      %1654 = vmatmul.bf16.gmra.mxu0 %v1564
      %v1655 = vpop.f32.mrf.mxu0
      %v1656 = vadd.f32 0.0, %v1655
      %v1657 = vpop.f32.mrf.mxu0
      %v1658 = vadd.f32 0.0, %v1657
      %1659 = vmatmul.bf16.gmra.mxu0 %v1567
      %v1660 = vpop.f32.mrf.mxu0
      %v1661 = vadd.f32 0.0, %v1660
      %v1662 = vpop.f32.mrf.mxu0
      %v1663 = vadd.f32 0.0, %v1662
      %1664 = vmatmul.bf16.gmra.mxu0 %v1570
      %v1665 = vpop.f32.mrf.mxu0
      %v1666 = vadd.f32 0.0, %v1665
      %v1667 = vpop.f32.mrf.mxu0
      %v1668 = vadd.f32 0.0, %v1667
      %1669 = vmatmul.bf16.gmra.mxu0 %v1573
      %v1670 = vpop.f32.mrf.mxu0
      %v1671 = vadd.f32 0.0, %v1670
      %v1672 = vpop.f32.mrf.mxu0
      %v1673 = vadd.f32 0.0, %v1672
      %1674 = vmatmul.bf16.gmra.mxu0 %v1576
      %v1675 = vpop.f32.mrf.mxu0
      %v1676 = vadd.f32 0.0, %v1675
      %v1677 = vpop.f32.mrf.mxu0
      %v1678 = vadd.f32 0.0, %v1677
      %1679 = vdwg.mxu0
      %v1680 = vadd.f32 %v1311, %v1591
      %v1681 = vadd.f32 %v1312, %v1593
      %v1682 = vadd.f32 %v1313, %v1596
      %v1683 = vadd.f32 %v1314, %v1598
      %v1684 = vadd.f32 %v1315, %v1601
      %v1685 = vadd.f32 %v1316, %v1603
      %v1686 = vadd.f32 %v1317, %v1606
      %v1687 = vadd.f32 %v1318, %v1608
      %v1688 = vadd.f32 %v1319, %v1611
      %v1689 = vadd.f32 %v1320, %v1613
      %v1690 = vadd.f32 %v1321, %v1616
      %v1691 = vadd.f32 %v1322, %v1618
      %v1692 = vadd.f32 %v1323, %v1621
      %v1693 = vadd.f32 %v1324, %v1623
      %v1694 = vadd.f32 %v1325, %v1626
      %v1695 = vadd.f32 %v1326, %v1628
      %v1696 = vadd.f32 %v1327, %v1631
      %v1697 = vadd.f32 %v1328, %v1633
      %v1698 = vadd.f32 %v1329, %v1636
      %v1699 = vadd.f32 %v1330, %v1638
      %v1700 = vadd.f32 %v1331, %v1641
      %v1701 = vadd.f32 %v1332, %v1643
      %v1702 = vadd.f32 %v1333, %v1646
      %v1703 = vadd.f32 %v1334, %v1648
      %v1704 = vadd.f32 %v1335, %v1651
      %v1705 = vadd.f32 %v1336, %v1653
      %v1706 = vadd.f32 %v1337, %v1656
      %v1707 = vadd.f32 %v1338, %v1658
      %v1708 = vadd.f32 %v1339, %v1661
      %v1709 = vadd.f32 %v1340, %v1663
      %v1710 = vadd.f32 %v1341, %v1666
      %v1711 = vadd.f32 %v1342, %v1668
      %v1712 = vadd.f32 %v1343, %v1671
      %v1713 = vadd.f32 %v1344, %v1673
      %v1714 = vadd.f32 %v1345, %v1676
      %v1715 = vadd.f32 %v1346, %v1678
      %v1716 = vld [vmem:[%s165 + $0x8] sm:$0xc]
      %s1717 = scalar_lea.vmem %s1, 20
      %v1718 = vld [vmem:[%s1717] sm:$0xf]
      %v1720 = vunpack.c.l.b16 %v1716
      %v1721 = vpack.c.b16 %v1063, %v1720
      %vm1722 = vcmask 1045504
      %v1723 = vrot.slane %v1721, 2
      %v1724 = vrot.slane %v1100, 2
      %v1725 = vsel %vm1722, %v1723, %v1724
      %v1726 = vrot.slane %v1101, 2
      %v1727 = vsel %vm1722, %v1724, %v1726
      %v1728 = vrot.slane %v1102, 2
      %v1729 = vsel %vm1722, %v1726, %v1728
      %v1730 = vrot.slane %v1103, 2
      %v1731 = vsel %vm1722, %v1728, %v1730
      %v1732 = vrot.slane %v1104, 2
      %v1733 = vsel %vm1722, %v1730, %v1732
      %v1734 = vrot.slane %v1105, 2
      %v1735 = vsel %vm1722, %v1732, %v1734
      %v1736 = vrot.slane %v1106, 2
      %v1737 = vsel %vm1722, %v1734, %v1736
      %v1738 = vrot.slane %v1107, 2
      %v1739 = vsel %vm1722, %v1736, %v1738
      %v1740 = vrot.slane %v1108, 2
      %v1741 = vsel %vm1722, %v1738, %v1740
      %v1742 = vrot.slane %v1109, 2
      %v1743 = vsel %vm1722, %v1740, %v1742
      %v1744 = vrot.slane %v1110, 2
      %v1745 = vsel %vm1722, %v1742, %v1744
      %v1746 = vrot.slane %v1111, 2
      %v1747 = vsel %vm1722, %v1744, %v1746
      %v1748 = vrot.slane %v1112, 2
      %v1749 = vsel %vm1722, %v1746, %v1748
      %v1750 = vrot.slane %v1113, 2
      %v1751 = vsel %vm1722, %v1748, %v1750
      %v1752 = vrot.slane %v1114, 2
      %v1753 = vsel %vm1722, %v1750, %v1752
      %v1754 = vrot.slane %v1115, 2
      %v1755 = vsel %vm1722, %v1752, %v1754
      %v1756 = vrot.slane %v1116, 2
      %v1757 = vsel %vm1722, %v1754, %v1756
      %v1758 = vrot.slane %v1352, 2
      %v1759 = vsel %vm1722, %v1756, %v1758
      %v1761 = vsel %vm454, %v1725, 0
      %v1764 = vsel %vm454, %v1727, 0
      %v1767 = vsel %vm454, %v1729, 0
      %v1770 = vsel %vm454, %v1731, 0
      %v1773 = vsel %vm454, %v1733, 0
      %v1776 = vsel %vm454, %v1735, 0
      %v1779 = vsel %vm454, %v1737, 0
      %v1782 = vsel %vm454, %v1739, 0
      %v1785 = vsel %vm454, %v1741, 0
      %v1788 = vsel %vm454, %v1743, 0
      %v1791 = vsel %vm454, %v1745, 0
      %v1794 = vsel %vm454, %v1747, 0
      %v1797 = vsel %vm454, %v1749, 0
      %v1800 = vsel %vm454, %v1751, 0
      %v1803 = vsel %vm454, %v1753, 0
      %v1806 = vsel %vm454, %v1755, 0
      %v1809 = vsel %vm454, %v1757, 0
      %v1812 = vsel %vm454, %v1759, 0
      %v1815 = vsel %vm509, %v1718, 0
      %1817 = vmatpush.bf16.msra.mxu0 0
      %1818 = vmatpush.bf16.msra.mxu0 0
      %1819 = vmatpush.bf16.msra.mxu0 0
      %1820 = vmatpush.bf16.msra.mxu0 0
      %1821 = vmatpush.bf16.msra.mxu0 0
      %1822 = vmatpush.bf16.msra.mxu0 0
      %1823 = vmatpush.bf16.msra.mxu0 0
      %1824 = vmatpush.bf16.msra.mxu0 %v1815
      %1825 = vmatmul.bf16.gmra.mxu0 %v1761
      %v1826 = vpop.f32.mrf.mxu0
      %v1827 = vadd.f32 0.0, %v1826
      %v1828 = vpop.f32.mrf.mxu0
      %v1829 = vadd.f32 0.0, %v1828
      %1830 = vmatmul.bf16.gmra.mxu0 %v1764
      %v1831 = vpop.f32.mrf.mxu0
      %v1832 = vadd.f32 0.0, %v1831
      %v1833 = vpop.f32.mrf.mxu0
      %v1834 = vadd.f32 0.0, %v1833
      %1835 = vmatmul.bf16.gmra.mxu0 %v1767
      %v1836 = vpop.f32.mrf.mxu0
      %v1837 = vadd.f32 0.0, %v1836
      %v1838 = vpop.f32.mrf.mxu0
      %v1839 = vadd.f32 0.0, %v1838
      %1840 = vmatmul.bf16.gmra.mxu0 %v1770
      %v1841 = vpop.f32.mrf.mxu0
      %v1842 = vadd.f32 0.0, %v1841
      %v1843 = vpop.f32.mrf.mxu0
      %v1844 = vadd.f32 0.0, %v1843
      %1845 = vmatmul.bf16.gmra.mxu0 %v1773
      %v1846 = vpop.f32.mrf.mxu0
      %v1847 = vadd.f32 0.0, %v1846
      %v1848 = vpop.f32.mrf.mxu0
      %v1849 = vadd.f32 0.0, %v1848
      %1850 = vmatmul.bf16.gmra.mxu0 %v1776
      %v1851 = vpop.f32.mrf.mxu0
      %v1852 = vadd.f32 0.0, %v1851
      %v1853 = vpop.f32.mrf.mxu0
      %v1854 = vadd.f32 0.0, %v1853
      %1855 = vmatmul.bf16.gmra.mxu0 %v1779
      %v1856 = vpop.f32.mrf.mxu0
      %v1857 = vadd.f32 0.0, %v1856
      %v1858 = vpop.f32.mrf.mxu0
      %v1859 = vadd.f32 0.0, %v1858
      %1860 = vmatmul.bf16.gmra.mxu0 %v1782
      %v1861 = vpop.f32.mrf.mxu0
      %v1862 = vadd.f32 0.0, %v1861
      %v1863 = vpop.f32.mrf.mxu0
      %v1864 = vadd.f32 0.0, %v1863
      %1865 = vmatmul.bf16.gmra.mxu0 %v1785
      %v1866 = vpop.f32.mrf.mxu0
      %v1867 = vadd.f32 0.0, %v1866
      %v1868 = vpop.f32.mrf.mxu0
      %v1869 = vadd.f32 0.0, %v1868
      %1870 = vmatmul.bf16.gmra.mxu0 %v1788
      %v1871 = vpop.f32.mrf.mxu0
      %v1872 = vadd.f32 0.0, %v1871
      %v1873 = vpop.f32.mrf.mxu0
      %v1874 = vadd.f32 0.0, %v1873
      %1875 = vmatmul.bf16.gmra.mxu0 %v1791
      %v1876 = vpop.f32.mrf.mxu0
      %v1877 = vadd.f32 0.0, %v1876
      %v1878 = vpop.f32.mrf.mxu0
      %v1879 = vadd.f32 0.0, %v1878
      %1880 = vmatmul.bf16.gmra.mxu0 %v1794
      %v1881 = vpop.f32.mrf.mxu0
      %v1882 = vadd.f32 0.0, %v1881
      %v1883 = vpop.f32.mrf.mxu0
      %v1884 = vadd.f32 0.0, %v1883
      %1885 = vmatmul.bf16.gmra.mxu0 %v1797
      %v1886 = vpop.f32.mrf.mxu0
      %v1887 = vadd.f32 0.0, %v1886
      %v1888 = vpop.f32.mrf.mxu0
      %v1889 = vadd.f32 0.0, %v1888
      %1890 = vmatmul.bf16.gmra.mxu0 %v1800
      %v1891 = vpop.f32.mrf.mxu0
      %v1892 = vadd.f32 0.0, %v1891
      %v1893 = vpop.f32.mrf.mxu0
      %v1894 = vadd.f32 0.0, %v1893
      %1895 = vmatmul.bf16.gmra.mxu0 %v1803
      %v1896 = vpop.f32.mrf.mxu0
      %v1897 = vadd.f32 0.0, %v1896
      %v1898 = vpop.f32.mrf.mxu0
      %v1899 = vadd.f32 0.0, %v1898
      %1900 = vmatmul.bf16.gmra.mxu0 %v1806
      %v1901 = vpop.f32.mrf.mxu0
      %v1902 = vadd.f32 0.0, %v1901
      %v1903 = vpop.f32.mrf.mxu0
      %v1904 = vadd.f32 0.0, %v1903
      %1905 = vmatmul.bf16.gmra.mxu0 %v1809
      %v1906 = vpop.f32.mrf.mxu0
      %v1907 = vadd.f32 0.0, %v1906
      %v1908 = vpop.f32.mrf.mxu0
      %v1909 = vadd.f32 0.0, %v1908
      %1910 = vmatmul.bf16.gmra.mxu0 %v1812
      %v1911 = vpop.f32.mrf.mxu0
      %v1912 = vadd.f32 0.0, %v1911
      %v1913 = vpop.f32.mrf.mxu0
      %v1914 = vadd.f32 0.0, %v1913
      %1915 = vdwg.mxu0
      %v1916 = vadd.f32 %v1680, %v1827
      %v1917 = vadd.f32 %v1681, %v1829
      %v1918 = vadd.f32 %v1682, %v1832
      %v1919 = vadd.f32 %v1683, %v1834
      %v1920 = vadd.f32 %v1684, %v1837
      %v1921 = vadd.f32 %v1685, %v1839
      %v1922 = vadd.f32 %v1686, %v1842
      %v1923 = vadd.f32 %v1687, %v1844
      %v1924 = vadd.f32 %v1688, %v1847
      %v1925 = vadd.f32 %v1689, %v1849
      %v1926 = vadd.f32 %v1690, %v1852
      %v1927 = vadd.f32 %v1691, %v1854
      %v1928 = vadd.f32 %v1692, %v1857
      %v1929 = vadd.f32 %v1693, %v1859
      %v1930 = vadd.f32 %v1694, %v1862
      %v1931 = vadd.f32 %v1695, %v1864
      %v1932 = vadd.f32 %v1696, %v1867
      %v1933 = vadd.f32 %v1697, %v1869
      %v1934 = vadd.f32 %v1698, %v1872
      %v1935 = vadd.f32 %v1699, %v1874
      %v1936 = vadd.f32 %v1700, %v1877
      %v1937 = vadd.f32 %v1701, %v1879
      %v1938 = vadd.f32 %v1702, %v1882
      %v1939 = vadd.f32 %v1703, %v1884
      %v1940 = vadd.f32 %v1704, %v1887
      %v1941 = vadd.f32 %v1705, %v1889
      %v1942 = vadd.f32 %v1706, %v1892
      %v1943 = vadd.f32 %v1707, %v1894
      %v1944 = vadd.f32 %v1708, %v1897
      %v1945 = vadd.f32 %v1709, %v1899
      %v1946 = vadd.f32 %v1710, %v1902
      %v1947 = vadd.f32 %v1711, %v1904
      %v1948 = vadd.f32 %v1712, %v1907
      %v1949 = vadd.f32 %v1713, %v1909
      %v1950 = vadd.f32 %v1714, %v1912
      %v1951 = vadd.f32 %v1715, %v1914
      %v1952 = vld [vmem:[%s165 + $0x10] sm:$0xc]
      %v1953 = vld [vmem:[%s165 + $0x14] sm:$0xf]
      %v1954 = vld [vmem:[%s165 + $0x18] sm:$0xf]
      %v1955 = vld [vmem:[%s165 + $0x1c] sm:$0xf]
      %v1956 = vld [vmem:[%s165 + $0x20] sm:$0xf]
      %v1957 = vld [vmem:[%s165 + $0x24] sm:$0xf]
      %v1958 = vld [vmem:[%s165 + $0x28] sm:$0xf]
      %v1959 = vld [vmem:[%s165 + $0x2c] sm:$0xf]
      %v1960 = vld [vmem:[%s165 + $0x30] sm:$0xf]
      %v1961 = vld [vmem:[%s165 + $0x34] sm:$0xf]
      %v1962 = vld [vmem:[%s165 + $0x38] sm:$0xf]
      %v1963 = vld [vmem:[%s165 + $0x3c] sm:$0xf]
      %v1964 = vld [vmem:[%s165 + $0x40] sm:$0xf]
      %v1965 = vld [vmem:[%s165 + $0x44] sm:$0xf]
      %v1966 = vld [vmem:[%s165 + $0x48] sm:$0xf]
      %v1967 = vld [vmem:[%s165 + $0x4c] sm:$0xf]
      %v1968 = vld [vmem:[%s165 + $0x50] sm:$0xf]
      %v1969 = vld [vmem:[%s165 + $0x54] sm:$0xf]
      %v1970 = vld [vmem:[%s165 + $0x58] sm:$0xf]
      %v1971 = vld [vmem:[%s165 + $0x5c] sm:$0xf]
      %v1972 = vld [vmem:[%s165 + $0x60] sm:$0xf]
      %v1973 = vld [vmem:[%s165 + $0x64] sm:$0xf]
      %v1974 = vld [vmem:[%s165 + $0x68] sm:$0xf]
      %v1975 = vld [vmem:[%s165 + $0x6c] sm:$0xf]
      %v1976 = vld [vmem:[%s165 + $0x70] sm:$0xf]
      %v1977 = vld [vmem:[%s165 + $0x74] sm:$0xf]
      %v1978 = vld [vmem:[%s165 + $0x78] sm:$0xf]
      %v1979 = vld [vmem:[%s165 + $0x7c] sm:$0xf]
      %v1980 = vld [vmem:[%s165 + $0x80] sm:$0xf]
      %v1981 = vld [vmem:[%s165 + $0x84] sm:$0xf]
      %v1982 = vld [vmem:[%s165 + $0x88] sm:$0xf]
      %v1983 = vld [vmem:[%s165 + $0x8c] sm:$0xf]
      %v1984 = vld [vmem:[%s165 + $0x90] sm:$0xf]
      %v1985 = vld [vmem:[%s165 + $0x94] sm:$0xf]
      %v1986 = vld [vmem:[%s165 + $0x98] sm:$0xf]
      %v1987 = vld [vmem:[%s165 + $0x9c] sm:$0xf]
      %v1988 = vld [vmem:[%s165 + $0xa0] sm:$0x3]
      %s1989 = scalar_lea.vmem %s1, 24
      %v1990 = vld [vmem:[%s1989] sm:$0xf]
      %v2028 = vunpack.c.l.b16 %v1952
      %v2029 = vunpack.c.l.b16 %v1953
      %v2030 = vunpack.c.l.b16 %v1954
      %v2031 = vunpack.c.l.b16 %v1955
      %v2032 = vunpack.c.l.b16 %v1956
      %v2033 = vunpack.c.l.b16 %v1957
      %v2034 = vunpack.c.l.b16 %v1958
      %v2035 = vunpack.c.l.b16 %v1959
      %v2036 = vunpack.c.l.b16 %v1960
      %v2037 = vunpack.c.l.b16 %v1961
      %v2038 = vunpack.c.l.b16 %v1962
      %v2039 = vunpack.c.l.b16 %v1963
      %v2040 = vunpack.c.l.b16 %v1964
      %v2041 = vunpack.c.l.b16 %v1965
      %v2042 = vunpack.c.l.b16 %v1966
      %v2043 = vunpack.c.l.b16 %v1967
      %v2044 = vunpack.c.l.b16 %v1968
      %v2045 = vunpack.c.l.b16 %v1969
      %v2046 = vunpack.c.l.b16 %v1970
      %v2047 = vunpack.c.l.b16 %v1971
      %v2048 = vunpack.c.l.b16 %v1972
      %v2049 = vunpack.c.l.b16 %v1973
      %v2050 = vunpack.c.l.b16 %v1974
      %v2051 = vunpack.c.l.b16 %v1975
      %v2052 = vunpack.c.l.b16 %v1976
      %v2053 = vunpack.c.l.b16 %v1977
      %v2054 = vunpack.c.l.b16 %v1978
      %v2055 = vunpack.c.l.b16 %v1979
      %v2056 = vunpack.c.l.b16 %v1980
      %v2057 = vunpack.c.l.b16 %v1981
      %v2058 = vunpack.c.l.b16 %v1982
      %v2059 = vunpack.c.l.b16 %v1983
      %v2060 = vunpack.c.l.b16 %v1984
      %v2061 = vunpack.c.l.b16 %v1985
      %v2062 = vunpack.c.l.b16 %v1986
      %v2063 = vunpack.c.l.b16 %v1987
      %v2064 = vunpack.c.l.b16 %v1988
      %v2065 = vpack.c.b16 %v2029, %v2028
      %v2066 = vpack.c.b16 %v2031, %v2030
      %v2067 = vpack.c.b16 %v2033, %v2032
      %v2068 = vpack.c.b16 %v2035, %v2034
      %v2069 = vpack.c.b16 %v2037, %v2036
      %v2070 = vpack.c.b16 %v2039, %v2038
      %v2071 = vpack.c.b16 %v2041, %v2040
      %v2072 = vpack.c.b16 %v2043, %v2042
      %v2073 = vpack.c.b16 %v2045, %v2044
      %v2074 = vpack.c.b16 %v2047, %v2046
      %v2075 = vpack.c.b16 %v2049, %v2048
      %v2076 = vpack.c.b16 %v2051, %v2050
      %v2077 = vpack.c.b16 %v2053, %v2052
      %v2078 = vpack.c.b16 %v2055, %v2054
      %v2079 = vpack.c.b16 %v2057, %v2056
      %v2080 = vpack.c.b16 %v2059, %v2058
      %v2081 = vpack.c.b16 %v2061, %v2060
      %v2082 = vpack.c.b16 %v2063, %v2062
      %v2083 = vpack.c.b16 %v2064, %v2064
      %v2084 = vrot.slane %v2065, 2
      %v2085 = vrot.slane %v2066, 2
      %v2086 = vsel %vm1722, %v2084, %v2085
      %v2087 = vrot.slane %v2067, 2
      %v2088 = vsel %vm1722, %v2085, %v2087
      %v2089 = vrot.slane %v2068, 2
      %v2090 = vsel %vm1722, %v2087, %v2089
      %v2091 = vrot.slane %v2069, 2
      %v2092 = vsel %vm1722, %v2089, %v2091
      %v2093 = vrot.slane %v2070, 2
      %v2094 = vsel %vm1722, %v2091, %v2093
      %v2095 = vrot.slane %v2071, 2
      %v2096 = vsel %vm1722, %v2093, %v2095
      %v2097 = vrot.slane %v2072, 2
      %v2098 = vsel %vm1722, %v2095, %v2097
      %v2099 = vrot.slane %v2073, 2
      %v2100 = vsel %vm1722, %v2097, %v2099
      %v2101 = vrot.slane %v2074, 2
      %v2102 = vsel %vm1722, %v2099, %v2101
      %v2103 = vrot.slane %v2075, 2
      %v2104 = vsel %vm1722, %v2101, %v2103
      %v2105 = vrot.slane %v2076, 2
      %v2106 = vsel %vm1722, %v2103, %v2105
      %v2107 = vrot.slane %v2077, 2
      %v2108 = vsel %vm1722, %v2105, %v2107
      %v2109 = vrot.slane %v2078, 2
      %v2110 = vsel %vm1722, %v2107, %v2109
      %v2111 = vrot.slane %v2079, 2
      %v2112 = vsel %vm1722, %v2109, %v2111
      %v2113 = vrot.slane %v2080, 2
      %v2114 = vsel %vm1722, %v2111, %v2113
      %v2115 = vrot.slane %v2081, 2
      %v2116 = vsel %vm1722, %v2113, %v2115
      %v2117 = vrot.slane %v2082, 2
      %v2118 = vsel %vm1722, %v2115, %v2117
      %v2119 = vrot.slane %v2083, 2
      %v2120 = vsel %vm1722, %v2117, %v2119
      %v2122 = vsel %vm454, %v2086, 0
      %v2125 = vsel %vm454, %v2088, 0
      %v2128 = vsel %vm454, %v2090, 0
      %v2131 = vsel %vm454, %v2092, 0
      %v2134 = vsel %vm454, %v2094, 0
      %v2137 = vsel %vm454, %v2096, 0
      %v2140 = vsel %vm454, %v2098, 0
      %v2143 = vsel %vm454, %v2100, 0
      %v2146 = vsel %vm454, %v2102, 0
      %v2149 = vsel %vm454, %v2104, 0
      %v2152 = vsel %vm454, %v2106, 0
      %v2155 = vsel %vm454, %v2108, 0
      %v2158 = vsel %vm454, %v2110, 0
      %v2161 = vsel %vm454, %v2112, 0
      %v2164 = vsel %vm454, %v2114, 0
      %v2167 = vsel %vm454, %v2116, 0
      %v2170 = vsel %vm454, %v2118, 0
      %v2173 = vsel %vm454, %v2120, 0
      %v2176 = vsel %vm509, %v1990, 0
      %2178 = vmatpush.bf16.msra.mxu0 0
      %2179 = vmatpush.bf16.msra.mxu0 0
      %2180 = vmatpush.bf16.msra.mxu0 0
      %2181 = vmatpush.bf16.msra.mxu0 0
      %2182 = vmatpush.bf16.msra.mxu0 0
      %2183 = vmatpush.bf16.msra.mxu0 0
      %2184 = vmatpush.bf16.msra.mxu0 0
      %2185 = vmatpush.bf16.msra.mxu0 %v2176
      %2186 = vmatmul.bf16.gmra.mxu0 %v2122
      %v2187 = vpop.f32.mrf.mxu0
      %v2188 = vadd.f32 0.0, %v2187
      %v2189 = vpop.f32.mrf.mxu0
      %v2190 = vadd.f32 0.0, %v2189
      %2191 = vmatmul.bf16.gmra.mxu0 %v2125
      %v2192 = vpop.f32.mrf.mxu0
      %v2193 = vadd.f32 0.0, %v2192
      %v2194 = vpop.f32.mrf.mxu0
      %v2195 = vadd.f32 0.0, %v2194
      %2196 = vmatmul.bf16.gmra.mxu0 %v2128
      %v2197 = vpop.f32.mrf.mxu0
      %v2198 = vadd.f32 0.0, %v2197
      %v2199 = vpop.f32.mrf.mxu0
      %v2200 = vadd.f32 0.0, %v2199
      %2201 = vmatmul.bf16.gmra.mxu0 %v2131
      %v2202 = vpop.f32.mrf.mxu0
      %v2203 = vadd.f32 0.0, %v2202
      %v2204 = vpop.f32.mrf.mxu0
      %v2205 = vadd.f32 0.0, %v2204
      %2206 = vmatmul.bf16.gmra.mxu0 %v2134
      %v2207 = vpop.f32.mrf.mxu0
      %v2208 = vadd.f32 0.0, %v2207
      %v2209 = vpop.f32.mrf.mxu0
      %v2210 = vadd.f32 0.0, %v2209
      %2211 = vmatmul.bf16.gmra.mxu0 %v2137
      %v2212 = vpop.f32.mrf.mxu0
      %v2213 = vadd.f32 0.0, %v2212
      %v2214 = vpop.f32.mrf.mxu0
      %v2215 = vadd.f32 0.0, %v2214
      %2216 = vmatmul.bf16.gmra.mxu0 %v2140
      %v2217 = vpop.f32.mrf.mxu0
      %v2218 = vadd.f32 0.0, %v2217
      %v2219 = vpop.f32.mrf.mxu0
      %v2220 = vadd.f32 0.0, %v2219
      %2221 = vmatmul.bf16.gmra.mxu0 %v2143
      %v2222 = vpop.f32.mrf.mxu0
      %v2223 = vadd.f32 0.0, %v2222
      %v2224 = vpop.f32.mrf.mxu0
      %v2225 = vadd.f32 0.0, %v2224
      %2226 = vmatmul.bf16.gmra.mxu0 %v2146
      %v2227 = vpop.f32.mrf.mxu0
      %v2228 = vadd.f32 0.0, %v2227
      %v2229 = vpop.f32.mrf.mxu0
      %v2230 = vadd.f32 0.0, %v2229
      %2231 = vmatmul.bf16.gmra.mxu0 %v2149
      %v2232 = vpop.f32.mrf.mxu0
      %v2233 = vadd.f32 0.0, %v2232
      %v2234 = vpop.f32.mrf.mxu0
      %v2235 = vadd.f32 0.0, %v2234
      %2236 = vmatmul.bf16.gmra.mxu0 %v2152
      %v2237 = vpop.f32.mrf.mxu0
      %v2238 = vadd.f32 0.0, %v2237
      %v2239 = vpop.f32.mrf.mxu0
      %v2240 = vadd.f32 0.0, %v2239
      %2241 = vmatmul.bf16.gmra.mxu0 %v2155
      %v2242 = vpop.f32.mrf.mxu0
      %v2243 = vadd.f32 0.0, %v2242
      %v2244 = vpop.f32.mrf.mxu0
      %v2245 = vadd.f32 0.0, %v2244
      %2246 = vmatmul.bf16.gmra.mxu0 %v2158
      %v2247 = vpop.f32.mrf.mxu0
      %v2248 = vadd.f32 0.0, %v2247
      %v2249 = vpop.f32.mrf.mxu0
      %v2250 = vadd.f32 0.0, %v2249
      %2251 = vmatmul.bf16.gmra.mxu0 %v2161
      %v2252 = vpop.f32.mrf.mxu0
      %v2253 = vadd.f32 0.0, %v2252
      %v2254 = vpop.f32.mrf.mxu0
      %v2255 = vadd.f32 0.0, %v2254
      %2256 = vmatmul.bf16.gmra.mxu0 %v2164
      %v2257 = vpop.f32.mrf.mxu0
      %v2258 = vadd.f32 0.0, %v2257
      %v2259 = vpop.f32.mrf.mxu0
      %v2260 = vadd.f32 0.0, %v2259
      %2261 = vmatmul.bf16.gmra.mxu0 %v2167
      %v2262 = vpop.f32.mrf.mxu0
      %v2263 = vadd.f32 0.0, %v2262
      %v2264 = vpop.f32.mrf.mxu0
      %v2265 = vadd.f32 0.0, %v2264
      %2266 = vmatmul.bf16.gmra.mxu0 %v2170
      %v2267 = vpop.f32.mrf.mxu0
      %v2268 = vadd.f32 0.0, %v2267
      %v2269 = vpop.f32.mrf.mxu0
      %v2270 = vadd.f32 0.0, %v2269
      %2271 = vmatmul.bf16.gmra.mxu0 %v2173
      %v2272 = vpop.f32.mrf.mxu0
      %v2273 = vadd.f32 0.0, %v2272
      %v2274 = vpop.f32.mrf.mxu0
      %v2275 = vadd.f32 0.0, %v2274
      %2276 = vdwg.mxu0
      %v2277 = vadd.f32 %v1916, %v2188
      %v2278 = vadd.f32 %v1917, %v2190
      %v2279 = vadd.f32 %v1918, %v2193
      %v2280 = vadd.f32 %v1919, %v2195
      %v2281 = vadd.f32 %v1920, %v2198
      %v2282 = vadd.f32 %v1921, %v2200
      %v2283 = vadd.f32 %v1922, %v2203
      %v2284 = vadd.f32 %v1923, %v2205
      %v2285 = vadd.f32 %v1924, %v2208
      %v2286 = vadd.f32 %v1925, %v2210
      %v2287 = vadd.f32 %v1926, %v2213
      %v2288 = vadd.f32 %v1927, %v2215
      %v2289 = vadd.f32 %v1928, %v2218
      %v2290 = vadd.f32 %v1929, %v2220
      %v2291 = vadd.f32 %v1930, %v2223
      %v2292 = vadd.f32 %v1931, %v2225
      %v2293 = vadd.f32 %v1932, %v2228
      %v2294 = vadd.f32 %v1933, %v2230
      %v2295 = vadd.f32 %v1934, %v2233
      %v2296 = vadd.f32 %v1935, %v2235
      %v2297 = vadd.f32 %v1936, %v2238
      %v2298 = vadd.f32 %v1937, %v2240
      %v2299 = vadd.f32 %v1938, %v2243
      %v2300 = vadd.f32 %v1939, %v2245
      %v2301 = vadd.f32 %v1940, %v2248
      %v2302 = vadd.f32 %v1941, %v2250
      %v2303 = vadd.f32 %v1942, %v2253
      %v2304 = vadd.f32 %v1943, %v2255
      %v2305 = vadd.f32 %v1944, %v2258
      %v2306 = vadd.f32 %v1945, %v2260
      %v2307 = vadd.f32 %v1946, %v2263
      %v2308 = vadd.f32 %v1947, %v2265
      %v2309 = vadd.f32 %v1948, %v2268
      %v2310 = vadd.f32 %v1949, %v2270
      %v2311 = vadd.f32 %v1950, %v2273
      %v2312 = vadd.f32 %v1951, %v2275
      %v2313 = vld [vmem:[%s165 + $0xa0] sm:$0x7]
      %s2314 = scalar_lea.vmem %s1, 28
      %v2315 = vld [vmem:[%s2314] sm:$0xf]
      %v2317 = vunpack.c.l.b16 %v2313
      %v2318 = vpack.c.b16 %v2317, %v2317
      %vm2319 = vsmask.f32 5376
      %v2321 = vshrl.u32 %v2065, 16
      %v2323 = vrot.slane %v2321, 2
      %v2324 = vshll.u32 %v2065, 16
      %v2326 = vrot.slane %v2324, 3
      %v2327 = vor.u32 %v2323, %v2326
      %v2329 = vshrl.u32 %v2066, 16
      %v2331 = vrot.slane %v2329, 2
      %v2332 = vshll.u32 %v2066, 16
      %v2334 = vrot.slane %v2332, 3
      %v2335 = vor.u32 %v2331, %v2334
      %v2336 = vsel %vm2319, %v2327, %v2335
      %v2338 = vshrl.u32 %v2067, 16
      %v2340 = vrot.slane %v2338, 2
      %v2341 = vshll.u32 %v2067, 16
      %v2343 = vrot.slane %v2341, 3
      %v2344 = vor.u32 %v2340, %v2343
      %v2345 = vsel %vm2319, %v2335, %v2344
      %v2347 = vshrl.u32 %v2068, 16
      %v2349 = vrot.slane %v2347, 2
      %v2350 = vshll.u32 %v2068, 16
      %v2352 = vrot.slane %v2350, 3
      %v2353 = vor.u32 %v2349, %v2352
      %v2354 = vsel %vm2319, %v2344, %v2353
      %v2356 = vshrl.u32 %v2069, 16
      %v2358 = vrot.slane %v2356, 2
      %v2359 = vshll.u32 %v2069, 16
      %v2361 = vrot.slane %v2359, 3
      %v2362 = vor.u32 %v2358, %v2361
      %v2363 = vsel %vm2319, %v2353, %v2362
      %v2365 = vshrl.u32 %v2070, 16
      %v2367 = vrot.slane %v2365, 2
      %v2368 = vshll.u32 %v2070, 16
      %v2370 = vrot.slane %v2368, 3
      %v2371 = vor.u32 %v2367, %v2370
      %v2372 = vsel %vm2319, %v2362, %v2371
      %v2374 = vshrl.u32 %v2071, 16
      %v2376 = vrot.slane %v2374, 2
      %v2377 = vshll.u32 %v2071, 16
      %v2379 = vrot.slane %v2377, 3
      %v2380 = vor.u32 %v2376, %v2379
      %v2381 = vsel %vm2319, %v2371, %v2380
      %v2383 = vshrl.u32 %v2072, 16
      %v2385 = vrot.slane %v2383, 2
      %v2386 = vshll.u32 %v2072, 16
      %v2388 = vrot.slane %v2386, 3
      %v2389 = vor.u32 %v2385, %v2388
      %v2390 = vsel %vm2319, %v2380, %v2389
      %v2392 = vshrl.u32 %v2073, 16
      %v2394 = vrot.slane %v2392, 2
      %v2395 = vshll.u32 %v2073, 16
      %v2397 = vrot.slane %v2395, 3
      %v2398 = vor.u32 %v2394, %v2397
      %v2399 = vsel %vm2319, %v2389, %v2398
      %v2401 = vshrl.u32 %v2074, 16
      %v2403 = vrot.slane %v2401, 2
      %v2404 = vshll.u32 %v2074, 16
      %v2406 = vrot.slane %v2404, 3
      %v2407 = vor.u32 %v2403, %v2406
      %v2408 = vsel %vm2319, %v2398, %v2407
      %v2410 = vshrl.u32 %v2075, 16
      %v2412 = vrot.slane %v2410, 2
      %v2413 = vshll.u32 %v2075, 16
      %v2415 = vrot.slane %v2413, 3
      %v2416 = vor.u32 %v2412, %v2415
      %v2417 = vsel %vm2319, %v2407, %v2416
      %v2419 = vshrl.u32 %v2076, 16
      %v2421 = vrot.slane %v2419, 2
      %v2422 = vshll.u32 %v2076, 16
      %v2424 = vrot.slane %v2422, 3
      %v2425 = vor.u32 %v2421, %v2424
      %v2426 = vsel %vm2319, %v2416, %v2425
      %v2428 = vshrl.u32 %v2077, 16
      %v2430 = vrot.slane %v2428, 2
      %v2431 = vshll.u32 %v2077, 16
      %v2433 = vrot.slane %v2431, 3
      %v2434 = vor.u32 %v2430, %v2433
      %v2435 = vsel %vm2319, %v2425, %v2434
      %v2437 = vshrl.u32 %v2078, 16
      %v2439 = vrot.slane %v2437, 2
      %v2440 = vshll.u32 %v2078, 16
      %v2442 = vrot.slane %v2440, 3
      %v2443 = vor.u32 %v2439, %v2442
      %v2444 = vsel %vm2319, %v2434, %v2443
      %v2446 = vshrl.u32 %v2079, 16
      %v2448 = vrot.slane %v2446, 2
      %v2449 = vshll.u32 %v2079, 16
      %v2451 = vrot.slane %v2449, 3
      %v2452 = vor.u32 %v2448, %v2451
      %v2453 = vsel %vm2319, %v2443, %v2452
      %v2455 = vshrl.u32 %v2080, 16
      %v2457 = vrot.slane %v2455, 2
      %v2458 = vshll.u32 %v2080, 16
      %v2460 = vrot.slane %v2458, 3
      %v2461 = vor.u32 %v2457, %v2460
      %v2462 = vsel %vm2319, %v2452, %v2461
      %v2464 = vshrl.u32 %v2081, 16
      %v2466 = vrot.slane %v2464, 2
      %v2467 = vshll.u32 %v2081, 16
      %v2469 = vrot.slane %v2467, 3
      %v2470 = vor.u32 %v2466, %v2469
      %v2471 = vsel %vm2319, %v2461, %v2470
      %v2473 = vshrl.u32 %v2082, 16
      %v2475 = vrot.slane %v2473, 2
      %v2476 = vshll.u32 %v2082, 16
      %v2478 = vrot.slane %v2476, 3
      %v2479 = vor.u32 %v2475, %v2478
      %v2480 = vsel %vm2319, %v2470, %v2479
      %v2482 = vshrl.u32 %v2318, 16
      %v2484 = vrot.slane %v2482, 2
      %v2485 = vshll.u32 %v2318, 16
      %v2487 = vrot.slane %v2485, 3
      %v2488 = vor.u32 %v2484, %v2487
      %v2489 = vsel %vm2319, %v2479, %v2488
      %v2491 = vsel %vm454, %v2336, 0
      %v2494 = vsel %vm454, %v2345, 0
      %v2497 = vsel %vm454, %v2354, 0
      %v2500 = vsel %vm454, %v2363, 0
      %v2503 = vsel %vm454, %v2372, 0
      %v2506 = vsel %vm454, %v2381, 0
      %v2509 = vsel %vm454, %v2390, 0
      %v2512 = vsel %vm454, %v2399, 0
      %v2515 = vsel %vm454, %v2408, 0
      %v2518 = vsel %vm454, %v2417, 0
      %v2521 = vsel %vm454, %v2426, 0
      %v2524 = vsel %vm454, %v2435, 0
      %v2527 = vsel %vm454, %v2444, 0
      %v2530 = vsel %vm454, %v2453, 0
      %v2533 = vsel %vm454, %v2462, 0
      %v2536 = vsel %vm454, %v2471, 0
      %v2539 = vsel %vm454, %v2480, 0
      %v2542 = vsel %vm454, %v2489, 0
      %v2545 = vsel %vm509, %v2315, 0
      %2547 = vmatpush.bf16.msra.mxu0 0
      %2548 = vmatpush.bf16.msra.mxu0 0
      %2549 = vmatpush.bf16.msra.mxu0 0
      %2550 = vmatpush.bf16.msra.mxu0 0
      %2551 = vmatpush.bf16.msra.mxu0 0
      %2552 = vmatpush.bf16.msra.mxu0 0
      %2553 = vmatpush.bf16.msra.mxu0 0
      %2554 = vmatpush.bf16.msra.mxu0 %v2545
      %2555 = vmatmul.bf16.gmra.mxu0 %v2491
      %v2556 = vpop.f32.mrf.mxu0
      %v2557 = vadd.f32 0.0, %v2556
      %v2558 = vpop.f32.mrf.mxu0
      %v2559 = vadd.f32 0.0, %v2558
      %2560 = vmatmul.bf16.gmra.mxu0 %v2494
      %v2561 = vpop.f32.mrf.mxu0
      %v2562 = vadd.f32 0.0, %v2561
      %v2563 = vpop.f32.mrf.mxu0
      %v2564 = vadd.f32 0.0, %v2563
      %2565 = vmatmul.bf16.gmra.mxu0 %v2497
      %v2566 = vpop.f32.mrf.mxu0
      %v2567 = vadd.f32 0.0, %v2566
      %v2568 = vpop.f32.mrf.mxu0
      %v2569 = vadd.f32 0.0, %v2568
      %2570 = vmatmul.bf16.gmra.mxu0 %v2500
      %v2571 = vpop.f32.mrf.mxu0
      %v2572 = vadd.f32 0.0, %v2571
      %v2573 = vpop.f32.mrf.mxu0
      %v2574 = vadd.f32 0.0, %v2573
      %2575 = vmatmul.bf16.gmra.mxu0 %v2503
      %v2576 = vpop.f32.mrf.mxu0
      %v2577 = vadd.f32 0.0, %v2576
      %v2578 = vpop.f32.mrf.mxu0
      %v2579 = vadd.f32 0.0, %v2578
      %2580 = vmatmul.bf16.gmra.mxu0 %v2506
      %v2581 = vpop.f32.mrf.mxu0
      %v2582 = vadd.f32 0.0, %v2581
      %v2583 = vpop.f32.mrf.mxu0
      %v2584 = vadd.f32 0.0, %v2583
      %2585 = vmatmul.bf16.gmra.mxu0 %v2509
      %v2586 = vpop.f32.mrf.mxu0
      %v2587 = vadd.f32 0.0, %v2586
      %v2588 = vpop.f32.mrf.mxu0
      %v2589 = vadd.f32 0.0, %v2588
      %2590 = vmatmul.bf16.gmra.mxu0 %v2512
      %v2591 = vpop.f32.mrf.mxu0
      %v2592 = vadd.f32 0.0, %v2591
      %v2593 = vpop.f32.mrf.mxu0
      %v2594 = vadd.f32 0.0, %v2593
      %2595 = vmatmul.bf16.gmra.mxu0 %v2515
      %v2596 = vpop.f32.mrf.mxu0
      %v2597 = vadd.f32 0.0, %v2596
      %v2598 = vpop.f32.mrf.mxu0
      %v2599 = vadd.f32 0.0, %v2598
      %2600 = vmatmul.bf16.gmra.mxu0 %v2518
      %v2601 = vpop.f32.mrf.mxu0
      %v2602 = vadd.f32 0.0, %v2601
      %v2603 = vpop.f32.mrf.mxu0
      %v2604 = vadd.f32 0.0, %v2603
      %2605 = vmatmul.bf16.gmra.mxu0 %v2521
      %v2606 = vpop.f32.mrf.mxu0
      %v2607 = vadd.f32 0.0, %v2606
      %v2608 = vpop.f32.mrf.mxu0
      %v2609 = vadd.f32 0.0, %v2608
      %2610 = vmatmul.bf16.gmra.mxu0 %v2524
      %v2611 = vpop.f32.mrf.mxu0
      %v2612 = vadd.f32 0.0, %v2611
      %v2613 = vpop.f32.mrf.mxu0
      %v2614 = vadd.f32 0.0, %v2613
      %2615 = vmatmul.bf16.gmra.mxu0 %v2527
      %v2616 = vpop.f32.mrf.mxu0
      %v2617 = vadd.f32 0.0, %v2616
      %v2618 = vpop.f32.mrf.mxu0
      %v2619 = vadd.f32 0.0, %v2618
      %2620 = vmatmul.bf16.gmra.mxu0 %v2530
      %v2621 = vpop.f32.mrf.mxu0
      %v2622 = vadd.f32 0.0, %v2621
      %v2623 = vpop.f32.mrf.mxu0
      %v2624 = vadd.f32 0.0, %v2623
      %2625 = vmatmul.bf16.gmra.mxu0 %v2533
      %v2626 = vpop.f32.mrf.mxu0
      %v2627 = vadd.f32 0.0, %v2626
      %v2628 = vpop.f32.mrf.mxu0
      %v2629 = vadd.f32 0.0, %v2628
      %2630 = vmatmul.bf16.gmra.mxu0 %v2536
      %v2631 = vpop.f32.mrf.mxu0
      %v2632 = vadd.f32 0.0, %v2631
      %v2633 = vpop.f32.mrf.mxu0
      %v2634 = vadd.f32 0.0, %v2633
      %2635 = vmatmul.bf16.gmra.mxu0 %v2539
      %v2636 = vpop.f32.mrf.mxu0
      %v2637 = vadd.f32 0.0, %v2636
      %v2638 = vpop.f32.mrf.mxu0
      %v2639 = vadd.f32 0.0, %v2638
      %2640 = vmatmul.bf16.gmra.mxu0 %v2542
      %v2641 = vpop.f32.mrf.mxu0
      %v2642 = vadd.f32 0.0, %v2641
      %v2643 = vpop.f32.mrf.mxu0
      %v2644 = vadd.f32 0.0, %v2643
      %2645 = vdwg.mxu0
      %v2646 = vadd.f32 %v2277, %v2557
      %v2647 = vadd.f32 %v2278, %v2559
      %v2648 = vadd.f32 %v2279, %v2562
      %v2649 = vadd.f32 %v2280, %v2564
      %v2650 = vadd.f32 %v2281, %v2567
      %v2651 = vadd.f32 %v2282, %v2569
      %v2652 = vadd.f32 %v2283, %v2572
      %v2653 = vadd.f32 %v2284, %v2574
      %v2654 = vadd.f32 %v2285, %v2577
      %v2655 = vadd.f32 %v2286, %v2579
      %v2656 = vadd.f32 %v2287, %v2582
      %v2657 = vadd.f32 %v2288, %v2584
      %v2658 = vadd.f32 %v2289, %v2587
      %v2659 = vadd.f32 %v2290, %v2589
      %v2660 = vadd.f32 %v2291, %v2592
      %v2661 = vadd.f32 %v2292, %v2594
      %v2662 = vadd.f32 %v2293, %v2597
      %v2663 = vadd.f32 %v2294, %v2599
      %v2664 = vadd.f32 %v2295, %v2602
      %v2665 = vadd.f32 %v2296, %v2604
      %v2666 = vadd.f32 %v2297, %v2607
      %v2667 = vadd.f32 %v2298, %v2609
      %v2668 = vadd.f32 %v2299, %v2612
      %v2669 = vadd.f32 %v2300, %v2614
      %v2670 = vadd.f32 %v2301, %v2617
      %v2671 = vadd.f32 %v2302, %v2619
      %v2672 = vadd.f32 %v2303, %v2622
      %v2673 = vadd.f32 %v2304, %v2624
      %v2674 = vadd.f32 %v2305, %v2627
      %v2675 = vadd.f32 %v2306, %v2629
      %v2676 = vadd.f32 %v2307, %v2632
      %v2677 = vadd.f32 %v2308, %v2634
      %v2678 = vadd.f32 %v2309, %v2637
      %v2679 = vadd.f32 %v2310, %v2639
      %v2680 = vadd.f32 %v2311, %v2642
      %v2681 = vadd.f32 %v2312, %v2644
      %v2682 = vld [vmem:[%s165 + $0x10] sm:$0x8]
      %s2683 = scalar_lea.vmem %s1, 32
      %v2684 = vld [vmem:[%s2683] sm:$0xf]
      %v2686 = vunpack.c.l.b16 %v2682
      %v2687 = vpack.c.b16 %v2029, %v2686
      %vm2688 = vcmask 1044480
      %v2689 = vrot.slane %v2687, 3
      %v2690 = vrot.slane %v2066, 3
      %v2691 = vsel %vm2688, %v2689, %v2690
      %v2692 = vrot.slane %v2067, 3
      %v2693 = vsel %vm2688, %v2690, %v2692
      %v2694 = vrot.slane %v2068, 3
      %v2695 = vsel %vm2688, %v2692, %v2694
      %v2696 = vrot.slane %v2069, 3
      %v2697 = vsel %vm2688, %v2694, %v2696
      %v2698 = vrot.slane %v2070, 3
      %v2699 = vsel %vm2688, %v2696, %v2698
      %v2700 = vrot.slane %v2071, 3
      %v2701 = vsel %vm2688, %v2698, %v2700
      %v2702 = vrot.slane %v2072, 3
      %v2703 = vsel %vm2688, %v2700, %v2702
      %v2704 = vrot.slane %v2073, 3
      %v2705 = vsel %vm2688, %v2702, %v2704
      %v2706 = vrot.slane %v2074, 3
      %v2707 = vsel %vm2688, %v2704, %v2706
      %v2708 = vrot.slane %v2075, 3
      %v2709 = vsel %vm2688, %v2706, %v2708
      %v2710 = vrot.slane %v2076, 3
      %v2711 = vsel %vm2688, %v2708, %v2710
      %v2712 = vrot.slane %v2077, 3
      %v2713 = vsel %vm2688, %v2710, %v2712
      %v2714 = vrot.slane %v2078, 3
      %v2715 = vsel %vm2688, %v2712, %v2714
      %v2716 = vrot.slane %v2079, 3
      %v2717 = vsel %vm2688, %v2714, %v2716
      %v2718 = vrot.slane %v2080, 3
      %v2719 = vsel %vm2688, %v2716, %v2718
      %v2720 = vrot.slane %v2081, 3
      %v2721 = vsel %vm2688, %v2718, %v2720
      %v2722 = vrot.slane %v2082, 3
      %v2723 = vsel %vm2688, %v2720, %v2722
      %v2724 = vrot.slane %v2318, 3
      %v2725 = vsel %vm2688, %v2722, %v2724
      %v2727 = vsel %vm454, %v2691, 0
      %v2730 = vsel %vm454, %v2693, 0
      %v2733 = vsel %vm454, %v2695, 0
      %v2736 = vsel %vm454, %v2697, 0
      %v2739 = vsel %vm454, %v2699, 0
      %v2742 = vsel %vm454, %v2701, 0
      %v2745 = vsel %vm454, %v2703, 0
      %v2748 = vsel %vm454, %v2705, 0
      %v2751 = vsel %vm454, %v2707, 0
      %v2754 = vsel %vm454, %v2709, 0
      %v2757 = vsel %vm454, %v2711, 0
      %v2760 = vsel %vm454, %v2713, 0
      %v2763 = vsel %vm454, %v2715, 0
      %v2766 = vsel %vm454, %v2717, 0
      %v2769 = vsel %vm454, %v2719, 0
      %v2772 = vsel %vm454, %v2721, 0
      %v2775 = vsel %vm454, %v2723, 0
      %v2778 = vsel %vm454, %v2725, 0
      %v2781 = vsel %vm509, %v2684, 0
      %2783 = vmatpush.bf16.msra.mxu0 0
      %2784 = vmatpush.bf16.msra.mxu0 0
      %2785 = vmatpush.bf16.msra.mxu0 0
      %2786 = vmatpush.bf16.msra.mxu0 0
      %2787 = vmatpush.bf16.msra.mxu0 0
      %2788 = vmatpush.bf16.msra.mxu0 0
      %2789 = vmatpush.bf16.msra.mxu0 0
      %2790 = vmatpush.bf16.msra.mxu0 %v2781
      %2791 = vmatmul.bf16.gmra.mxu0 %v2727
      %v2792 = vpop.f32.mrf.mxu0
      %v2793 = vadd.f32 0.0, %v2792
      %v2794 = vpop.f32.mrf.mxu0
      %v2795 = vadd.f32 0.0, %v2794
      %2796 = vmatmul.bf16.gmra.mxu0 %v2730
      %v2797 = vpop.f32.mrf.mxu0
      %v2798 = vadd.f32 0.0, %v2797
      %v2799 = vpop.f32.mrf.mxu0
      %v2800 = vadd.f32 0.0, %v2799
      %2801 = vmatmul.bf16.gmra.mxu0 %v2733
      %v2802 = vpop.f32.mrf.mxu0
      %v2803 = vadd.f32 0.0, %v2802
      %v2804 = vpop.f32.mrf.mxu0
      %v2805 = vadd.f32 0.0, %v2804
      %2806 = vmatmul.bf16.gmra.mxu0 %v2736
      %v2807 = vpop.f32.mrf.mxu0
      %v2808 = vadd.f32 0.0, %v2807
      %v2809 = vpop.f32.mrf.mxu0
      %v2810 = vadd.f32 0.0, %v2809
      %2811 = vmatmul.bf16.gmra.mxu0 %v2739
      %v2812 = vpop.f32.mrf.mxu0
      %v2813 = vadd.f32 0.0, %v2812
      %v2814 = vpop.f32.mrf.mxu0
      %v2815 = vadd.f32 0.0, %v2814
      %2816 = vmatmul.bf16.gmra.mxu0 %v2742
      %v2817 = vpop.f32.mrf.mxu0
      %v2818 = vadd.f32 0.0, %v2817
      %v2819 = vpop.f32.mrf.mxu0
      %v2820 = vadd.f32 0.0, %v2819
      %2821 = vmatmul.bf16.gmra.mxu0 %v2745
      %v2822 = vpop.f32.mrf.mxu0
      %v2823 = vadd.f32 0.0, %v2822
      %v2824 = vpop.f32.mrf.mxu0
      %v2825 = vadd.f32 0.0, %v2824
      %2826 = vmatmul.bf16.gmra.mxu0 %v2748
      %v2827 = vpop.f32.mrf.mxu0
      %v2828 = vadd.f32 0.0, %v2827
      %v2829 = vpop.f32.mrf.mxu0
      %v2830 = vadd.f32 0.0, %v2829
      %2831 = vmatmul.bf16.gmra.mxu0 %v2751
      %v2832 = vpop.f32.mrf.mxu0
      %v2833 = vadd.f32 0.0, %v2832
      %v2834 = vpop.f32.mrf.mxu0
      %v2835 = vadd.f32 0.0, %v2834
      %2836 = vmatmul.bf16.gmra.mxu0 %v2754
      %v2837 = vpop.f32.mrf.mxu0
      %v2838 = vadd.f32 0.0, %v2837
      %v2839 = vpop.f32.mrf.mxu0
      %v2840 = vadd.f32 0.0, %v2839
      %2841 = vmatmul.bf16.gmra.mxu0 %v2757
      %v2842 = vpop.f32.mrf.mxu0
      %v2843 = vadd.f32 0.0, %v2842
      %v2844 = vpop.f32.mrf.mxu0
      %v2845 = vadd.f32 0.0, %v2844
      %2846 = vmatmul.bf16.gmra.mxu0 %v2760
      %v2847 = vpop.f32.mrf.mxu0
      %v2848 = vadd.f32 0.0, %v2847
      %v2849 = vpop.f32.mrf.mxu0
      %v2850 = vadd.f32 0.0, %v2849
      %2851 = vmatmul.bf16.gmra.mxu0 %v2763
      %v2852 = vpop.f32.mrf.mxu0
      %v2853 = vadd.f32 0.0, %v2852
      %v2854 = vpop.f32.mrf.mxu0
      %v2855 = vadd.f32 0.0, %v2854
      %2856 = vmatmul.bf16.gmra.mxu0 %v2766
      %v2857 = vpop.f32.mrf.mxu0
      %v2858 = vadd.f32 0.0, %v2857
      %v2859 = vpop.f32.mrf.mxu0
      %v2860 = vadd.f32 0.0, %v2859
      %2861 = vmatmul.bf16.gmra.mxu0 %v2769
      %v2862 = vpop.f32.mrf.mxu0
      %v2863 = vadd.f32 0.0, %v2862
      %v2864 = vpop.f32.mrf.mxu0
      %v2865 = vadd.f32 0.0, %v2864
      %2866 = vmatmul.bf16.gmra.mxu0 %v2772
      %v2867 = vpop.f32.mrf.mxu0
      %v2868 = vadd.f32 0.0, %v2867
      %v2869 = vpop.f32.mrf.mxu0
      %v2870 = vadd.f32 0.0, %v2869
      %2871 = vmatmul.bf16.gmra.mxu0 %v2775
      %v2872 = vpop.f32.mrf.mxu0
      %v2873 = vadd.f32 0.0, %v2872
      %v2874 = vpop.f32.mrf.mxu0
      %v2875 = vadd.f32 0.0, %v2874
      %2876 = vmatmul.bf16.gmra.mxu0 %v2778
      %v2877 = vpop.f32.mrf.mxu0
      %v2878 = vadd.f32 0.0, %v2877
      %v2879 = vpop.f32.mrf.mxu0
      %v2880 = vadd.f32 0.0, %v2879
      %2881 = vdwg.mxu0
      %v2882 = vadd.f32 %v2646, %v2793
      %v2883 = vadd.f32 %v2647, %v2795
      %v2884 = vadd.f32 %v2648, %v2798
      %v2885 = vadd.f32 %v2649, %v2800
      %v2886 = vadd.f32 %v2650, %v2803
      %v2887 = vadd.f32 %v2651, %v2805
      %v2888 = vadd.f32 %v2652, %v2808
      %v2889 = vadd.f32 %v2653, %v2810
      %v2890 = vadd.f32 %v2654, %v2813
      %v2891 = vadd.f32 %v2655, %v2815
      %v2892 = vadd.f32 %v2656, %v2818
      %v2893 = vadd.f32 %v2657, %v2820
      %v2894 = vadd.f32 %v2658, %v2823
      %v2895 = vadd.f32 %v2659, %v2825
      %v2896 = vadd.f32 %v2660, %v2828
      %v2897 = vadd.f32 %v2661, %v2830
      %v2898 = vadd.f32 %v2662, %v2833
      %v2899 = vadd.f32 %v2663, %v2835
      %v2900 = vadd.f32 %v2664, %v2838
      %v2901 = vadd.f32 %v2665, %v2840
      %v2902 = vadd.f32 %v2666, %v2843
      %v2903 = vadd.f32 %v2667, %v2845
      %v2904 = vadd.f32 %v2668, %v2848
      %v2905 = vadd.f32 %v2669, %v2850
      %v2906 = vadd.f32 %v2670, %v2853
      %v2907 = vadd.f32 %v2671, %v2855
      %v2908 = vadd.f32 %v2672, %v2858
      %v2909 = vadd.f32 %v2673, %v2860
      %v2910 = vadd.f32 %v2674, %v2863
      %v2911 = vadd.f32 %v2675, %v2865
      %v2912 = vadd.f32 %v2676, %v2868
      %v2913 = vadd.f32 %v2677, %v2870
      %v2914 = vadd.f32 %v2678, %v2873
      %v2915 = vadd.f32 %v2679, %v2875
      %v2916 = vadd.f32 %v2680, %v2878
      %v2917 = vadd.f32 %v2681, %v2880
      %v2918 = vld [vmem:[%s2] sm:$0x1]
      %v2920 = vperm.slane %v2918, 0
      %v2922 = vadd.f32 %v2882, %v2920
      %v2923 = vadd.f32 %v2883, %v2920
      %v2924 = vadd.f32 %v2884, %v2920
      %v2925 = vadd.f32 %v2885, %v2920
      %v2926 = vadd.f32 %v2886, %v2920
      %v2927 = vadd.f32 %v2887, %v2920
      %v2928 = vadd.f32 %v2888, %v2920
      %v2929 = vadd.f32 %v2889, %v2920
      %v2930 = vadd.f32 %v2890, %v2920
      %v2931 = vadd.f32 %v2891, %v2920
      %v2932 = vadd.f32 %v2892, %v2920
      %v2933 = vadd.f32 %v2893, %v2920
      %v2934 = vadd.f32 %v2894, %v2920
      %v2935 = vadd.f32 %v2895, %v2920
      %v2936 = vadd.f32 %v2896, %v2920
      %v2937 = vadd.f32 %v2897, %v2920
      %v2938 = vadd.f32 %v2898, %v2920
      %v2939 = vadd.f32 %v2899, %v2920
      %v2940 = vadd.f32 %v2900, %v2920
      %v2941 = vadd.f32 %v2901, %v2920
      %v2942 = vadd.f32 %v2902, %v2920
      %v2943 = vadd.f32 %v2903, %v2920
      %v2944 = vadd.f32 %v2904, %v2920
      %v2945 = vadd.f32 %v2905, %v2920
      %v2946 = vadd.f32 %v2906, %v2920
      %v2947 = vadd.f32 %v2907, %v2920
      %v2948 = vadd.f32 %v2908, %v2920
      %v2949 = vadd.f32 %v2909, %v2920
      %v2950 = vadd.f32 %v2910, %v2920
      %v2951 = vadd.f32 %v2911, %v2920
      %v2952 = vadd.f32 %v2912, %v2920
      %v2953 = vadd.f32 %v2913, %v2920
      %v2954 = vadd.f32 %v2914, %v2920
      %v2955 = vadd.f32 %v2915, %v2920
      %v2956 = vadd.f32 %v2916, %v2920
      %v2957 = vadd.f32 %v2917, %v2920
      %v2958 = vsub.f32 0.0, %v2922
      %v2959 = vsub.f32 0.0, %v2923
      %v2960 = vsub.f32 0.0, %v2924
      %v2961 = vsub.f32 0.0, %v2925
      %v2962 = vsub.f32 0.0, %v2926
      %v2963 = vsub.f32 0.0, %v2927
      %v2964 = vsub.f32 0.0, %v2928
      %v2965 = vsub.f32 0.0, %v2929
      %v2966 = vsub.f32 0.0, %v2930
      %v2967 = vsub.f32 0.0, %v2931
      %v2968 = vsub.f32 0.0, %v2932
      %v2969 = vsub.f32 0.0, %v2933
      %v2970 = vsub.f32 0.0, %v2934
      %v2971 = vsub.f32 0.0, %v2935
      %v2972 = vsub.f32 0.0, %v2936
      %v2973 = vsub.f32 0.0, %v2937
      %v2974 = vsub.f32 0.0, %v2938
      %v2975 = vsub.f32 0.0, %v2939
      %v2976 = vsub.f32 0.0, %v2940
      %v2977 = vsub.f32 0.0, %v2941
      %v2978 = vsub.f32 0.0, %v2942
      %v2979 = vsub.f32 0.0, %v2943
      %v2980 = vsub.f32 0.0, %v2944
      %v2981 = vsub.f32 0.0, %v2945
      %v2982 = vsub.f32 0.0, %v2946
      %v2983 = vsub.f32 0.0, %v2947
      %v2984 = vsub.f32 0.0, %v2948
      %v2985 = vsub.f32 0.0, %v2949
      %v2986 = vsub.f32 0.0, %v2950
      %v2987 = vsub.f32 0.0, %v2951
      %v2988 = vsub.f32 0.0, %v2952
      %v2989 = vsub.f32 0.0, %v2953
      %v2990 = vsub.f32 0.0, %v2954
      %v2991 = vsub.f32 0.0, %v2955
      %v2992 = vsub.f32 0.0, %v2956
      %v2993 = vsub.f32 0.0, %v2957
      %v2994 = vmul.f32 %v2958, 1.442695
      %v2995 = vpow.pop %v2994
      %v2996 = vmul.f32 %v2959, 1.442695
      %v2997 = vpow.pop %v2996
      %v2998 = vmul.f32 %v2960, 1.442695
      %v2999 = vpow.pop %v2998
      %v3000 = vmul.f32 %v2961, 1.442695
      %v3001 = vpow.pop %v3000
      %v3002 = vmul.f32 %v2962, 1.442695
      %v3003 = vpow.pop %v3002
      %v3004 = vmul.f32 %v2963, 1.442695
      %v3005 = vpow.pop %v3004
      %v3006 = vmul.f32 %v2964, 1.442695
      %v3007 = vpow.pop %v3006
      %v3008 = vmul.f32 %v2965, 1.442695
      %v3009 = vpow.pop %v3008
      %v3010 = vmul.f32 %v2966, 1.442695
      %v3011 = vpow.pop %v3010
      %v3012 = vmul.f32 %v2967, 1.442695
      %v3013 = vpow.pop %v3012
      %v3014 = vmul.f32 %v2968, 1.442695
      %v3015 = vpow.pop %v3014
      %v3016 = vmul.f32 %v2969, 1.442695
      %v3017 = vpow.pop %v3016
      %v3018 = vmul.f32 %v2970, 1.442695
      %v3019 = vpow.pop %v3018
      %v3020 = vmul.f32 %v2971, 1.442695
      %v3021 = vpow.pop %v3020
      %v3022 = vmul.f32 %v2972, 1.442695
      %v3023 = vpow.pop %v3022
      %v3024 = vmul.f32 %v2973, 1.442695
      %v3025 = vpow.pop %v3024
      %v3026 = vmul.f32 %v2974, 1.442695
      %v3027 = vpow.pop %v3026
      %v3028 = vmul.f32 %v2975, 1.442695
      %v3029 = vpow.pop %v3028
      %v3030 = vmul.f32 %v2976, 1.442695
      %v3031 = vpow.pop %v3030
      %v3032 = vmul.f32 %v2977, 1.442695
      %v3033 = vpow.pop %v3032
      %v3034 = vmul.f32 %v2978, 1.442695
      %v3035 = vpow.pop %v3034
      %v3036 = vmul.f32 %v2979, 1.442695
      %v3037 = vpow.pop %v3036
      %v3038 = vmul.f32 %v2980, 1.442695
      %v3039 = vpow.pop %v3038
      %v3040 = vmul.f32 %v2981, 1.442695
      %v3041 = vpow.pop %v3040
      %v3042 = vmul.f32 %v2982, 1.442695
      %v3043 = vpow.pop %v3042
      %v3044 = vmul.f32 %v2983, 1.442695
      %v3045 = vpow.pop %v3044
      %v3046 = vmul.f32 %v2984, 1.442695
      %v3047 = vpow.pop %v3046
      %v3048 = vmul.f32 %v2985, 1.442695
      %v3049 = vpow.pop %v3048
      %v3050 = vmul.f32 %v2986, 1.442695
      %v3051 = vpow.pop %v3050
      %v3052 = vmul.f32 %v2987, 1.442695
      %v3053 = vpow.pop %v3052
      %v3054 = vmul.f32 %v2988, 1.442695
      %v3055 = vpow.pop %v3054
      %v3056 = vmul.f32 %v2989, 1.442695
      %v3057 = vpow.pop %v3056
      %v3058 = vmul.f32 %v2990, 1.442695
      %v3059 = vpow.pop %v3058
      %v3060 = vmul.f32 %v2991, 1.442695
      %v3061 = vpow.pop %v3060
      %v3062 = vmul.f32 %v2992, 1.442695
      %v3063 = vpow.pop %v3062
      %v3064 = vmul.f32 %v2993, 1.442695
      %v3065 = vpow.pop %v3064
      %v3066 = vadd.f32 %v2995, 1.0
      %v3067 = vadd.f32 %v2997, 1.0
      %v3068 = vadd.f32 %v2999, 1.0
      %v3069 = vadd.f32 %v3001, 1.0
      %v3070 = vadd.f32 %v3003, 1.0
      %v3071 = vadd.f32 %v3005, 1.0
      %v3072 = vadd.f32 %v3007, 1.0
      %v3073 = vadd.f32 %v3009, 1.0
      %v3074 = vadd.f32 %v3011, 1.0
      %v3075 = vadd.f32 %v3013, 1.0
      %v3076 = vadd.f32 %v3015, 1.0
      %v3077 = vadd.f32 %v3017, 1.0
      %v3078 = vadd.f32 %v3019, 1.0
      %v3079 = vadd.f32 %v3021, 1.0
      %v3080 = vadd.f32 %v3023, 1.0
      %v3081 = vadd.f32 %v3025, 1.0
      %v3082 = vadd.f32 %v3027, 1.0
      %v3083 = vadd.f32 %v3029, 1.0
      %v3084 = vadd.f32 %v3031, 1.0
      %v3085 = vadd.f32 %v3033, 1.0
      %v3086 = vadd.f32 %v3035, 1.0
      %v3087 = vadd.f32 %v3037, 1.0
      %v3088 = vadd.f32 %v3039, 1.0
      %v3089 = vadd.f32 %v3041, 1.0
      %v3090 = vadd.f32 %v3043, 1.0
      %v3091 = vadd.f32 %v3045, 1.0
      %v3092 = vadd.f32 %v3047, 1.0
      %v3093 = vadd.f32 %v3049, 1.0
      %v3094 = vadd.f32 %v3051, 1.0
      %v3095 = vadd.f32 %v3053, 1.0
      %v3096 = vadd.f32 %v3055, 1.0
      %v3097 = vadd.f32 %v3057, 1.0
      %v3098 = vadd.f32 %v3059, 1.0
      %v3099 = vadd.f32 %v3061, 1.0
      %v3100 = vadd.f32 %v3063, 1.0
      %v3101 = vadd.f32 %v3065, 1.0
      %v3102 = vrcp.pop %v3066
      %v3103 = vrcp.pop %v3067
      %v3104 = vrcp.pop %v3068
      %v3105 = vrcp.pop %v3069
      %v3106 = vrcp.pop %v3070
      %v3107 = vrcp.pop %v3071
      %v3108 = vrcp.pop %v3072
      %v3109 = vrcp.pop %v3073
      %v3110 = vrcp.pop %v3074
      %v3111 = vrcp.pop %v3075
      %v3112 = vrcp.pop %v3076
      %v3113 = vrcp.pop %v3077
      %v3114 = vrcp.pop %v3078
      %v3115 = vrcp.pop %v3079
      %v3116 = vrcp.pop %v3080
      %v3117 = vrcp.pop %v3081
      %v3118 = vrcp.pop %v3082
      %v3119 = vrcp.pop %v3083
      %v3120 = vrcp.pop %v3084
      %v3121 = vrcp.pop %v3085
      %v3122 = vrcp.pop %v3086
      %v3123 = vrcp.pop %v3087
      %v3124 = vrcp.pop %v3088
      %v3125 = vrcp.pop %v3089
      %v3126 = vrcp.pop %v3090
      %v3127 = vrcp.pop %v3091
      %v3128 = vrcp.pop %v3092
      %v3129 = vrcp.pop %v3093
      %v3130 = vrcp.pop %v3094
      %v3131 = vrcp.pop %v3095
      %v3132 = vrcp.pop %v3096
      %v3133 = vrcp.pop %v3097
      %v3134 = vrcp.pop %v3098
      %v3135 = vrcp.pop %v3099
      %v3136 = vrcp.pop %v3100
      %v3137 = vrcp.pop %v3101
      %v3138 = vmul.f32 %v2922, %v3102
      %v3139 = vmul.f32 %v2923, %v3103
      %v3140 = vmul.f32 %v2924, %v3104
      %v3141 = vmul.f32 %v2925, %v3105
      %v3142 = vmul.f32 %v2926, %v3106
      %v3143 = vmul.f32 %v2927, %v3107
      %v3144 = vmul.f32 %v2928, %v3108
      %v3145 = vmul.f32 %v2929, %v3109
      %v3146 = vmul.f32 %v2930, %v3110
      %v3147 = vmul.f32 %v2931, %v3111
      %v3148 = vmul.f32 %v2932, %v3112
      %v3149 = vmul.f32 %v2933, %v3113
      %v3150 = vmul.f32 %v2934, %v3114
      %v3151 = vmul.f32 %v2935, %v3115
      %v3152 = vmul.f32 %v2936, %v3116
      %v3153 = vmul.f32 %v2937, %v3117
      %v3154 = vmul.f32 %v2938, %v3118
      %v3155 = vmul.f32 %v2939, %v3119
      %v3156 = vmul.f32 %v2940, %v3120
      %v3157 = vmul.f32 %v2941, %v3121
      %v3158 = vmul.f32 %v2942, %v3122
      %v3159 = vmul.f32 %v2943, %v3123
      %v3160 = vmul.f32 %v2944, %v3124
      %v3161 = vmul.f32 %v2945, %v3125
      %v3162 = vmul.f32 %v2946, %v3126
      %v3163 = vmul.f32 %v2947, %v3127
      %v3164 = vmul.f32 %v2948, %v3128
      %v3165 = vmul.f32 %v2949, %v3129
      %v3166 = vmul.f32 %v2950, %v3130
      %v3167 = vmul.f32 %v2951, %v3131
      %v3168 = vmul.f32 %v2952, %v3132
      %v3169 = vmul.f32 %v2953, %v3133
      %v3170 = vmul.f32 %v2954, %v3134
      %v3171 = vmul.f32 %v2955, %v3135
      %v3172 = vmul.f32 %v2956, %v3136
      %v3173 = vmul.f32 %v2957, %v3137
      %v3174 = vpack.c.bf16 %v3138, %v3138
      %v3175 = vpack.c.bf16 %v3139, %v3139
      %v3176 = vpack.c.bf16 %v3140, %v3140
      %v3177 = vpack.c.bf16 %v3141, %v3141
      %v3178 = vpack.c.bf16 %v3142, %v3142
      %v3179 = vpack.c.bf16 %v3143, %v3143
      %v3180 = vpack.c.bf16 %v3144, %v3144
      %v3181 = vpack.c.bf16 %v3145, %v3145
      %v3182 = vpack.c.bf16 %v3146, %v3146
      %v3183 = vpack.c.bf16 %v3147, %v3147
      %v3184 = vpack.c.bf16 %v3148, %v3148
      %v3185 = vpack.c.bf16 %v3149, %v3149
      %v3186 = vpack.c.bf16 %v3150, %v3150
      %v3187 = vpack.c.bf16 %v3151, %v3151
      %v3188 = vpack.c.bf16 %v3152, %v3152
      %v3189 = vpack.c.bf16 %v3153, %v3153
      %v3190 = vpack.c.bf16 %v3154, %v3154
      %v3191 = vpack.c.bf16 %v3155, %v3155
      %v3192 = vpack.c.bf16 %v3156, %v3156
      %v3193 = vpack.c.bf16 %v3157, %v3157
      %v3194 = vpack.c.bf16 %v3158, %v3158
      %v3195 = vpack.c.bf16 %v3159, %v3159
      %v3196 = vpack.c.bf16 %v3160, %v3160
      %v3197 = vpack.c.bf16 %v3161, %v3161
      %v3198 = vpack.c.bf16 %v3162, %v3162
      %v3199 = vpack.c.bf16 %v3163, %v3163
      %v3200 = vpack.c.bf16 %v3164, %v3164
      %v3201 = vpack.c.bf16 %v3165, %v3165
      %v3202 = vpack.c.bf16 %v3166, %v3166
      %v3203 = vpack.c.bf16 %v3167, %v3167
      %v3204 = vpack.c.bf16 %v3168, %v3168
      %v3205 = vpack.c.bf16 %v3169, %v3169
      %v3206 = vpack.c.bf16 %v3170, %v3170
      %v3207 = vpack.c.bf16 %v3171, %v3171
      %v3208 = vpack.c.bf16 %v3172, %v3172
      %v3209 = vpack.c.bf16 %v3173, %v3173
      %vm3210 = vcmask 27648
      %3211 = vst.msk [vmem:[%s170] sm:$0xf] %vm3210, %v3174
      %3212 = vst.msk [vmem:[%s170 + $0x4] sm:$0xf] %vm3210, %v3175
      %3213 = vst.msk [vmem:[%s170 + $0x8] sm:$0xf] %vm3210, %v3176
      %3214 = vst.msk [vmem:[%s170 + $0xc] sm:$0xf] %vm3210, %v3177
      %3215 = vst.msk [vmem:[%s170 + $0x10] sm:$0xf] %vm3210, %v3178
      %3216 = vst.msk [vmem:[%s170 + $0x14] sm:$0xf] %vm3210, %v3179
      %3217 = vst.msk [vmem:[%s170 + $0x18] sm:$0xf] %vm3210, %v3180
      %3218 = vst.msk [vmem:[%s170 + $0x1c] sm:$0xf] %vm3210, %v3181
      %3219 = vst.msk [vmem:[%s170 + $0x20] sm:$0xf] %vm3210, %v3182
      %3220 = vst.msk [vmem:[%s170 + $0x24] sm:$0xf] %vm3210, %v3183
      %3221 = vst.msk [vmem:[%s170 + $0x28] sm:$0xf] %vm3210, %v3184
      %3222 = vst.msk [vmem:[%s170 + $0x2c] sm:$0xf] %vm3210, %v3185
      %3223 = vst.msk [vmem:[%s170 + $0x30] sm:$0xf] %vm3210, %v3186
      %3224 = vst.msk [vmem:[%s170 + $0x34] sm:$0xf] %vm3210, %v3187
      %3225 = vst.msk [vmem:[%s170 + $0x38] sm:$0xf] %vm3210, %v3188
      %3226 = vst.msk [vmem:[%s170 + $0x3c] sm:$0xf] %vm3210, %v3189
      %3227 = vst.msk [vmem:[%s170 + $0x40] sm:$0xf] %vm3210, %v3190
      %3228 = vst.msk [vmem:[%s170 + $0x44] sm:$0xf] %vm3210, %v3191
      %3229 = vst.msk [vmem:[%s170 + $0x48] sm:$0xf] %vm3210, %v3192
      %3230 = vst.msk [vmem:[%s170 + $0x4c] sm:$0xf] %vm3210, %v3193
      %3231 = vst.msk [vmem:[%s170 + $0x50] sm:$0xf] %vm3210, %v3194
      %3232 = vst.msk [vmem:[%s170 + $0x54] sm:$0xf] %vm3210, %v3195
      %3233 = vst.msk [vmem:[%s170 + $0x58] sm:$0xf] %vm3210, %v3196
      %3234 = vst.msk [vmem:[%s170 + $0x5c] sm:$0xf] %vm3210, %v3197
      %3235 = vst.msk [vmem:[%s170 + $0x60] sm:$0xf] %vm3210, %v3198
      %3236 = vst.msk [vmem:[%s170 + $0x64] sm:$0xf] %vm3210, %v3199
      %3237 = vst.msk [vmem:[%s170 + $0x68] sm:$0xf] %vm3210, %v3200
      %3238 = vst.msk [vmem:[%s170 + $0x6c] sm:$0xf] %vm3210, %v3201
      %3239 = vst.msk [vmem:[%s170 + $0x70] sm:$0xf] %vm3210, %v3202
      %3240 = vst.msk [vmem:[%s170 + $0x74] sm:$0xf] %vm3210, %v3203
      %3241 = vst.msk [vmem:[%s170 + $0x78] sm:$0xf] %vm3210, %v3204
      %3242 = vst.msk [vmem:[%s170 + $0x7c] sm:$0xf] %vm3210, %v3205
      %3243 = vst.msk [vmem:[%s170 + $0x80] sm:$0xf] %vm3210, %v3206
      %3244 = vst.msk [vmem:[%s170 + $0x84] sm:$0xf] %vm3210, %v3207
      %3245 = vst.msk [vmem:[%s170 + $0x88] sm:$0xf] %vm3210, %v3208
      %3246 = vst.msk [vmem:[%s170 + $0x8c] sm:$0xf] %vm3210, %v3209
      %p3247 = scmp.lt.s32.totalorder %s14, 1
      %s3248 = scalar_select %p3247, %s14, 1
      %s3249 = smul.addr %s3248, 36
      %s3250 = smul.addr %s3249, 4
      %s3251 = scalar_lea.vmem %s3, %s3250
      // Predicated region
      $region33: #{elan_neck_forward.7} parent=31 // pred_check
        %p3252 = pneg %p100
      $region34: #{elan_neck_forward.7} parent=31 // pred_check_branch
        %3254 = sbr.rel (%p3252) target = $region36
      $region35: #{elan_neck_forward.7} parent=31 // pred_region
        _
      $region36: #{elan_neck_forward.7} parent=31 // pred_fallthru
        _
    $region32: #{elan_neck_forward.7} parent=5 // pred_fallthru
      _
    %p3255 = scmp.le.s32.totalorder 2, %s9
    // Predicated region
    $region37: #{elan_neck_forward.7} parent=5 // pred_check
      %p3256 = pneg %p3255
    $region38: #{elan_neck_forward.7} parent=5 // pred_check_branch
      %3258 = sbr.rel (%p3256) target = $region40
    $region39: #{elan_neck_forward.7} parent=5 // pred_region
      %s3259 = ssub.s32 %s9, 2
      // Predicated region
      $region41: #{elan_neck_forward.7} parent=39 // pred_check
        %p3260 = pneg %p106
      $region42: #{elan_neck_forward.7} parent=39 // pred_check_branch
        %3262 = sbr.rel (%p3260) target = $region44
      $region43: #{elan_neck_forward.7} parent=39 // pred_region
        %p3263 = scmp.lt.s32.totalorder %s15, 1
        %s3264 = scalar_select %p3263, %s15, 1
        %s3265 = smul.addr %s3264, 36
        %s3266 = smul.addr %s3265, 4
        %s3267 = scalar_lea.vmem %s3, %s3266
      $region44: #{elan_neck_forward.7} parent=39 // pred_fallthru
        _
    $region40: #{elan_neck_forward.7} parent=5 // pred_fallthru
      _
  $region6: #{elan_neck_forward.7} parent=0 // loop_footer
    %s13 = sadd.s32 1, %s9
  $region7: #{elan_neck_forward.7} parent=0 // loop_footer_branch
    %8 = sbr.rel target = $region3
  $region8: #{elan_neck_forward.7} parent=0 // loop_exit
    _

// kernel: elan_neck_forward.8
$region0: #{elan_neck_forward.8}
  #allocation0 [shape = 'u32[]', space=smem, size = 0x4, offset = 0x4, fixed_abs, tag = 'smem constant byte address 0x4 - core index']
  #allocation1 [shape = 'u32[72,128]{1,0:T(1,128)}', space=vmem, size = 0x9000, scoped, tag = 'internal scratch']
  %s0 = inlined_call_operand.vmem [shape: bf16[2,328,4], index: 0, kind: input, shape index: {}]
  %s1 = inlined_call_operand.vmem [shape: bf16[9,4,4], index: 1, kind: input, shape index: {}]
  %s2 = inlined_call_operand.vmem [shape: f32[1,4], index: 2, kind: input, shape index: {}]
  %s3 = inlined_call_operand.vmem [shape: bf16[2,288,4], index: 3, kind: output, shape index: {}]
  %s4 = sld [smem:[#allocation0]]
  $region45: #{elan_neck_forward.8} parent=0
    _
  %s6 = ssub.s32 1, %s4
  %s7 = scalar_select 0, %s6, %s4
  loop: start=0, step=1, limit=4
  $region2: #{elan_neck_forward.8} parent=0 // loop_pre_header
    _
  $region3: #{elan_neck_forward.8} parent=0 // loop_header
    %s9 = sphi 0, %s13
    %p10 = scmp.ge.s32.totalorder %s9, 4
    %s19 = sphi 0, %s21
    %s22 = sphi 0, %s19
    %s23 = sphi 0, %s22
    %s39 = sphi 0, %s23
    %s43 = sphi 0, %s43
    %s45 = sphi 0, %s43
    %s46 = sphi 0, %s45
    %s60 = sphi 0, %s46
    %s64 = sphi 0, %s64
    %s66 = sphi 0, %s64
    %s67 = sphi 0, %s66
    %s81 = sphi 0, %s67
    %s87 = sphi 0, %s89
    %s90 = sphi 0, %s87
    %s91 = sphi 0, %s90
    %s107 = sphi 0, %s91
  $region4: #{elan_neck_forward.8} parent=0 // loop_header_branch
    %12 = sbr.rel (%p10) target = $region8
  $region5: #{elan_neck_forward.8} parent=0 // loop_body
    %s14 = ssub.s32 %s9, 1
    %s15 = ssub.s32 %s9, 2
    %s16 = sadd.s32 %s9, 1
    %s17 = ssub.s32 %s9, %s16
    %p18 = scmp.eq.s32.totalorder %s17, 0
    %s20 = sadd.s32 %s19, 1
    %s21 = scalar_select %p18, %s19, %s20
    %p24 = pneg %p18
    %p25 = scmp.eq.s32.totalorder %s9, 1
    %p26 = por %p24, %p25
    %p27 = scmp.ne.s32.totalorder %s19, %s22
    %p28 = scmp.eq.s32.totalorder %s9, 0
    %p29 = por %p27, %p28
    %p30 = scmp.ne.s32.totalorder %s19, %s22
    %p31 = scmp.eq.s32.totalorder %s14, 1
    %p32 = por %p30, %p31
    %p33 = scmp.ne.s32.totalorder %s22, %s23
    %p34 = scmp.eq.s32.totalorder %s14, 0
    %p35 = por %p33, %p34
    %p36 = scmp.ne.s32.totalorder %s22, %s23
    %p37 = scmp.eq.s32.totalorder %s15, 1
    %p38 = por %p36, %p37
    %p40 = scmp.ne.s32.totalorder %s23, %s39
    %p41 = scmp.eq.s32.totalorder %s15, 0
    %p42 = por %p40, %p41
    %s44 = sadd.s32 %s43, 1
    %p47 = scmp.eq.s32.totalorder %s9, 1
    %p48 = scmp.ne.s32.totalorder %s43, %s45
    %p49 = scmp.eq.s32.totalorder %s9, 0
    %p50 = por %p48, %p49
    %p51 = scmp.ne.s32.totalorder %s43, %s45
    %p52 = scmp.eq.s32.totalorder %s14, 1
    %p53 = por %p51, %p52
    %p54 = scmp.ne.s32.totalorder %s45, %s46
    %p55 = scmp.eq.s32.totalorder %s14, 0
    %p56 = por %p54, %p55
    %p57 = scmp.ne.s32.totalorder %s45, %s46
    %p58 = scmp.eq.s32.totalorder %s15, 1
    %p59 = por %p57, %p58
    %p61 = scmp.ne.s32.totalorder %s46, %s60
    %p62 = scmp.eq.s32.totalorder %s15, 0
    %p63 = por %p61, %p62
    %s65 = sadd.s32 %s64, 1
    %p68 = scmp.eq.s32.totalorder %s9, 1
    %p69 = scmp.ne.s32.totalorder %s64, %s66
    %p70 = scmp.eq.s32.totalorder %s9, 0
    %p71 = por %p69, %p70
    %p72 = scmp.ne.s32.totalorder %s64, %s66
    %p73 = scmp.eq.s32.totalorder %s14, 1
    %p74 = por %p72, %p73
    %p75 = scmp.ne.s32.totalorder %s66, %s67
    %p76 = scmp.eq.s32.totalorder %s14, 0
    %p77 = por %p75, %p76
    %p78 = scmp.ne.s32.totalorder %s66, %s67
    %p79 = scmp.eq.s32.totalorder %s15, 1
    %p80 = por %p78, %p79
    %p82 = scmp.ne.s32.totalorder %s67, %s81
    %p83 = scmp.eq.s32.totalorder %s15, 0
    %p84 = por %p82, %p83
    %s85 = ssub.s32 %s9, %s16
    %p86 = scmp.eq.s32.totalorder %s85, 0
    %s88 = sadd.s32 %s87, 1
    %s89 = scalar_select %p86, %s87, %s88
    %p92 = pneg %p86
    %p93 = scmp.eq.s32.totalorder %s9, 1
    %p94 = por %p92, %p93
    %p95 = scmp.ne.s32.totalorder %s87, %s90
    %p96 = scmp.eq.s32.totalorder %s9, 0
    %p97 = por %p95, %p96
    %p98 = scmp.ne.s32.totalorder %s87, %s90
    %p99 = scmp.eq.s32.totalorder %s14, 1
    %p100 = por %p98, %p99
    %p101 = scmp.ne.s32.totalorder %s90, %s91
    %p102 = scmp.eq.s32.totalorder %s14, 0
    %p103 = por %p101, %p102
    %p104 = scmp.ne.s32.totalorder %s90, %s91
    %p105 = scmp.eq.s32.totalorder %s15, 1
    %p106 = por %p104, %p105
    %p108 = scmp.ne.s32.totalorder %s91, %s107
    %p109 = scmp.eq.s32.totalorder %s15, 0
    %p110 = por %p108, %p109
    %p111 = scmp.le.s32.totalorder 1, %s9
    %p112 = scmp.lt.s32.totalorder %s9, 3
    %p113 = pnand %p111, %p112
    %p114 = pneg %p113
    // Predicated region
    $region9: #{elan_neck_forward.8} parent=5 // pred_check
      _
    $region10: #{elan_neck_forward.8} parent=5 // pred_check_branch
      %116 = sbr.rel (%p113) target = $region12
    $region11: #{elan_neck_forward.8} parent=5 // pred_region
      %s117 = ssub.s32 %s9, 1
      // Predicated region
      $region13: #{elan_neck_forward.8} parent=11 // pred_check
        %p118 = pneg %p56
      $region14: #{elan_neck_forward.8} parent=11 // pred_check_branch
        %120 = sbr.rel (%p118) target = $region16
      $region15: #{elan_neck_forward.8} parent=11 // pred_region
        _
      $region16: #{elan_neck_forward.8} parent=11 // pred_fallthru
        _
      // Predicated region
      $region17: #{elan_neck_forward.8} parent=11 // pred_check
        %p121 = pneg %p77
      $region18: #{elan_neck_forward.8} parent=11 // pred_check_branch
        %123 = sbr.rel (%p121) target = $region20
      $region19: #{elan_neck_forward.8} parent=11 // pred_region
        _
      $region20: #{elan_neck_forward.8} parent=11 // pred_fallthru
        _
    $region12: #{elan_neck_forward.8} parent=5 // pred_fallthru
      _
    %p124 = scmp.lt.s32.totalorder %s9, 2
    // Predicated region
    $region21: #{elan_neck_forward.8} parent=5 // pred_check
      %p125 = pneg %p124
    $region22: #{elan_neck_forward.8} parent=5 // pred_check_branch
      %127 = sbr.rel (%p125) target = $region24
    $region23: #{elan_neck_forward.8} parent=5 // pred_region
      // Predicated region
      $region25: #{elan_neck_forward.8} parent=23 // pred_check
        %p128 = pneg %p29
      $region26: #{elan_neck_forward.8} parent=23 // pred_check_branch
        %130 = sbr.rel (%p128) target = $region28
      $region27: #{elan_neck_forward.8} parent=23 // pred_region
        %p131 = scmp.lt.s32.totalorder %s9, 1
        %s132 = scalar_select %p131, %s9, 1
        %s133 = smul.addr %s132, 41
        %s134 = smul.addr %s133, 4
        %s135 = scalar_lea.vmem %s0, %s134
      $region28: #{elan_neck_forward.8} parent=23 // pred_fallthru
        _
    $region24: #{elan_neck_forward.8} parent=5 // pred_fallthru
      _
    %p136 = scmp.le.s32.totalorder 1, %s9
    %p137 = scmp.lt.s32.totalorder %s9, 3
    %p138 = pnand %p136, %p137
    %p139 = pneg %p138
    // Predicated region
    $region29: #{elan_neck_forward.8} parent=5 // pred_check
      _
    $region30: #{elan_neck_forward.8} parent=5 // pred_check_branch
      %141 = sbr.rel (%p138) target = $region32
    $region31: #{elan_neck_forward.8} parent=5 // pred_region
      %s142 = ssub.s32 %s9, 1
      %p143 = scmp.lt.s32.totalorder %s14, 1
      %s144 = scalar_select %p143, %s14, 1
      %s145 = smul.addr %s144, 41
      %s146 = smul.addr %s145, 4
      %s147 = scalar_lea.vmem %s0, %s146
      %p148 = pneg %p35
      %p149 = pneg %p32
      %p150 = pneg %p56
      %p151 = pneg %p53
      %p152 = pneg %p77
      %p153 = pneg %p74
      %p154 = pneg %p103
      %p155 = pneg %p100
      %p156 = scmp.lt.s32.totalorder %s14, 1
      %s157 = scalar_select %p156, %s14, 1
      %s158 = smul.addr %s157, 36
      %s159 = smul.addr %s158, 4
      %s160 = scalar_lea.vmem %s3, %s159
      %p161 = scmp.lt.s32.totalorder %s14, 1
      %s162 = scalar_select %p161, %s14, 1
      %s163 = smul.addr %s162, 41
      %s164 = smul.addr %s163, 4
      %s165 = scalar_lea.vmem %s0, %s164
      %p166 = scmp.lt.s32.totalorder %s14, 1
      %s167 = scalar_select %p166, %s14, 1
      %s168 = smul.addr %s167, 36
      %s169 = smul.addr %s168, 4
      %s170 = scalar_lea.vmem %s3, %s169
      %v172 = vld [vmem:[%s165] sm:$0xf]
      %v173 = vld [vmem:[%s165 + $0x4] sm:$0xf]
      %v174 = vld [vmem:[%s165 + $0x8] sm:$0xf]
      %v175 = vld [vmem:[%s165 + $0xc] sm:$0xf]
      %v176 = vld [vmem:[%s165 + $0x10] sm:$0xf]
      %v177 = vld [vmem:[%s165 + $0x14] sm:$0xf]
      %v178 = vld [vmem:[%s165 + $0x18] sm:$0xf]
      %v179 = vld [vmem:[%s165 + $0x1c] sm:$0xf]
      %v180 = vld [vmem:[%s165 + $0x20] sm:$0xf]
      %v181 = vld [vmem:[%s165 + $0x24] sm:$0xf]
      %v182 = vld [vmem:[%s165 + $0x28] sm:$0xf]
      %v183 = vld [vmem:[%s165 + $0x2c] sm:$0xf]
      %v184 = vld [vmem:[%s165 + $0x30] sm:$0xf]
      %v185 = vld [vmem:[%s165 + $0x34] sm:$0xf]
      %v186 = vld [vmem:[%s165 + $0x38] sm:$0xf]
      %v187 = vld [vmem:[%s165 + $0x3c] sm:$0xf]
      %v188 = vld [vmem:[%s165 + $0x40] sm:$0xf]
      %v189 = vld [vmem:[%s165 + $0x44] sm:$0xf]
      %v190 = vld [vmem:[%s165 + $0x48] sm:$0xf]
      %v191 = vld [vmem:[%s165 + $0x4c] sm:$0xf]
      %v192 = vld [vmem:[%s165 + $0x50] sm:$0xf]
      %v193 = vld [vmem:[%s165 + $0x54] sm:$0xf]
      %v194 = vld [vmem:[%s165 + $0x58] sm:$0xf]
      %v195 = vld [vmem:[%s165 + $0x5c] sm:$0xf]
      %v196 = vld [vmem:[%s165 + $0x60] sm:$0xf]
      %v197 = vld [vmem:[%s165 + $0x64] sm:$0xf]
      %v198 = vld [vmem:[%s165 + $0x68] sm:$0xf]
      %v199 = vld [vmem:[%s165 + $0x6c] sm:$0xf]
      %v200 = vld [vmem:[%s165 + $0x70] sm:$0xf]
      %v201 = vld [vmem:[%s165 + $0x74] sm:$0xf]
      %v202 = vld [vmem:[%s165 + $0x78] sm:$0xf]
      %v203 = vld [vmem:[%s165 + $0x7c] sm:$0xf]
      %v204 = vld [vmem:[%s165 + $0x80] sm:$0xf]
      %v205 = vld [vmem:[%s165 + $0x84] sm:$0xf]
      %v206 = vld [vmem:[%s165 + $0x88] sm:$0xf]
      %v207 = vld [vmem:[%s165 + $0x8c] sm:$0xf]
      %v208 = vld [vmem:[%s1] sm:$0x3]
      %v209 = vld [vmem:[%s165 + $0x90] sm:$0x1]
      %s210 = scalar_lea.vmem %s1, 2
      %v211 = vld [vmem:[%s210] sm:$0x3]
      %v249 = vunpack.c.l.b16 %v172
      %v250 = vunpack.c.l.b16 %v173
      %v251 = vunpack.c.l.b16 %v174
      %v252 = vunpack.c.l.b16 %v175
      %v253 = vunpack.c.l.b16 %v176
      %v254 = vunpack.c.l.b16 %v177
      %v255 = vunpack.c.l.b16 %v178
      %v256 = vunpack.c.l.b16 %v179
      %v257 = vunpack.c.l.b16 %v180
      %v258 = vunpack.c.l.b16 %v181
      %v259 = vunpack.c.l.b16 %v182
      %v260 = vunpack.c.l.b16 %v183
      %v261 = vunpack.c.l.b16 %v184
      %v262 = vunpack.c.l.b16 %v185
      %v263 = vunpack.c.l.b16 %v186
      %v264 = vunpack.c.l.b16 %v187
      %v265 = vunpack.c.l.b16 %v188
      %v266 = vunpack.c.l.b16 %v189
      %v267 = vunpack.c.l.b16 %v190
      %v268 = vunpack.c.l.b16 %v191
      %v269 = vunpack.c.l.b16 %v192
      %v270 = vunpack.c.l.b16 %v193
      %v271 = vunpack.c.l.b16 %v194
      %v272 = vunpack.c.l.b16 %v195
      %v273 = vunpack.c.l.b16 %v196
      %v274 = vunpack.c.l.b16 %v197
      %v275 = vunpack.c.l.b16 %v198
      %v276 = vunpack.c.l.b16 %v199
      %v277 = vunpack.c.l.b16 %v200
      %v278 = vunpack.c.l.b16 %v201
      %v279 = vunpack.c.l.b16 %v202
      %v280 = vunpack.c.l.b16 %v203
      %v281 = vunpack.c.l.b16 %v204
      %v282 = vunpack.c.l.b16 %v205
      %v283 = vunpack.c.l.b16 %v206
      %v284 = vunpack.c.l.b16 %v207
      %v285 = vunpack.c.l.b16 %v209
      %v286 = vpack.c.b16 %v250, %v249
      %v287 = vpack.c.b16 %v252, %v251
      %v288 = vpack.c.b16 %v254, %v253
      %v289 = vpack.c.b16 %v256, %v255
      %v290 = vpack.c.b16 %v258, %v257
      %v291 = vpack.c.b16 %v260, %v259
      %v292 = vpack.c.b16 %v262, %v261
      %v293 = vpack.c.b16 %v264, %v263
      %v294 = vpack.c.b16 %v266, %v265
      %v295 = vpack.c.b16 %v268, %v267
      %v296 = vpack.c.b16 %v270, %v269
      %v297 = vpack.c.b16 %v272, %v271
      %v298 = vpack.c.b16 %v274, %v273
      %v299 = vpack.c.b16 %v276, %v275
      %v300 = vpack.c.b16 %v278, %v277
      %v301 = vpack.c.b16 %v280, %v279
      %v302 = vpack.c.b16 %v282, %v281
      %v303 = vpack.c.b16 %v284, %v283
      %v304 = vpack.c.b16 %v285, %v285
      %vm305 = vsmask.f32 7424
      %v307 = vshrl.u32 %v286, 16
      %v309 = vshll.u32 %v286, 16
      %v311 = vrot.slane %v309, 1
      %v312 = vor.u32 %v307, %v311
      %v314 = vshll.u32 %v287, 16
      %v316 = vrot.slane %v314, 1
      %v317 = vsel %vm305, %v312, %v316
      %v318 = vshrl.u32 %v287, 16
      %v320 = vor.u32 %v318, %v316
      %v322 = vshll.u32 %v288, 16
      %v324 = vrot.slane %v322, 1
      %v325 = vsel %vm305, %v320, %v324
      %v326 = vshrl.u32 %v288, 16
      %v328 = vor.u32 %v326, %v324
      %v330 = vshll.u32 %v289, 16
      %v332 = vrot.slane %v330, 1
      %v333 = vsel %vm305, %v328, %v332
      %v334 = vshrl.u32 %v289, 16
      %v336 = vor.u32 %v334, %v332
      %v338 = vshll.u32 %v290, 16
      %v340 = vrot.slane %v338, 1
      %v341 = vsel %vm305, %v336, %v340
      %v342 = vshrl.u32 %v290, 16
      %v344 = vor.u32 %v342, %v340
      %v346 = vshll.u32 %v291, 16
      %v348 = vrot.slane %v346, 1
      %v349 = vsel %vm305, %v344, %v348
      %v350 = vshrl.u32 %v291, 16
      %v352 = vor.u32 %v350, %v348
      %v354 = vshll.u32 %v292, 16
      %v356 = vrot.slane %v354, 1
      %v357 = vsel %vm305, %v352, %v356
      %v358 = vshrl.u32 %v292, 16
      %v360 = vor.u32 %v358, %v356
      %v362 = vshll.u32 %v293, 16
      %v364 = vrot.slane %v362, 1
      %v365 = vsel %vm305, %v360, %v364
      %v366 = vshrl.u32 %v293, 16
      %v368 = vor.u32 %v366, %v364
      %v370 = vshll.u32 %v294, 16
      %v372 = vrot.slane %v370, 1
      %v373 = vsel %vm305, %v368, %v372
      %v374 = vshrl.u32 %v294, 16
      %v376 = vor.u32 %v374, %v372
      %v378 = vshll.u32 %v295, 16
      %v380 = vrot.slane %v378, 1
      %v381 = vsel %vm305, %v376, %v380
      %v382 = vshrl.u32 %v295, 16
      %v384 = vor.u32 %v382, %v380
      %v386 = vshll.u32 %v296, 16
      %v388 = vrot.slane %v386, 1
      %v389 = vsel %vm305, %v384, %v388
      %v390 = vshrl.u32 %v296, 16
      %v392 = vor.u32 %v390, %v388
      %v394 = vshll.u32 %v297, 16
      %v396 = vrot.slane %v394, 1
      %v397 = vsel %vm305, %v392, %v396
      %v398 = vshrl.u32 %v297, 16
      %v400 = vor.u32 %v398, %v396
      %v402 = vshll.u32 %v298, 16
      %v404 = vrot.slane %v402, 1
      %v405 = vsel %vm305, %v400, %v404
      %v406 = vshrl.u32 %v298, 16
      %v408 = vor.u32 %v406, %v404
      %v410 = vshll.u32 %v299, 16
      %v412 = vrot.slane %v410, 1
      %v413 = vsel %vm305, %v408, %v412
      %v414 = vshrl.u32 %v299, 16
      %v416 = vor.u32 %v414, %v412
      %v418 = vshll.u32 %v300, 16
      %v420 = vrot.slane %v418, 1
      %v421 = vsel %vm305, %v416, %v420
      %v422 = vshrl.u32 %v300, 16
      %v424 = vor.u32 %v422, %v420
      %v426 = vshll.u32 %v301, 16
      %v428 = vrot.slane %v426, 1
      %v429 = vsel %vm305, %v424, %v428
      %v430 = vshrl.u32 %v301, 16
      %v432 = vor.u32 %v430, %v428
      %v434 = vshll.u32 %v302, 16
      %v436 = vrot.slane %v434, 1
      %v437 = vsel %vm305, %v432, %v436
      %v438 = vshrl.u32 %v302, 16
      %v440 = vor.u32 %v438, %v436
      %v442 = vshll.u32 %v303, 16
      %v444 = vrot.slane %v442, 1
      %v445 = vsel %vm305, %v440, %v444
      %v446 = vshrl.u32 %v303, 16
      %v448 = vor.u32 %v446, %v444
      %v450 = vshll.u32 %v304, 16
      %v452 = vrot.slane %v450, 1
      %v453 = vsel %vm305, %v448, %v452
      %vm454 = vcmask 31744
      %v456 = vsel %vm454, %v317, 0
      %v459 = vsel %vm454, %v325, 0
      %v462 = vsel %vm454, %v333, 0
      %v465 = vsel %vm454, %v341, 0
      %v468 = vsel %vm454, %v349, 0
      %v471 = vsel %vm454, %v357, 0
      %v474 = vsel %vm454, %v365, 0
      %v477 = vsel %vm454, %v373, 0
      %v480 = vsel %vm454, %v381, 0
      %v483 = vsel %vm454, %v389, 0
      %v486 = vsel %vm454, %v397, 0
      %v489 = vsel %vm454, %v405, 0
      %v492 = vsel %vm454, %v413, 0
      %v495 = vsel %vm454, %v421, 0
      %v498 = vsel %vm454, %v429, 0
      %v501 = vsel %vm454, %v437, 0
      %v504 = vsel %vm454, %v445, 0
      %v507 = vsel %vm454, %v453, 0
      %vm509 = vcmask 1041408
      %v511 = vsel %vm509, %v211, 0
      %513 = vmatpush.bf16.msra.mxu0 0
      %514 = vmatpush.bf16.msra.mxu0 0
      %515 = vmatpush.bf16.msra.mxu0 0
      %516 = vmatpush.bf16.msra.mxu0 0
      %517 = vmatpush.bf16.msra.mxu0 0
      %518 = vmatpush.bf16.msra.mxu0 0
      %519 = vmatpush.bf16.msra.mxu0 0
      %520 = vmatpush.bf16.msra.mxu0 %v511
      %521 = vmatmul.bf16.gmra.mxu0 %v456
      %v522 = vpop.f32.mrf.mxu0
      %v523 = vadd.f32 0.0, %v522
      %v524 = vpop.f32.mrf.mxu0
      %v525 = vadd.f32 0.0, %v524
      %526 = vmatmul.bf16.gmra.mxu0 %v459
      %v527 = vpop.f32.mrf.mxu0
      %v528 = vadd.f32 0.0, %v527
      %v529 = vpop.f32.mrf.mxu0
      %v530 = vadd.f32 0.0, %v529
      %531 = vmatmul.bf16.gmra.mxu0 %v462
      %v532 = vpop.f32.mrf.mxu0
      %v533 = vadd.f32 0.0, %v532
      %v534 = vpop.f32.mrf.mxu0
      %v535 = vadd.f32 0.0, %v534
      %536 = vmatmul.bf16.gmra.mxu0 %v465
      %v537 = vpop.f32.mrf.mxu0
      %v538 = vadd.f32 0.0, %v537
      %v539 = vpop.f32.mrf.mxu0
      %v540 = vadd.f32 0.0, %v539
      %541 = vmatmul.bf16.gmra.mxu0 %v468
      %v542 = vpop.f32.mrf.mxu0
      %v543 = vadd.f32 0.0, %v542
      %v544 = vpop.f32.mrf.mxu0
      %v545 = vadd.f32 0.0, %v544
      %546 = vmatmul.bf16.gmra.mxu0 %v471
      %v547 = vpop.f32.mrf.mxu0
      %v548 = vadd.f32 0.0, %v547
      %v549 = vpop.f32.mrf.mxu0
      %v550 = vadd.f32 0.0, %v549
      %551 = vmatmul.bf16.gmra.mxu0 %v474
      %v552 = vpop.f32.mrf.mxu0
      %v553 = vadd.f32 0.0, %v552
      %v554 = vpop.f32.mrf.mxu0
      %v555 = vadd.f32 0.0, %v554
      %556 = vmatmul.bf16.gmra.mxu0 %v477
      %v557 = vpop.f32.mrf.mxu0
      %v558 = vadd.f32 0.0, %v557
      %v559 = vpop.f32.mrf.mxu0
      %v560 = vadd.f32 0.0, %v559
      %561 = vmatmul.bf16.gmra.mxu0 %v480
      %v562 = vpop.f32.mrf.mxu0
      %v563 = vadd.f32 0.0, %v562
      %v564 = vpop.f32.mrf.mxu0
      %v565 = vadd.f32 0.0, %v564
      %566 = vmatmul.bf16.gmra.mxu0 %v483
      %v567 = vpop.f32.mrf.mxu0
      %v568 = vadd.f32 0.0, %v567
      %v569 = vpop.f32.mrf.mxu0
      %v570 = vadd.f32 0.0, %v569
      %571 = vmatmul.bf16.gmra.mxu0 %v486
      %v572 = vpop.f32.mrf.mxu0
      %v573 = vadd.f32 0.0, %v572
      %v574 = vpop.f32.mrf.mxu0
      %v575 = vadd.f32 0.0, %v574
      %576 = vmatmul.bf16.gmra.mxu0 %v489
      %v577 = vpop.f32.mrf.mxu0
      %v578 = vadd.f32 0.0, %v577
      %v579 = vpop.f32.mrf.mxu0
      %v580 = vadd.f32 0.0, %v579
      %581 = vmatmul.bf16.gmra.mxu0 %v492
      %v582 = vpop.f32.mrf.mxu0
      %v583 = vadd.f32 0.0, %v582
      %v584 = vpop.f32.mrf.mxu0
      %v585 = vadd.f32 0.0, %v584
      %586 = vmatmul.bf16.gmra.mxu0 %v495
      %v587 = vpop.f32.mrf.mxu0
      %v588 = vadd.f32 0.0, %v587
      %v589 = vpop.f32.mrf.mxu0
      %v590 = vadd.f32 0.0, %v589
      %591 = vmatmul.bf16.gmra.mxu0 %v498
      %v592 = vpop.f32.mrf.mxu0
      %v593 = vadd.f32 0.0, %v592
      %v594 = vpop.f32.mrf.mxu0
      %v595 = vadd.f32 0.0, %v594
      %596 = vmatmul.bf16.gmra.mxu0 %v501
      %v597 = vpop.f32.mrf.mxu0
      %v598 = vadd.f32 0.0, %v597
      %v599 = vpop.f32.mrf.mxu0
      %v600 = vadd.f32 0.0, %v599
      %601 = vmatmul.bf16.gmra.mxu0 %v504
      %v602 = vpop.f32.mrf.mxu0
      %v603 = vadd.f32 0.0, %v602
      %v604 = vpop.f32.mrf.mxu0
      %v605 = vadd.f32 0.0, %v604
      %606 = vmatmul.bf16.gmra.mxu0 %v507
      %v607 = vpop.f32.mrf.mxu0
      %v608 = vadd.f32 0.0, %v607
      %v609 = vpop.f32.mrf.mxu0
      %v610 = vadd.f32 0.0, %v609
      %611 = vdwg.mxu0
      %v612 = vsel %vm454, %v286, 0
      %v614 = vsel %vm454, %v287, 0
      %v616 = vsel %vm454, %v288, 0
      %v618 = vsel %vm454, %v289, 0
      %v620 = vsel %vm454, %v290, 0
      %v622 = vsel %vm454, %v291, 0
      %v624 = vsel %vm454, %v292, 0
      %v626 = vsel %vm454, %v293, 0
      %v628 = vsel %vm454, %v294, 0
      %v630 = vsel %vm454, %v295, 0
      %v632 = vsel %vm454, %v296, 0
      %v634 = vsel %vm454, %v297, 0
      %v636 = vsel %vm454, %v298, 0
      %v638 = vsel %vm454, %v299, 0
      %v640 = vsel %vm454, %v300, 0
      %v642 = vsel %vm454, %v301, 0
      %v644 = vsel %vm454, %v302, 0
      %v646 = vsel %vm454, %v303, 0
      %v649 = vsel %vm509, %v208, 0
      %651 = vmatpush.bf16.msra.mxu0 0
      %652 = vmatpush.bf16.msra.mxu0 0
      %653 = vmatpush.bf16.msra.mxu0 0
      %654 = vmatpush.bf16.msra.mxu0 0
      %655 = vmatpush.bf16.msra.mxu0 0
      %656 = vmatpush.bf16.msra.mxu0 0
      %657 = vmatpush.bf16.msra.mxu0 0
      %658 = vmatpush.bf16.msra.mxu0 %v649
      %659 = vmatmul.bf16.gmra.mxu0 %v612
      %v660 = vpop.f32.mrf.mxu0
      %v661 = vadd.f32 %v523, %v660
      %v662 = vpop.f32.mrf.mxu0
      %v663 = vadd.f32 %v525, %v662
      %664 = vmatmul.bf16.gmra.mxu0 %v614
      %v665 = vpop.f32.mrf.mxu0
      %v666 = vadd.f32 %v528, %v665
      %v667 = vpop.f32.mrf.mxu0
      %v668 = vadd.f32 %v530, %v667
      %669 = vmatmul.bf16.gmra.mxu0 %v616
      %v670 = vpop.f32.mrf.mxu0
      %v671 = vadd.f32 %v533, %v670
      %v672 = vpop.f32.mrf.mxu0
      %v673 = vadd.f32 %v535, %v672
      %674 = vmatmul.bf16.gmra.mxu0 %v618
      %v675 = vpop.f32.mrf.mxu0
      %v676 = vadd.f32 %v538, %v675
      %v677 = vpop.f32.mrf.mxu0
      %v678 = vadd.f32 %v540, %v677
      %679 = vmatmul.bf16.gmra.mxu0 %v620
      %v680 = vpop.f32.mrf.mxu0
      %v681 = vadd.f32 %v543, %v680
      %v682 = vpop.f32.mrf.mxu0
      %v683 = vadd.f32 %v545, %v682
      %684 = vmatmul.bf16.gmra.mxu0 %v622
      %v685 = vpop.f32.mrf.mxu0
      %v686 = vadd.f32 %v548, %v685
      %v687 = vpop.f32.mrf.mxu0
      %v688 = vadd.f32 %v550, %v687
      %689 = vmatmul.bf16.gmra.mxu0 %v624
      %v690 = vpop.f32.mrf.mxu0
      %v691 = vadd.f32 %v553, %v690
      %v692 = vpop.f32.mrf.mxu0
      %v693 = vadd.f32 %v555, %v692
      %694 = vmatmul.bf16.gmra.mxu0 %v626
      %v695 = vpop.f32.mrf.mxu0
      %v696 = vadd.f32 %v558, %v695
      %v697 = vpop.f32.mrf.mxu0
      %v698 = vadd.f32 %v560, %v697
      %699 = vmatmul.bf16.gmra.mxu0 %v628
      %v700 = vpop.f32.mrf.mxu0
      %v701 = vadd.f32 %v563, %v700
      %v702 = vpop.f32.mrf.mxu0
      %v703 = vadd.f32 %v565, %v702
      %704 = vmatmul.bf16.gmra.mxu0 %v630
      %v705 = vpop.f32.mrf.mxu0
      %v706 = vadd.f32 %v568, %v705
      %v707 = vpop.f32.mrf.mxu0
      %v708 = vadd.f32 %v570, %v707
      %709 = vmatmul.bf16.gmra.mxu0 %v632
      %v710 = vpop.f32.mrf.mxu0
      %v711 = vadd.f32 %v573, %v710
      %v712 = vpop.f32.mrf.mxu0
      %v713 = vadd.f32 %v575, %v712
      %714 = vmatmul.bf16.gmra.mxu0 %v634
      %v715 = vpop.f32.mrf.mxu0
      %v716 = vadd.f32 %v578, %v715
      %v717 = vpop.f32.mrf.mxu0
      %v718 = vadd.f32 %v580, %v717
      %719 = vmatmul.bf16.gmra.mxu0 %v636
      %v720 = vpop.f32.mrf.mxu0
      %v721 = vadd.f32 %v583, %v720
      %v722 = vpop.f32.mrf.mxu0
      %v723 = vadd.f32 %v585, %v722
      %724 = vmatmul.bf16.gmra.mxu0 %v638
      %v725 = vpop.f32.mrf.mxu0
      %v726 = vadd.f32 %v588, %v725
      %v727 = vpop.f32.mrf.mxu0
      %v728 = vadd.f32 %v590, %v727
      %729 = vmatmul.bf16.gmra.mxu0 %v640
      %v730 = vpop.f32.mrf.mxu0
      %v731 = vadd.f32 %v593, %v730
      %v732 = vpop.f32.mrf.mxu0
      %v733 = vadd.f32 %v595, %v732
      %734 = vmatmul.bf16.gmra.mxu0 %v642
      %v735 = vpop.f32.mrf.mxu0
      %v736 = vadd.f32 %v598, %v735
      %v737 = vpop.f32.mrf.mxu0
      %v738 = vadd.f32 %v600, %v737
      %739 = vmatmul.bf16.gmra.mxu0 %v644
      %v740 = vpop.f32.mrf.mxu0
      %v741 = vadd.f32 %v603, %v740
      %v742 = vpop.f32.mrf.mxu0
      %v743 = vadd.f32 %v605, %v742
      %744 = vmatmul.bf16.gmra.mxu0 %v646
      %v745 = vpop.f32.mrf.mxu0
      %v746 = vadd.f32 %v608, %v745
      %v747 = vpop.f32.mrf.mxu0
      %v748 = vadd.f32 %v610, %v747
      %749 = vdwg.mxu0
      %v750 = vld [vmem:[%s165] sm:$0xe]
      %s751 = scalar_lea.vmem %s1, 4
      %v752 = vld [vmem:[%s751] sm:$0x3]
      %v754 = vunpack.c.l.b16 %v750
      %v755 = vpack.c.b16 %v250, %v754
      %vm756 = vcmask 1046528
      %v757 = vrot.slane %v755, 1
      %v758 = vrot.slane %v287, 1
      %v759 = vsel %vm756, %v757, %v758
      %v760 = vrot.slane %v288, 1
      %v761 = vsel %vm756, %v758, %v760
      %v762 = vrot.slane %v289, 1
      %v763 = vsel %vm756, %v760, %v762
      %v764 = vrot.slane %v290, 1
      %v765 = vsel %vm756, %v762, %v764
      %v766 = vrot.slane %v291, 1
      %v767 = vsel %vm756, %v764, %v766
      %v768 = vrot.slane %v292, 1
      %v769 = vsel %vm756, %v766, %v768
      %v770 = vrot.slane %v293, 1
      %v771 = vsel %vm756, %v768, %v770
      %v772 = vrot.slane %v294, 1
      %v773 = vsel %vm756, %v770, %v772
      %v774 = vrot.slane %v295, 1
      %v775 = vsel %vm756, %v772, %v774
      %v776 = vrot.slane %v296, 1
      %v777 = vsel %vm756, %v774, %v776
      %v778 = vrot.slane %v297, 1
      %v779 = vsel %vm756, %v776, %v778
      %v780 = vrot.slane %v298, 1
      %v781 = vsel %vm756, %v778, %v780
      %v782 = vrot.slane %v299, 1
      %v783 = vsel %vm756, %v780, %v782
      %v784 = vrot.slane %v300, 1
      %v785 = vsel %vm756, %v782, %v784
      %v786 = vrot.slane %v301, 1
      %v787 = vsel %vm756, %v784, %v786
      %v788 = vrot.slane %v302, 1
      %v789 = vsel %vm756, %v786, %v788
      %v790 = vrot.slane %v303, 1
      %v791 = vsel %vm756, %v788, %v790
      %v792 = vrot.slane %v304, 1
      %v793 = vsel %vm756, %v790, %v792
      %v795 = vsel %vm454, %v759, 0
      %v798 = vsel %vm454, %v761, 0
      %v801 = vsel %vm454, %v763, 0
      %v804 = vsel %vm454, %v765, 0
      %v807 = vsel %vm454, %v767, 0
      %v810 = vsel %vm454, %v769, 0
      %v813 = vsel %vm454, %v771, 0
      %v816 = vsel %vm454, %v773, 0
      %v819 = vsel %vm454, %v775, 0
      %v822 = vsel %vm454, %v777, 0
      %v825 = vsel %vm454, %v779, 0
      %v828 = vsel %vm454, %v781, 0
      %v831 = vsel %vm454, %v783, 0
      %v834 = vsel %vm454, %v785, 0
      %v837 = vsel %vm454, %v787, 0
      %v840 = vsel %vm454, %v789, 0
      %v843 = vsel %vm454, %v791, 0
      %v846 = vsel %vm454, %v793, 0
      %v849 = vsel %vm509, %v752, 0
      %851 = vmatpush.bf16.msra.mxu0 0
      %852 = vmatpush.bf16.msra.mxu0 0
      %853 = vmatpush.bf16.msra.mxu0 0
      %854 = vmatpush.bf16.msra.mxu0 0
      %855 = vmatpush.bf16.msra.mxu0 0
      %856 = vmatpush.bf16.msra.mxu0 0
      %857 = vmatpush.bf16.msra.mxu0 0
      %858 = vmatpush.bf16.msra.mxu0 %v849
      %859 = vmatmul.bf16.gmra.mxu0 %v795
      %v860 = vpop.f32.mrf.mxu0
      %v861 = vadd.f32 0.0, %v860
      %v862 = vpop.f32.mrf.mxu0
      %v863 = vadd.f32 0.0, %v862
      %864 = vmatmul.bf16.gmra.mxu0 %v798
      %v865 = vpop.f32.mrf.mxu0
      %v866 = vadd.f32 0.0, %v865
      %v867 = vpop.f32.mrf.mxu0
      %v868 = vadd.f32 0.0, %v867
      %869 = vmatmul.bf16.gmra.mxu0 %v801
      %v870 = vpop.f32.mrf.mxu0
      %v871 = vadd.f32 0.0, %v870
      %v872 = vpop.f32.mrf.mxu0
      %v873 = vadd.f32 0.0, %v872
      %874 = vmatmul.bf16.gmra.mxu0 %v804
      %v875 = vpop.f32.mrf.mxu0
      %v876 = vadd.f32 0.0, %v875
      %v877 = vpop.f32.mrf.mxu0
      %v878 = vadd.f32 0.0, %v877
      %879 = vmatmul.bf16.gmra.mxu0 %v807
      %v880 = vpop.f32.mrf.mxu0
      %v881 = vadd.f32 0.0, %v880
      %v882 = vpop.f32.mrf.mxu0
      %v883 = vadd.f32 0.0, %v882
      %884 = vmatmul.bf16.gmra.mxu0 %v810
      %v885 = vpop.f32.mrf.mxu0
      %v886 = vadd.f32 0.0, %v885
      %v887 = vpop.f32.mrf.mxu0
      %v888 = vadd.f32 0.0, %v887
      %889 = vmatmul.bf16.gmra.mxu0 %v813
      %v890 = vpop.f32.mrf.mxu0
      %v891 = vadd.f32 0.0, %v890
      %v892 = vpop.f32.mrf.mxu0
      %v893 = vadd.f32 0.0, %v892
      %894 = vmatmul.bf16.gmra.mxu0 %v816
      %v895 = vpop.f32.mrf.mxu0
      %v896 = vadd.f32 0.0, %v895
      %v897 = vpop.f32.mrf.mxu0
      %v898 = vadd.f32 0.0, %v897
      %899 = vmatmul.bf16.gmra.mxu0 %v819
      %v900 = vpop.f32.mrf.mxu0
      %v901 = vadd.f32 0.0, %v900
      %v902 = vpop.f32.mrf.mxu0
      %v903 = vadd.f32 0.0, %v902
      %904 = vmatmul.bf16.gmra.mxu0 %v822
      %v905 = vpop.f32.mrf.mxu0
      %v906 = vadd.f32 0.0, %v905
      %v907 = vpop.f32.mrf.mxu0
      %v908 = vadd.f32 0.0, %v907
      %909 = vmatmul.bf16.gmra.mxu0 %v825
      %v910 = vpop.f32.mrf.mxu0
      %v911 = vadd.f32 0.0, %v910
      %v912 = vpop.f32.mrf.mxu0
      %v913 = vadd.f32 0.0, %v912
      %914 = vmatmul.bf16.gmra.mxu0 %v828
      %v915 = vpop.f32.mrf.mxu0
      %v916 = vadd.f32 0.0, %v915
      %v917 = vpop.f32.mrf.mxu0
      %v918 = vadd.f32 0.0, %v917
      %919 = vmatmul.bf16.gmra.mxu0 %v831
      %v920 = vpop.f32.mrf.mxu0
      %v921 = vadd.f32 0.0, %v920
      %v922 = vpop.f32.mrf.mxu0
      %v923 = vadd.f32 0.0, %v922
      %924 = vmatmul.bf16.gmra.mxu0 %v834
      %v925 = vpop.f32.mrf.mxu0
      %v926 = vadd.f32 0.0, %v925
      %v927 = vpop.f32.mrf.mxu0
      %v928 = vadd.f32 0.0, %v927
      %929 = vmatmul.bf16.gmra.mxu0 %v837
      %v930 = vpop.f32.mrf.mxu0
      %v931 = vadd.f32 0.0, %v930
      %v932 = vpop.f32.mrf.mxu0
      %v933 = vadd.f32 0.0, %v932
      %934 = vmatmul.bf16.gmra.mxu0 %v840
      %v935 = vpop.f32.mrf.mxu0
      %v936 = vadd.f32 0.0, %v935
      %v937 = vpop.f32.mrf.mxu0
      %v938 = vadd.f32 0.0, %v937
      %939 = vmatmul.bf16.gmra.mxu0 %v843
      %v940 = vpop.f32.mrf.mxu0
      %v941 = vadd.f32 0.0, %v940
      %v942 = vpop.f32.mrf.mxu0
      %v943 = vadd.f32 0.0, %v942
      %944 = vmatmul.bf16.gmra.mxu0 %v846
      %v945 = vpop.f32.mrf.mxu0
      %v946 = vadd.f32 0.0, %v945
      %v947 = vpop.f32.mrf.mxu0
      %v948 = vadd.f32 0.0, %v947
      %949 = vdwg.mxu0
      %v950 = vadd.f32 %v661, %v861
      %v951 = vadd.f32 %v663, %v863
      %v952 = vadd.f32 %v666, %v866
      %v953 = vadd.f32 %v668, %v868
      %v954 = vadd.f32 %v671, %v871
      %v955 = vadd.f32 %v673, %v873
      %v956 = vadd.f32 %v676, %v876
      %v957 = vadd.f32 %v678, %v878
      %v958 = vadd.f32 %v681, %v881
      %v959 = vadd.f32 %v683, %v883
      %v960 = vadd.f32 %v686, %v886
      %v961 = vadd.f32 %v688, %v888
      %v962 = vadd.f32 %v691, %v891
      %v963 = vadd.f32 %v693, %v893
      %v964 = vadd.f32 %v696, %v896
      %v965 = vadd.f32 %v698, %v898
      %v966 = vadd.f32 %v701, %v901
      %v967 = vadd.f32 %v703, %v903
      %v968 = vadd.f32 %v706, %v906
      %v969 = vadd.f32 %v708, %v908
      %v970 = vadd.f32 %v711, %v911
      %v971 = vadd.f32 %v713, %v913
      %v972 = vadd.f32 %v716, %v916
      %v973 = vadd.f32 %v718, %v918
      %v974 = vadd.f32 %v721, %v921
      %v975 = vadd.f32 %v723, %v923
      %v976 = vadd.f32 %v726, %v926
      %v977 = vadd.f32 %v728, %v928
      %v978 = vadd.f32 %v731, %v931
      %v979 = vadd.f32 %v733, %v933
      %v980 = vadd.f32 %v736, %v936
      %v981 = vadd.f32 %v738, %v938
      %v982 = vadd.f32 %v741, %v941
      %v983 = vadd.f32 %v743, %v943
      %v984 = vadd.f32 %v746, %v946
      %v985 = vadd.f32 %v748, %v948
      %v986 = vld [vmem:[%s165 + $0x8] sm:$0xe]
      %v987 = vld [vmem:[%s165 + $0xc] sm:$0xf]
      %v988 = vld [vmem:[%s165 + $0x10] sm:$0xf]
      %v989 = vld [vmem:[%s165 + $0x14] sm:$0xf]
      %v990 = vld [vmem:[%s165 + $0x18] sm:$0xf]
      %v991 = vld [vmem:[%s165 + $0x1c] sm:$0xf]
      %v992 = vld [vmem:[%s165 + $0x20] sm:$0xf]
      %v993 = vld [vmem:[%s165 + $0x24] sm:$0xf]
      %v994 = vld [vmem:[%s165 + $0x28] sm:$0xf]
      %v995 = vld [vmem:[%s165 + $0x2c] sm:$0xf]
      %v996 = vld [vmem:[%s165 + $0x30] sm:$0xf]
      %v997 = vld [vmem:[%s165 + $0x34] sm:$0xf]
      %v998 = vld [vmem:[%s165 + $0x38] sm:$0xf]
      %v999 = vld [vmem:[%s165 + $0x3c] sm:$0xf]
      %v1000 = vld [vmem:[%s165 + $0x40] sm:$0xf]
      %v1001 = vld [vmem:[%s165 + $0x44] sm:$0xf]
      %v1002 = vld [vmem:[%s165 + $0x48] sm:$0xf]
      %v1003 = vld [vmem:[%s165 + $0x4c] sm:$0xf]
      %v1004 = vld [vmem:[%s165 + $0x50] sm:$0xf]
      %v1005 = vld [vmem:[%s165 + $0x54] sm:$0xf]
      %v1006 = vld [vmem:[%s165 + $0x58] sm:$0xf]
      %v1007 = vld [vmem:[%s165 + $0x5c] sm:$0xf]
      %v1008 = vld [vmem:[%s165 + $0x60] sm:$0xf]
      %v1009 = vld [vmem:[%s165 + $0x64] sm:$0xf]
      %v1010 = vld [vmem:[%s165 + $0x68] sm:$0xf]
      %v1011 = vld [vmem:[%s165 + $0x6c] sm:$0xf]
      %v1012 = vld [vmem:[%s165 + $0x70] sm:$0xf]
      %v1013 = vld [vmem:[%s165 + $0x74] sm:$0xf]
      %v1014 = vld [vmem:[%s165 + $0x78] sm:$0xf]
      %v1015 = vld [vmem:[%s165 + $0x7c] sm:$0xf]
      %v1016 = vld [vmem:[%s165 + $0x80] sm:$0xf]
      %v1017 = vld [vmem:[%s165 + $0x84] sm:$0xf]
      %v1018 = vld [vmem:[%s165 + $0x88] sm:$0xf]
      %v1019 = vld [vmem:[%s165 + $0x8c] sm:$0xf]
      %v1020 = vld [vmem:[%s165 + $0x90] sm:$0xf]
      %v1021 = vld [vmem:[%s165 + $0x94] sm:$0xf]
      %v1022 = vld [vmem:[%s165 + $0x98] sm:$0x1]
      %s1023 = scalar_lea.vmem %s1, 6
      %v1024 = vld [vmem:[%s1023] sm:$0x3]
      %v1062 = vunpack.c.l.b16 %v986
      %v1063 = vunpack.c.l.b16 %v987
      %v1064 = vunpack.c.l.b16 %v988
      %v1065 = vunpack.c.l.b16 %v989
      %v1066 = vunpack.c.l.b16 %v990
      %v1067 = vunpack.c.l.b16 %v991
      %v1068 = vunpack.c.l.b16 %v992
      %v1069 = vunpack.c.l.b16 %v993
      %v1070 = vunpack.c.l.b16 %v994
      %v1071 = vunpack.c.l.b16 %v995
      %v1072 = vunpack.c.l.b16 %v996
      %v1073 = vunpack.c.l.b16 %v997
      %v1074 = vunpack.c.l.b16 %v998
      %v1075 = vunpack.c.l.b16 %v999
      %v1076 = vunpack.c.l.b16 %v1000
      %v1077 = vunpack.c.l.b16 %v1001
      %v1078 = vunpack.c.l.b16 %v1002
      %v1079 = vunpack.c.l.b16 %v1003
      %v1080 = vunpack.c.l.b16 %v1004
      %v1081 = vunpack.c.l.b16 %v1005
      %v1082 = vunpack.c.l.b16 %v1006
      %v1083 = vunpack.c.l.b16 %v1007
      %v1084 = vunpack.c.l.b16 %v1008
      %v1085 = vunpack.c.l.b16 %v1009
      %v1086 = vunpack.c.l.b16 %v1010
      %v1087 = vunpack.c.l.b16 %v1011
      %v1088 = vunpack.c.l.b16 %v1012
      %v1089 = vunpack.c.l.b16 %v1013
      %v1090 = vunpack.c.l.b16 %v1014
      %v1091 = vunpack.c.l.b16 %v1015
      %v1092 = vunpack.c.l.b16 %v1016
      %v1093 = vunpack.c.l.b16 %v1017
      %v1094 = vunpack.c.l.b16 %v1018
      %v1095 = vunpack.c.l.b16 %v1019
      %v1096 = vunpack.c.l.b16 %v1020
      %v1097 = vunpack.c.l.b16 %v1021
      %v1098 = vunpack.c.l.b16 %v1022
      %v1099 = vpack.c.b16 %v1063, %v1062
      %v1100 = vpack.c.b16 %v1065, %v1064
      %v1101 = vpack.c.b16 %v1067, %v1066
      %v1102 = vpack.c.b16 %v1069, %v1068
      %v1103 = vpack.c.b16 %v1071, %v1070
      %v1104 = vpack.c.b16 %v1073, %v1072
      %v1105 = vpack.c.b16 %v1075, %v1074
      %v1106 = vpack.c.b16 %v1077, %v1076
      %v1107 = vpack.c.b16 %v1079, %v1078
      %v1108 = vpack.c.b16 %v1081, %v1080
      %v1109 = vpack.c.b16 %v1083, %v1082
      %v1110 = vpack.c.b16 %v1085, %v1084
      %v1111 = vpack.c.b16 %v1087, %v1086
      %v1112 = vpack.c.b16 %v1089, %v1088
      %v1113 = vpack.c.b16 %v1091, %v1090
      %v1114 = vpack.c.b16 %v1093, %v1092
      %v1115 = vpack.c.b16 %v1095, %v1094
      %v1116 = vpack.c.b16 %v1097, %v1096
      %v1117 = vpack.c.b16 %v1098, %v1098
      %v1118 = vrot.slane %v1099, 1
      %v1119 = vrot.slane %v1100, 1
      %v1120 = vsel %vm756, %v1118, %v1119
      %v1121 = vrot.slane %v1101, 1
      %v1122 = vsel %vm756, %v1119, %v1121
      %v1123 = vrot.slane %v1102, 1
      %v1124 = vsel %vm756, %v1121, %v1123
      %v1125 = vrot.slane %v1103, 1
      %v1126 = vsel %vm756, %v1123, %v1125
      %v1127 = vrot.slane %v1104, 1
      %v1128 = vsel %vm756, %v1125, %v1127
      %v1129 = vrot.slane %v1105, 1
      %v1130 = vsel %vm756, %v1127, %v1129
      %v1131 = vrot.slane %v1106, 1
      %v1132 = vsel %vm756, %v1129, %v1131
      %v1133 = vrot.slane %v1107, 1
      %v1134 = vsel %vm756, %v1131, %v1133
      %v1135 = vrot.slane %v1108, 1
      %v1136 = vsel %vm756, %v1133, %v1135
      %v1137 = vrot.slane %v1109, 1
      %v1138 = vsel %vm756, %v1135, %v1137
      %v1139 = vrot.slane %v1110, 1
      %v1140 = vsel %vm756, %v1137, %v1139
      %v1141 = vrot.slane %v1111, 1
      %v1142 = vsel %vm756, %v1139, %v1141
      %v1143 = vrot.slane %v1112, 1
      %v1144 = vsel %vm756, %v1141, %v1143
      %v1145 = vrot.slane %v1113, 1
      %v1146 = vsel %vm756, %v1143, %v1145
      %v1147 = vrot.slane %v1114, 1
      %v1148 = vsel %vm756, %v1145, %v1147
      %v1149 = vrot.slane %v1115, 1
      %v1150 = vsel %vm756, %v1147, %v1149
      %v1151 = vrot.slane %v1116, 1
      %v1152 = vsel %vm756, %v1149, %v1151
      %v1153 = vrot.slane %v1117, 1
      %v1154 = vsel %vm756, %v1151, %v1153
      %v1156 = vsel %vm454, %v1120, 0
      %v1159 = vsel %vm454, %v1122, 0
      %v1162 = vsel %vm454, %v1124, 0
      %v1165 = vsel %vm454, %v1126, 0
      %v1168 = vsel %vm454, %v1128, 0
      %v1171 = vsel %vm454, %v1130, 0
      %v1174 = vsel %vm454, %v1132, 0
      %v1177 = vsel %vm454, %v1134, 0
      %v1180 = vsel %vm454, %v1136, 0
      %v1183 = vsel %vm454, %v1138, 0
      %v1186 = vsel %vm454, %v1140, 0
      %v1189 = vsel %vm454, %v1142, 0
      %v1192 = vsel %vm454, %v1144, 0
      %v1195 = vsel %vm454, %v1146, 0
      %v1198 = vsel %vm454, %v1148, 0
      %v1201 = vsel %vm454, %v1150, 0
      %v1204 = vsel %vm454, %v1152, 0
      %v1207 = vsel %vm454, %v1154, 0
      %v1210 = vsel %vm509, %v1024, 0
      %1212 = vmatpush.bf16.msra.mxu0 0
      %1213 = vmatpush.bf16.msra.mxu0 0
      %1214 = vmatpush.bf16.msra.mxu0 0
      %1215 = vmatpush.bf16.msra.mxu0 0
      %1216 = vmatpush.bf16.msra.mxu0 0
      %1217 = vmatpush.bf16.msra.mxu0 0
      %1218 = vmatpush.bf16.msra.mxu0 0
      %1219 = vmatpush.bf16.msra.mxu0 %v1210
      %1220 = vmatmul.bf16.gmra.mxu0 %v1156
      %v1221 = vpop.f32.mrf.mxu0
      %v1222 = vadd.f32 0.0, %v1221
      %v1223 = vpop.f32.mrf.mxu0
      %v1224 = vadd.f32 0.0, %v1223
      %1225 = vmatmul.bf16.gmra.mxu0 %v1159
      %v1226 = vpop.f32.mrf.mxu0
      %v1227 = vadd.f32 0.0, %v1226
      %v1228 = vpop.f32.mrf.mxu0
      %v1229 = vadd.f32 0.0, %v1228
      %1230 = vmatmul.bf16.gmra.mxu0 %v1162
      %v1231 = vpop.f32.mrf.mxu0
      %v1232 = vadd.f32 0.0, %v1231
      %v1233 = vpop.f32.mrf.mxu0
      %v1234 = vadd.f32 0.0, %v1233
      %1235 = vmatmul.bf16.gmra.mxu0 %v1165
      %v1236 = vpop.f32.mrf.mxu0
      %v1237 = vadd.f32 0.0, %v1236
      %v1238 = vpop.f32.mrf.mxu0
      %v1239 = vadd.f32 0.0, %v1238
      %1240 = vmatmul.bf16.gmra.mxu0 %v1168
      %v1241 = vpop.f32.mrf.mxu0
      %v1242 = vadd.f32 0.0, %v1241
      %v1243 = vpop.f32.mrf.mxu0
      %v1244 = vadd.f32 0.0, %v1243
      %1245 = vmatmul.bf16.gmra.mxu0 %v1171
      %v1246 = vpop.f32.mrf.mxu0
      %v1247 = vadd.f32 0.0, %v1246
      %v1248 = vpop.f32.mrf.mxu0
      %v1249 = vadd.f32 0.0, %v1248
      %1250 = vmatmul.bf16.gmra.mxu0 %v1174
      %v1251 = vpop.f32.mrf.mxu0
      %v1252 = vadd.f32 0.0, %v1251
      %v1253 = vpop.f32.mrf.mxu0
      %v1254 = vadd.f32 0.0, %v1253
      %1255 = vmatmul.bf16.gmra.mxu0 %v1177
      %v1256 = vpop.f32.mrf.mxu0
      %v1257 = vadd.f32 0.0, %v1256
      %v1258 = vpop.f32.mrf.mxu0
      %v1259 = vadd.f32 0.0, %v1258
      %1260 = vmatmul.bf16.gmra.mxu0 %v1180
      %v1261 = vpop.f32.mrf.mxu0
      %v1262 = vadd.f32 0.0, %v1261
      %v1263 = vpop.f32.mrf.mxu0
      %v1264 = vadd.f32 0.0, %v1263
      %1265 = vmatmul.bf16.gmra.mxu0 %v1183
      %v1266 = vpop.f32.mrf.mxu0
      %v1267 = vadd.f32 0.0, %v1266
      %v1268 = vpop.f32.mrf.mxu0
      %v1269 = vadd.f32 0.0, %v1268
      %1270 = vmatmul.bf16.gmra.mxu0 %v1186
      %v1271 = vpop.f32.mrf.mxu0
      %v1272 = vadd.f32 0.0, %v1271
      %v1273 = vpop.f32.mrf.mxu0
      %v1274 = vadd.f32 0.0, %v1273
      %1275 = vmatmul.bf16.gmra.mxu0 %v1189
      %v1276 = vpop.f32.mrf.mxu0
      %v1277 = vadd.f32 0.0, %v1276
      %v1278 = vpop.f32.mrf.mxu0
      %v1279 = vadd.f32 0.0, %v1278
      %1280 = vmatmul.bf16.gmra.mxu0 %v1192
      %v1281 = vpop.f32.mrf.mxu0
      %v1282 = vadd.f32 0.0, %v1281
      %v1283 = vpop.f32.mrf.mxu0
      %v1284 = vadd.f32 0.0, %v1283
      %1285 = vmatmul.bf16.gmra.mxu0 %v1195
      %v1286 = vpop.f32.mrf.mxu0
      %v1287 = vadd.f32 0.0, %v1286
      %v1288 = vpop.f32.mrf.mxu0
      %v1289 = vadd.f32 0.0, %v1288
      %1290 = vmatmul.bf16.gmra.mxu0 %v1198
      %v1291 = vpop.f32.mrf.mxu0
      %v1292 = vadd.f32 0.0, %v1291
      %v1293 = vpop.f32.mrf.mxu0
      %v1294 = vadd.f32 0.0, %v1293
      %1295 = vmatmul.bf16.gmra.mxu0 %v1201
      %v1296 = vpop.f32.mrf.mxu0
      %v1297 = vadd.f32 0.0, %v1296
      %v1298 = vpop.f32.mrf.mxu0
      %v1299 = vadd.f32 0.0, %v1298
      %1300 = vmatmul.bf16.gmra.mxu0 %v1204
      %v1301 = vpop.f32.mrf.mxu0
      %v1302 = vadd.f32 0.0, %v1301
      %v1303 = vpop.f32.mrf.mxu0
      %v1304 = vadd.f32 0.0, %v1303
      %1305 = vmatmul.bf16.gmra.mxu0 %v1207
      %v1306 = vpop.f32.mrf.mxu0
      %v1307 = vadd.f32 0.0, %v1306
      %v1308 = vpop.f32.mrf.mxu0
      %v1309 = vadd.f32 0.0, %v1308
      %1310 = vdwg.mxu0
      %v1311 = vadd.f32 %v950, %v1222
      %v1312 = vadd.f32 %v951, %v1224
      %v1313 = vadd.f32 %v952, %v1227
      %v1314 = vadd.f32 %v953, %v1229
      %v1315 = vadd.f32 %v954, %v1232
      %v1316 = vadd.f32 %v955, %v1234
      %v1317 = vadd.f32 %v956, %v1237
      %v1318 = vadd.f32 %v957, %v1239
      %v1319 = vadd.f32 %v958, %v1242
      %v1320 = vadd.f32 %v959, %v1244
      %v1321 = vadd.f32 %v960, %v1247
      %v1322 = vadd.f32 %v961, %v1249
      %v1323 = vadd.f32 %v962, %v1252
      %v1324 = vadd.f32 %v963, %v1254
      %v1325 = vadd.f32 %v964, %v1257
      %v1326 = vadd.f32 %v965, %v1259
      %v1327 = vadd.f32 %v966, %v1262
      %v1328 = vadd.f32 %v967, %v1264
      %v1329 = vadd.f32 %v968, %v1267
      %v1330 = vadd.f32 %v969, %v1269
      %v1331 = vadd.f32 %v970, %v1272
      %v1332 = vadd.f32 %v971, %v1274
      %v1333 = vadd.f32 %v972, %v1277
      %v1334 = vadd.f32 %v973, %v1279
      %v1335 = vadd.f32 %v974, %v1282
      %v1336 = vadd.f32 %v975, %v1284
      %v1337 = vadd.f32 %v976, %v1287
      %v1338 = vadd.f32 %v977, %v1289
      %v1339 = vadd.f32 %v978, %v1292
      %v1340 = vadd.f32 %v979, %v1294
      %v1341 = vadd.f32 %v980, %v1297
      %v1342 = vadd.f32 %v981, %v1299
      %v1343 = vadd.f32 %v982, %v1302
      %v1344 = vadd.f32 %v983, %v1304
      %v1345 = vadd.f32 %v984, %v1307
      %v1346 = vadd.f32 %v985, %v1309
      %v1347 = vld [vmem:[%s165 + $0x98] sm:$0x3]
      %s1348 = scalar_lea.vmem %s1, 8
      %v1349 = vld [vmem:[%s1348] sm:$0x3]
      %v1351 = vunpack.c.l.b16 %v1347
      %v1352 = vpack.c.b16 %v1351, %v1351
      %vm1353 = vsmask.f32 6400
      %v1355 = vshrl.u32 %v1099, 16
      %v1357 = vrot.slane %v1355, 1
      %v1358 = vshll.u32 %v1099, 16
      %v1360 = vrot.slane %v1358, 2
      %v1361 = vor.u32 %v1357, %v1360
      %v1363 = vshrl.u32 %v1100, 16
      %v1365 = vrot.slane %v1363, 1
      %v1366 = vshll.u32 %v1100, 16
      %v1368 = vrot.slane %v1366, 2
      %v1369 = vor.u32 %v1365, %v1368
      %v1370 = vsel %vm1353, %v1361, %v1369
      %v1372 = vshrl.u32 %v1101, 16
      %v1374 = vrot.slane %v1372, 1
      %v1375 = vshll.u32 %v1101, 16
      %v1377 = vrot.slane %v1375, 2
      %v1378 = vor.u32 %v1374, %v1377
      %v1379 = vsel %vm1353, %v1369, %v1378
      %v1381 = vshrl.u32 %v1102, 16
      %v1383 = vrot.slane %v1381, 1
      %v1384 = vshll.u32 %v1102, 16
      %v1386 = vrot.slane %v1384, 2
      %v1387 = vor.u32 %v1383, %v1386
      %v1388 = vsel %vm1353, %v1378, %v1387
      %v1390 = vshrl.u32 %v1103, 16
      %v1392 = vrot.slane %v1390, 1
      %v1393 = vshll.u32 %v1103, 16
      %v1395 = vrot.slane %v1393, 2
      %v1396 = vor.u32 %v1392, %v1395
      %v1397 = vsel %vm1353, %v1387, %v1396
      %v1399 = vshrl.u32 %v1104, 16
      %v1401 = vrot.slane %v1399, 1
      %v1402 = vshll.u32 %v1104, 16
      %v1404 = vrot.slane %v1402, 2
      %v1405 = vor.u32 %v1401, %v1404
      %v1406 = vsel %vm1353, %v1396, %v1405
      %v1408 = vshrl.u32 %v1105, 16
      %v1410 = vrot.slane %v1408, 1
      %v1411 = vshll.u32 %v1105, 16
      %v1413 = vrot.slane %v1411, 2
      %v1414 = vor.u32 %v1410, %v1413
      %v1415 = vsel %vm1353, %v1405, %v1414
      %v1417 = vshrl.u32 %v1106, 16
      %v1419 = vrot.slane %v1417, 1
      %v1420 = vshll.u32 %v1106, 16
      %v1422 = vrot.slane %v1420, 2
      %v1423 = vor.u32 %v1419, %v1422
      %v1424 = vsel %vm1353, %v1414, %v1423
      %v1426 = vshrl.u32 %v1107, 16
      %v1428 = vrot.slane %v1426, 1
      %v1429 = vshll.u32 %v1107, 16
      %v1431 = vrot.slane %v1429, 2
      %v1432 = vor.u32 %v1428, %v1431
      %v1433 = vsel %vm1353, %v1423, %v1432
      %v1435 = vshrl.u32 %v1108, 16
      %v1437 = vrot.slane %v1435, 1
      %v1438 = vshll.u32 %v1108, 16
      %v1440 = vrot.slane %v1438, 2
      %v1441 = vor.u32 %v1437, %v1440
      %v1442 = vsel %vm1353, %v1432, %v1441
      %v1444 = vshrl.u32 %v1109, 16
      %v1446 = vrot.slane %v1444, 1
      %v1447 = vshll.u32 %v1109, 16
      %v1449 = vrot.slane %v1447, 2
      %v1450 = vor.u32 %v1446, %v1449
      %v1451 = vsel %vm1353, %v1441, %v1450
      %v1453 = vshrl.u32 %v1110, 16
      %v1455 = vrot.slane %v1453, 1
      %v1456 = vshll.u32 %v1110, 16
      %v1458 = vrot.slane %v1456, 2
      %v1459 = vor.u32 %v1455, %v1458
      %v1460 = vsel %vm1353, %v1450, %v1459
      %v1462 = vshrl.u32 %v1111, 16
      %v1464 = vrot.slane %v1462, 1
      %v1465 = vshll.u32 %v1111, 16
      %v1467 = vrot.slane %v1465, 2
      %v1468 = vor.u32 %v1464, %v1467
      %v1469 = vsel %vm1353, %v1459, %v1468
      %v1471 = vshrl.u32 %v1112, 16
      %v1473 = vrot.slane %v1471, 1
      %v1474 = vshll.u32 %v1112, 16
      %v1476 = vrot.slane %v1474, 2
      %v1477 = vor.u32 %v1473, %v1476
      %v1478 = vsel %vm1353, %v1468, %v1477
      %v1480 = vshrl.u32 %v1113, 16
      %v1482 = vrot.slane %v1480, 1
      %v1483 = vshll.u32 %v1113, 16
      %v1485 = vrot.slane %v1483, 2
      %v1486 = vor.u32 %v1482, %v1485
      %v1487 = vsel %vm1353, %v1477, %v1486
      %v1489 = vshrl.u32 %v1114, 16
      %v1491 = vrot.slane %v1489, 1
      %v1492 = vshll.u32 %v1114, 16
      %v1494 = vrot.slane %v1492, 2
      %v1495 = vor.u32 %v1491, %v1494
      %v1496 = vsel %vm1353, %v1486, %v1495
      %v1498 = vshrl.u32 %v1115, 16
      %v1500 = vrot.slane %v1498, 1
      %v1501 = vshll.u32 %v1115, 16
      %v1503 = vrot.slane %v1501, 2
      %v1504 = vor.u32 %v1500, %v1503
      %v1505 = vsel %vm1353, %v1495, %v1504
      %v1507 = vshrl.u32 %v1116, 16
      %v1509 = vrot.slane %v1507, 1
      %v1510 = vshll.u32 %v1116, 16
      %v1512 = vrot.slane %v1510, 2
      %v1513 = vor.u32 %v1509, %v1512
      %v1514 = vsel %vm1353, %v1504, %v1513
      %v1516 = vshrl.u32 %v1352, 16
      %v1518 = vrot.slane %v1516, 1
      %v1519 = vshll.u32 %v1352, 16
      %v1521 = vrot.slane %v1519, 2
      %v1522 = vor.u32 %v1518, %v1521
      %v1523 = vsel %vm1353, %v1513, %v1522
      %v1525 = vsel %vm454, %v1370, 0
      %v1528 = vsel %vm454, %v1379, 0
      %v1531 = vsel %vm454, %v1388, 0
      %v1534 = vsel %vm454, %v1397, 0
      %v1537 = vsel %vm454, %v1406, 0
      %v1540 = vsel %vm454, %v1415, 0
      %v1543 = vsel %vm454, %v1424, 0
      %v1546 = vsel %vm454, %v1433, 0
      %v1549 = vsel %vm454, %v1442, 0
      %v1552 = vsel %vm454, %v1451, 0
      %v1555 = vsel %vm454, %v1460, 0
      %v1558 = vsel %vm454, %v1469, 0
      %v1561 = vsel %vm454, %v1478, 0
      %v1564 = vsel %vm454, %v1487, 0
      %v1567 = vsel %vm454, %v1496, 0
      %v1570 = vsel %vm454, %v1505, 0
      %v1573 = vsel %vm454, %v1514, 0
      %v1576 = vsel %vm454, %v1523, 0
      %v1579 = vsel %vm509, %v1349, 0
      %1581 = vmatpush.bf16.msra.mxu0 0
      %1582 = vmatpush.bf16.msra.mxu0 0
      %1583 = vmatpush.bf16.msra.mxu0 0
      %1584 = vmatpush.bf16.msra.mxu0 0
      %1585 = vmatpush.bf16.msra.mxu0 0
      %1586 = vmatpush.bf16.msra.mxu0 0
      %1587 = vmatpush.bf16.msra.mxu0 0
      %1588 = vmatpush.bf16.msra.mxu0 %v1579
      %1589 = vmatmul.bf16.gmra.mxu0 %v1525
      %v1590 = vpop.f32.mrf.mxu0
      %v1591 = vadd.f32 0.0, %v1590
      %v1592 = vpop.f32.mrf.mxu0
      %v1593 = vadd.f32 0.0, %v1592
      %1594 = vmatmul.bf16.gmra.mxu0 %v1528
      %v1595 = vpop.f32.mrf.mxu0
      %v1596 = vadd.f32 0.0, %v1595
      %v1597 = vpop.f32.mrf.mxu0
      %v1598 = vadd.f32 0.0, %v1597
      %1599 = vmatmul.bf16.gmra.mxu0 %v1531
      %v1600 = vpop.f32.mrf.mxu0
      %v1601 = vadd.f32 0.0, %v1600
      %v1602 = vpop.f32.mrf.mxu0
      %v1603 = vadd.f32 0.0, %v1602
      %1604 = vmatmul.bf16.gmra.mxu0 %v1534
      %v1605 = vpop.f32.mrf.mxu0
      %v1606 = vadd.f32 0.0, %v1605
      %v1607 = vpop.f32.mrf.mxu0
      %v1608 = vadd.f32 0.0, %v1607
      %1609 = vmatmul.bf16.gmra.mxu0 %v1537
      %v1610 = vpop.f32.mrf.mxu0
      %v1611 = vadd.f32 0.0, %v1610
      %v1612 = vpop.f32.mrf.mxu0
      %v1613 = vadd.f32 0.0, %v1612
      %1614 = vmatmul.bf16.gmra.mxu0 %v1540
      %v1615 = vpop.f32.mrf.mxu0
      %v1616 = vadd.f32 0.0, %v1615
      %v1617 = vpop.f32.mrf.mxu0
      %v1618 = vadd.f32 0.0, %v1617
      %1619 = vmatmul.bf16.gmra.mxu0 %v1543
      %v1620 = vpop.f32.mrf.mxu0
      %v1621 = vadd.f32 0.0, %v1620
      %v1622 = vpop.f32.mrf.mxu0
      %v1623 = vadd.f32 0.0, %v1622
      %1624 = vmatmul.bf16.gmra.mxu0 %v1546
      %v1625 = vpop.f32.mrf.mxu0
      %v1626 = vadd.f32 0.0, %v1625
      %v1627 = vpop.f32.mrf.mxu0
      %v1628 = vadd.f32 0.0, %v1627
      %1629 = vmatmul.bf16.gmra.mxu0 %v1549
      %v1630 = vpop.f32.mrf.mxu0
      %v1631 = vadd.f32 0.0, %v1630
      %v1632 = vpop.f32.mrf.mxu0
      %v1633 = vadd.f32 0.0, %v1632
      %1634 = vmatmul.bf16.gmra.mxu0 %v1552
      %v1635 = vpop.f32.mrf.mxu0
      %v1636 = vadd.f32 0.0, %v1635
      %v1637 = vpop.f32.mrf.mxu0
      %v1638 = vadd.f32 0.0, %v1637
      %1639 = vmatmul.bf16.gmra.mxu0 %v1555
      %v1640 = vpop.f32.mrf.mxu0
      %v1641 = vadd.f32 0.0, %v1640
      %v1642 = vpop.f32.mrf.mxu0
      %v1643 = vadd.f32 0.0, %v1642
      %1644 = vmatmul.bf16.gmra.mxu0 %v1558
      %v1645 = vpop.f32.mrf.mxu0
      %v1646 = vadd.f32 0.0, %v1645
      %v1647 = vpop.f32.mrf.mxu0
      %v1648 = vadd.f32 0.0, %v1647
      %1649 = vmatmul.bf16.gmra.mxu0 %v1561
      %v1650 = vpop.f32.mrf.mxu0
      %v1651 = vadd.f32 0.0, %v1650
      %v1652 = vpop.f32.mrf.mxu0
      %v1653 = vadd.f32 0.0, %v1652
      %1654 = vmatmul.bf16.gmra.mxu0 %v1564
      %v1655 = vpop.f32.mrf.mxu0
      %v1656 = vadd.f32 0.0, %v1655
      %v1657 = vpop.f32.mrf.mxu0
      %v1658 = vadd.f32 0.0, %v1657
      %1659 = vmatmul.bf16.gmra.mxu0 %v1567
      %v1660 = vpop.f32.mrf.mxu0
      %v1661 = vadd.f32 0.0, %v1660
      %v1662 = vpop.f32.mrf.mxu0
      %v1663 = vadd.f32 0.0, %v1662
      %1664 = vmatmul.bf16.gmra.mxu0 %v1570
      %v1665 = vpop.f32.mrf.mxu0
      %v1666 = vadd.f32 0.0, %v1665
      %v1667 = vpop.f32.mrf.mxu0
      %v1668 = vadd.f32 0.0, %v1667
      %1669 = vmatmul.bf16.gmra.mxu0 %v1573
      %v1670 = vpop.f32.mrf.mxu0
      %v1671 = vadd.f32 0.0, %v1670
      %v1672 = vpop.f32.mrf.mxu0
      %v1673 = vadd.f32 0.0, %v1672
      %1674 = vmatmul.bf16.gmra.mxu0 %v1576
      %v1675 = vpop.f32.mrf.mxu0
      %v1676 = vadd.f32 0.0, %v1675
      %v1677 = vpop.f32.mrf.mxu0
      %v1678 = vadd.f32 0.0, %v1677
      %1679 = vdwg.mxu0
      %v1680 = vadd.f32 %v1311, %v1591
      %v1681 = vadd.f32 %v1312, %v1593
      %v1682 = vadd.f32 %v1313, %v1596
      %v1683 = vadd.f32 %v1314, %v1598
      %v1684 = vadd.f32 %v1315, %v1601
      %v1685 = vadd.f32 %v1316, %v1603
      %v1686 = vadd.f32 %v1317, %v1606
      %v1687 = vadd.f32 %v1318, %v1608
      %v1688 = vadd.f32 %v1319, %v1611
      %v1689 = vadd.f32 %v1320, %v1613
      %v1690 = vadd.f32 %v1321, %v1616
      %v1691 = vadd.f32 %v1322, %v1618
      %v1692 = vadd.f32 %v1323, %v1621
      %v1693 = vadd.f32 %v1324, %v1623
      %v1694 = vadd.f32 %v1325, %v1626
      %v1695 = vadd.f32 %v1326, %v1628
      %v1696 = vadd.f32 %v1327, %v1631
      %v1697 = vadd.f32 %v1328, %v1633
      %v1698 = vadd.f32 %v1329, %v1636
      %v1699 = vadd.f32 %v1330, %v1638
      %v1700 = vadd.f32 %v1331, %v1641
      %v1701 = vadd.f32 %v1332, %v1643
      %v1702 = vadd.f32 %v1333, %v1646
      %v1703 = vadd.f32 %v1334, %v1648
      %v1704 = vadd.f32 %v1335, %v1651
      %v1705 = vadd.f32 %v1336, %v1653
      %v1706 = vadd.f32 %v1337, %v1656
      %v1707 = vadd.f32 %v1338, %v1658
      %v1708 = vadd.f32 %v1339, %v1661
      %v1709 = vadd.f32 %v1340, %v1663
      %v1710 = vadd.f32 %v1341, %v1666
      %v1711 = vadd.f32 %v1342, %v1668
      %v1712 = vadd.f32 %v1343, %v1671
      %v1713 = vadd.f32 %v1344, %v1673
      %v1714 = vadd.f32 %v1345, %v1676
      %v1715 = vadd.f32 %v1346, %v1678
      %v1716 = vld [vmem:[%s165 + $0x8] sm:$0xc]
      %s1717 = scalar_lea.vmem %s1, 10
      %v1718 = vld [vmem:[%s1717] sm:$0x3]
      %v1720 = vunpack.c.l.b16 %v1716
      %v1721 = vpack.c.b16 %v1063, %v1720
      %vm1722 = vcmask 1045504
      %v1723 = vrot.slane %v1721, 2
      %v1724 = vrot.slane %v1100, 2
      %v1725 = vsel %vm1722, %v1723, %v1724
      %v1726 = vrot.slane %v1101, 2
      %v1727 = vsel %vm1722, %v1724, %v1726
      %v1728 = vrot.slane %v1102, 2
      %v1729 = vsel %vm1722, %v1726, %v1728
      %v1730 = vrot.slane %v1103, 2
      %v1731 = vsel %vm1722, %v1728, %v1730
      %v1732 = vrot.slane %v1104, 2
      %v1733 = vsel %vm1722, %v1730, %v1732
      %v1734 = vrot.slane %v1105, 2
      %v1735 = vsel %vm1722, %v1732, %v1734
      %v1736 = vrot.slane %v1106, 2
      %v1737 = vsel %vm1722, %v1734, %v1736
      %v1738 = vrot.slane %v1107, 2
      %v1739 = vsel %vm1722, %v1736, %v1738
      %v1740 = vrot.slane %v1108, 2
      %v1741 = vsel %vm1722, %v1738, %v1740
      %v1742 = vrot.slane %v1109, 2
      %v1743 = vsel %vm1722, %v1740, %v1742
      %v1744 = vrot.slane %v1110, 2
      %v1745 = vsel %vm1722, %v1742, %v1744
      %v1746 = vrot.slane %v1111, 2
      %v1747 = vsel %vm1722, %v1744, %v1746
      %v1748 = vrot.slane %v1112, 2
      %v1749 = vsel %vm1722, %v1746, %v1748
      %v1750 = vrot.slane %v1113, 2
      %v1751 = vsel %vm1722, %v1748, %v1750
      %v1752 = vrot.slane %v1114, 2
      %v1753 = vsel %vm1722, %v1750, %v1752
      %v1754 = vrot.slane %v1115, 2
      %v1755 = vsel %vm1722, %v1752, %v1754
      %v1756 = vrot.slane %v1116, 2
      %v1757 = vsel %vm1722, %v1754, %v1756
      %v1758 = vrot.slane %v1352, 2
      %v1759 = vsel %vm1722, %v1756, %v1758
      %v1761 = vsel %vm454, %v1725, 0
      %v1764 = vsel %vm454, %v1727, 0
      %v1767 = vsel %vm454, %v1729, 0
      %v1770 = vsel %vm454, %v1731, 0
      %v1773 = vsel %vm454, %v1733, 0
      %v1776 = vsel %vm454, %v1735, 0
      %v1779 = vsel %vm454, %v1737, 0
      %v1782 = vsel %vm454, %v1739, 0
      %v1785 = vsel %vm454, %v1741, 0
      %v1788 = vsel %vm454, %v1743, 0
      %v1791 = vsel %vm454, %v1745, 0
      %v1794 = vsel %vm454, %v1747, 0
      %v1797 = vsel %vm454, %v1749, 0
      %v1800 = vsel %vm454, %v1751, 0
      %v1803 = vsel %vm454, %v1753, 0
      %v1806 = vsel %vm454, %v1755, 0
      %v1809 = vsel %vm454, %v1757, 0
      %v1812 = vsel %vm454, %v1759, 0
      %v1815 = vsel %vm509, %v1718, 0
      %1817 = vmatpush.bf16.msra.mxu0 0
      %1818 = vmatpush.bf16.msra.mxu0 0
      %1819 = vmatpush.bf16.msra.mxu0 0
      %1820 = vmatpush.bf16.msra.mxu0 0
      %1821 = vmatpush.bf16.msra.mxu0 0
      %1822 = vmatpush.bf16.msra.mxu0 0
      %1823 = vmatpush.bf16.msra.mxu0 0
      %1824 = vmatpush.bf16.msra.mxu0 %v1815
      %1825 = vmatmul.bf16.gmra.mxu0 %v1761
      %v1826 = vpop.f32.mrf.mxu0
      %v1827 = vadd.f32 0.0, %v1826
      %v1828 = vpop.f32.mrf.mxu0
      %v1829 = vadd.f32 0.0, %v1828
      %1830 = vmatmul.bf16.gmra.mxu0 %v1764
      %v1831 = vpop.f32.mrf.mxu0
      %v1832 = vadd.f32 0.0, %v1831
      %v1833 = vpop.f32.mrf.mxu0
      %v1834 = vadd.f32 0.0, %v1833
      %1835 = vmatmul.bf16.gmra.mxu0 %v1767
      %v1836 = vpop.f32.mrf.mxu0
      %v1837 = vadd.f32 0.0, %v1836
      %v1838 = vpop.f32.mrf.mxu0
      %v1839 = vadd.f32 0.0, %v1838
      %1840 = vmatmul.bf16.gmra.mxu0 %v1770
      %v1841 = vpop.f32.mrf.mxu0
      %v1842 = vadd.f32 0.0, %v1841
      %v1843 = vpop.f32.mrf.mxu0
      %v1844 = vadd.f32 0.0, %v1843
      %1845 = vmatmul.bf16.gmra.mxu0 %v1773
      %v1846 = vpop.f32.mrf.mxu0
      %v1847 = vadd.f32 0.0, %v1846
      %v1848 = vpop.f32.mrf.mxu0
      %v1849 = vadd.f32 0.0, %v1848
      %1850 = vmatmul.bf16.gmra.mxu0 %v1776
      %v1851 = vpop.f32.mrf.mxu0
      %v1852 = vadd.f32 0.0, %v1851
      %v1853 = vpop.f32.mrf.mxu0
      %v1854 = vadd.f32 0.0, %v1853
      %1855 = vmatmul.bf16.gmra.mxu0 %v1779
      %v1856 = vpop.f32.mrf.mxu0
      %v1857 = vadd.f32 0.0, %v1856
      %v1858 = vpop.f32.mrf.mxu0
      %v1859 = vadd.f32 0.0, %v1858
      %1860 = vmatmul.bf16.gmra.mxu0 %v1782
      %v1861 = vpop.f32.mrf.mxu0
      %v1862 = vadd.f32 0.0, %v1861
      %v1863 = vpop.f32.mrf.mxu0
      %v1864 = vadd.f32 0.0, %v1863
      %1865 = vmatmul.bf16.gmra.mxu0 %v1785
      %v1866 = vpop.f32.mrf.mxu0
      %v1867 = vadd.f32 0.0, %v1866
      %v1868 = vpop.f32.mrf.mxu0
      %v1869 = vadd.f32 0.0, %v1868
      %1870 = vmatmul.bf16.gmra.mxu0 %v1788
      %v1871 = vpop.f32.mrf.mxu0
      %v1872 = vadd.f32 0.0, %v1871
      %v1873 = vpop.f32.mrf.mxu0
      %v1874 = vadd.f32 0.0, %v1873
      %1875 = vmatmul.bf16.gmra.mxu0 %v1791
      %v1876 = vpop.f32.mrf.mxu0
      %v1877 = vadd.f32 0.0, %v1876
      %v1878 = vpop.f32.mrf.mxu0
      %v1879 = vadd.f32 0.0, %v1878
      %1880 = vmatmul.bf16.gmra.mxu0 %v1794
      %v1881 = vpop.f32.mrf.mxu0
      %v1882 = vadd.f32 0.0, %v1881
      %v1883 = vpop.f32.mrf.mxu0
      %v1884 = vadd.f32 0.0, %v1883
      %1885 = vmatmul.bf16.gmra.mxu0 %v1797
      %v1886 = vpop.f32.mrf.mxu0
      %v1887 = vadd.f32 0.0, %v1886
      %v1888 = vpop.f32.mrf.mxu0
      %v1889 = vadd.f32 0.0, %v1888
      %1890 = vmatmul.bf16.gmra.mxu0 %v1800
      %v1891 = vpop.f32.mrf.mxu0
      %v1892 = vadd.f32 0.0, %v1891
      %v1893 = vpop.f32.mrf.mxu0
      %v1894 = vadd.f32 0.0, %v1893
      %1895 = vmatmul.bf16.gmra.mxu0 %v1803
      %v1896 = vpop.f32.mrf.mxu0
      %v1897 = vadd.f32 0.0, %v1896
      %v1898 = vpop.f32.mrf.mxu0
      %v1899 = vadd.f32 0.0, %v1898
      %1900 = vmatmul.bf16.gmra.mxu0 %v1806
      %v1901 = vpop.f32.mrf.mxu0
      %v1902 = vadd.f32 0.0, %v1901
      %v1903 = vpop.f32.mrf.mxu0
      %v1904 = vadd.f32 0.0, %v1903
      %1905 = vmatmul.bf16.gmra.mxu0 %v1809
      %v1906 = vpop.f32.mrf.mxu0
      %v1907 = vadd.f32 0.0, %v1906
      %v1908 = vpop.f32.mrf.mxu0
      %v1909 = vadd.f32 0.0, %v1908
      %1910 = vmatmul.bf16.gmra.mxu0 %v1812
      %v1911 = vpop.f32.mrf.mxu0
      %v1912 = vadd.f32 0.0, %v1911
      %v1913 = vpop.f32.mrf.mxu0
      %v1914 = vadd.f32 0.0, %v1913
      %1915 = vdwg.mxu0
      %v1916 = vadd.f32 %v1680, %v1827
      %v1917 = vadd.f32 %v1681, %v1829
      %v1918 = vadd.f32 %v1682, %v1832
      %v1919 = vadd.f32 %v1683, %v1834
      %v1920 = vadd.f32 %v1684, %v1837
      %v1921 = vadd.f32 %v1685, %v1839
      %v1922 = vadd.f32 %v1686, %v1842
      %v1923 = vadd.f32 %v1687, %v1844
      %v1924 = vadd.f32 %v1688, %v1847
      %v1925 = vadd.f32 %v1689, %v1849
      %v1926 = vadd.f32 %v1690, %v1852
      %v1927 = vadd.f32 %v1691, %v1854
      %v1928 = vadd.f32 %v1692, %v1857
      %v1929 = vadd.f32 %v1693, %v1859
      %v1930 = vadd.f32 %v1694, %v1862
      %v1931 = vadd.f32 %v1695, %v1864
      %v1932 = vadd.f32 %v1696, %v1867
      %v1933 = vadd.f32 %v1697, %v1869
      %v1934 = vadd.f32 %v1698, %v1872
      %v1935 = vadd.f32 %v1699, %v1874
      %v1936 = vadd.f32 %v1700, %v1877
      %v1937 = vadd.f32 %v1701, %v1879
      %v1938 = vadd.f32 %v1702, %v1882
      %v1939 = vadd.f32 %v1703, %v1884
      %v1940 = vadd.f32 %v1704, %v1887
      %v1941 = vadd.f32 %v1705, %v1889
      %v1942 = vadd.f32 %v1706, %v1892
      %v1943 = vadd.f32 %v1707, %v1894
      %v1944 = vadd.f32 %v1708, %v1897
      %v1945 = vadd.f32 %v1709, %v1899
      %v1946 = vadd.f32 %v1710, %v1902
      %v1947 = vadd.f32 %v1711, %v1904
      %v1948 = vadd.f32 %v1712, %v1907
      %v1949 = vadd.f32 %v1713, %v1909
      %v1950 = vadd.f32 %v1714, %v1912
      %v1951 = vadd.f32 %v1715, %v1914
      %v1952 = vld [vmem:[%s165 + $0x10] sm:$0xc]
      %v1953 = vld [vmem:[%s165 + $0x14] sm:$0xf]
      %v1954 = vld [vmem:[%s165 + $0x18] sm:$0xf]
      %v1955 = vld [vmem:[%s165 + $0x1c] sm:$0xf]
      %v1956 = vld [vmem:[%s165 + $0x20] sm:$0xf]
      %v1957 = vld [vmem:[%s165 + $0x24] sm:$0xf]
      %v1958 = vld [vmem:[%s165 + $0x28] sm:$0xf]
      %v1959 = vld [vmem:[%s165 + $0x2c] sm:$0xf]
      %v1960 = vld [vmem:[%s165 + $0x30] sm:$0xf]
      %v1961 = vld [vmem:[%s165 + $0x34] sm:$0xf]
      %v1962 = vld [vmem:[%s165 + $0x38] sm:$0xf]
      %v1963 = vld [vmem:[%s165 + $0x3c] sm:$0xf]
      %v1964 = vld [vmem:[%s165 + $0x40] sm:$0xf]
      %v1965 = vld [vmem:[%s165 + $0x44] sm:$0xf]
      %v1966 = vld [vmem:[%s165 + $0x48] sm:$0xf]
      %v1967 = vld [vmem:[%s165 + $0x4c] sm:$0xf]
      %v1968 = vld [vmem:[%s165 + $0x50] sm:$0xf]
      %v1969 = vld [vmem:[%s165 + $0x54] sm:$0xf]
      %v1970 = vld [vmem:[%s165 + $0x58] sm:$0xf]
      %v1971 = vld [vmem:[%s165 + $0x5c] sm:$0xf]
      %v1972 = vld [vmem:[%s165 + $0x60] sm:$0xf]
      %v1973 = vld [vmem:[%s165 + $0x64] sm:$0xf]
      %v1974 = vld [vmem:[%s165 + $0x68] sm:$0xf]
      %v1975 = vld [vmem:[%s165 + $0x6c] sm:$0xf]
      %v1976 = vld [vmem:[%s165 + $0x70] sm:$0xf]
      %v1977 = vld [vmem:[%s165 + $0x74] sm:$0xf]
      %v1978 = vld [vmem:[%s165 + $0x78] sm:$0xf]
      %v1979 = vld [vmem:[%s165 + $0x7c] sm:$0xf]
      %v1980 = vld [vmem:[%s165 + $0x80] sm:$0xf]
      %v1981 = vld [vmem:[%s165 + $0x84] sm:$0xf]
      %v1982 = vld [vmem:[%s165 + $0x88] sm:$0xf]
      %v1983 = vld [vmem:[%s165 + $0x8c] sm:$0xf]
      %v1984 = vld [vmem:[%s165 + $0x90] sm:$0xf]
      %v1985 = vld [vmem:[%s165 + $0x94] sm:$0xf]
      %v1986 = vld [vmem:[%s165 + $0x98] sm:$0xf]
      %v1987 = vld [vmem:[%s165 + $0x9c] sm:$0xf]
      %v1988 = vld [vmem:[%s165 + $0xa0] sm:$0x3]
      %s1989 = scalar_lea.vmem %s1, 12
      %v1990 = vld [vmem:[%s1989] sm:$0x3]
      %v2028 = vunpack.c.l.b16 %v1952
      %v2029 = vunpack.c.l.b16 %v1953
      %v2030 = vunpack.c.l.b16 %v1954
      %v2031 = vunpack.c.l.b16 %v1955
      %v2032 = vunpack.c.l.b16 %v1956
      %v2033 = vunpack.c.l.b16 %v1957
      %v2034 = vunpack.c.l.b16 %v1958
      %v2035 = vunpack.c.l.b16 %v1959
      %v2036 = vunpack.c.l.b16 %v1960
      %v2037 = vunpack.c.l.b16 %v1961
      %v2038 = vunpack.c.l.b16 %v1962
      %v2039 = vunpack.c.l.b16 %v1963
      %v2040 = vunpack.c.l.b16 %v1964
      %v2041 = vunpack.c.l.b16 %v1965
      %v2042 = vunpack.c.l.b16 %v1966
      %v2043 = vunpack.c.l.b16 %v1967
      %v2044 = vunpack.c.l.b16 %v1968
      %v2045 = vunpack.c.l.b16 %v1969
      %v2046 = vunpack.c.l.b16 %v1970
      %v2047 = vunpack.c.l.b16 %v1971
      %v2048 = vunpack.c.l.b16 %v1972
      %v2049 = vunpack.c.l.b16 %v1973
      %v2050 = vunpack.c.l.b16 %v1974
      %v2051 = vunpack.c.l.b16 %v1975
      %v2052 = vunpack.c.l.b16 %v1976
      %v2053 = vunpack.c.l.b16 %v1977
      %v2054 = vunpack.c.l.b16 %v1978
      %v2055 = vunpack.c.l.b16 %v1979
      %v2056 = vunpack.c.l.b16 %v1980
      %v2057 = vunpack.c.l.b16 %v1981
      %v2058 = vunpack.c.l.b16 %v1982
      %v2059 = vunpack.c.l.b16 %v1983
      %v2060 = vunpack.c.l.b16 %v1984
      %v2061 = vunpack.c.l.b16 %v1985
      %v2062 = vunpack.c.l.b16 %v1986
      %v2063 = vunpack.c.l.b16 %v1987
      %v2064 = vunpack.c.l.b16 %v1988
      %v2065 = vpack.c.b16 %v2029, %v2028
      %v2066 = vpack.c.b16 %v2031, %v2030
      %v2067 = vpack.c.b16 %v2033, %v2032
      %v2068 = vpack.c.b16 %v2035, %v2034
      %v2069 = vpack.c.b16 %v2037, %v2036
      %v2070 = vpack.c.b16 %v2039, %v2038
      %v2071 = vpack.c.b16 %v2041, %v2040
      %v2072 = vpack.c.b16 %v2043, %v2042
      %v2073 = vpack.c.b16 %v2045, %v2044
      %v2074 = vpack.c.b16 %v2047, %v2046
      %v2075 = vpack.c.b16 %v2049, %v2048
      %v2076 = vpack.c.b16 %v2051, %v2050
      %v2077 = vpack.c.b16 %v2053, %v2052
      %v2078 = vpack.c.b16 %v2055, %v2054
      %v2079 = vpack.c.b16 %v2057, %v2056
      %v2080 = vpack.c.b16 %v2059, %v2058
      %v2081 = vpack.c.b16 %v2061, %v2060
      %v2082 = vpack.c.b16 %v2063, %v2062
      %v2083 = vpack.c.b16 %v2064, %v2064
      %v2084 = vrot.slane %v2065, 2
      %v2085 = vrot.slane %v2066, 2
      %v2086 = vsel %vm1722, %v2084, %v2085
      %v2087 = vrot.slane %v2067, 2
      %v2088 = vsel %vm1722, %v2085, %v2087
      %v2089 = vrot.slane %v2068, 2
      %v2090 = vsel %vm1722, %v2087, %v2089
      %v2091 = vrot.slane %v2069, 2
      %v2092 = vsel %vm1722, %v2089, %v2091
      %v2093 = vrot.slane %v2070, 2
      %v2094 = vsel %vm1722, %v2091, %v2093
      %v2095 = vrot.slane %v2071, 2
      %v2096 = vsel %vm1722, %v2093, %v2095
      %v2097 = vrot.slane %v2072, 2
      %v2098 = vsel %vm1722, %v2095, %v2097
      %v2099 = vrot.slane %v2073, 2
      %v2100 = vsel %vm1722, %v2097, %v2099
      %v2101 = vrot.slane %v2074, 2
      %v2102 = vsel %vm1722, %v2099, %v2101
      %v2103 = vrot.slane %v2075, 2
      %v2104 = vsel %vm1722, %v2101, %v2103
      %v2105 = vrot.slane %v2076, 2
      %v2106 = vsel %vm1722, %v2103, %v2105
      %v2107 = vrot.slane %v2077, 2
      %v2108 = vsel %vm1722, %v2105, %v2107
      %v2109 = vrot.slane %v2078, 2
      %v2110 = vsel %vm1722, %v2107, %v2109
      %v2111 = vrot.slane %v2079, 2
      %v2112 = vsel %vm1722, %v2109, %v2111
      %v2113 = vrot.slane %v2080, 2
      %v2114 = vsel %vm1722, %v2111, %v2113
      %v2115 = vrot.slane %v2081, 2
      %v2116 = vsel %vm1722, %v2113, %v2115
      %v2117 = vrot.slane %v2082, 2
      %v2118 = vsel %vm1722, %v2115, %v2117
      %v2119 = vrot.slane %v2083, 2
      %v2120 = vsel %vm1722, %v2117, %v2119
      %v2122 = vsel %vm454, %v2086, 0
      %v2125 = vsel %vm454, %v2088, 0
      %v2128 = vsel %vm454, %v2090, 0
      %v2131 = vsel %vm454, %v2092, 0
      %v2134 = vsel %vm454, %v2094, 0
      %v2137 = vsel %vm454, %v2096, 0
      %v2140 = vsel %vm454, %v2098, 0
      %v2143 = vsel %vm454, %v2100, 0
      %v2146 = vsel %vm454, %v2102, 0
      %v2149 = vsel %vm454, %v2104, 0
      %v2152 = vsel %vm454, %v2106, 0
      %v2155 = vsel %vm454, %v2108, 0
      %v2158 = vsel %vm454, %v2110, 0
      %v2161 = vsel %vm454, %v2112, 0
      %v2164 = vsel %vm454, %v2114, 0
      %v2167 = vsel %vm454, %v2116, 0
      %v2170 = vsel %vm454, %v2118, 0
      %v2173 = vsel %vm454, %v2120, 0
      %v2176 = vsel %vm509, %v1990, 0
      %2178 = vmatpush.bf16.msra.mxu0 0
      %2179 = vmatpush.bf16.msra.mxu0 0
      %2180 = vmatpush.bf16.msra.mxu0 0
      %2181 = vmatpush.bf16.msra.mxu0 0
      %2182 = vmatpush.bf16.msra.mxu0 0
      %2183 = vmatpush.bf16.msra.mxu0 0
      %2184 = vmatpush.bf16.msra.mxu0 0
      %2185 = vmatpush.bf16.msra.mxu0 %v2176
      %2186 = vmatmul.bf16.gmra.mxu0 %v2122
      %v2187 = vpop.f32.mrf.mxu0
      %v2188 = vadd.f32 0.0, %v2187
      %v2189 = vpop.f32.mrf.mxu0
      %v2190 = vadd.f32 0.0, %v2189
      %2191 = vmatmul.bf16.gmra.mxu0 %v2125
      %v2192 = vpop.f32.mrf.mxu0
      %v2193 = vadd.f32 0.0, %v2192
      %v2194 = vpop.f32.mrf.mxu0
      %v2195 = vadd.f32 0.0, %v2194
      %2196 = vmatmul.bf16.gmra.mxu0 %v2128
      %v2197 = vpop.f32.mrf.mxu0
      %v2198 = vadd.f32 0.0, %v2197
      %v2199 = vpop.f32.mrf.mxu0
      %v2200 = vadd.f32 0.0, %v2199
      %2201 = vmatmul.bf16.gmra.mxu0 %v2131
      %v2202 = vpop.f32.mrf.mxu0
      %v2203 = vadd.f32 0.0, %v2202
      %v2204 = vpop.f32.mrf.mxu0
      %v2205 = vadd.f32 0.0, %v2204
      %2206 = vmatmul.bf16.gmra.mxu0 %v2134
      %v2207 = vpop.f32.mrf.mxu0
      %v2208 = vadd.f32 0.0, %v2207
      %v2209 = vpop.f32.mrf.mxu0
      %v2210 = vadd.f32 0.0, %v2209
      %2211 = vmatmul.bf16.gmra.mxu0 %v2137
      %v2212 = vpop.f32.mrf.mxu0
      %v2213 = vadd.f32 0.0, %v2212
      %v2214 = vpop.f32.mrf.mxu0
      %v2215 = vadd.f32 0.0, %v2214
      %2216 = vmatmul.bf16.gmra.mxu0 %v2140
      %v2217 = vpop.f32.mrf.mxu0
      %v2218 = vadd.f32 0.0, %v2217
      %v2219 = vpop.f32.mrf.mxu0
      %v2220 = vadd.f32 0.0, %v2219
      %2221 = vmatmul.bf16.gmra.mxu0 %v2143
      %v2222 = vpop.f32.mrf.mxu0
      %v2223 = vadd.f32 0.0, %v2222
      %v2224 = vpop.f32.mrf.mxu0
      %v2225 = vadd.f32 0.0, %v2224
      %2226 = vmatmul.bf16.gmra.mxu0 %v2146
      %v2227 = vpop.f32.mrf.mxu0
      %v2228 = vadd.f32 0.0, %v2227
      %v2229 = vpop.f32.mrf.mxu0
      %v2230 = vadd.f32 0.0, %v2229
      %2231 = vmatmul.bf16.gmra.mxu0 %v2149
      %v2232 = vpop.f32.mrf.mxu0
      %v2233 = vadd.f32 0.0, %v2232
      %v2234 = vpop.f32.mrf.mxu0
      %v2235 = vadd.f32 0.0, %v2234
      %2236 = vmatmul.bf16.gmra.mxu0 %v2152
      %v2237 = vpop.f32.mrf.mxu0
      %v2238 = vadd.f32 0.0, %v2237
      %v2239 = vpop.f32.mrf.mxu0
      %v2240 = vadd.f32 0.0, %v2239
      %2241 = vmatmul.bf16.gmra.mxu0 %v2155
      %v2242 = vpop.f32.mrf.mxu0
      %v2243 = vadd.f32 0.0, %v2242
      %v2244 = vpop.f32.mrf.mxu0
      %v2245 = vadd.f32 0.0, %v2244
      %2246 = vmatmul.bf16.gmra.mxu0 %v2158
      %v2247 = vpop.f32.mrf.mxu0
      %v2248 = vadd.f32 0.0, %v2247
      %v2249 = vpop.f32.mrf.mxu0
      %v2250 = vadd.f32 0.0, %v2249
      %2251 = vmatmul.bf16.gmra.mxu0 %v2161
      %v2252 = vpop.f32.mrf.mxu0
      %v2253 = vadd.f32 0.0, %v2252
      %v2254 = vpop.f32.mrf.mxu0
      %v2255 = vadd.f32 0.0, %v2254
      %2256 = vmatmul.bf16.gmra.mxu0 %v2164
      %v2257 = vpop.f32.mrf.mxu0
      %v2258 = vadd.f32 0.0, %v2257
      %v2259 = vpop.f32.mrf.mxu0
      %v2260 = vadd.f32 0.0, %v2259
      %2261 = vmatmul.bf16.gmra.mxu0 %v2167
      %v2262 = vpop.f32.mrf.mxu0
      %v2263 = vadd.f32 0.0, %v2262
      %v2264 = vpop.f32.mrf.mxu0
      %v2265 = vadd.f32 0.0, %v2264
      %2266 = vmatmul.bf16.gmra.mxu0 %v2170
      %v2267 = vpop.f32.mrf.mxu0
      %v2268 = vadd.f32 0.0, %v2267
      %v2269 = vpop.f32.mrf.mxu0
      %v2270 = vadd.f32 0.0, %v2269
      %2271 = vmatmul.bf16.gmra.mxu0 %v2173
      %v2272 = vpop.f32.mrf.mxu0
      %v2273 = vadd.f32 0.0, %v2272
      %v2274 = vpop.f32.mrf.mxu0
      %v2275 = vadd.f32 0.0, %v2274
      %2276 = vdwg.mxu0
      %v2277 = vadd.f32 %v1916, %v2188
      %v2278 = vadd.f32 %v1917, %v2190
      %v2279 = vadd.f32 %v1918, %v2193
      %v2280 = vadd.f32 %v1919, %v2195
      %v2281 = vadd.f32 %v1920, %v2198
      %v2282 = vadd.f32 %v1921, %v2200
      %v2283 = vadd.f32 %v1922, %v2203
      %v2284 = vadd.f32 %v1923, %v2205
      %v2285 = vadd.f32 %v1924, %v2208
      %v2286 = vadd.f32 %v1925, %v2210
      %v2287 = vadd.f32 %v1926, %v2213
      %v2288 = vadd.f32 %v1927, %v2215
      %v2289 = vadd.f32 %v1928, %v2218
      %v2290 = vadd.f32 %v1929, %v2220
      %v2291 = vadd.f32 %v1930, %v2223
      %v2292 = vadd.f32 %v1931, %v2225
      %v2293 = vadd.f32 %v1932, %v2228
      %v2294 = vadd.f32 %v1933, %v2230
      %v2295 = vadd.f32 %v1934, %v2233
      %v2296 = vadd.f32 %v1935, %v2235
      %v2297 = vadd.f32 %v1936, %v2238
      %v2298 = vadd.f32 %v1937, %v2240
      %v2299 = vadd.f32 %v1938, %v2243
      %v2300 = vadd.f32 %v1939, %v2245
      %v2301 = vadd.f32 %v1940, %v2248
      %v2302 = vadd.f32 %v1941, %v2250
      %v2303 = vadd.f32 %v1942, %v2253
      %v2304 = vadd.f32 %v1943, %v2255
      %v2305 = vadd.f32 %v1944, %v2258
      %v2306 = vadd.f32 %v1945, %v2260
      %v2307 = vadd.f32 %v1946, %v2263
      %v2308 = vadd.f32 %v1947, %v2265
      %v2309 = vadd.f32 %v1948, %v2268
      %v2310 = vadd.f32 %v1949, %v2270
      %v2311 = vadd.f32 %v1950, %v2273
      %v2312 = vadd.f32 %v1951, %v2275
      %v2313 = vld [vmem:[%s165 + $0xa0] sm:$0x7]
      %s2314 = scalar_lea.vmem %s1, 14
      %v2315 = vld [vmem:[%s2314] sm:$0x3]
      %v2317 = vunpack.c.l.b16 %v2313
      %v2318 = vpack.c.b16 %v2317, %v2317
      %vm2319 = vsmask.f32 5376
      %v2321 = vshrl.u32 %v2065, 16
      %v2323 = vrot.slane %v2321, 2
      %v2324 = vshll.u32 %v2065, 16
      %v2326 = vrot.slane %v2324, 3
      %v2327 = vor.u32 %v2323, %v2326
      %v2329 = vshrl.u32 %v2066, 16
      %v2331 = vrot.slane %v2329, 2
      %v2332 = vshll.u32 %v2066, 16
      %v2334 = vrot.slane %v2332, 3
      %v2335 = vor.u32 %v2331, %v2334
      %v2336 = vsel %vm2319, %v2327, %v2335
      %v2338 = vshrl.u32 %v2067, 16
      %v2340 = vrot.slane %v2338, 2
      %v2341 = vshll.u32 %v2067, 16
      %v2343 = vrot.slane %v2341, 3
      %v2344 = vor.u32 %v2340, %v2343
      %v2345 = vsel %vm2319, %v2335, %v2344
      %v2347 = vshrl.u32 %v2068, 16
      %v2349 = vrot.slane %v2347, 2
      %v2350 = vshll.u32 %v2068, 16
      %v2352 = vrot.slane %v2350, 3
      %v2353 = vor.u32 %v2349, %v2352
      %v2354 = vsel %vm2319, %v2344, %v2353
      %v2356 = vshrl.u32 %v2069, 16
      %v2358 = vrot.slane %v2356, 2
      %v2359 = vshll.u32 %v2069, 16
      %v2361 = vrot.slane %v2359, 3
      %v2362 = vor.u32 %v2358, %v2361
      %v2363 = vsel %vm2319, %v2353, %v2362
      %v2365 = vshrl.u32 %v2070, 16
      %v2367 = vrot.slane %v2365, 2
      %v2368 = vshll.u32 %v2070, 16
      %v2370 = vrot.slane %v2368, 3
      %v2371 = vor.u32 %v2367, %v2370
      %v2372 = vsel %vm2319, %v2362, %v2371
      %v2374 = vshrl.u32 %v2071, 16
      %v2376 = vrot.slane %v2374, 2
      %v2377 = vshll.u32 %v2071, 16
      %v2379 = vrot.slane %v2377, 3
      %v2380 = vor.u32 %v2376, %v2379
      %v2381 = vsel %vm2319, %v2371, %v2380
      %v2383 = vshrl.u32 %v2072, 16
      %v2385 = vrot.slane %v2383, 2
      %v2386 = vshll.u32 %v2072, 16
      %v2388 = vrot.slane %v2386, 3
      %v2389 = vor.u32 %v2385, %v2388
      %v2390 = vsel %vm2319, %v2380, %v2389
      %v2392 = vshrl.u32 %v2073, 16
      %v2394 = vrot.slane %v2392, 2
      %v2395 = vshll.u32 %v2073, 16
      %v2397 = vrot.slane %v2395, 3
      %v2398 = vor.u32 %v2394, %v2397
      %v2399 = vsel %vm2319, %v2389, %v2398
      %v2401 = vshrl.u32 %v2074, 16
      %v2403 = vrot.slane %v2401, 2
      %v2404 = vshll.u32 %v2074, 16
      %v2406 = vrot.slane %v2404, 3
      %v2407 = vor.u32 %v2403, %v2406
      %v2408 = vsel %vm2319, %v2398, %v2407
      %v2410 = vshrl.u32 %v2075, 16
      %v2412 = vrot.slane %v2410, 2
      %v2413 = vshll.u32 %v2075, 16
      %v2415 = vrot.slane %v2413, 3
      %v2416 = vor.u32 %v2412, %v2415
      %v2417 = vsel %vm2319, %v2407, %v2416
      %v2419 = vshrl.u32 %v2076, 16
      %v2421 = vrot.slane %v2419, 2
      %v2422 = vshll.u32 %v2076, 16
      %v2424 = vrot.slane %v2422, 3
      %v2425 = vor.u32 %v2421, %v2424
      %v2426 = vsel %vm2319, %v2416, %v2425
      %v2428 = vshrl.u32 %v2077, 16
      %v2430 = vrot.slane %v2428, 2
      %v2431 = vshll.u32 %v2077, 16
      %v2433 = vrot.slane %v2431, 3
      %v2434 = vor.u32 %v2430, %v2433
      %v2435 = vsel %vm2319, %v2425, %v2434
      %v2437 = vshrl.u32 %v2078, 16
      %v2439 = vrot.slane %v2437, 2
      %v2440 = vshll.u32 %v2078, 16
      %v2442 = vrot.slane %v2440, 3
      %v2443 = vor.u32 %v2439, %v2442
      %v2444 = vsel %vm2319, %v2434, %v2443
      %v2446 = vshrl.u32 %v2079, 16
      %v2448 = vrot.slane %v2446, 2
      %v2449 = vshll.u32 %v2079, 16
      %v2451 = vrot.slane %v2449, 3
      %v2452 = vor.u32 %v2448, %v2451
      %v2453 = vsel %vm2319, %v2443, %v2452
      %v2455 = vshrl.u32 %v2080, 16
      %v2457 = vrot.slane %v2455, 2
      %v2458 = vshll.u32 %v2080, 16
      %v2460 = vrot.slane %v2458, 3
      %v2461 = vor.u32 %v2457, %v2460
      %v2462 = vsel %vm2319, %v2452, %v2461
      %v2464 = vshrl.u32 %v2081, 16
      %v2466 = vrot.slane %v2464, 2
      %v2467 = vshll.u32 %v2081, 16
      %v2469 = vrot.slane %v2467, 3
      %v2470 = vor.u32 %v2466, %v2469
      %v2471 = vsel %vm2319, %v2461, %v2470
      %v2473 = vshrl.u32 %v2082, 16
      %v2475 = vrot.slane %v2473, 2
      %v2476 = vshll.u32 %v2082, 16
      %v2478 = vrot.slane %v2476, 3
      %v2479 = vor.u32 %v2475, %v2478
      %v2480 = vsel %vm2319, %v2470, %v2479
      %v2482 = vshrl.u32 %v2318, 16
      %v2484 = vrot.slane %v2482, 2
      %v2485 = vshll.u32 %v2318, 16
      %v2487 = vrot.slane %v2485, 3
      %v2488 = vor.u32 %v2484, %v2487
      %v2489 = vsel %vm2319, %v2479, %v2488
      %v2491 = vsel %vm454, %v2336, 0
      %v2494 = vsel %vm454, %v2345, 0
      %v2497 = vsel %vm454, %v2354, 0
      %v2500 = vsel %vm454, %v2363, 0
      %v2503 = vsel %vm454, %v2372, 0
      %v2506 = vsel %vm454, %v2381, 0
      %v2509 = vsel %vm454, %v2390, 0
      %v2512 = vsel %vm454, %v2399, 0
      %v2515 = vsel %vm454, %v2408, 0
      %v2518 = vsel %vm454, %v2417, 0
      %v2521 = vsel %vm454, %v2426, 0
      %v2524 = vsel %vm454, %v2435, 0
      %v2527 = vsel %vm454, %v2444, 0
      %v2530 = vsel %vm454, %v2453, 0
      %v2533 = vsel %vm454, %v2462, 0
      %v2536 = vsel %vm454, %v2471, 0
      %v2539 = vsel %vm454, %v2480, 0
      %v2542 = vsel %vm454, %v2489, 0
      %v2545 = vsel %vm509, %v2315, 0
      %2547 = vmatpush.bf16.msra.mxu0 0
      %2548 = vmatpush.bf16.msra.mxu0 0
      %2549 = vmatpush.bf16.msra.mxu0 0
      %2550 = vmatpush.bf16.msra.mxu0 0
      %2551 = vmatpush.bf16.msra.mxu0 0
      %2552 = vmatpush.bf16.msra.mxu0 0
      %2553 = vmatpush.bf16.msra.mxu0 0
      %2554 = vmatpush.bf16.msra.mxu0 %v2545
      %2555 = vmatmul.bf16.gmra.mxu0 %v2491
      %v2556 = vpop.f32.mrf.mxu0
      %v2557 = vadd.f32 0.0, %v2556
      %v2558 = vpop.f32.mrf.mxu0
      %v2559 = vadd.f32 0.0, %v2558
      %2560 = vmatmul.bf16.gmra.mxu0 %v2494
      %v2561 = vpop.f32.mrf.mxu0
      %v2562 = vadd.f32 0.0, %v2561
      %v2563 = vpop.f32.mrf.mxu0
      %v2564 = vadd.f32 0.0, %v2563
      %2565 = vmatmul.bf16.gmra.mxu0 %v2497
      %v2566 = vpop.f32.mrf.mxu0
      %v2567 = vadd.f32 0.0, %v2566
      %v2568 = vpop.f32.mrf.mxu0
      %v2569 = vadd.f32 0.0, %v2568
      %2570 = vmatmul.bf16.gmra.mxu0 %v2500
      %v2571 = vpop.f32.mrf.mxu0
      %v2572 = vadd.f32 0.0, %v2571
      %v2573 = vpop.f32.mrf.mxu0
      %v2574 = vadd.f32 0.0, %v2573
      %2575 = vmatmul.bf16.gmra.mxu0 %v2503
      %v2576 = vpop.f32.mrf.mxu0
      %v2577 = vadd.f32 0.0, %v2576
      %v2578 = vpop.f32.mrf.mxu0
      %v2579 = vadd.f32 0.0, %v2578
      %2580 = vmatmul.bf16.gmra.mxu0 %v2506
      %v2581 = vpop.f32.mrf.mxu0
      %v2582 = vadd.f32 0.0, %v2581
      %v2583 = vpop.f32.mrf.mxu0
      %v2584 = vadd.f32 0.0, %v2583
      %2585 = vmatmul.bf16.gmra.mxu0 %v2509
      %v2586 = vpop.f32.mrf.mxu0
      %v2587 = vadd.f32 0.0, %v2586
      %v2588 = vpop.f32.mrf.mxu0
      %v2589 = vadd.f32 0.0, %v2588
      %2590 = vmatmul.bf16.gmra.mxu0 %v2512
      %v2591 = vpop.f32.mrf.mxu0
      %v2592 = vadd.f32 0.0, %v2591
      %v2593 = vpop.f32.mrf.mxu0
      %v2594 = vadd.f32 0.0, %v2593
      %2595 = vmatmul.bf16.gmra.mxu0 %v2515
      %v2596 = vpop.f32.mrf.mxu0
      %v2597 = vadd.f32 0.0, %v2596
      %v2598 = vpop.f32.mrf.mxu0
      %v2599 = vadd.f32 0.0, %v2598
      %2600 = vmatmul.bf16.gmra.mxu0 %v2518
      %v2601 = vpop.f32.mrf.mxu0
      %v2602 = vadd.f32 0.0, %v2601
      %v2603 = vpop.f32.mrf.mxu0
      %v2604 = vadd.f32 0.0, %v2603
      %2605 = vmatmul.bf16.gmra.mxu0 %v2521
      %v2606 = vpop.f32.mrf.mxu0
      %v2607 = vadd.f32 0.0, %v2606
      %v2608 = vpop.f32.mrf.mxu0
      %v2609 = vadd.f32 0.0, %v2608
      %2610 = vmatmul.bf16.gmra.mxu0 %v2524
      %v2611 = vpop.f32.mrf.mxu0
      %v2612 = vadd.f32 0.0, %v2611
      %v2613 = vpop.f32.mrf.mxu0
      %v2614 = vadd.f32 0.0, %v2613
      %2615 = vmatmul.bf16.gmra.mxu0 %v2527
      %v2616 = vpop.f32.mrf.mxu0
      %v2617 = vadd.f32 0.0, %v2616
      %v2618 = vpop.f32.mrf.mxu0
      %v2619 = vadd.f32 0.0, %v2618
      %2620 = vmatmul.bf16.gmra.mxu0 %v2530
      %v2621 = vpop.f32.mrf.mxu0
      %v2622 = vadd.f32 0.0, %v2621
      %v2623 = vpop.f32.mrf.mxu0
      %v2624 = vadd.f32 0.0, %v2623
      %2625 = vmatmul.bf16.gmra.mxu0 %v2533
      %v2626 = vpop.f32.mrf.mxu0
      %v2627 = vadd.f32 0.0, %v2626
      %v2628 = vpop.f32.mrf.mxu0
      %v2629 = vadd.f32 0.0, %v2628
      %2630 = vmatmul.bf16.gmra.mxu0 %v2536
      %v2631 = vpop.f32.mrf.mxu0
      %v2632 = vadd.f32 0.0, %v2631
      %v2633 = vpop.f32.mrf.mxu0
      %v2634 = vadd.f32 0.0, %v2633
      %2635 = vmatmul.bf16.gmra.mxu0 %v2539
      %v2636 = vpop.f32.mrf.mxu0
      %v2637 = vadd.f32 0.0, %v2636
      %v2638 = vpop.f32.mrf.mxu0
      %v2639 = vadd.f32 0.0, %v2638
      %2640 = vmatmul.bf16.gmra.mxu0 %v2542
      %v2641 = vpop.f32.mrf.mxu0
      %v2642 = vadd.f32 0.0, %v2641
      %v2643 = vpop.f32.mrf.mxu0
      %v2644 = vadd.f32 0.0, %v2643
      %2645 = vdwg.mxu0
      %v2646 = vadd.f32 %v2277, %v2557
      %v2647 = vadd.f32 %v2278, %v2559
      %v2648 = vadd.f32 %v2279, %v2562
      %v2649 = vadd.f32 %v2280, %v2564
      %v2650 = vadd.f32 %v2281, %v2567
      %v2651 = vadd.f32 %v2282, %v2569
      %v2652 = vadd.f32 %v2283, %v2572
      %v2653 = vadd.f32 %v2284, %v2574
      %v2654 = vadd.f32 %v2285, %v2577
      %v2655 = vadd.f32 %v2286, %v2579
      %v2656 = vadd.f32 %v2287, %v2582
      %v2657 = vadd.f32 %v2288, %v2584
      %v2658 = vadd.f32 %v2289, %v2587
      %v2659 = vadd.f32 %v2290, %v2589
      %v2660 = vadd.f32 %v2291, %v2592
      %v2661 = vadd.f32 %v2292, %v2594
      %v2662 = vadd.f32 %v2293, %v2597
      %v2663 = vadd.f32 %v2294, %v2599
      %v2664 = vadd.f32 %v2295, %v2602
      %v2665 = vadd.f32 %v2296, %v2604
      %v2666 = vadd.f32 %v2297, %v2607
      %v2667 = vadd.f32 %v2298, %v2609
      %v2668 = vadd.f32 %v2299, %v2612
      %v2669 = vadd.f32 %v2300, %v2614
      %v2670 = vadd.f32 %v2301, %v2617
      %v2671 = vadd.f32 %v2302, %v2619
      %v2672 = vadd.f32 %v2303, %v2622
      %v2673 = vadd.f32 %v2304, %v2624
      %v2674 = vadd.f32 %v2305, %v2627
      %v2675 = vadd.f32 %v2306, %v2629
      %v2676 = vadd.f32 %v2307, %v2632
      %v2677 = vadd.f32 %v2308, %v2634
      %v2678 = vadd.f32 %v2309, %v2637
      %v2679 = vadd.f32 %v2310, %v2639
      %v2680 = vadd.f32 %v2311, %v2642
      %v2681 = vadd.f32 %v2312, %v2644
      %v2682 = vld [vmem:[%s165 + $0x10] sm:$0x8]
      %s2683 = scalar_lea.vmem %s1, 16
      %v2684 = vld [vmem:[%s2683] sm:$0x3]
      %v2686 = vunpack.c.l.b16 %v2682
      %v2687 = vpack.c.b16 %v2029, %v2686
      %vm2688 = vcmask 1044480
      %v2689 = vrot.slane %v2687, 3
      %v2690 = vrot.slane %v2066, 3
      %v2691 = vsel %vm2688, %v2689, %v2690
      %v2692 = vrot.slane %v2067, 3
      %v2693 = vsel %vm2688, %v2690, %v2692
      %v2694 = vrot.slane %v2068, 3
      %v2695 = vsel %vm2688, %v2692, %v2694
      %v2696 = vrot.slane %v2069, 3
      %v2697 = vsel %vm2688, %v2694, %v2696
      %v2698 = vrot.slane %v2070, 3
      %v2699 = vsel %vm2688, %v2696, %v2698
      %v2700 = vrot.slane %v2071, 3
      %v2701 = vsel %vm2688, %v2698, %v2700
      %v2702 = vrot.slane %v2072, 3
      %v2703 = vsel %vm2688, %v2700, %v2702
      %v2704 = vrot.slane %v2073, 3
      %v2705 = vsel %vm2688, %v2702, %v2704
      %v2706 = vrot.slane %v2074, 3
      %v2707 = vsel %vm2688, %v2704, %v2706
      %v2708 = vrot.slane %v2075, 3
      %v2709 = vsel %vm2688, %v2706, %v2708
      %v2710 = vrot.slane %v2076, 3
      %v2711 = vsel %vm2688, %v2708, %v2710
      %v2712 = vrot.slane %v2077, 3
      %v2713 = vsel %vm2688, %v2710, %v2712
      %v2714 = vrot.slane %v2078, 3
      %v2715 = vsel %vm2688, %v2712, %v2714
      %v2716 = vrot.slane %v2079, 3
      %v2717 = vsel %vm2688, %v2714, %v2716
      %v2718 = vrot.slane %v2080, 3
      %v2719 = vsel %vm2688, %v2716, %v2718
      %v2720 = vrot.slane %v2081, 3
      %v2721 = vsel %vm2688, %v2718, %v2720
      %v2722 = vrot.slane %v2082, 3
      %v2723 = vsel %vm2688, %v2720, %v2722
      %v2724 = vrot.slane %v2318, 3
      %v2725 = vsel %vm2688, %v2722, %v2724
      %v2727 = vsel %vm454, %v2691, 0
      %v2730 = vsel %vm454, %v2693, 0
      %v2733 = vsel %vm454, %v2695, 0
      %v2736 = vsel %vm454, %v2697, 0
      %v2739 = vsel %vm454, %v2699, 0
      %v2742 = vsel %vm454, %v2701, 0
      %v2745 = vsel %vm454, %v2703, 0
      %v2748 = vsel %vm454, %v2705, 0
      %v2751 = vsel %vm454, %v2707, 0
      %v2754 = vsel %vm454, %v2709, 0
      %v2757 = vsel %vm454, %v2711, 0
      %v2760 = vsel %vm454, %v2713, 0
      %v2763 = vsel %vm454, %v2715, 0
      %v2766 = vsel %vm454, %v2717, 0
      %v2769 = vsel %vm454, %v2719, 0
      %v2772 = vsel %vm454, %v2721, 0
      %v2775 = vsel %vm454, %v2723, 0
      %v2778 = vsel %vm454, %v2725, 0
      %v2781 = vsel %vm509, %v2684, 0
      %2783 = vmatpush.bf16.msra.mxu0 0
      %2784 = vmatpush.bf16.msra.mxu0 0
      %2785 = vmatpush.bf16.msra.mxu0 0
      %2786 = vmatpush.bf16.msra.mxu0 0
      %2787 = vmatpush.bf16.msra.mxu0 0
      %2788 = vmatpush.bf16.msra.mxu0 0
      %2789 = vmatpush.bf16.msra.mxu0 0
      %2790 = vmatpush.bf16.msra.mxu0 %v2781
      %2791 = vmatmul.bf16.gmra.mxu0 %v2727
      %v2792 = vpop.f32.mrf.mxu0
      %v2793 = vadd.f32 0.0, %v2792
      %v2794 = vpop.f32.mrf.mxu0
      %v2795 = vadd.f32 0.0, %v2794
      %2796 = vmatmul.bf16.gmra.mxu0 %v2730
      %v2797 = vpop.f32.mrf.mxu0
      %v2798 = vadd.f32 0.0, %v2797
      %v2799 = vpop.f32.mrf.mxu0
      %v2800 = vadd.f32 0.0, %v2799
      %2801 = vmatmul.bf16.gmra.mxu0 %v2733
      %v2802 = vpop.f32.mrf.mxu0
      %v2803 = vadd.f32 0.0, %v2802
      %v2804 = vpop.f32.mrf.mxu0
      %v2805 = vadd.f32 0.0, %v2804
      %2806 = vmatmul.bf16.gmra.mxu0 %v2736
      %v2807 = vpop.f32.mrf.mxu0
      %v2808 = vadd.f32 0.0, %v2807
      %v2809 = vpop.f32.mrf.mxu0
      %v2810 = vadd.f32 0.0, %v2809
      %2811 = vmatmul.bf16.gmra.mxu0 %v2739
      %v2812 = vpop.f32.mrf.mxu0
      %v2813 = vadd.f32 0.0, %v2812
      %v2814 = vpop.f32.mrf.mxu0
      %v2815 = vadd.f32 0.0, %v2814
      %2816 = vmatmul.bf16.gmra.mxu0 %v2742
      %v2817 = vpop.f32.mrf.mxu0
      %v2818 = vadd.f32 0.0, %v2817
      %v2819 = vpop.f32.mrf.mxu0
      %v2820 = vadd.f32 0.0, %v2819
      %2821 = vmatmul.bf16.gmra.mxu0 %v2745
      %v2822 = vpop.f32.mrf.mxu0
      %v2823 = vadd.f32 0.0, %v2822
      %v2824 = vpop.f32.mrf.mxu0
      %v2825 = vadd.f32 0.0, %v2824
      %2826 = vmatmul.bf16.gmra.mxu0 %v2748
      %v2827 = vpop.f32.mrf.mxu0
      %v2828 = vadd.f32 0.0, %v2827
      %v2829 = vpop.f32.mrf.mxu0
      %v2830 = vadd.f32 0.0, %v2829
      %2831 = vmatmul.bf16.gmra.mxu0 %v2751
      %v2832 = vpop.f32.mrf.mxu0
      %v2833 = vadd.f32 0.0, %v2832
      %v2834 = vpop.f32.mrf.mxu0
      %v2835 = vadd.f32 0.0, %v2834
      %2836 = vmatmul.bf16.gmra.mxu0 %v2754
      %v2837 = vpop.f32.mrf.mxu0
      %v2838 = vadd.f32 0.0, %v2837
      %v2839 = vpop.f32.mrf.mxu0
      %v2840 = vadd.f32 0.0, %v2839
      %2841 = vmatmul.bf16.gmra.mxu0 %v2757
      %v2842 = vpop.f32.mrf.mxu0
      %v2843 = vadd.f32 0.0, %v2842
      %v2844 = vpop.f32.mrf.mxu0
      %v2845 = vadd.f32 0.0, %v2844
      %2846 = vmatmul.bf16.gmra.mxu0 %v2760
      %v2847 = vpop.f32.mrf.mxu0
      %v2848 = vadd.f32 0.0, %v2847
      %v2849 = vpop.f32.mrf.mxu0
      %v2850 = vadd.f32 0.0, %v2849
      %2851 = vmatmul.bf16.gmra.mxu0 %v2763
      %v2852 = vpop.f32.mrf.mxu0
      %v2853 = vadd.f32 0.0, %v2852
      %v2854 = vpop.f32.mrf.mxu0
      %v2855 = vadd.f32 0.0, %v2854
      %2856 = vmatmul.bf16.gmra.mxu0 %v2766
      %v2857 = vpop.f32.mrf.mxu0
      %v2858 = vadd.f32 0.0, %v2857
      %v2859 = vpop.f32.mrf.mxu0
      %v2860 = vadd.f32 0.0, %v2859
      %2861 = vmatmul.bf16.gmra.mxu0 %v2769
      %v2862 = vpop.f32.mrf.mxu0
      %v2863 = vadd.f32 0.0, %v2862
      %v2864 = vpop.f32.mrf.mxu0
      %v2865 = vadd.f32 0.0, %v2864
      %2866 = vmatmul.bf16.gmra.mxu0 %v2772
      %v2867 = vpop.f32.mrf.mxu0
      %v2868 = vadd.f32 0.0, %v2867
      %v2869 = vpop.f32.mrf.mxu0
      %v2870 = vadd.f32 0.0, %v2869
      %2871 = vmatmul.bf16.gmra.mxu0 %v2775
      %v2872 = vpop.f32.mrf.mxu0
      %v2873 = vadd.f32 0.0, %v2872
      %v2874 = vpop.f32.mrf.mxu0
      %v2875 = vadd.f32 0.0, %v2874
      %2876 = vmatmul.bf16.gmra.mxu0 %v2778
      %v2877 = vpop.f32.mrf.mxu0
      %v2878 = vadd.f32 0.0, %v2877
      %v2879 = vpop.f32.mrf.mxu0
      %v2880 = vadd.f32 0.0, %v2879
      %2881 = vdwg.mxu0
      %v2882 = vadd.f32 %v2646, %v2793
      %v2883 = vadd.f32 %v2647, %v2795
      %v2884 = vadd.f32 %v2648, %v2798
      %v2885 = vadd.f32 %v2649, %v2800
      %v2886 = vadd.f32 %v2650, %v2803
      %v2887 = vadd.f32 %v2651, %v2805
      %v2888 = vadd.f32 %v2652, %v2808
      %v2889 = vadd.f32 %v2653, %v2810
      %v2890 = vadd.f32 %v2654, %v2813
      %v2891 = vadd.f32 %v2655, %v2815
      %v2892 = vadd.f32 %v2656, %v2818
      %v2893 = vadd.f32 %v2657, %v2820
      %v2894 = vadd.f32 %v2658, %v2823
      %v2895 = vadd.f32 %v2659, %v2825
      %v2896 = vadd.f32 %v2660, %v2828
      %v2897 = vadd.f32 %v2661, %v2830
      %v2898 = vadd.f32 %v2662, %v2833
      %v2899 = vadd.f32 %v2663, %v2835
      %v2900 = vadd.f32 %v2664, %v2838
      %v2901 = vadd.f32 %v2665, %v2840
      %v2902 = vadd.f32 %v2666, %v2843
      %v2903 = vadd.f32 %v2667, %v2845
      %v2904 = vadd.f32 %v2668, %v2848
      %v2905 = vadd.f32 %v2669, %v2850
      %v2906 = vadd.f32 %v2670, %v2853
      %v2907 = vadd.f32 %v2671, %v2855
      %v2908 = vadd.f32 %v2672, %v2858
      %v2909 = vadd.f32 %v2673, %v2860
      %v2910 = vadd.f32 %v2674, %v2863
      %v2911 = vadd.f32 %v2675, %v2865
      %v2912 = vadd.f32 %v2676, %v2868
      %v2913 = vadd.f32 %v2677, %v2870
      %v2914 = vadd.f32 %v2678, %v2873
      %v2915 = vadd.f32 %v2679, %v2875
      %v2916 = vadd.f32 %v2680, %v2878
      %v2917 = vadd.f32 %v2681, %v2880
      %v2918 = vld [vmem:[%s2] sm:$0x1]
      %v2920 = vperm.slane %v2918, 0
      %v2922 = vadd.f32 %v2882, %v2920
      %v2923 = vadd.f32 %v2883, %v2920
      %v2924 = vadd.f32 %v2884, %v2920
      %v2925 = vadd.f32 %v2885, %v2920
      %v2926 = vadd.f32 %v2886, %v2920
      %v2927 = vadd.f32 %v2887, %v2920
      %v2928 = vadd.f32 %v2888, %v2920
      %v2929 = vadd.f32 %v2889, %v2920
      %v2930 = vadd.f32 %v2890, %v2920
      %v2931 = vadd.f32 %v2891, %v2920
      %v2932 = vadd.f32 %v2892, %v2920
      %v2933 = vadd.f32 %v2893, %v2920
      %v2934 = vadd.f32 %v2894, %v2920
      %v2935 = vadd.f32 %v2895, %v2920
      %v2936 = vadd.f32 %v2896, %v2920
      %v2937 = vadd.f32 %v2897, %v2920
      %v2938 = vadd.f32 %v2898, %v2920
      %v2939 = vadd.f32 %v2899, %v2920
      %v2940 = vadd.f32 %v2900, %v2920
      %v2941 = vadd.f32 %v2901, %v2920
      %v2942 = vadd.f32 %v2902, %v2920
      %v2943 = vadd.f32 %v2903, %v2920
      %v2944 = vadd.f32 %v2904, %v2920
      %v2945 = vadd.f32 %v2905, %v2920
      %v2946 = vadd.f32 %v2906, %v2920
      %v2947 = vadd.f32 %v2907, %v2920
      %v2948 = vadd.f32 %v2908, %v2920
      %v2949 = vadd.f32 %v2909, %v2920
      %v2950 = vadd.f32 %v2910, %v2920
      %v2951 = vadd.f32 %v2911, %v2920
      %v2952 = vadd.f32 %v2912, %v2920
      %v2953 = vadd.f32 %v2913, %v2920
      %v2954 = vadd.f32 %v2914, %v2920
      %v2955 = vadd.f32 %v2915, %v2920
      %v2956 = vadd.f32 %v2916, %v2920
      %v2957 = vadd.f32 %v2917, %v2920
      %v2958 = vsub.f32 0.0, %v2922
      %v2959 = vsub.f32 0.0, %v2923
      %v2960 = vsub.f32 0.0, %v2924
      %v2961 = vsub.f32 0.0, %v2925
      %v2962 = vsub.f32 0.0, %v2926
      %v2963 = vsub.f32 0.0, %v2927
      %v2964 = vsub.f32 0.0, %v2928
      %v2965 = vsub.f32 0.0, %v2929
      %v2966 = vsub.f32 0.0, %v2930
      %v2967 = vsub.f32 0.0, %v2931
      %v2968 = vsub.f32 0.0, %v2932
      %v2969 = vsub.f32 0.0, %v2933
      %v2970 = vsub.f32 0.0, %v2934
      %v2971 = vsub.f32 0.0, %v2935
      %v2972 = vsub.f32 0.0, %v2936
      %v2973 = vsub.f32 0.0, %v2937
      %v2974 = vsub.f32 0.0, %v2938
      %v2975 = vsub.f32 0.0, %v2939
      %v2976 = vsub.f32 0.0, %v2940
      %v2977 = vsub.f32 0.0, %v2941
      %v2978 = vsub.f32 0.0, %v2942
      %v2979 = vsub.f32 0.0, %v2943
      %v2980 = vsub.f32 0.0, %v2944
      %v2981 = vsub.f32 0.0, %v2945
      %v2982 = vsub.f32 0.0, %v2946
      %v2983 = vsub.f32 0.0, %v2947
      %v2984 = vsub.f32 0.0, %v2948
      %v2985 = vsub.f32 0.0, %v2949
      %v2986 = vsub.f32 0.0, %v2950
      %v2987 = vsub.f32 0.0, %v2951
      %v2988 = vsub.f32 0.0, %v2952
      %v2989 = vsub.f32 0.0, %v2953
      %v2990 = vsub.f32 0.0, %v2954
      %v2991 = vsub.f32 0.0, %v2955
      %v2992 = vsub.f32 0.0, %v2956
      %v2993 = vsub.f32 0.0, %v2957
      %v2994 = vmul.f32 %v2958, 1.442695
      %v2995 = vpow.pop %v2994
      %v2996 = vmul.f32 %v2959, 1.442695
      %v2997 = vpow.pop %v2996
      %v2998 = vmul.f32 %v2960, 1.442695
      %v2999 = vpow.pop %v2998
      %v3000 = vmul.f32 %v2961, 1.442695
      %v3001 = vpow.pop %v3000
      %v3002 = vmul.f32 %v2962, 1.442695
      %v3003 = vpow.pop %v3002
      %v3004 = vmul.f32 %v2963, 1.442695
      %v3005 = vpow.pop %v3004
      %v3006 = vmul.f32 %v2964, 1.442695
      %v3007 = vpow.pop %v3006
      %v3008 = vmul.f32 %v2965, 1.442695
      %v3009 = vpow.pop %v3008
      %v3010 = vmul.f32 %v2966, 1.442695
      %v3011 = vpow.pop %v3010
      %v3012 = vmul.f32 %v2967, 1.442695
      %v3013 = vpow.pop %v3012
      %v3014 = vmul.f32 %v2968, 1.442695
      %v3015 = vpow.pop %v3014
      %v3016 = vmul.f32 %v2969, 1.442695
      %v3017 = vpow.pop %v3016
      %v3018 = vmul.f32 %v2970, 1.442695
      %v3019 = vpow.pop %v3018
      %v3020 = vmul.f32 %v2971, 1.442695
      %v3021 = vpow.pop %v3020
      %v3022 = vmul.f32 %v2972, 1.442695
      %v3023 = vpow.pop %v3022
      %v3024 = vmul.f32 %v2973, 1.442695
      %v3025 = vpow.pop %v3024
      %v3026 = vmul.f32 %v2974, 1.442695
      %v3027 = vpow.pop %v3026
      %v3028 = vmul.f32 %v2975, 1.442695
      %v3029 = vpow.pop %v3028
      %v3030 = vmul.f32 %v2976, 1.442695
      %v3031 = vpow.pop %v3030
      %v3032 = vmul.f32 %v2977, 1.442695
      %v3033 = vpow.pop %v3032
      %v3034 = vmul.f32 %v2978, 1.442695
      %v3035 = vpow.pop %v3034
      %v3036 = vmul.f32 %v2979, 1.442695
      %v3037 = vpow.pop %v3036
      %v3038 = vmul.f32 %v2980, 1.442695
      %v3039 = vpow.pop %v3038
      %v3040 = vmul.f32 %v2981, 1.442695
      %v3041 = vpow.pop %v3040
      %v3042 = vmul.f32 %v2982, 1.442695
      %v3043 = vpow.pop %v3042
      %v3044 = vmul.f32 %v2983, 1.442695
      %v3045 = vpow.pop %v3044
      %v3046 = vmul.f32 %v2984, 1.442695
      %v3047 = vpow.pop %v3046
      %v3048 = vmul.f32 %v2985, 1.442695
      %v3049 = vpow.pop %v3048
      %v3050 = vmul.f32 %v2986, 1.442695
      %v3051 = vpow.pop %v3050
      %v3052 = vmul.f32 %v2987, 1.442695
      %v3053 = vpow.pop %v3052
      %v3054 = vmul.f32 %v2988, 1.442695
      %v3055 = vpow.pop %v3054
      %v3056 = vmul.f32 %v2989, 1.442695
      %v3057 = vpow.pop %v3056
      %v3058 = vmul.f32 %v2990, 1.442695
      %v3059 = vpow.pop %v3058
      %v3060 = vmul.f32 %v2991, 1.442695
      %v3061 = vpow.pop %v3060
      %v3062 = vmul.f32 %v2992, 1.442695
      %v3063 = vpow.pop %v3062
      %v3064 = vmul.f32 %v2993, 1.442695
      %v3065 = vpow.pop %v3064
      %v3066 = vadd.f32 %v2995, 1.0
      %v3067 = vadd.f32 %v2997, 1.0
      %v3068 = vadd.f32 %v2999, 1.0
      %v3069 = vadd.f32 %v3001, 1.0
      %v3070 = vadd.f32 %v3003, 1.0
      %v3071 = vadd.f32 %v3005, 1.0
      %v3072 = vadd.f32 %v3007, 1.0
      %v3073 = vadd.f32 %v3009, 1.0
      %v3074 = vadd.f32 %v3011, 1.0
      %v3075 = vadd.f32 %v3013, 1.0
      %v3076 = vadd.f32 %v3015, 1.0
      %v3077 = vadd.f32 %v3017, 1.0
      %v3078 = vadd.f32 %v3019, 1.0
      %v3079 = vadd.f32 %v3021, 1.0
      %v3080 = vadd.f32 %v3023, 1.0
      %v3081 = vadd.f32 %v3025, 1.0
      %v3082 = vadd.f32 %v3027, 1.0
      %v3083 = vadd.f32 %v3029, 1.0
      %v3084 = vadd.f32 %v3031, 1.0
      %v3085 = vadd.f32 %v3033, 1.0
      %v3086 = vadd.f32 %v3035, 1.0
      %v3087 = vadd.f32 %v3037, 1.0
      %v3088 = vadd.f32 %v3039, 1.0
      %v3089 = vadd.f32 %v3041, 1.0
      %v3090 = vadd.f32 %v3043, 1.0
      %v3091 = vadd.f32 %v3045, 1.0
      %v3092 = vadd.f32 %v3047, 1.0
      %v3093 = vadd.f32 %v3049, 1.0
      %v3094 = vadd.f32 %v3051, 1.0
      %v3095 = vadd.f32 %v3053, 1.0
      %v3096 = vadd.f32 %v3055, 1.0
      %v3097 = vadd.f32 %v3057, 1.0
      %v3098 = vadd.f32 %v3059, 1.0
      %v3099 = vadd.f32 %v3061, 1.0
      %v3100 = vadd.f32 %v3063, 1.0
      %v3101 = vadd.f32 %v3065, 1.0
      %v3102 = vrcp.pop %v3066
      %v3103 = vrcp.pop %v3067
      %v3104 = vrcp.pop %v3068
      %v3105 = vrcp.pop %v3069
      %v3106 = vrcp.pop %v3070
      %v3107 = vrcp.pop %v3071
      %v3108 = vrcp.pop %v3072
      %v3109 = vrcp.pop %v3073
      %v3110 = vrcp.pop %v3074
      %v3111 = vrcp.pop %v3075
      %v3112 = vrcp.pop %v3076
      %v3113 = vrcp.pop %v3077
      %v3114 = vrcp.pop %v3078
      %v3115 = vrcp.pop %v3079
      %v3116 = vrcp.pop %v3080
      %v3117 = vrcp.pop %v3081
      %v3118 = vrcp.pop %v3082
      %v3119 = vrcp.pop %v3083
      %v3120 = vrcp.pop %v3084
      %v3121 = vrcp.pop %v3085
      %v3122 = vrcp.pop %v3086
      %v3123 = vrcp.pop %v3087
      %v3124 = vrcp.pop %v3088
      %v3125 = vrcp.pop %v3089
      %v3126 = vrcp.pop %v3090
      %v3127 = vrcp.pop %v3091
      %v3128 = vrcp.pop %v3092
      %v3129 = vrcp.pop %v3093
      %v3130 = vrcp.pop %v3094
      %v3131 = vrcp.pop %v3095
      %v3132 = vrcp.pop %v3096
      %v3133 = vrcp.pop %v3097
      %v3134 = vrcp.pop %v3098
      %v3135 = vrcp.pop %v3099
      %v3136 = vrcp.pop %v3100
      %v3137 = vrcp.pop %v3101
      %v3138 = vmul.f32 %v2922, %v3102
      %v3139 = vmul.f32 %v2923, %v3103
      %v3140 = vmul.f32 %v2924, %v3104
      %v3141 = vmul.f32 %v2925, %v3105
      %v3142 = vmul.f32 %v2926, %v3106
      %v3143 = vmul.f32 %v2927, %v3107
      %v3144 = vmul.f32 %v2928, %v3108
      %v3145 = vmul.f32 %v2929, %v3109
      %v3146 = vmul.f32 %v2930, %v3110
      %v3147 = vmul.f32 %v2931, %v3111
      %v3148 = vmul.f32 %v2932, %v3112
      %v3149 = vmul.f32 %v2933, %v3113
      %v3150 = vmul.f32 %v2934, %v3114
      %v3151 = vmul.f32 %v2935, %v3115
      %v3152 = vmul.f32 %v2936, %v3116
      %v3153 = vmul.f32 %v2937, %v3117
      %v3154 = vmul.f32 %v2938, %v3118
      %v3155 = vmul.f32 %v2939, %v3119
      %v3156 = vmul.f32 %v2940, %v3120
      %v3157 = vmul.f32 %v2941, %v3121
      %v3158 = vmul.f32 %v2942, %v3122
      %v3159 = vmul.f32 %v2943, %v3123
      %v3160 = vmul.f32 %v2944, %v3124
      %v3161 = vmul.f32 %v2945, %v3125
      %v3162 = vmul.f32 %v2946, %v3126
      %v3163 = vmul.f32 %v2947, %v3127
      %v3164 = vmul.f32 %v2948, %v3128
      %v3165 = vmul.f32 %v2949, %v3129
      %v3166 = vmul.f32 %v2950, %v3130
      %v3167 = vmul.f32 %v2951, %v3131
      %v3168 = vmul.f32 %v2952, %v3132
      %v3169 = vmul.f32 %v2953, %v3133
      %v3170 = vmul.f32 %v2954, %v3134
      %v3171 = vmul.f32 %v2955, %v3135
      %v3172 = vmul.f32 %v2956, %v3136
      %v3173 = vmul.f32 %v2957, %v3137
      %v3174 = vpack.c.bf16 %v3138, %v3138
      %v3175 = vpack.c.bf16 %v3139, %v3139
      %v3176 = vpack.c.bf16 %v3140, %v3140
      %v3177 = vpack.c.bf16 %v3141, %v3141
      %v3178 = vpack.c.bf16 %v3142, %v3142
      %v3179 = vpack.c.bf16 %v3143, %v3143
      %v3180 = vpack.c.bf16 %v3144, %v3144
      %v3181 = vpack.c.bf16 %v3145, %v3145
      %v3182 = vpack.c.bf16 %v3146, %v3146
      %v3183 = vpack.c.bf16 %v3147, %v3147
      %v3184 = vpack.c.bf16 %v3148, %v3148
      %v3185 = vpack.c.bf16 %v3149, %v3149
      %v3186 = vpack.c.bf16 %v3150, %v3150
      %v3187 = vpack.c.bf16 %v3151, %v3151
      %v3188 = vpack.c.bf16 %v3152, %v3152
      %v3189 = vpack.c.bf16 %v3153, %v3153
      %v3190 = vpack.c.bf16 %v3154, %v3154
      %v3191 = vpack.c.bf16 %v3155, %v3155
      %v3192 = vpack.c.bf16 %v3156, %v3156
      %v3193 = vpack.c.bf16 %v3157, %v3157
      %v3194 = vpack.c.bf16 %v3158, %v3158
      %v3195 = vpack.c.bf16 %v3159, %v3159
      %v3196 = vpack.c.bf16 %v3160, %v3160
      %v3197 = vpack.c.bf16 %v3161, %v3161
      %v3198 = vpack.c.bf16 %v3162, %v3162
      %v3199 = vpack.c.bf16 %v3163, %v3163
      %v3200 = vpack.c.bf16 %v3164, %v3164
      %v3201 = vpack.c.bf16 %v3165, %v3165
      %v3202 = vpack.c.bf16 %v3166, %v3166
      %v3203 = vpack.c.bf16 %v3167, %v3167
      %v3204 = vpack.c.bf16 %v3168, %v3168
      %v3205 = vpack.c.bf16 %v3169, %v3169
      %v3206 = vpack.c.bf16 %v3170, %v3170
      %v3207 = vpack.c.bf16 %v3171, %v3171
      %v3208 = vpack.c.bf16 %v3172, %v3172
      %v3209 = vpack.c.bf16 %v3173, %v3173
      %vm3210 = vcmask 27648
      %3211 = vst.msk [vmem:[%s170] sm:$0xf] %vm3210, %v3174
      %3212 = vst.msk [vmem:[%s170 + $0x4] sm:$0xf] %vm3210, %v3175
      %3213 = vst.msk [vmem:[%s170 + $0x8] sm:$0xf] %vm3210, %v3176
      %3214 = vst.msk [vmem:[%s170 + $0xc] sm:$0xf] %vm3210, %v3177
      %3215 = vst.msk [vmem:[%s170 + $0x10] sm:$0xf] %vm3210, %v3178
      %3216 = vst.msk [vmem:[%s170 + $0x14] sm:$0xf] %vm3210, %v3179
      %3217 = vst.msk [vmem:[%s170 + $0x18] sm:$0xf] %vm3210, %v3180
      %3218 = vst.msk [vmem:[%s170 + $0x1c] sm:$0xf] %vm3210, %v3181
      %3219 = vst.msk [vmem:[%s170 + $0x20] sm:$0xf] %vm3210, %v3182
      %3220 = vst.msk [vmem:[%s170 + $0x24] sm:$0xf] %vm3210, %v3183
      %3221 = vst.msk [vmem:[%s170 + $0x28] sm:$0xf] %vm3210, %v3184
      %3222 = vst.msk [vmem:[%s170 + $0x2c] sm:$0xf] %vm3210, %v3185
      %3223 = vst.msk [vmem:[%s170 + $0x30] sm:$0xf] %vm3210, %v3186
      %3224 = vst.msk [vmem:[%s170 + $0x34] sm:$0xf] %vm3210, %v3187
      %3225 = vst.msk [vmem:[%s170 + $0x38] sm:$0xf] %vm3210, %v3188
      %3226 = vst.msk [vmem:[%s170 + $0x3c] sm:$0xf] %vm3210, %v3189
      %3227 = vst.msk [vmem:[%s170 + $0x40] sm:$0xf] %vm3210, %v3190
      %3228 = vst.msk [vmem:[%s170 + $0x44] sm:$0xf] %vm3210, %v3191
      %3229 = vst.msk [vmem:[%s170 + $0x48] sm:$0xf] %vm3210, %v3192
      %3230 = vst.msk [vmem:[%s170 + $0x4c] sm:$0xf] %vm3210, %v3193
      %3231 = vst.msk [vmem:[%s170 + $0x50] sm:$0xf] %vm3210, %v3194
      %3232 = vst.msk [vmem:[%s170 + $0x54] sm:$0xf] %vm3210, %v3195
      %3233 = vst.msk [vmem:[%s170 + $0x58] sm:$0xf] %vm3210, %v3196
      %3234 = vst.msk [vmem:[%s170 + $0x5c] sm:$0xf] %vm3210, %v3197
      %3235 = vst.msk [vmem:[%s170 + $0x60] sm:$0xf] %vm3210, %v3198
      %3236 = vst.msk [vmem:[%s170 + $0x64] sm:$0xf] %vm3210, %v3199
      %3237 = vst.msk [vmem:[%s170 + $0x68] sm:$0xf] %vm3210, %v3200
      %3238 = vst.msk [vmem:[%s170 + $0x6c] sm:$0xf] %vm3210, %v3201
      %3239 = vst.msk [vmem:[%s170 + $0x70] sm:$0xf] %vm3210, %v3202
      %3240 = vst.msk [vmem:[%s170 + $0x74] sm:$0xf] %vm3210, %v3203
      %3241 = vst.msk [vmem:[%s170 + $0x78] sm:$0xf] %vm3210, %v3204
      %3242 = vst.msk [vmem:[%s170 + $0x7c] sm:$0xf] %vm3210, %v3205
      %3243 = vst.msk [vmem:[%s170 + $0x80] sm:$0xf] %vm3210, %v3206
      %3244 = vst.msk [vmem:[%s170 + $0x84] sm:$0xf] %vm3210, %v3207
      %3245 = vst.msk [vmem:[%s170 + $0x88] sm:$0xf] %vm3210, %v3208
      %3246 = vst.msk [vmem:[%s170 + $0x8c] sm:$0xf] %vm3210, %v3209
      %p3247 = scmp.lt.s32.totalorder %s14, 1
      %s3248 = scalar_select %p3247, %s14, 1
      %s3249 = smul.addr %s3248, 36
      %s3250 = smul.addr %s3249, 4
      %s3251 = scalar_lea.vmem %s3, %s3250
      // Predicated region
      $region33: #{elan_neck_forward.8} parent=31 // pred_check
        %p3252 = pneg %p100
      $region34: #{elan_neck_forward.8} parent=31 // pred_check_branch
        %3254 = sbr.rel (%p3252) target = $region36
      $region35: #{elan_neck_forward.8} parent=31 // pred_region
        _
      $region36: #{elan_neck_forward.8} parent=31 // pred_fallthru
        _
    $region32: #{elan_neck_forward.8} parent=5 // pred_fallthru
      _
    %p3255 = scmp.le.s32.totalorder 2, %s9
    // Predicated region
    $region37: #{elan_neck_forward.8} parent=5 // pred_check
      %p3256 = pneg %p3255
    $region38: #{elan_neck_forward.8} parent=5 // pred_check_branch
      %3258 = sbr.rel (%p3256) target = $region40
    $region39: #{elan_neck_forward.8} parent=5 // pred_region
      %s3259 = ssub.s32 %s9, 2
      // Predicated region
      $region41: #{elan_neck_forward.8} parent=39 // pred_check
        %p3260 = pneg %p106
      $region42: #{elan_neck_forward.8} parent=39 // pred_check_branch
        %3262 = sbr.rel (%p3260) target = $region44
      $region43: #{elan_neck_forward.8} parent=39 // pred_region
        %p3263 = scmp.lt.s32.totalorder %s15, 1
        %s3264 = scalar_select %p3263, %s15, 1
        %s3265 = smul.addr %s3264, 36
        %s3266 = smul.addr %s3265, 4
        %s3267 = scalar_lea.vmem %s3, %s3266
      $region44: #{elan_neck_forward.8} parent=39 // pred_fallthru
        _
    $region40: #{elan_neck_forward.8} parent=5 // pred_fallthru
      _
  $region6: #{elan_neck_forward.8} parent=0 // loop_footer
    %s13 = sadd.s32 1, %s9
  $region7: #{elan_neck_forward.8} parent=0 // loop_footer_branch
    %8 = sbr.rel target = $region3
  $region8: #{elan_neck_forward.8} parent=0 // loop_exit
    _

// kernel: elan_neck_forward.11
$region0: #{elan_neck_forward.11}
  #allocation0 [shape = 'u32[]', space=smem, size = 0x4, offset = 0x4, fixed_abs, tag = 'smem constant byte address 0x4 - core index']
  #allocation1 [shape = 'u32[72,128]{1,0:T(1,128)}', space=vmem, size = 0x9000, scoped, tag = 'internal scratch']
  %s0 = inlined_call_operand.vmem [shape: bf16[512,4], index: 0, kind: input, shape index: {}]
  %s1 = inlined_call_operand.vmem [shape: bf16[512,4], index: 1, kind: input, shape index: {}]
  %s2 = inlined_call_operand.vmem [shape: bf16[512,4], index: 2, kind: input, shape index: {}]
  %s3 = inlined_call_operand.vmem [shape: bf16[512,4], index: 3, kind: input, shape index: {}]
  %s4 = inlined_call_operand.vmem [shape: bf16[512,8], index: 4, kind: input, shape index: {}]
  %s5 = inlined_call_operand.vmem [shape: bf16[512,8], index: 5, kind: input, shape index: {}]
  %s6 = inlined_call_operand.vmem [shape: bf16[4,8], index: 6, kind: input, shape index: {}]
  %s7 = inlined_call_operand.vmem [shape: bf16[4,8], index: 7, kind: input, shape index: {}]
  %s8 = inlined_call_operand.vmem [shape: bf16[4,8], index: 8, kind: input, shape index: {}]
  %s9 = inlined_call_operand.vmem [shape: bf16[4,8], index: 9, kind: input, shape index: {}]
  %s10 = inlined_call_operand.vmem [shape: bf16[8,8], index: 10, kind: input, shape index: {}]
  %s11 = inlined_call_operand.vmem [shape: bf16[8,8], index: 11, kind: input, shape index: {}]
  %s12 = inlined_call_operand.vmem [shape: f32[1,8], index: 12, kind: input, shape index: {}]
  %s13 = inlined_call_operand.vmem [shape: f32[512,8], index: 13, kind: output, shape index: {}]
  %s14 = sld [smem:[#allocation0]]
  $region62: #{elan_neck_forward.11} parent=0
    _
  %s16 = ssub.s32 1, %s14
  %s17 = scalar_select 0, %s16, %s14
  // Predicated region
  $region2: #{elan_neck_forward.11} parent=0 // pred_check
    _
  $region3: #{elan_neck_forward.11} parent=0 // pred_check_branch
    %19 = sbr.rel (0) target = $region5
  $region4: #{elan_neck_forward.11} parent=0 // pred_region
    _
  $region5: #{elan_neck_forward.11} parent=0 // pred_fallthru
    _
  // Predicated region
  $region6: #{elan_neck_forward.11} parent=0 // pred_check
    _
  $region7: #{elan_neck_forward.11} parent=0 // pred_check_branch
    %21 = sbr.rel (0) target = $region9
  $region8: #{elan_neck_forward.11} parent=0 // pred_region
    _
  $region9: #{elan_neck_forward.11} parent=0 // pred_fallthru
    _
  // Predicated region
  $region10: #{elan_neck_forward.11} parent=0 // pred_check
    _
  $region11: #{elan_neck_forward.11} parent=0 // pred_check_branch
    %23 = sbr.rel (0) target = $region13
  $region12: #{elan_neck_forward.11} parent=0 // pred_region
    _
  $region13: #{elan_neck_forward.11} parent=0 // pred_fallthru
    _
  // Predicated region
  $region14: #{elan_neck_forward.11} parent=0 // pred_check
    _
  $region15: #{elan_neck_forward.11} parent=0 // pred_check_branch
    %25 = sbr.rel (0) target = $region17
  $region16: #{elan_neck_forward.11} parent=0 // pred_region
    _
  $region17: #{elan_neck_forward.11} parent=0 // pred_fallthru
    _
  // Predicated region
  $region18: #{elan_neck_forward.11} parent=0 // pred_check
    _
  $region19: #{elan_neck_forward.11} parent=0 // pred_check_branch
    %27 = sbr.rel (0) target = $region21
  $region20: #{elan_neck_forward.11} parent=0 // pred_region
    _
  $region21: #{elan_neck_forward.11} parent=0 // pred_fallthru
    _
  // Predicated region
  $region22: #{elan_neck_forward.11} parent=0 // pred_check
    _
  $region23: #{elan_neck_forward.11} parent=0 // pred_check_branch
    %29 = sbr.rel (0) target = $region25
  $region24: #{elan_neck_forward.11} parent=0 // pred_region
    _
  $region25: #{elan_neck_forward.11} parent=0 // pred_fallthru
    _
  // Predicated region
  $region26: #{elan_neck_forward.11} parent=0 // pred_check
    _
  $region27: #{elan_neck_forward.11} parent=0 // pred_check_branch
    %31 = sbr.rel (0) target = $region29
  $region28: #{elan_neck_forward.11} parent=0 // pred_region
    _
  $region29: #{elan_neck_forward.11} parent=0 // pred_fallthru
    _
  // Predicated region
  $region30: #{elan_neck_forward.11} parent=0 // pred_check
    _
  $region31: #{elan_neck_forward.11} parent=0 // pred_check_branch
    %33 = sbr.rel (0) target = $region33
  $region32: #{elan_neck_forward.11} parent=0 // pred_region
    _
  $region33: #{elan_neck_forward.11} parent=0 // pred_fallthru
    _
  // Predicated region
  $region34: #{elan_neck_forward.11} parent=0 // pred_check
    _
  $region35: #{elan_neck_forward.11} parent=0 // pred_check_branch
    %35 = sbr.rel (0) target = $region37
  $region36: #{elan_neck_forward.11} parent=0 // pred_region
    _
  $region37: #{elan_neck_forward.11} parent=0 // pred_fallthru
    _
  // Predicated region
  $region38: #{elan_neck_forward.11} parent=0 // pred_check
    _
  $region39: #{elan_neck_forward.11} parent=0 // pred_check_branch
    %37 = sbr.rel (0) target = $region41
  $region40: #{elan_neck_forward.11} parent=0 // pred_region
    _
  $region41: #{elan_neck_forward.11} parent=0 // pred_fallthru
    _
  // Predicated region
  $region42: #{elan_neck_forward.11} parent=0 // pred_check
    _
  $region43: #{elan_neck_forward.11} parent=0 // pred_check_branch
    %39 = sbr.rel (0) target = $region45
  $region44: #{elan_neck_forward.11} parent=0 // pred_region
    _
  $region45: #{elan_neck_forward.11} parent=0 // pred_fallthru
    _
  // Predicated region
  $region46: #{elan_neck_forward.11} parent=0 // pred_check
    _
  $region47: #{elan_neck_forward.11} parent=0 // pred_check_branch
    %41 = sbr.rel (0) target = $region49
  $region48: #{elan_neck_forward.11} parent=0 // pred_region
    _
  $region49: #{elan_neck_forward.11} parent=0 // pred_fallthru
    _
  // Predicated region
  $region50: #{elan_neck_forward.11} parent=0 // pred_check
    _
  $region51: #{elan_neck_forward.11} parent=0 // pred_check_branch
    %43 = sbr.rel (0) target = $region53
  $region52: #{elan_neck_forward.11} parent=0 // pred_region
    _
  $region53: #{elan_neck_forward.11} parent=0 // pred_fallthru
    _
  %v45 = vld [vmem:[%s0] sm:$0xf]
  %v46 = vld [vmem:[%s0 + $0x4] sm:$0xf]
  %v47 = vld [vmem:[%s0 + $0x8] sm:$0xf]
  %v48 = vld [vmem:[%s0 + $0xc] sm:$0xf]
  %v49 = vld [vmem:[%s0 + $0x10] sm:$0xf]
  %v50 = vld [vmem:[%s0 + $0x14] sm:$0xf]
  %v51 = vld [vmem:[%s0 + $0x18] sm:$0xf]
  %v52 = vld [vmem:[%s0 + $0x1c] sm:$0xf]
  %v53 = vld [vmem:[%s0 + $0x20] sm:$0xf]
  %v54 = vld [vmem:[%s0 + $0x24] sm:$0xf]
  %v55 = vld [vmem:[%s0 + $0x28] sm:$0xf]
  %v56 = vld [vmem:[%s0 + $0x2c] sm:$0xf]
  %v57 = vld [vmem:[%s0 + $0x30] sm:$0xf]
  %v58 = vld [vmem:[%s0 + $0x34] sm:$0xf]
  %v59 = vld [vmem:[%s0 + $0x38] sm:$0xf]
  %v60 = vld [vmem:[%s0 + $0x3c] sm:$0xf]
  %v61 = vld [vmem:[%s0 + $0x40] sm:$0xf]
  %v62 = vld [vmem:[%s0 + $0x44] sm:$0xf]
  %v63 = vld [vmem:[%s0 + $0x48] sm:$0xf]
  %v64 = vld [vmem:[%s0 + $0x4c] sm:$0xf]
  %v65 = vld [vmem:[%s0 + $0x50] sm:$0xf]
  %v66 = vld [vmem:[%s0 + $0x54] sm:$0xf]
  %v67 = vld [vmem:[%s0 + $0x58] sm:$0xf]
  %v68 = vld [vmem:[%s0 + $0x5c] sm:$0xf]
  %v69 = vld [vmem:[%s0 + $0x60] sm:$0xf]
  %v70 = vld [vmem:[%s0 + $0x64] sm:$0xf]
  %v71 = vld [vmem:[%s0 + $0x68] sm:$0xf]
  %v72 = vld [vmem:[%s0 + $0x6c] sm:$0xf]
  %v73 = vld [vmem:[%s0 + $0x70] sm:$0xf]
  %v74 = vld [vmem:[%s0 + $0x74] sm:$0xf]
  %v75 = vld [vmem:[%s0 + $0x78] sm:$0xf]
  %v76 = vld [vmem:[%s0 + $0x7c] sm:$0xf]
  %v77 = vld [vmem:[%s0 + $0x80] sm:$0xf]
  %v78 = vld [vmem:[%s0 + $0x84] sm:$0xf]
  %v79 = vld [vmem:[%s0 + $0x88] sm:$0xf]
  %v80 = vld [vmem:[%s0 + $0x8c] sm:$0xf]
  %v81 = vld [vmem:[%s0 + $0x90] sm:$0xf]
  %v82 = vld [vmem:[%s0 + $0x94] sm:$0xf]
  %v83 = vld [vmem:[%s0 + $0x98] sm:$0xf]
  %v84 = vld [vmem:[%s0 + $0x9c] sm:$0xf]
  %v85 = vld [vmem:[%s0 + $0xa0] sm:$0xf]
  %v86 = vld [vmem:[%s0 + $0xa4] sm:$0xf]
  %v87 = vld [vmem:[%s0 + $0xa8] sm:$0xf]
  %v88 = vld [vmem:[%s0 + $0xac] sm:$0xf]
  %v89 = vld [vmem:[%s0 + $0xb0] sm:$0xf]
  %v90 = vld [vmem:[%s0 + $0xb4] sm:$0xf]
  %v91 = vld [vmem:[%s0 + $0xb8] sm:$0xf]
  %v92 = vld [vmem:[%s0 + $0xbc] sm:$0xf]
  %v93 = vld [vmem:[%s0 + $0xc0] sm:$0xf]
  %v94 = vld [vmem:[%s0 + $0xc4] sm:$0xf]
  %v95 = vld [vmem:[%s0 + $0xc8] sm:$0xf]
  %v96 = vld [vmem:[%s0 + $0xcc] sm:$0xf]
  %v97 = vld [vmem:[%s0 + $0xd0] sm:$0xf]
  %v98 = vld [vmem:[%s0 + $0xd4] sm:$0xf]
  %v99 = vld [vmem:[%s0 + $0xd8] sm:$0xf]
  %v100 = vld [vmem:[%s0 + $0xdc] sm:$0xf]
  %v101 = vld [vmem:[%s0 + $0xe0] sm:$0xf]
  %v102 = vld [vmem:[%s0 + $0xe4] sm:$0xf]
  %v103 = vld [vmem:[%s0 + $0xe8] sm:$0xf]
  %v104 = vld [vmem:[%s0 + $0xec] sm:$0xf]
  %v105 = vld [vmem:[%s0 + $0xf0] sm:$0xf]
  %v106 = vld [vmem:[%s0 + $0xf4] sm:$0xf]
  %v107 = vld [vmem:[%s0 + $0xf8] sm:$0xf]
  %v108 = vld [vmem:[%s0 + $0xfc] sm:$0xf]
  %v109 = vld [vmem:[%s6] sm:$0x3]
  %v110 = vld [vmem:[%s1] sm:$0xf]
  %v111 = vld [vmem:[%s1 + $0x4] sm:$0xf]
  %v112 = vld [vmem:[%s1 + $0x8] sm:$0xf]
  %v113 = vld [vmem:[%s1 + $0xc] sm:$0xf]
  %v114 = vld [vmem:[%s1 + $0x10] sm:$0xf]
  %v115 = vld [vmem:[%s1 + $0x14] sm:$0xf]
  %v116 = vld [vmem:[%s1 + $0x18] sm:$0xf]
  %v117 = vld [vmem:[%s1 + $0x1c] sm:$0xf]
  %v118 = vld [vmem:[%s1 + $0x20] sm:$0xf]
  %v119 = vld [vmem:[%s1 + $0x24] sm:$0xf]
  %v120 = vld [vmem:[%s1 + $0x28] sm:$0xf]
  %v121 = vld [vmem:[%s1 + $0x2c] sm:$0xf]
  %v122 = vld [vmem:[%s1 + $0x30] sm:$0xf]
  %v123 = vld [vmem:[%s1 + $0x34] sm:$0xf]
  %v124 = vld [vmem:[%s1 + $0x38] sm:$0xf]
  %v125 = vld [vmem:[%s1 + $0x3c] sm:$0xf]
  %v126 = vld [vmem:[%s1 + $0x40] sm:$0xf]
  %v127 = vld [vmem:[%s1 + $0x44] sm:$0xf]
  %v128 = vld [vmem:[%s1 + $0x48] sm:$0xf]
  %v129 = vld [vmem:[%s1 + $0x4c] sm:$0xf]
  %v130 = vld [vmem:[%s1 + $0x50] sm:$0xf]
  %v131 = vld [vmem:[%s1 + $0x54] sm:$0xf]
  %v132 = vld [vmem:[%s1 + $0x58] sm:$0xf]
  %v133 = vld [vmem:[%s1 + $0x5c] sm:$0xf]
  %v134 = vld [vmem:[%s1 + $0x60] sm:$0xf]
  %v135 = vld [vmem:[%s1 + $0x64] sm:$0xf]
  %v136 = vld [vmem:[%s1 + $0x68] sm:$0xf]
  %v137 = vld [vmem:[%s1 + $0x6c] sm:$0xf]
  %v138 = vld [vmem:[%s1 + $0x70] sm:$0xf]
  %v139 = vld [vmem:[%s1 + $0x74] sm:$0xf]
  %v140 = vld [vmem:[%s1 + $0x78] sm:$0xf]
  %v141 = vld [vmem:[%s1 + $0x7c] sm:$0xf]
  %v142 = vld [vmem:[%s1 + $0x80] sm:$0xf]
  %v143 = vld [vmem:[%s1 + $0x84] sm:$0xf]
  %v144 = vld [vmem:[%s1 + $0x88] sm:$0xf]
  %v145 = vld [vmem:[%s1 + $0x8c] sm:$0xf]
  %v146 = vld [vmem:[%s1 + $0x90] sm:$0xf]
  %v147 = vld [vmem:[%s1 + $0x94] sm:$0xf]
  %v148 = vld [vmem:[%s1 + $0x98] sm:$0xf]
  %v149 = vld [vmem:[%s1 + $0x9c] sm:$0xf]
  %v150 = vld [vmem:[%s1 + $0xa0] sm:$0xf]
  %v151 = vld [vmem:[%s1 + $0xa4] sm:$0xf]
  %v152 = vld [vmem:[%s1 + $0xa8] sm:$0xf]
  %v153 = vld [vmem:[%s1 + $0xac] sm:$0xf]
  %v154 = vld [vmem:[%s1 + $0xb0] sm:$0xf]
  %v155 = vld [vmem:[%s1 + $0xb4] sm:$0xf]
  %v156 = vld [vmem:[%s1 + $0xb8] sm:$0xf]
  %v157 = vld [vmem:[%s1 + $0xbc] sm:$0xf]
  %v158 = vld [vmem:[%s1 + $0xc0] sm:$0xf]
  %v159 = vld [vmem:[%s1 + $0xc4] sm:$0xf]
  %v160 = vld [vmem:[%s1 + $0xc8] sm:$0xf]
  %v161 = vld [vmem:[%s1 + $0xcc] sm:$0xf]
  %v162 = vld [vmem:[%s1 + $0xd0] sm:$0xf]
  %v163 = vld [vmem:[%s1 + $0xd4] sm:$0xf]
  %v164 = vld [vmem:[%s1 + $0xd8] sm:$0xf]
  %v165 = vld [vmem:[%s1 + $0xdc] sm:$0xf]
  %v166 = vld [vmem:[%s1 + $0xe0] sm:$0xf]
  %v167 = vld [vmem:[%s1 + $0xe4] sm:$0xf]
  %v168 = vld [vmem:[%s1 + $0xe8] sm:$0xf]
  %v169 = vld [vmem:[%s1 + $0xec] sm:$0xf]
  %v170 = vld [vmem:[%s1 + $0xf0] sm:$0xf]
  %v171 = vld [vmem:[%s1 + $0xf4] sm:$0xf]
  %v172 = vld [vmem:[%s1 + $0xf8] sm:$0xf]
  %v173 = vld [vmem:[%s1 + $0xfc] sm:$0xf]
  %v174 = vld [vmem:[%s7] sm:$0x3]
  %v239 = vunpack.c.l.b16 %v110
  %v240 = vunpack.c.l.b16 %v111
  %v241 = vunpack.c.l.b16 %v112
  %v242 = vunpack.c.l.b16 %v113
  %v243 = vunpack.c.l.b16 %v114
  %v244 = vunpack.c.l.b16 %v115
  %v245 = vunpack.c.l.b16 %v116
  %v246 = vunpack.c.l.b16 %v117
  %v247 = vunpack.c.l.b16 %v118
  %v248 = vunpack.c.l.b16 %v119
  %v249 = vunpack.c.l.b16 %v120
  %v250 = vunpack.c.l.b16 %v121
  %v251 = vunpack.c.l.b16 %v122
  %v252 = vunpack.c.l.b16 %v123
  %v253 = vunpack.c.l.b16 %v124
  %v254 = vunpack.c.l.b16 %v125
  %v255 = vunpack.c.l.b16 %v126
  %v256 = vunpack.c.l.b16 %v127
  %v257 = vunpack.c.l.b16 %v128
  %v258 = vunpack.c.l.b16 %v129
  %v259 = vunpack.c.l.b16 %v130
  %v260 = vunpack.c.l.b16 %v131
  %v261 = vunpack.c.l.b16 %v132
  %v262 = vunpack.c.l.b16 %v133
  %v263 = vunpack.c.l.b16 %v134
  %v264 = vunpack.c.l.b16 %v135
  %v265 = vunpack.c.l.b16 %v136
  %v266 = vunpack.c.l.b16 %v137
  %v267 = vunpack.c.l.b16 %v138
  %v268 = vunpack.c.l.b16 %v139
  %v269 = vunpack.c.l.b16 %v140
  %v270 = vunpack.c.l.b16 %v141
  %v271 = vunpack.c.l.b16 %v142
  %v272 = vunpack.c.l.b16 %v143
  %v273 = vunpack.c.l.b16 %v144
  %v274 = vunpack.c.l.b16 %v145
  %v275 = vunpack.c.l.b16 %v146
  %v276 = vunpack.c.l.b16 %v147
  %v277 = vunpack.c.l.b16 %v148
  %v278 = vunpack.c.l.b16 %v149
  %v279 = vunpack.c.l.b16 %v150
  %v280 = vunpack.c.l.b16 %v151
  %v281 = vunpack.c.l.b16 %v152
  %v282 = vunpack.c.l.b16 %v153
  %v283 = vunpack.c.l.b16 %v154
  %v284 = vunpack.c.l.b16 %v155
  %v285 = vunpack.c.l.b16 %v156
  %v286 = vunpack.c.l.b16 %v157
  %v287 = vunpack.c.l.b16 %v158
  %v288 = vunpack.c.l.b16 %v159
  %v289 = vunpack.c.l.b16 %v160
  %v290 = vunpack.c.l.b16 %v161
  %v291 = vunpack.c.l.b16 %v162
  %v292 = vunpack.c.l.b16 %v163
  %v293 = vunpack.c.l.b16 %v164
  %v294 = vunpack.c.l.b16 %v165
  %v295 = vunpack.c.l.b16 %v166
  %v296 = vunpack.c.l.b16 %v167
  %v297 = vunpack.c.l.b16 %v168
  %v298 = vunpack.c.l.b16 %v169
  %v299 = vunpack.c.l.b16 %v170
  %v300 = vunpack.c.l.b16 %v171
  %v301 = vunpack.c.l.b16 %v172
  %v302 = vunpack.c.l.b16 %v173
  %v303 = vpack.c.b16 %v240, %v239
  %v304 = vpack.c.b16 %v242, %v241
  %v305 = vpack.c.b16 %v244, %v243
  %v306 = vpack.c.b16 %v246, %v245
  %v307 = vpack.c.b16 %v248, %v247
  %v308 = vpack.c.b16 %v250, %v249
  %v309 = vpack.c.b16 %v252, %v251
  %v310 = vpack.c.b16 %v254, %v253
  %v311 = vpack.c.b16 %v256, %v255
  %v312 = vpack.c.b16 %v258, %v257
  %v313 = vpack.c.b16 %v260, %v259
  %v314 = vpack.c.b16 %v262, %v261
  %v315 = vpack.c.b16 %v264, %v263
  %v316 = vpack.c.b16 %v266, %v265
  %v317 = vpack.c.b16 %v268, %v267
  %v318 = vpack.c.b16 %v270, %v269
  %v319 = vpack.c.b16 %v272, %v271
  %v320 = vpack.c.b16 %v274, %v273
  %v321 = vpack.c.b16 %v276, %v275
  %v322 = vpack.c.b16 %v278, %v277
  %v323 = vpack.c.b16 %v280, %v279
  %v324 = vpack.c.b16 %v282, %v281
  %v325 = vpack.c.b16 %v284, %v283
  %v326 = vpack.c.b16 %v286, %v285
  %v327 = vpack.c.b16 %v288, %v287
  %v328 = vpack.c.b16 %v290, %v289
  %v329 = vpack.c.b16 %v292, %v291
  %v330 = vpack.c.b16 %v294, %v293
  %v331 = vpack.c.b16 %v296, %v295
  %v332 = vpack.c.b16 %v298, %v297
  %v333 = vpack.c.b16 %v300, %v299
  %v334 = vpack.c.b16 %v302, %v301
  %vm335 = vcmask 31744
  %v337 = vsel %vm335, %v303, 0
  %v340 = vsel %vm335, %v304, 0
  %v343 = vsel %vm335, %v305, 0
  %v346 = vsel %vm335, %v306, 0
  %v349 = vsel %vm335, %v307, 0
  %v352 = vsel %vm335, %v308, 0
  %v355 = vsel %vm335, %v309, 0
  %v358 = vsel %vm335, %v310, 0
  %v361 = vsel %vm335, %v311, 0
  %v364 = vsel %vm335, %v312, 0
  %v367 = vsel %vm335, %v313, 0
  %v370 = vsel %vm335, %v314, 0
  %v373 = vsel %vm335, %v315, 0
  %v376 = vsel %vm335, %v316, 0
  %v379 = vsel %vm335, %v317, 0
  %v382 = vsel %vm335, %v318, 0
  %v385 = vsel %vm335, %v319, 0
  %v388 = vsel %vm335, %v320, 0
  %v391 = vsel %vm335, %v321, 0
  %v394 = vsel %vm335, %v322, 0
  %v397 = vsel %vm335, %v323, 0
  %v400 = vsel %vm335, %v324, 0
  %v403 = vsel %vm335, %v325, 0
  %v406 = vsel %vm335, %v326, 0
  %v409 = vsel %vm335, %v327, 0
  %v412 = vsel %vm335, %v328, 0
  %v415 = vsel %vm335, %v329, 0
  %v418 = vsel %vm335, %v330, 0
  %v421 = vsel %vm335, %v331, 0
  %v424 = vsel %vm335, %v332, 0
  %v427 = vsel %vm335, %v333, 0
  %v430 = vsel %vm335, %v334, 0
  %vm432 = vcmask 1041408
  %v434 = vsel %vm432, %v174, 0
  %436 = vmatpush.bf16.msra.mxu0 0
  %437 = vmatpush.bf16.msra.mxu0 0
  %438 = vmatpush.bf16.msra.mxu0 0
  %439 = vmatpush.bf16.msra.mxu0 0
  %440 = vmatpush.bf16.msra.mxu0 0
  %441 = vmatpush.bf16.msra.mxu0 0
  %442 = vmatpush.bf16.msra.mxu0 0
  %443 = vmatpush.bf16.msra.mxu0 %v434
  %444 = vmatmul.bf16.gmra.mxu0 %v337
  %v445 = vpop.f32.mrf.mxu0
  %v446 = vadd.f32 0.0, %v445
  %v447 = vpop.f32.mrf.mxu0
  %v448 = vadd.f32 0.0, %v447
  %449 = vmatmul.bf16.gmra.mxu0 %v340
  %v450 = vpop.f32.mrf.mxu0
  %v451 = vadd.f32 0.0, %v450
  %v452 = vpop.f32.mrf.mxu0
  %v453 = vadd.f32 0.0, %v452
  %454 = vmatmul.bf16.gmra.mxu0 %v343
  %v455 = vpop.f32.mrf.mxu0
  %v456 = vadd.f32 0.0, %v455
  %v457 = vpop.f32.mrf.mxu0
  %v458 = vadd.f32 0.0, %v457
  %459 = vmatmul.bf16.gmra.mxu0 %v346
  %v460 = vpop.f32.mrf.mxu0
  %v461 = vadd.f32 0.0, %v460
  %v462 = vpop.f32.mrf.mxu0
  %v463 = vadd.f32 0.0, %v462
  %464 = vmatmul.bf16.gmra.mxu0 %v349
  %v465 = vpop.f32.mrf.mxu0
  %v466 = vadd.f32 0.0, %v465
  %v467 = vpop.f32.mrf.mxu0
  %v468 = vadd.f32 0.0, %v467
  %469 = vmatmul.bf16.gmra.mxu0 %v352
  %v470 = vpop.f32.mrf.mxu0
  %v471 = vadd.f32 0.0, %v470
  %v472 = vpop.f32.mrf.mxu0
  %v473 = vadd.f32 0.0, %v472
  %474 = vmatmul.bf16.gmra.mxu0 %v355
  %v475 = vpop.f32.mrf.mxu0
  %v476 = vadd.f32 0.0, %v475
  %v477 = vpop.f32.mrf.mxu0
  %v478 = vadd.f32 0.0, %v477
  %479 = vmatmul.bf16.gmra.mxu0 %v358
  %v480 = vpop.f32.mrf.mxu0
  %v481 = vadd.f32 0.0, %v480
  %v482 = vpop.f32.mrf.mxu0
  %v483 = vadd.f32 0.0, %v482
  %484 = vmatmul.bf16.gmra.mxu0 %v361
  %v485 = vpop.f32.mrf.mxu0
  %v486 = vadd.f32 0.0, %v485
  %v487 = vpop.f32.mrf.mxu0
  %v488 = vadd.f32 0.0, %v487
  %489 = vmatmul.bf16.gmra.mxu0 %v364
  %v490 = vpop.f32.mrf.mxu0
  %v491 = vadd.f32 0.0, %v490
  %v492 = vpop.f32.mrf.mxu0
  %v493 = vadd.f32 0.0, %v492
  %494 = vmatmul.bf16.gmra.mxu0 %v367
  %v495 = vpop.f32.mrf.mxu0
  %v496 = vadd.f32 0.0, %v495
  %v497 = vpop.f32.mrf.mxu0
  %v498 = vadd.f32 0.0, %v497
  %499 = vmatmul.bf16.gmra.mxu0 %v370
  %v500 = vpop.f32.mrf.mxu0
  %v501 = vadd.f32 0.0, %v500
  %v502 = vpop.f32.mrf.mxu0
  %v503 = vadd.f32 0.0, %v502
  %504 = vmatmul.bf16.gmra.mxu0 %v373
  %v505 = vpop.f32.mrf.mxu0
  %v506 = vadd.f32 0.0, %v505
  %v507 = vpop.f32.mrf.mxu0
  %v508 = vadd.f32 0.0, %v507
  %509 = vmatmul.bf16.gmra.mxu0 %v376
  %v510 = vpop.f32.mrf.mxu0
  %v511 = vadd.f32 0.0, %v510
  %v512 = vpop.f32.mrf.mxu0
  %v513 = vadd.f32 0.0, %v512
  %514 = vmatmul.bf16.gmra.mxu0 %v379
  %v515 = vpop.f32.mrf.mxu0
  %v516 = vadd.f32 0.0, %v515
  %v517 = vpop.f32.mrf.mxu0
  %v518 = vadd.f32 0.0, %v517
  %519 = vmatmul.bf16.gmra.mxu0 %v382
  %v520 = vpop.f32.mrf.mxu0
  %v521 = vadd.f32 0.0, %v520
  %v522 = vpop.f32.mrf.mxu0
  %v523 = vadd.f32 0.0, %v522
  %524 = vmatmul.bf16.gmra.mxu0 %v385
  %v525 = vpop.f32.mrf.mxu0
  %v526 = vadd.f32 0.0, %v525
  %v527 = vpop.f32.mrf.mxu0
  %v528 = vadd.f32 0.0, %v527
  %529 = vmatmul.bf16.gmra.mxu0 %v388
  %v530 = vpop.f32.mrf.mxu0
  %v531 = vadd.f32 0.0, %v530
  %v532 = vpop.f32.mrf.mxu0
  %v533 = vadd.f32 0.0, %v532
  %534 = vmatmul.bf16.gmra.mxu0 %v391
  %v535 = vpop.f32.mrf.mxu0
  %v536 = vadd.f32 0.0, %v535
  %v537 = vpop.f32.mrf.mxu0
  %v538 = vadd.f32 0.0, %v537
  %539 = vmatmul.bf16.gmra.mxu0 %v394
  %v540 = vpop.f32.mrf.mxu0
  %v541 = vadd.f32 0.0, %v540
  %v542 = vpop.f32.mrf.mxu0
  %v543 = vadd.f32 0.0, %v542
  %544 = vmatmul.bf16.gmra.mxu0 %v397
  %v545 = vpop.f32.mrf.mxu0
  %v546 = vadd.f32 0.0, %v545
  %v547 = vpop.f32.mrf.mxu0
  %v548 = vadd.f32 0.0, %v547
  %549 = vmatmul.bf16.gmra.mxu0 %v400
  %v550 = vpop.f32.mrf.mxu0
  %v551 = vadd.f32 0.0, %v550
  %v552 = vpop.f32.mrf.mxu0
  %v553 = vadd.f32 0.0, %v552
  %554 = vmatmul.bf16.gmra.mxu0 %v403
  %v555 = vpop.f32.mrf.mxu0
  %v556 = vadd.f32 0.0, %v555
  %v557 = vpop.f32.mrf.mxu0
  %v558 = vadd.f32 0.0, %v557
  %559 = vmatmul.bf16.gmra.mxu0 %v406
  %v560 = vpop.f32.mrf.mxu0
  %v561 = vadd.f32 0.0, %v560
  %v562 = vpop.f32.mrf.mxu0
  %v563 = vadd.f32 0.0, %v562
  %564 = vmatmul.bf16.gmra.mxu0 %v409
  %v565 = vpop.f32.mrf.mxu0
  %v566 = vadd.f32 0.0, %v565
  %v567 = vpop.f32.mrf.mxu0
  %v568 = vadd.f32 0.0, %v567
  %569 = vmatmul.bf16.gmra.mxu0 %v412
  %v570 = vpop.f32.mrf.mxu0
  %v571 = vadd.f32 0.0, %v570
  %v572 = vpop.f32.mrf.mxu0
  %v573 = vadd.f32 0.0, %v572
  %574 = vmatmul.bf16.gmra.mxu0 %v415
  %v575 = vpop.f32.mrf.mxu0
  %v576 = vadd.f32 0.0, %v575
  %v577 = vpop.f32.mrf.mxu0
  %v578 = vadd.f32 0.0, %v577
  %579 = vmatmul.bf16.gmra.mxu0 %v418
  %v580 = vpop.f32.mrf.mxu0
  %v581 = vadd.f32 0.0, %v580
  %v582 = vpop.f32.mrf.mxu0
  %v583 = vadd.f32 0.0, %v582
  %584 = vmatmul.bf16.gmra.mxu0 %v421
  %v585 = vpop.f32.mrf.mxu0
  %v586 = vadd.f32 0.0, %v585
  %v587 = vpop.f32.mrf.mxu0
  %v588 = vadd.f32 0.0, %v587
  %589 = vmatmul.bf16.gmra.mxu0 %v424
  %v590 = vpop.f32.mrf.mxu0
  %v591 = vadd.f32 0.0, %v590
  %v592 = vpop.f32.mrf.mxu0
  %v593 = vadd.f32 0.0, %v592
  %594 = vmatmul.bf16.gmra.mxu0 %v427
  %v595 = vpop.f32.mrf.mxu0
  %v596 = vadd.f32 0.0, %v595
  %v597 = vpop.f32.mrf.mxu0
  %v598 = vadd.f32 0.0, %v597
  %599 = vmatmul.bf16.gmra.mxu0 %v430
  %v600 = vpop.f32.mrf.mxu0
  %v601 = vadd.f32 0.0, %v600
  %v602 = vpop.f32.mrf.mxu0
  %v603 = vadd.f32 0.0, %v602
  %604 = vdwg.mxu0
  %v669 = vunpack.c.l.b16 %v45
  %v670 = vunpack.c.l.b16 %v46
  %v671 = vunpack.c.l.b16 %v47
  %v672 = vunpack.c.l.b16 %v48
  %v673 = vunpack.c.l.b16 %v49
  %v674 = vunpack.c.l.b16 %v50
  %v675 = vunpack.c.l.b16 %v51
  %v676 = vunpack.c.l.b16 %v52
  %v677 = vunpack.c.l.b16 %v53
  %v678 = vunpack.c.l.b16 %v54
  %v679 = vunpack.c.l.b16 %v55
  %v680 = vunpack.c.l.b16 %v56
  %v681 = vunpack.c.l.b16 %v57
  %v682 = vunpack.c.l.b16 %v58
  %v683 = vunpack.c.l.b16 %v59
  %v684 = vunpack.c.l.b16 %v60
  %v685 = vunpack.c.l.b16 %v61
  %v686 = vunpack.c.l.b16 %v62
  %v687 = vunpack.c.l.b16 %v63
  %v688 = vunpack.c.l.b16 %v64
  %v689 = vunpack.c.l.b16 %v65
  %v690 = vunpack.c.l.b16 %v66
  %v691 = vunpack.c.l.b16 %v67
  %v692 = vunpack.c.l.b16 %v68
  %v693 = vunpack.c.l.b16 %v69
  %v694 = vunpack.c.l.b16 %v70
  %v695 = vunpack.c.l.b16 %v71
  %v696 = vunpack.c.l.b16 %v72
  %v697 = vunpack.c.l.b16 %v73
  %v698 = vunpack.c.l.b16 %v74
  %v699 = vunpack.c.l.b16 %v75
  %v700 = vunpack.c.l.b16 %v76
  %v701 = vunpack.c.l.b16 %v77
  %v702 = vunpack.c.l.b16 %v78
  %v703 = vunpack.c.l.b16 %v79
  %v704 = vunpack.c.l.b16 %v80
  %v705 = vunpack.c.l.b16 %v81
  %v706 = vunpack.c.l.b16 %v82
  %v707 = vunpack.c.l.b16 %v83
  %v708 = vunpack.c.l.b16 %v84
  %v709 = vunpack.c.l.b16 %v85
  %v710 = vunpack.c.l.b16 %v86
  %v711 = vunpack.c.l.b16 %v87
  %v712 = vunpack.c.l.b16 %v88
  %v713 = vunpack.c.l.b16 %v89
  %v714 = vunpack.c.l.b16 %v90
  %v715 = vunpack.c.l.b16 %v91
  %v716 = vunpack.c.l.b16 %v92
  %v717 = vunpack.c.l.b16 %v93
  %v718 = vunpack.c.l.b16 %v94
  %v719 = vunpack.c.l.b16 %v95
  %v720 = vunpack.c.l.b16 %v96
  %v721 = vunpack.c.l.b16 %v97
  %v722 = vunpack.c.l.b16 %v98
  %v723 = vunpack.c.l.b16 %v99
  %v724 = vunpack.c.l.b16 %v100
  %v725 = vunpack.c.l.b16 %v101
  %v726 = vunpack.c.l.b16 %v102
  %v727 = vunpack.c.l.b16 %v103
  %v728 = vunpack.c.l.b16 %v104
  %v729 = vunpack.c.l.b16 %v105
  %v730 = vunpack.c.l.b16 %v106
  %v731 = vunpack.c.l.b16 %v107
  %v732 = vunpack.c.l.b16 %v108
  %v733 = vpack.c.b16 %v670, %v669
  %v734 = vpack.c.b16 %v672, %v671
  %v735 = vpack.c.b16 %v674, %v673
  %v736 = vpack.c.b16 %v676, %v675
  %v737 = vpack.c.b16 %v678, %v677
  %v738 = vpack.c.b16 %v680, %v679
  %v739 = vpack.c.b16 %v682, %v681
  %v740 = vpack.c.b16 %v684, %v683
  %v741 = vpack.c.b16 %v686, %v685
  %v742 = vpack.c.b16 %v688, %v687
  %v743 = vpack.c.b16 %v690, %v689
  %v744 = vpack.c.b16 %v692, %v691
  %v745 = vpack.c.b16 %v694, %v693
  %v746 = vpack.c.b16 %v696, %v695
  %v747 = vpack.c.b16 %v698, %v697
  %v748 = vpack.c.b16 %v700, %v699
  %v749 = vpack.c.b16 %v702, %v701
  %v750 = vpack.c.b16 %v704, %v703
  %v751 = vpack.c.b16 %v706, %v705
  %v752 = vpack.c.b16 %v708, %v707
  %v753 = vpack.c.b16 %v710, %v709
  %v754 = vpack.c.b16 %v712, %v711
  %v755 = vpack.c.b16 %v714, %v713
  %v756 = vpack.c.b16 %v716, %v715
  %v757 = vpack.c.b16 %v718, %v717
  %v758 = vpack.c.b16 %v720, %v719
  %v759 = vpack.c.b16 %v722, %v721
  %v760 = vpack.c.b16 %v724, %v723
  %v761 = vpack.c.b16 %v726, %v725
  %v762 = vpack.c.b16 %v728, %v727
  %v763 = vpack.c.b16 %v730, %v729
  %v764 = vpack.c.b16 %v732, %v731
  %v766 = vsel %vm335, %v733, 0
  %v769 = vsel %vm335, %v734, 0
  %v772 = vsel %vm335, %v735, 0
  %v775 = vsel %vm335, %v736, 0
  %v778 = vsel %vm335, %v737, 0
  %v781 = vsel %vm335, %v738, 0
  %v784 = vsel %vm335, %v739, 0
  %v787 = vsel %vm335, %v740, 0
  %v790 = vsel %vm335, %v741, 0
  %v793 = vsel %vm335, %v742, 0
  %v796 = vsel %vm335, %v743, 0
  %v799 = vsel %vm335, %v744, 0
  %v802 = vsel %vm335, %v745, 0
  %v805 = vsel %vm335, %v746, 0
  %v808 = vsel %vm335, %v747, 0
  %v811 = vsel %vm335, %v748, 0
  %v814 = vsel %vm335, %v749, 0
  %v817 = vsel %vm335, %v750, 0
  %v820 = vsel %vm335, %v751, 0
  %v823 = vsel %vm335, %v752, 0
  %v826 = vsel %vm335, %v753, 0
  %v829 = vsel %vm335, %v754, 0
  %v832 = vsel %vm335, %v755, 0
  %v835 = vsel %vm335, %v756, 0
  %v838 = vsel %vm335, %v757, 0
  %v841 = vsel %vm335, %v758, 0
  %v844 = vsel %vm335, %v759, 0
  %v847 = vsel %vm335, %v760, 0
  %v850 = vsel %vm335, %v761, 0
  %v853 = vsel %vm335, %v762, 0
  %v856 = vsel %vm335, %v763, 0
  %v859 = vsel %vm335, %v764, 0
  %v862 = vsel %vm432, %v109, 0
  %864 = vmatpush.bf16.msra.mxu0 0
  %865 = vmatpush.bf16.msra.mxu0 0
  %866 = vmatpush.bf16.msra.mxu0 0
  %867 = vmatpush.bf16.msra.mxu0 0
  %868 = vmatpush.bf16.msra.mxu0 0
  %869 = vmatpush.bf16.msra.mxu0 0
  %870 = vmatpush.bf16.msra.mxu0 0
  %871 = vmatpush.bf16.msra.mxu0 %v862
  %872 = vmatmul.bf16.gmra.mxu0 %v766
  %v873 = vpop.f32.mrf.mxu0
  %v874 = vadd.f32 %v446, %v873
  %v875 = vpop.f32.mrf.mxu0
  %v876 = vadd.f32 %v448, %v875
  %877 = vmatmul.bf16.gmra.mxu0 %v769
  %v878 = vpop.f32.mrf.mxu0
  %v879 = vadd.f32 %v451, %v878
  %v880 = vpop.f32.mrf.mxu0
  %v881 = vadd.f32 %v453, %v880
  %882 = vmatmul.bf16.gmra.mxu0 %v772
  %v883 = vpop.f32.mrf.mxu0
  %v884 = vadd.f32 %v456, %v883
  %v885 = vpop.f32.mrf.mxu0
  %v886 = vadd.f32 %v458, %v885
  %887 = vmatmul.bf16.gmra.mxu0 %v775
  %v888 = vpop.f32.mrf.mxu0
  %v889 = vadd.f32 %v461, %v888
  %v890 = vpop.f32.mrf.mxu0
  %v891 = vadd.f32 %v463, %v890
  %892 = vmatmul.bf16.gmra.mxu0 %v778
  %v893 = vpop.f32.mrf.mxu0
  %v894 = vadd.f32 %v466, %v893
  %v895 = vpop.f32.mrf.mxu0
  %v896 = vadd.f32 %v468, %v895
  %897 = vmatmul.bf16.gmra.mxu0 %v781
  %v898 = vpop.f32.mrf.mxu0
  %v899 = vadd.f32 %v471, %v898
  %v900 = vpop.f32.mrf.mxu0
  %v901 = vadd.f32 %v473, %v900
  %902 = vmatmul.bf16.gmra.mxu0 %v784
  %v903 = vpop.f32.mrf.mxu0
  %v904 = vadd.f32 %v476, %v903
  %v905 = vpop.f32.mrf.mxu0
  %v906 = vadd.f32 %v478, %v905
  %907 = vmatmul.bf16.gmra.mxu0 %v787
  %v908 = vpop.f32.mrf.mxu0
  %v909 = vadd.f32 %v481, %v908
  %v910 = vpop.f32.mrf.mxu0
  %v911 = vadd.f32 %v483, %v910
  %912 = vmatmul.bf16.gmra.mxu0 %v790
  %v913 = vpop.f32.mrf.mxu0
  %v914 = vadd.f32 %v486, %v913
  %v915 = vpop.f32.mrf.mxu0
  %v916 = vadd.f32 %v488, %v915
  %917 = vmatmul.bf16.gmra.mxu0 %v793
  %v918 = vpop.f32.mrf.mxu0
  %v919 = vadd.f32 %v491, %v918
  %v920 = vpop.f32.mrf.mxu0
  %v921 = vadd.f32 %v493, %v920
  %922 = vmatmul.bf16.gmra.mxu0 %v796
  %v923 = vpop.f32.mrf.mxu0
  %v924 = vadd.f32 %v496, %v923
  %v925 = vpop.f32.mrf.mxu0
  %v926 = vadd.f32 %v498, %v925
  %927 = vmatmul.bf16.gmra.mxu0 %v799
  %v928 = vpop.f32.mrf.mxu0
  %v929 = vadd.f32 %v501, %v928
  %v930 = vpop.f32.mrf.mxu0
  %v931 = vadd.f32 %v503, %v930
  %932 = vmatmul.bf16.gmra.mxu0 %v802
  %v933 = vpop.f32.mrf.mxu0
  %v934 = vadd.f32 %v506, %v933
  %v935 = vpop.f32.mrf.mxu0
  %v936 = vadd.f32 %v508, %v935
  %937 = vmatmul.bf16.gmra.mxu0 %v805
  %v938 = vpop.f32.mrf.mxu0
  %v939 = vadd.f32 %v511, %v938
  %v940 = vpop.f32.mrf.mxu0
  %v941 = vadd.f32 %v513, %v940
  %942 = vmatmul.bf16.gmra.mxu0 %v808
  %v943 = vpop.f32.mrf.mxu0
  %v944 = vadd.f32 %v516, %v943
  %v945 = vpop.f32.mrf.mxu0
  %v946 = vadd.f32 %v518, %v945
  %947 = vmatmul.bf16.gmra.mxu0 %v811
  %v948 = vpop.f32.mrf.mxu0
  %v949 = vadd.f32 %v521, %v948
  %v950 = vpop.f32.mrf.mxu0
  %v951 = vadd.f32 %v523, %v950
  %952 = vmatmul.bf16.gmra.mxu0 %v814
  %v953 = vpop.f32.mrf.mxu0
  %v954 = vadd.f32 %v526, %v953
  %v955 = vpop.f32.mrf.mxu0
  %v956 = vadd.f32 %v528, %v955
  %957 = vmatmul.bf16.gmra.mxu0 %v817
  %v958 = vpop.f32.mrf.mxu0
  %v959 = vadd.f32 %v531, %v958
  %v960 = vpop.f32.mrf.mxu0
  %v961 = vadd.f32 %v533, %v960
  %962 = vmatmul.bf16.gmra.mxu0 %v820
  %v963 = vpop.f32.mrf.mxu0
  %v964 = vadd.f32 %v536, %v963
  %v965 = vpop.f32.mrf.mxu0
  %v966 = vadd.f32 %v538, %v965
  %967 = vmatmul.bf16.gmra.mxu0 %v823
  %v968 = vpop.f32.mrf.mxu0
  %v969 = vadd.f32 %v541, %v968
  %v970 = vpop.f32.mrf.mxu0
  %v971 = vadd.f32 %v543, %v970
  %972 = vmatmul.bf16.gmra.mxu0 %v826
  %v973 = vpop.f32.mrf.mxu0
  %v974 = vadd.f32 %v546, %v973
  %v975 = vpop.f32.mrf.mxu0
  %v976 = vadd.f32 %v548, %v975
  %977 = vmatmul.bf16.gmra.mxu0 %v829
  %v978 = vpop.f32.mrf.mxu0
  %v979 = vadd.f32 %v551, %v978
  %v980 = vpop.f32.mrf.mxu0
  %v981 = vadd.f32 %v553, %v980
  %982 = vmatmul.bf16.gmra.mxu0 %v832
  %v983 = vpop.f32.mrf.mxu0
  %v984 = vadd.f32 %v556, %v983
  %v985 = vpop.f32.mrf.mxu0
  %v986 = vadd.f32 %v558, %v985
  %987 = vmatmul.bf16.gmra.mxu0 %v835
  %v988 = vpop.f32.mrf.mxu0
  %v989 = vadd.f32 %v561, %v988
  %v990 = vpop.f32.mrf.mxu0
  %v991 = vadd.f32 %v563, %v990
  %992 = vmatmul.bf16.gmra.mxu0 %v838
  %v993 = vpop.f32.mrf.mxu0
  %v994 = vadd.f32 %v566, %v993
  %v995 = vpop.f32.mrf.mxu0
  %v996 = vadd.f32 %v568, %v995
  %997 = vmatmul.bf16.gmra.mxu0 %v841
  %v998 = vpop.f32.mrf.mxu0
  %v999 = vadd.f32 %v571, %v998
  %v1000 = vpop.f32.mrf.mxu0
  %v1001 = vadd.f32 %v573, %v1000
  %1002 = vmatmul.bf16.gmra.mxu0 %v844
  %v1003 = vpop.f32.mrf.mxu0
  %v1004 = vadd.f32 %v576, %v1003
  %v1005 = vpop.f32.mrf.mxu0
  %v1006 = vadd.f32 %v578, %v1005
  %1007 = vmatmul.bf16.gmra.mxu0 %v847
  %v1008 = vpop.f32.mrf.mxu0
  %v1009 = vadd.f32 %v581, %v1008
  %v1010 = vpop.f32.mrf.mxu0
  %v1011 = vadd.f32 %v583, %v1010
  %1012 = vmatmul.bf16.gmra.mxu0 %v850
  %v1013 = vpop.f32.mrf.mxu0
  %v1014 = vadd.f32 %v586, %v1013
  %v1015 = vpop.f32.mrf.mxu0
  %v1016 = vadd.f32 %v588, %v1015
  %1017 = vmatmul.bf16.gmra.mxu0 %v853
  %v1018 = vpop.f32.mrf.mxu0
  %v1019 = vadd.f32 %v591, %v1018
  %v1020 = vpop.f32.mrf.mxu0
  %v1021 = vadd.f32 %v593, %v1020
  %1022 = vmatmul.bf16.gmra.mxu0 %v856
  %v1023 = vpop.f32.mrf.mxu0
  %v1024 = vadd.f32 %v596, %v1023
  %v1025 = vpop.f32.mrf.mxu0
  %v1026 = vadd.f32 %v598, %v1025
  %1027 = vmatmul.bf16.gmra.mxu0 %v859
  %v1028 = vpop.f32.mrf.mxu0
  %v1029 = vadd.f32 %v601, %v1028
  %v1030 = vpop.f32.mrf.mxu0
  %v1031 = vadd.f32 %v603, %v1030
  %1032 = vdwg.mxu0
  %v1033 = vld [vmem:[%s2] sm:$0xf]
  %v1034 = vld [vmem:[%s2 + $0x4] sm:$0xf]
  %v1035 = vld [vmem:[%s2 + $0x8] sm:$0xf]
  %v1036 = vld [vmem:[%s2 + $0xc] sm:$0xf]
  %v1037 = vld [vmem:[%s2 + $0x10] sm:$0xf]
  %v1038 = vld [vmem:[%s2 + $0x14] sm:$0xf]
  %v1039 = vld [vmem:[%s2 + $0x18] sm:$0xf]
  %v1040 = vld [vmem:[%s2 + $0x1c] sm:$0xf]
  %v1041 = vld [vmem:[%s2 + $0x20] sm:$0xf]
  %v1042 = vld [vmem:[%s2 + $0x24] sm:$0xf]
  %v1043 = vld [vmem:[%s2 + $0x28] sm:$0xf]
  %v1044 = vld [vmem:[%s2 + $0x2c] sm:$0xf]
  %v1045 = vld [vmem:[%s2 + $0x30] sm:$0xf]
  %v1046 = vld [vmem:[%s2 + $0x34] sm:$0xf]
  %v1047 = vld [vmem:[%s2 + $0x38] sm:$0xf]
  %v1048 = vld [vmem:[%s2 + $0x3c] sm:$0xf]
  %v1049 = vld [vmem:[%s2 + $0x40] sm:$0xf]
  %v1050 = vld [vmem:[%s2 + $0x44] sm:$0xf]
  %v1051 = vld [vmem:[%s2 + $0x48] sm:$0xf]
  %v1052 = vld [vmem:[%s2 + $0x4c] sm:$0xf]
  %v1053 = vld [vmem:[%s2 + $0x50] sm:$0xf]
  %v1054 = vld [vmem:[%s2 + $0x54] sm:$0xf]
  %v1055 = vld [vmem:[%s2 + $0x58] sm:$0xf]
  %v1056 = vld [vmem:[%s2 + $0x5c] sm:$0xf]
  %v1057 = vld [vmem:[%s2 + $0x60] sm:$0xf]
  %v1058 = vld [vmem:[%s2 + $0x64] sm:$0xf]
  %v1059 = vld [vmem:[%s2 + $0x68] sm:$0xf]
  %v1060 = vld [vmem:[%s2 + $0x6c] sm:$0xf]
  %v1061 = vld [vmem:[%s2 + $0x70] sm:$0xf]
  %v1062 = vld [vmem:[%s2 + $0x74] sm:$0xf]
  %v1063 = vld [vmem:[%s2 + $0x78] sm:$0xf]
  %v1064 = vld [vmem:[%s2 + $0x7c] sm:$0xf]
  %v1065 = vld [vmem:[%s2 + $0x80] sm:$0xf]
  %v1066 = vld [vmem:[%s2 + $0x84] sm:$0xf]
  %v1067 = vld [vmem:[%s2 + $0x88] sm:$0xf]
  %v1068 = vld [vmem:[%s2 + $0x8c] sm:$0xf]
  %v1069 = vld [vmem:[%s2 + $0x90] sm:$0xf]
  %v1070 = vld [vmem:[%s2 + $0x94] sm:$0xf]
  %v1071 = vld [vmem:[%s2 + $0x98] sm:$0xf]
  %v1072 = vld [vmem:[%s2 + $0x9c] sm:$0xf]
  %v1073 = vld [vmem:[%s2 + $0xa0] sm:$0xf]
  %v1074 = vld [vmem:[%s2 + $0xa4] sm:$0xf]
  %v1075 = vld [vmem:[%s2 + $0xa8] sm:$0xf]
  %v1076 = vld [vmem:[%s2 + $0xac] sm:$0xf]
  %v1077 = vld [vmem:[%s2 + $0xb0] sm:$0xf]
  %v1078 = vld [vmem:[%s2 + $0xb4] sm:$0xf]
  %v1079 = vld [vmem:[%s2 + $0xb8] sm:$0xf]
  %v1080 = vld [vmem:[%s2 + $0xbc] sm:$0xf]
  %v1081 = vld [vmem:[%s2 + $0xc0] sm:$0xf]
  %v1082 = vld [vmem:[%s2 + $0xc4] sm:$0xf]
  %v1083 = vld [vmem:[%s2 + $0xc8] sm:$0xf]
  %v1084 = vld [vmem:[%s2 + $0xcc] sm:$0xf]
  %v1085 = vld [vmem:[%s2 + $0xd0] sm:$0xf]
  %v1086 = vld [vmem:[%s2 + $0xd4] sm:$0xf]
  %v1087 = vld [vmem:[%s2 + $0xd8] sm:$0xf]
  %v1088 = vld [vmem:[%s2 + $0xdc] sm:$0xf]
  %v1089 = vld [vmem:[%s2 + $0xe0] sm:$0xf]
  %v1090 = vld [vmem:[%s2 + $0xe4] sm:$0xf]
  %v1091 = vld [vmem:[%s2 + $0xe8] sm:$0xf]
  %v1092 = vld [vmem:[%s2 + $0xec] sm:$0xf]
  %v1093 = vld [vmem:[%s2 + $0xf0] sm:$0xf]
  %v1094 = vld [vmem:[%s2 + $0xf4] sm:$0xf]
  %v1095 = vld [vmem:[%s2 + $0xf8] sm:$0xf]
  %v1096 = vld [vmem:[%s2 + $0xfc] sm:$0xf]
  %v1097 = vld [vmem:[%s8] sm:$0x3]
  %v1162 = vunpack.c.l.b16 %v1033
  %v1163 = vunpack.c.l.b16 %v1034
  %v1164 = vunpack.c.l.b16 %v1035
  %v1165 = vunpack.c.l.b16 %v1036
  %v1166 = vunpack.c.l.b16 %v1037
  %v1167 = vunpack.c.l.b16 %v1038
  %v1168 = vunpack.c.l.b16 %v1039
  %v1169 = vunpack.c.l.b16 %v1040
  %v1170 = vunpack.c.l.b16 %v1041
  %v1171 = vunpack.c.l.b16 %v1042
  %v1172 = vunpack.c.l.b16 %v1043
  %v1173 = vunpack.c.l.b16 %v1044
  %v1174 = vunpack.c.l.b16 %v1045
  %v1175 = vunpack.c.l.b16 %v1046
  %v1176 = vunpack.c.l.b16 %v1047
  %v1177 = vunpack.c.l.b16 %v1048
  %v1178 = vunpack.c.l.b16 %v1049
  %v1179 = vunpack.c.l.b16 %v1050
  %v1180 = vunpack.c.l.b16 %v1051
  %v1181 = vunpack.c.l.b16 %v1052
  %v1182 = vunpack.c.l.b16 %v1053
  %v1183 = vunpack.c.l.b16 %v1054
  %v1184 = vunpack.c.l.b16 %v1055
  %v1185 = vunpack.c.l.b16 %v1056
  %v1186 = vunpack.c.l.b16 %v1057
  %v1187 = vunpack.c.l.b16 %v1058
  %v1188 = vunpack.c.l.b16 %v1059
  %v1189 = vunpack.c.l.b16 %v1060
  %v1190 = vunpack.c.l.b16 %v1061
  %v1191 = vunpack.c.l.b16 %v1062
  %v1192 = vunpack.c.l.b16 %v1063
  %v1193 = vunpack.c.l.b16 %v1064
  %v1194 = vunpack.c.l.b16 %v1065
  %v1195 = vunpack.c.l.b16 %v1066
  %v1196 = vunpack.c.l.b16 %v1067
  %v1197 = vunpack.c.l.b16 %v1068
  %v1198 = vunpack.c.l.b16 %v1069
  %v1199 = vunpack.c.l.b16 %v1070
  %v1200 = vunpack.c.l.b16 %v1071
  %v1201 = vunpack.c.l.b16 %v1072
  %v1202 = vunpack.c.l.b16 %v1073
  %v1203 = vunpack.c.l.b16 %v1074
  %v1204 = vunpack.c.l.b16 %v1075
  %v1205 = vunpack.c.l.b16 %v1076
  %v1206 = vunpack.c.l.b16 %v1077
  %v1207 = vunpack.c.l.b16 %v1078
  %v1208 = vunpack.c.l.b16 %v1079
  %v1209 = vunpack.c.l.b16 %v1080
  %v1210 = vunpack.c.l.b16 %v1081
  %v1211 = vunpack.c.l.b16 %v1082
  %v1212 = vunpack.c.l.b16 %v1083
  %v1213 = vunpack.c.l.b16 %v1084
  %v1214 = vunpack.c.l.b16 %v1085
  %v1215 = vunpack.c.l.b16 %v1086
  %v1216 = vunpack.c.l.b16 %v1087
  %v1217 = vunpack.c.l.b16 %v1088
  %v1218 = vunpack.c.l.b16 %v1089
  %v1219 = vunpack.c.l.b16 %v1090
  %v1220 = vunpack.c.l.b16 %v1091
  %v1221 = vunpack.c.l.b16 %v1092
  %v1222 = vunpack.c.l.b16 %v1093
  %v1223 = vunpack.c.l.b16 %v1094
  %v1224 = vunpack.c.l.b16 %v1095
  %v1225 = vunpack.c.l.b16 %v1096
  %v1226 = vpack.c.b16 %v1163, %v1162
  %v1227 = vpack.c.b16 %v1165, %v1164
  %v1228 = vpack.c.b16 %v1167, %v1166
  %v1229 = vpack.c.b16 %v1169, %v1168
  %v1230 = vpack.c.b16 %v1171, %v1170
  %v1231 = vpack.c.b16 %v1173, %v1172
  %v1232 = vpack.c.b16 %v1175, %v1174
  %v1233 = vpack.c.b16 %v1177, %v1176
  %v1234 = vpack.c.b16 %v1179, %v1178
  %v1235 = vpack.c.b16 %v1181, %v1180
  %v1236 = vpack.c.b16 %v1183, %v1182
  %v1237 = vpack.c.b16 %v1185, %v1184
  %v1238 = vpack.c.b16 %v1187, %v1186
  %v1239 = vpack.c.b16 %v1189, %v1188
  %v1240 = vpack.c.b16 %v1191, %v1190
  %v1241 = vpack.c.b16 %v1193, %v1192
  %v1242 = vpack.c.b16 %v1195, %v1194
  %v1243 = vpack.c.b16 %v1197, %v1196
  %v1244 = vpack.c.b16 %v1199, %v1198
  %v1245 = vpack.c.b16 %v1201, %v1200
  %v1246 = vpack.c.b16 %v1203, %v1202
  %v1247 = vpack.c.b16 %v1205, %v1204
  %v1248 = vpack.c.b16 %v1207, %v1206
  %v1249 = vpack.c.b16 %v1209, %v1208
  %v1250 = vpack.c.b16 %v1211, %v1210
  %v1251 = vpack.c.b16 %v1213, %v1212
  %v1252 = vpack.c.b16 %v1215, %v1214
  %v1253 = vpack.c.b16 %v1217, %v1216
  %v1254 = vpack.c.b16 %v1219, %v1218
  %v1255 = vpack.c.b16 %v1221, %v1220
  %v1256 = vpack.c.b16 %v1223, %v1222
  %v1257 = vpack.c.b16 %v1225, %v1224
  %v1259 = vsel %vm335, %v1226, 0
  %v1262 = vsel %vm335, %v1227, 0
  %v1265 = vsel %vm335, %v1228, 0
  %v1268 = vsel %vm335, %v1229, 0
  %v1271 = vsel %vm335, %v1230, 0
  %v1274 = vsel %vm335, %v1231, 0
  %v1277 = vsel %vm335, %v1232, 0
  %v1280 = vsel %vm335, %v1233, 0
  %v1283 = vsel %vm335, %v1234, 0
  %v1286 = vsel %vm335, %v1235, 0
  %v1289 = vsel %vm335, %v1236, 0
  %v1292 = vsel %vm335, %v1237, 0
  %v1295 = vsel %vm335, %v1238, 0
  %v1298 = vsel %vm335, %v1239, 0
  %v1301 = vsel %vm335, %v1240, 0
  %v1304 = vsel %vm335, %v1241, 0
  %v1307 = vsel %vm335, %v1242, 0
  %v1310 = vsel %vm335, %v1243, 0
  %v1313 = vsel %vm335, %v1244, 0
  %v1316 = vsel %vm335, %v1245, 0
  %v1319 = vsel %vm335, %v1246, 0
  %v1322 = vsel %vm335, %v1247, 0
  %v1325 = vsel %vm335, %v1248, 0
  %v1328 = vsel %vm335, %v1249, 0
  %v1331 = vsel %vm335, %v1250, 0
  %v1334 = vsel %vm335, %v1251, 0
  %v1337 = vsel %vm335, %v1252, 0
  %v1340 = vsel %vm335, %v1253, 0
  %v1343 = vsel %vm335, %v1254, 0
  %v1346 = vsel %vm335, %v1255, 0
  %v1349 = vsel %vm335, %v1256, 0
  %v1352 = vsel %vm335, %v1257, 0
  %v1355 = vsel %vm432, %v1097, 0
  %1357 = vmatpush.bf16.msra.mxu0 0
  %1358 = vmatpush.bf16.msra.mxu0 0
  %1359 = vmatpush.bf16.msra.mxu0 0
  %1360 = vmatpush.bf16.msra.mxu0 0
  %1361 = vmatpush.bf16.msra.mxu0 0
  %1362 = vmatpush.bf16.msra.mxu0 0
  %1363 = vmatpush.bf16.msra.mxu0 0
  %1364 = vmatpush.bf16.msra.mxu0 %v1355
  %1365 = vmatmul.bf16.gmra.mxu0 %v1259
  %v1366 = vpop.f32.mrf.mxu0
  %v1367 = vadd.f32 0.0, %v1366
  %v1368 = vpop.f32.mrf.mxu0
  %v1369 = vadd.f32 0.0, %v1368
  %1370 = vmatmul.bf16.gmra.mxu0 %v1262
  %v1371 = vpop.f32.mrf.mxu0
  %v1372 = vadd.f32 0.0, %v1371
  %v1373 = vpop.f32.mrf.mxu0
  %v1374 = vadd.f32 0.0, %v1373
  %1375 = vmatmul.bf16.gmra.mxu0 %v1265
  %v1376 = vpop.f32.mrf.mxu0
  %v1377 = vadd.f32 0.0, %v1376
  %v1378 = vpop.f32.mrf.mxu0
  %v1379 = vadd.f32 0.0, %v1378
  %1380 = vmatmul.bf16.gmra.mxu0 %v1268
  %v1381 = vpop.f32.mrf.mxu0
  %v1382 = vadd.f32 0.0, %v1381
  %v1383 = vpop.f32.mrf.mxu0
  %v1384 = vadd.f32 0.0, %v1383
  %1385 = vmatmul.bf16.gmra.mxu0 %v1271
  %v1386 = vpop.f32.mrf.mxu0
  %v1387 = vadd.f32 0.0, %v1386
  %v1388 = vpop.f32.mrf.mxu0
  %v1389 = vadd.f32 0.0, %v1388
  %1390 = vmatmul.bf16.gmra.mxu0 %v1274
  %v1391 = vpop.f32.mrf.mxu0
  %v1392 = vadd.f32 0.0, %v1391
  %v1393 = vpop.f32.mrf.mxu0
  %v1394 = vadd.f32 0.0, %v1393
  %1395 = vmatmul.bf16.gmra.mxu0 %v1277
  %v1396 = vpop.f32.mrf.mxu0
  %v1397 = vadd.f32 0.0, %v1396
  %v1398 = vpop.f32.mrf.mxu0
  %v1399 = vadd.f32 0.0, %v1398
  %1400 = vmatmul.bf16.gmra.mxu0 %v1280
  %v1401 = vpop.f32.mrf.mxu0
  %v1402 = vadd.f32 0.0, %v1401
  %v1403 = vpop.f32.mrf.mxu0
  %v1404 = vadd.f32 0.0, %v1403
  %1405 = vmatmul.bf16.gmra.mxu0 %v1283
  %v1406 = vpop.f32.mrf.mxu0
  %v1407 = vadd.f32 0.0, %v1406
  %v1408 = vpop.f32.mrf.mxu0
  %v1409 = vadd.f32 0.0, %v1408
  %1410 = vmatmul.bf16.gmra.mxu0 %v1286
  %v1411 = vpop.f32.mrf.mxu0
  %v1412 = vadd.f32 0.0, %v1411
  %v1413 = vpop.f32.mrf.mxu0
  %v1414 = vadd.f32 0.0, %v1413
  %1415 = vmatmul.bf16.gmra.mxu0 %v1289
  %v1416 = vpop.f32.mrf.mxu0
  %v1417 = vadd.f32 0.0, %v1416
  %v1418 = vpop.f32.mrf.mxu0
  %v1419 = vadd.f32 0.0, %v1418
  %1420 = vmatmul.bf16.gmra.mxu0 %v1292
  %v1421 = vpop.f32.mrf.mxu0
  %v1422 = vadd.f32 0.0, %v1421
  %v1423 = vpop.f32.mrf.mxu0
  %v1424 = vadd.f32 0.0, %v1423
  %1425 = vmatmul.bf16.gmra.mxu0 %v1295
  %v1426 = vpop.f32.mrf.mxu0
  %v1427 = vadd.f32 0.0, %v1426
  %v1428 = vpop.f32.mrf.mxu0
  %v1429 = vadd.f32 0.0, %v1428
  %1430 = vmatmul.bf16.gmra.mxu0 %v1298
  %v1431 = vpop.f32.mrf.mxu0
  %v1432 = vadd.f32 0.0, %v1431
  %v1433 = vpop.f32.mrf.mxu0
  %v1434 = vadd.f32 0.0, %v1433
  %1435 = vmatmul.bf16.gmra.mxu0 %v1301
  %v1436 = vpop.f32.mrf.mxu0
  %v1437 = vadd.f32 0.0, %v1436
  %v1438 = vpop.f32.mrf.mxu0
  %v1439 = vadd.f32 0.0, %v1438
  %1440 = vmatmul.bf16.gmra.mxu0 %v1304
  %v1441 = vpop.f32.mrf.mxu0
  %v1442 = vadd.f32 0.0, %v1441
  %v1443 = vpop.f32.mrf.mxu0
  %v1444 = vadd.f32 0.0, %v1443
  %1445 = vmatmul.bf16.gmra.mxu0 %v1307
  %v1446 = vpop.f32.mrf.mxu0
  %v1447 = vadd.f32 0.0, %v1446
  %v1448 = vpop.f32.mrf.mxu0
  %v1449 = vadd.f32 0.0, %v1448
  %1450 = vmatmul.bf16.gmra.mxu0 %v1310
  %v1451 = vpop.f32.mrf.mxu0
  %v1452 = vadd.f32 0.0, %v1451
  %v1453 = vpop.f32.mrf.mxu0
  %v1454 = vadd.f32 0.0, %v1453
  %1455 = vmatmul.bf16.gmra.mxu0 %v1313
  %v1456 = vpop.f32.mrf.mxu0
  %v1457 = vadd.f32 0.0, %v1456
  %v1458 = vpop.f32.mrf.mxu0
  %v1459 = vadd.f32 0.0, %v1458
  %1460 = vmatmul.bf16.gmra.mxu0 %v1316
  %v1461 = vpop.f32.mrf.mxu0
  %v1462 = vadd.f32 0.0, %v1461
  %v1463 = vpop.f32.mrf.mxu0
  %v1464 = vadd.f32 0.0, %v1463
  %1465 = vmatmul.bf16.gmra.mxu0 %v1319
  %v1466 = vpop.f32.mrf.mxu0
  %v1467 = vadd.f32 0.0, %v1466
  %v1468 = vpop.f32.mrf.mxu0
  %v1469 = vadd.f32 0.0, %v1468
  %1470 = vmatmul.bf16.gmra.mxu0 %v1322
  %v1471 = vpop.f32.mrf.mxu0
  %v1472 = vadd.f32 0.0, %v1471
  %v1473 = vpop.f32.mrf.mxu0
  %v1474 = vadd.f32 0.0, %v1473
  %1475 = vmatmul.bf16.gmra.mxu0 %v1325
  %v1476 = vpop.f32.mrf.mxu0
  %v1477 = vadd.f32 0.0, %v1476
  %v1478 = vpop.f32.mrf.mxu0
  %v1479 = vadd.f32 0.0, %v1478
  %1480 = vmatmul.bf16.gmra.mxu0 %v1328
  %v1481 = vpop.f32.mrf.mxu0
  %v1482 = vadd.f32 0.0, %v1481
  %v1483 = vpop.f32.mrf.mxu0
  %v1484 = vadd.f32 0.0, %v1483
  %1485 = vmatmul.bf16.gmra.mxu0 %v1331
  %v1486 = vpop.f32.mrf.mxu0
  %v1487 = vadd.f32 0.0, %v1486
  %v1488 = vpop.f32.mrf.mxu0
  %v1489 = vadd.f32 0.0, %v1488
  %1490 = vmatmul.bf16.gmra.mxu0 %v1334
  %v1491 = vpop.f32.mrf.mxu0
  %v1492 = vadd.f32 0.0, %v1491
  %v1493 = vpop.f32.mrf.mxu0
  %v1494 = vadd.f32 0.0, %v1493
  %1495 = vmatmul.bf16.gmra.mxu0 %v1337
  %v1496 = vpop.f32.mrf.mxu0
  %v1497 = vadd.f32 0.0, %v1496
  %v1498 = vpop.f32.mrf.mxu0
  %v1499 = vadd.f32 0.0, %v1498
  %1500 = vmatmul.bf16.gmra.mxu0 %v1340
  %v1501 = vpop.f32.mrf.mxu0
  %v1502 = vadd.f32 0.0, %v1501
  %v1503 = vpop.f32.mrf.mxu0
  %v1504 = vadd.f32 0.0, %v1503
  %1505 = vmatmul.bf16.gmra.mxu0 %v1343
  %v1506 = vpop.f32.mrf.mxu0
  %v1507 = vadd.f32 0.0, %v1506
  %v1508 = vpop.f32.mrf.mxu0
  %v1509 = vadd.f32 0.0, %v1508
  %1510 = vmatmul.bf16.gmra.mxu0 %v1346
  %v1511 = vpop.f32.mrf.mxu0
  %v1512 = vadd.f32 0.0, %v1511
  %v1513 = vpop.f32.mrf.mxu0
  %v1514 = vadd.f32 0.0, %v1513
  %1515 = vmatmul.bf16.gmra.mxu0 %v1349
  %v1516 = vpop.f32.mrf.mxu0
  %v1517 = vadd.f32 0.0, %v1516
  %v1518 = vpop.f32.mrf.mxu0
  %v1519 = vadd.f32 0.0, %v1518
  %1520 = vmatmul.bf16.gmra.mxu0 %v1352
  %v1521 = vpop.f32.mrf.mxu0
  %v1522 = vadd.f32 0.0, %v1521
  %v1523 = vpop.f32.mrf.mxu0
  %v1524 = vadd.f32 0.0, %v1523
  %1525 = vdwg.mxu0
  %v1526 = vadd.f32 %v874, %v1367
  %v1527 = vadd.f32 %v876, %v1369
  %v1528 = vadd.f32 %v879, %v1372
  %v1529 = vadd.f32 %v881, %v1374
  %v1530 = vadd.f32 %v884, %v1377
  %v1531 = vadd.f32 %v886, %v1379
  %v1532 = vadd.f32 %v889, %v1382
  %v1533 = vadd.f32 %v891, %v1384
  %v1534 = vadd.f32 %v894, %v1387
  %v1535 = vadd.f32 %v896, %v1389
  %v1536 = vadd.f32 %v899, %v1392
  %v1537 = vadd.f32 %v901, %v1394
  %v1538 = vadd.f32 %v904, %v1397
  %v1539 = vadd.f32 %v906, %v1399
  %v1540 = vadd.f32 %v909, %v1402
  %v1541 = vadd.f32 %v911, %v1404
  %v1542 = vadd.f32 %v914, %v1407
  %v1543 = vadd.f32 %v916, %v1409
  %v1544 = vadd.f32 %v919, %v1412
  %v1545 = vadd.f32 %v921, %v1414
  %v1546 = vadd.f32 %v924, %v1417
  %v1547 = vadd.f32 %v926, %v1419
  %v1548 = vadd.f32 %v929, %v1422
  %v1549 = vadd.f32 %v931, %v1424
  %v1550 = vadd.f32 %v934, %v1427
  %v1551 = vadd.f32 %v936, %v1429
  %v1552 = vadd.f32 %v939, %v1432
  %v1553 = vadd.f32 %v941, %v1434
  %v1554 = vadd.f32 %v944, %v1437
  %v1555 = vadd.f32 %v946, %v1439
  %v1556 = vadd.f32 %v949, %v1442
  %v1557 = vadd.f32 %v951, %v1444
  %v1558 = vadd.f32 %v954, %v1447
  %v1559 = vadd.f32 %v956, %v1449
  %v1560 = vadd.f32 %v959, %v1452
  %v1561 = vadd.f32 %v961, %v1454
  %v1562 = vadd.f32 %v964, %v1457
  %v1563 = vadd.f32 %v966, %v1459
  %v1564 = vadd.f32 %v969, %v1462
  %v1565 = vadd.f32 %v971, %v1464
  %v1566 = vadd.f32 %v974, %v1467
  %v1567 = vadd.f32 %v976, %v1469
  %v1568 = vadd.f32 %v979, %v1472
  %v1569 = vadd.f32 %v981, %v1474
  %v1570 = vadd.f32 %v984, %v1477
  %v1571 = vadd.f32 %v986, %v1479
  %v1572 = vadd.f32 %v989, %v1482
  %v1573 = vadd.f32 %v991, %v1484
  %v1574 = vadd.f32 %v994, %v1487
  %v1575 = vadd.f32 %v996, %v1489
  %v1576 = vadd.f32 %v999, %v1492
  %v1577 = vadd.f32 %v1001, %v1494
  %v1578 = vadd.f32 %v1004, %v1497
  %v1579 = vadd.f32 %v1006, %v1499
  %v1580 = vadd.f32 %v1009, %v1502
  %v1581 = vadd.f32 %v1011, %v1504
  %v1582 = vadd.f32 %v1014, %v1507
  %v1583 = vadd.f32 %v1016, %v1509
  %v1584 = vadd.f32 %v1019, %v1512
  %v1585 = vadd.f32 %v1021, %v1514
  %v1586 = vadd.f32 %v1024, %v1517
  %v1587 = vadd.f32 %v1026, %v1519
  %v1588 = vadd.f32 %v1029, %v1522
  %v1589 = vadd.f32 %v1031, %v1524
  %v1590 = vld [vmem:[%s3] sm:$0xf]
  %v1591 = vld [vmem:[%s3 + $0x4] sm:$0xf]
  %v1592 = vld [vmem:[%s3 + $0x8] sm:$0xf]
  %v1593 = vld [vmem:[%s3 + $0xc] sm:$0xf]
  %v1594 = vld [vmem:[%s3 + $0x10] sm:$0xf]
  %v1595 = vld [vmem:[%s3 + $0x14] sm:$0xf]
  %v1596 = vld [vmem:[%s3 + $0x18] sm:$0xf]
  %v1597 = vld [vmem:[%s3 + $0x1c] sm:$0xf]
  %v1598 = vld [vmem:[%s3 + $0x20] sm:$0xf]
  %v1599 = vld [vmem:[%s3 + $0x24] sm:$0xf]
  %v1600 = vld [vmem:[%s3 + $0x28] sm:$0xf]
  %v1601 = vld [vmem:[%s3 + $0x2c] sm:$0xf]
  %v1602 = vld [vmem:[%s3 + $0x30] sm:$0xf]
  %v1603 = vld [vmem:[%s3 + $0x34] sm:$0xf]
  %v1604 = vld [vmem:[%s3 + $0x38] sm:$0xf]
  %v1605 = vld [vmem:[%s3 + $0x3c] sm:$0xf]
  %v1606 = vld [vmem:[%s3 + $0x40] sm:$0xf]
  %v1607 = vld [vmem:[%s3 + $0x44] sm:$0xf]
  %v1608 = vld [vmem:[%s3 + $0x48] sm:$0xf]
  %v1609 = vld [vmem:[%s3 + $0x4c] sm:$0xf]
  %v1610 = vld [vmem:[%s3 + $0x50] sm:$0xf]
  %v1611 = vld [vmem:[%s3 + $0x54] sm:$0xf]
  %v1612 = vld [vmem:[%s3 + $0x58] sm:$0xf]
  %v1613 = vld [vmem:[%s3 + $0x5c] sm:$0xf]
  %v1614 = vld [vmem:[%s3 + $0x60] sm:$0xf]
  %v1615 = vld [vmem:[%s3 + $0x64] sm:$0xf]
  %v1616 = vld [vmem:[%s3 + $0x68] sm:$0xf]
  %v1617 = vld [vmem:[%s3 + $0x6c] sm:$0xf]
  %v1618 = vld [vmem:[%s3 + $0x70] sm:$0xf]
  %v1619 = vld [vmem:[%s3 + $0x74] sm:$0xf]
  %v1620 = vld [vmem:[%s3 + $0x78] sm:$0xf]
  %v1621 = vld [vmem:[%s3 + $0x7c] sm:$0xf]
  %v1622 = vld [vmem:[%s3 + $0x80] sm:$0xf]
  %v1623 = vld [vmem:[%s3 + $0x84] sm:$0xf]
  %v1624 = vld [vmem:[%s3 + $0x88] sm:$0xf]
  %v1625 = vld [vmem:[%s3 + $0x8c] sm:$0xf]
  %v1626 = vld [vmem:[%s3 + $0x90] sm:$0xf]
  %v1627 = vld [vmem:[%s3 + $0x94] sm:$0xf]
  %v1628 = vld [vmem:[%s3 + $0x98] sm:$0xf]
  %v1629 = vld [vmem:[%s3 + $0x9c] sm:$0xf]
  %v1630 = vld [vmem:[%s3 + $0xa0] sm:$0xf]
  %v1631 = vld [vmem:[%s3 + $0xa4] sm:$0xf]
  %v1632 = vld [vmem:[%s3 + $0xa8] sm:$0xf]
  %v1633 = vld [vmem:[%s3 + $0xac] sm:$0xf]
  %v1634 = vld [vmem:[%s3 + $0xb0] sm:$0xf]
  %v1635 = vld [vmem:[%s3 + $0xb4] sm:$0xf]
  %v1636 = vld [vmem:[%s3 + $0xb8] sm:$0xf]
  %v1637 = vld [vmem:[%s3 + $0xbc] sm:$0xf]
  %v1638 = vld [vmem:[%s3 + $0xc0] sm:$0xf]
  %v1639 = vld [vmem:[%s3 + $0xc4] sm:$0xf]
  %v1640 = vld [vmem:[%s3 + $0xc8] sm:$0xf]
  %v1641 = vld [vmem:[%s3 + $0xcc] sm:$0xf]
  %v1642 = vld [vmem:[%s3 + $0xd0] sm:$0xf]
  %v1643 = vld [vmem:[%s3 + $0xd4] sm:$0xf]
  %v1644 = vld [vmem:[%s3 + $0xd8] sm:$0xf]
  %v1645 = vld [vmem:[%s3 + $0xdc] sm:$0xf]
  %v1646 = vld [vmem:[%s3 + $0xe0] sm:$0xf]
  %v1647 = vld [vmem:[%s3 + $0xe4] sm:$0xf]
  %v1648 = vld [vmem:[%s3 + $0xe8] sm:$0xf]
  %v1649 = vld [vmem:[%s3 + $0xec] sm:$0xf]
  %v1650 = vld [vmem:[%s3 + $0xf0] sm:$0xf]
  %v1651 = vld [vmem:[%s3 + $0xf4] sm:$0xf]
  %v1652 = vld [vmem:[%s3 + $0xf8] sm:$0xf]
  %v1653 = vld [vmem:[%s3 + $0xfc] sm:$0xf]
  %v1654 = vld [vmem:[%s9] sm:$0x3]
  %v1719 = vunpack.c.l.b16 %v1590
  %v1720 = vunpack.c.l.b16 %v1591
  %v1721 = vunpack.c.l.b16 %v1592
  %v1722 = vunpack.c.l.b16 %v1593
  %v1723 = vunpack.c.l.b16 %v1594
  %v1724 = vunpack.c.l.b16 %v1595
  %v1725 = vunpack.c.l.b16 %v1596
  %v1726 = vunpack.c.l.b16 %v1597
  %v1727 = vunpack.c.l.b16 %v1598
  %v1728 = vunpack.c.l.b16 %v1599
  %v1729 = vunpack.c.l.b16 %v1600
  %v1730 = vunpack.c.l.b16 %v1601
  %v1731 = vunpack.c.l.b16 %v1602
  %v1732 = vunpack.c.l.b16 %v1603
  %v1733 = vunpack.c.l.b16 %v1604
  %v1734 = vunpack.c.l.b16 %v1605
  %v1735 = vunpack.c.l.b16 %v1606
  %v1736 = vunpack.c.l.b16 %v1607
  %v1737 = vunpack.c.l.b16 %v1608
  %v1738 = vunpack.c.l.b16 %v1609
  %v1739 = vunpack.c.l.b16 %v1610
  %v1740 = vunpack.c.l.b16 %v1611
  %v1741 = vunpack.c.l.b16 %v1612
  %v1742 = vunpack.c.l.b16 %v1613
  %v1743 = vunpack.c.l.b16 %v1614
  %v1744 = vunpack.c.l.b16 %v1615
  %v1745 = vunpack.c.l.b16 %v1616
  %v1746 = vunpack.c.l.b16 %v1617
  %v1747 = vunpack.c.l.b16 %v1618
  %v1748 = vunpack.c.l.b16 %v1619
  %v1749 = vunpack.c.l.b16 %v1620
  %v1750 = vunpack.c.l.b16 %v1621
  %v1751 = vunpack.c.l.b16 %v1622
  %v1752 = vunpack.c.l.b16 %v1623
  %v1753 = vunpack.c.l.b16 %v1624
  %v1754 = vunpack.c.l.b16 %v1625
  %v1755 = vunpack.c.l.b16 %v1626
  %v1756 = vunpack.c.l.b16 %v1627
  %v1757 = vunpack.c.l.b16 %v1628
  %v1758 = vunpack.c.l.b16 %v1629
  %v1759 = vunpack.c.l.b16 %v1630
  %v1760 = vunpack.c.l.b16 %v1631
  %v1761 = vunpack.c.l.b16 %v1632
  %v1762 = vunpack.c.l.b16 %v1633
  %v1763 = vunpack.c.l.b16 %v1634
  %v1764 = vunpack.c.l.b16 %v1635
  %v1765 = vunpack.c.l.b16 %v1636
  %v1766 = vunpack.c.l.b16 %v1637
  %v1767 = vunpack.c.l.b16 %v1638
  %v1768 = vunpack.c.l.b16 %v1639
  %v1769 = vunpack.c.l.b16 %v1640
  %v1770 = vunpack.c.l.b16 %v1641
  %v1771 = vunpack.c.l.b16 %v1642
  %v1772 = vunpack.c.l.b16 %v1643
  %v1773 = vunpack.c.l.b16 %v1644
  %v1774 = vunpack.c.l.b16 %v1645
  %v1775 = vunpack.c.l.b16 %v1646
  %v1776 = vunpack.c.l.b16 %v1647
  %v1777 = vunpack.c.l.b16 %v1648
  %v1778 = vunpack.c.l.b16 %v1649
  %v1779 = vunpack.c.l.b16 %v1650
  %v1780 = vunpack.c.l.b16 %v1651
  %v1781 = vunpack.c.l.b16 %v1652
  %v1782 = vunpack.c.l.b16 %v1653
  %v1783 = vpack.c.b16 %v1720, %v1719
  %v1784 = vpack.c.b16 %v1722, %v1721
  %v1785 = vpack.c.b16 %v1724, %v1723
  %v1786 = vpack.c.b16 %v1726, %v1725
  %v1787 = vpack.c.b16 %v1728, %v1727
  %v1788 = vpack.c.b16 %v1730, %v1729
  %v1789 = vpack.c.b16 %v1732, %v1731
  %v1790 = vpack.c.b16 %v1734, %v1733
  %v1791 = vpack.c.b16 %v1736, %v1735
  %v1792 = vpack.c.b16 %v1738, %v1737
  %v1793 = vpack.c.b16 %v1740, %v1739
  %v1794 = vpack.c.b16 %v1742, %v1741
  %v1795 = vpack.c.b16 %v1744, %v1743
  %v1796 = vpack.c.b16 %v1746, %v1745
  %v1797 = vpack.c.b16 %v1748, %v1747
  %v1798 = vpack.c.b16 %v1750, %v1749
  %v1799 = vpack.c.b16 %v1752, %v1751
  %v1800 = vpack.c.b16 %v1754, %v1753
  %v1801 = vpack.c.b16 %v1756, %v1755
  %v1802 = vpack.c.b16 %v1758, %v1757
  %v1803 = vpack.c.b16 %v1760, %v1759
  %v1804 = vpack.c.b16 %v1762, %v1761
  %v1805 = vpack.c.b16 %v1764, %v1763
  %v1806 = vpack.c.b16 %v1766, %v1765
  %v1807 = vpack.c.b16 %v1768, %v1767
  %v1808 = vpack.c.b16 %v1770, %v1769
  %v1809 = vpack.c.b16 %v1772, %v1771
  %v1810 = vpack.c.b16 %v1774, %v1773
  %v1811 = vpack.c.b16 %v1776, %v1775
  %v1812 = vpack.c.b16 %v1778, %v1777
  %v1813 = vpack.c.b16 %v1780, %v1779
  %v1814 = vpack.c.b16 %v1782, %v1781
  %v1816 = vsel %vm335, %v1783, 0
  %v1819 = vsel %vm335, %v1784, 0
  %v1822 = vsel %vm335, %v1785, 0
  %v1825 = vsel %vm335, %v1786, 0
  %v1828 = vsel %vm335, %v1787, 0
  %v1831 = vsel %vm335, %v1788, 0
  %v1834 = vsel %vm335, %v1789, 0
  %v1837 = vsel %vm335, %v1790, 0
  %v1840 = vsel %vm335, %v1791, 0
  %v1843 = vsel %vm335, %v1792, 0
  %v1846 = vsel %vm335, %v1793, 0
  %v1849 = vsel %vm335, %v1794, 0
  %v1852 = vsel %vm335, %v1795, 0
  %v1855 = vsel %vm335, %v1796, 0
  %v1858 = vsel %vm335, %v1797, 0
  %v1861 = vsel %vm335, %v1798, 0
  %v1864 = vsel %vm335, %v1799, 0
  %v1867 = vsel %vm335, %v1800, 0
  %v1870 = vsel %vm335, %v1801, 0
  %v1873 = vsel %vm335, %v1802, 0
  %v1876 = vsel %vm335, %v1803, 0
  %v1879 = vsel %vm335, %v1804, 0
  %v1882 = vsel %vm335, %v1805, 0
  %v1885 = vsel %vm335, %v1806, 0
  %v1888 = vsel %vm335, %v1807, 0
  %v1891 = vsel %vm335, %v1808, 0
  %v1894 = vsel %vm335, %v1809, 0
  %v1897 = vsel %vm335, %v1810, 0
  %v1900 = vsel %vm335, %v1811, 0
  %v1903 = vsel %vm335, %v1812, 0
  %v1906 = vsel %vm335, %v1813, 0
  %v1909 = vsel %vm335, %v1814, 0
  %v1912 = vsel %vm432, %v1654, 0
  %1914 = vmatpush.bf16.msra.mxu0 0
  %1915 = vmatpush.bf16.msra.mxu0 0
  %1916 = vmatpush.bf16.msra.mxu0 0
  %1917 = vmatpush.bf16.msra.mxu0 0
  %1918 = vmatpush.bf16.msra.mxu0 0
  %1919 = vmatpush.bf16.msra.mxu0 0
  %1920 = vmatpush.bf16.msra.mxu0 0
  %1921 = vmatpush.bf16.msra.mxu0 %v1912
  %1922 = vmatmul.bf16.gmra.mxu0 %v1816
  %v1923 = vpop.f32.mrf.mxu0
  %v1924 = vadd.f32 0.0, %v1923
  %v1925 = vpop.f32.mrf.mxu0
  %v1926 = vadd.f32 0.0, %v1925
  %1927 = vmatmul.bf16.gmra.mxu0 %v1819
  %v1928 = vpop.f32.mrf.mxu0
  %v1929 = vadd.f32 0.0, %v1928
  %v1930 = vpop.f32.mrf.mxu0
  %v1931 = vadd.f32 0.0, %v1930
  %1932 = vmatmul.bf16.gmra.mxu0 %v1822
  %v1933 = vpop.f32.mrf.mxu0
  %v1934 = vadd.f32 0.0, %v1933
  %v1935 = vpop.f32.mrf.mxu0
  %v1936 = vadd.f32 0.0, %v1935
  %1937 = vmatmul.bf16.gmra.mxu0 %v1825
  %v1938 = vpop.f32.mrf.mxu0
  %v1939 = vadd.f32 0.0, %v1938
  %v1940 = vpop.f32.mrf.mxu0
  %v1941 = vadd.f32 0.0, %v1940
  %1942 = vmatmul.bf16.gmra.mxu0 %v1828
  %v1943 = vpop.f32.mrf.mxu0
  %v1944 = vadd.f32 0.0, %v1943
  %v1945 = vpop.f32.mrf.mxu0
  %v1946 = vadd.f32 0.0, %v1945
  %1947 = vmatmul.bf16.gmra.mxu0 %v1831
  %v1948 = vpop.f32.mrf.mxu0
  %v1949 = vadd.f32 0.0, %v1948
  %v1950 = vpop.f32.mrf.mxu0
  %v1951 = vadd.f32 0.0, %v1950
  %1952 = vmatmul.bf16.gmra.mxu0 %v1834
  %v1953 = vpop.f32.mrf.mxu0
  %v1954 = vadd.f32 0.0, %v1953
  %v1955 = vpop.f32.mrf.mxu0
  %v1956 = vadd.f32 0.0, %v1955
  %1957 = vmatmul.bf16.gmra.mxu0 %v1837
  %v1958 = vpop.f32.mrf.mxu0
  %v1959 = vadd.f32 0.0, %v1958
  %v1960 = vpop.f32.mrf.mxu0
  %v1961 = vadd.f32 0.0, %v1960
  %1962 = vmatmul.bf16.gmra.mxu0 %v1840
  %v1963 = vpop.f32.mrf.mxu0
  %v1964 = vadd.f32 0.0, %v1963
  %v1965 = vpop.f32.mrf.mxu0
  %v1966 = vadd.f32 0.0, %v1965
  %1967 = vmatmul.bf16.gmra.mxu0 %v1843
  %v1968 = vpop.f32.mrf.mxu0
  %v1969 = vadd.f32 0.0, %v1968
  %v1970 = vpop.f32.mrf.mxu0
  %v1971 = vadd.f32 0.0, %v1970
  %1972 = vmatmul.bf16.gmra.mxu0 %v1846
  %v1973 = vpop.f32.mrf.mxu0
  %v1974 = vadd.f32 0.0, %v1973
  %v1975 = vpop.f32.mrf.mxu0
  %v1976 = vadd.f32 0.0, %v1975
  %1977 = vmatmul.bf16.gmra.mxu0 %v1849
  %v1978 = vpop.f32.mrf.mxu0
  %v1979 = vadd.f32 0.0, %v1978
  %v1980 = vpop.f32.mrf.mxu0
  %v1981 = vadd.f32 0.0, %v1980
  %1982 = vmatmul.bf16.gmra.mxu0 %v1852
  %v1983 = vpop.f32.mrf.mxu0
  %v1984 = vadd.f32 0.0, %v1983
  %v1985 = vpop.f32.mrf.mxu0
  %v1986 = vadd.f32 0.0, %v1985
  %1987 = vmatmul.bf16.gmra.mxu0 %v1855
  %v1988 = vpop.f32.mrf.mxu0
  %v1989 = vadd.f32 0.0, %v1988
  %v1990 = vpop.f32.mrf.mxu0
  %v1991 = vadd.f32 0.0, %v1990
  %1992 = vmatmul.bf16.gmra.mxu0 %v1858
  %v1993 = vpop.f32.mrf.mxu0
  %v1994 = vadd.f32 0.0, %v1993
  %v1995 = vpop.f32.mrf.mxu0
  %v1996 = vadd.f32 0.0, %v1995
  %1997 = vmatmul.bf16.gmra.mxu0 %v1861
  %v1998 = vpop.f32.mrf.mxu0
  %v1999 = vadd.f32 0.0, %v1998
  %v2000 = vpop.f32.mrf.mxu0
  %v2001 = vadd.f32 0.0, %v2000
  %2002 = vmatmul.bf16.gmra.mxu0 %v1864
  %v2003 = vpop.f32.mrf.mxu0
  %v2004 = vadd.f32 0.0, %v2003
  %v2005 = vpop.f32.mrf.mxu0
  %v2006 = vadd.f32 0.0, %v2005
  %2007 = vmatmul.bf16.gmra.mxu0 %v1867
  %v2008 = vpop.f32.mrf.mxu0
  %v2009 = vadd.f32 0.0, %v2008
  %v2010 = vpop.f32.mrf.mxu0
  %v2011 = vadd.f32 0.0, %v2010
  %2012 = vmatmul.bf16.gmra.mxu0 %v1870
  %v2013 = vpop.f32.mrf.mxu0
  %v2014 = vadd.f32 0.0, %v2013
  %v2015 = vpop.f32.mrf.mxu0
  %v2016 = vadd.f32 0.0, %v2015
  %2017 = vmatmul.bf16.gmra.mxu0 %v1873
  %v2018 = vpop.f32.mrf.mxu0
  %v2019 = vadd.f32 0.0, %v2018
  %v2020 = vpop.f32.mrf.mxu0
  %v2021 = vadd.f32 0.0, %v2020
  %2022 = vmatmul.bf16.gmra.mxu0 %v1876
  %v2023 = vpop.f32.mrf.mxu0
  %v2024 = vadd.f32 0.0, %v2023
  %v2025 = vpop.f32.mrf.mxu0
  %v2026 = vadd.f32 0.0, %v2025
  %2027 = vmatmul.bf16.gmra.mxu0 %v1879
  %v2028 = vpop.f32.mrf.mxu0
  %v2029 = vadd.f32 0.0, %v2028
  %v2030 = vpop.f32.mrf.mxu0
  %v2031 = vadd.f32 0.0, %v2030
  %2032 = vmatmul.bf16.gmra.mxu0 %v1882
  %v2033 = vpop.f32.mrf.mxu0
  %v2034 = vadd.f32 0.0, %v2033
  %v2035 = vpop.f32.mrf.mxu0
  %v2036 = vadd.f32 0.0, %v2035
  %2037 = vmatmul.bf16.gmra.mxu0 %v1885
  %v2038 = vpop.f32.mrf.mxu0
  %v2039 = vadd.f32 0.0, %v2038
  %v2040 = vpop.f32.mrf.mxu0
  %v2041 = vadd.f32 0.0, %v2040
  %2042 = vmatmul.bf16.gmra.mxu0 %v1888
  %v2043 = vpop.f32.mrf.mxu0
  %v2044 = vadd.f32 0.0, %v2043
  %v2045 = vpop.f32.mrf.mxu0
  %v2046 = vadd.f32 0.0, %v2045
  %2047 = vmatmul.bf16.gmra.mxu0 %v1891
  %v2048 = vpop.f32.mrf.mxu0
  %v2049 = vadd.f32 0.0, %v2048
  %v2050 = vpop.f32.mrf.mxu0
  %v2051 = vadd.f32 0.0, %v2050
  %2052 = vmatmul.bf16.gmra.mxu0 %v1894
  %v2053 = vpop.f32.mrf.mxu0
  %v2054 = vadd.f32 0.0, %v2053
  %v2055 = vpop.f32.mrf.mxu0
  %v2056 = vadd.f32 0.0, %v2055
  %2057 = vmatmul.bf16.gmra.mxu0 %v1897
  %v2058 = vpop.f32.mrf.mxu0
  %v2059 = vadd.f32 0.0, %v2058
  %v2060 = vpop.f32.mrf.mxu0
  %v2061 = vadd.f32 0.0, %v2060
  %2062 = vmatmul.bf16.gmra.mxu0 %v1900
  %v2063 = vpop.f32.mrf.mxu0
  %v2064 = vadd.f32 0.0, %v2063
  %v2065 = vpop.f32.mrf.mxu0
  %v2066 = vadd.f32 0.0, %v2065
  %2067 = vmatmul.bf16.gmra.mxu0 %v1903
  %v2068 = vpop.f32.mrf.mxu0
  %v2069 = vadd.f32 0.0, %v2068
  %v2070 = vpop.f32.mrf.mxu0
  %v2071 = vadd.f32 0.0, %v2070
  %2072 = vmatmul.bf16.gmra.mxu0 %v1906
  %v2073 = vpop.f32.mrf.mxu0
  %v2074 = vadd.f32 0.0, %v2073
  %v2075 = vpop.f32.mrf.mxu0
  %v2076 = vadd.f32 0.0, %v2075
  %2077 = vmatmul.bf16.gmra.mxu0 %v1909
  %v2078 = vpop.f32.mrf.mxu0
  %v2079 = vadd.f32 0.0, %v2078
  %v2080 = vpop.f32.mrf.mxu0
  %v2081 = vadd.f32 0.0, %v2080
  %2082 = vdwg.mxu0
  %v2083 = vadd.f32 %v1526, %v1924
  %v2084 = vadd.f32 %v1527, %v1926
  %v2085 = vadd.f32 %v1528, %v1929
  %v2086 = vadd.f32 %v1529, %v1931
  %v2087 = vadd.f32 %v1530, %v1934
  %v2088 = vadd.f32 %v1531, %v1936
  %v2089 = vadd.f32 %v1532, %v1939
  %v2090 = vadd.f32 %v1533, %v1941
  %v2091 = vadd.f32 %v1534, %v1944
  %v2092 = vadd.f32 %v1535, %v1946
  %v2093 = vadd.f32 %v1536, %v1949
  %v2094 = vadd.f32 %v1537, %v1951
  %v2095 = vadd.f32 %v1538, %v1954
  %v2096 = vadd.f32 %v1539, %v1956
  %v2097 = vadd.f32 %v1540, %v1959
  %v2098 = vadd.f32 %v1541, %v1961
  %v2099 = vadd.f32 %v1542, %v1964
  %v2100 = vadd.f32 %v1543, %v1966
  %v2101 = vadd.f32 %v1544, %v1969
  %v2102 = vadd.f32 %v1545, %v1971
  %v2103 = vadd.f32 %v1546, %v1974
  %v2104 = vadd.f32 %v1547, %v1976
  %v2105 = vadd.f32 %v1548, %v1979
  %v2106 = vadd.f32 %v1549, %v1981
  %v2107 = vadd.f32 %v1550, %v1984
  %v2108 = vadd.f32 %v1551, %v1986
  %v2109 = vadd.f32 %v1552, %v1989
  %v2110 = vadd.f32 %v1553, %v1991
  %v2111 = vadd.f32 %v1554, %v1994
  %v2112 = vadd.f32 %v1555, %v1996
  %v2113 = vadd.f32 %v1556, %v1999
  %v2114 = vadd.f32 %v1557, %v2001
  %v2115 = vadd.f32 %v1558, %v2004
  %v2116 = vadd.f32 %v1559, %v2006
  %v2117 = vadd.f32 %v1560, %v2009
  %v2118 = vadd.f32 %v1561, %v2011
  %v2119 = vadd.f32 %v1562, %v2014
  %v2120 = vadd.f32 %v1563, %v2016
  %v2121 = vadd.f32 %v1564, %v2019
  %v2122 = vadd.f32 %v1565, %v2021
  %v2123 = vadd.f32 %v1566, %v2024
  %v2124 = vadd.f32 %v1567, %v2026
  %v2125 = vadd.f32 %v1568, %v2029
  %v2126 = vadd.f32 %v1569, %v2031
  %v2127 = vadd.f32 %v1570, %v2034
  %v2128 = vadd.f32 %v1571, %v2036
  %v2129 = vadd.f32 %v1572, %v2039
  %v2130 = vadd.f32 %v1573, %v2041
  %v2131 = vadd.f32 %v1574, %v2044
  %v2132 = vadd.f32 %v1575, %v2046
  %v2133 = vadd.f32 %v1576, %v2049
  %v2134 = vadd.f32 %v1577, %v2051
  %v2135 = vadd.f32 %v1578, %v2054
  %v2136 = vadd.f32 %v1579, %v2056
  %v2137 = vadd.f32 %v1580, %v2059
  %v2138 = vadd.f32 %v1581, %v2061
  %v2139 = vadd.f32 %v1582, %v2064
  %v2140 = vadd.f32 %v1583, %v2066
  %v2141 = vadd.f32 %v1584, %v2069
  %v2142 = vadd.f32 %v1585, %v2071
  %v2143 = vadd.f32 %v1586, %v2074
  %v2144 = vadd.f32 %v1587, %v2076
  %v2145 = vadd.f32 %v1588, %v2079
  %v2146 = vadd.f32 %v1589, %v2081
  %v2147 = vld [vmem:[%s4] sm:$0xf]
  %v2148 = vld [vmem:[%s4 + $0x4] sm:$0xf]
  %v2149 = vld [vmem:[%s4 + $0x8] sm:$0xf]
  %v2150 = vld [vmem:[%s4 + $0xc] sm:$0xf]
  %v2151 = vld [vmem:[%s4 + $0x10] sm:$0xf]
  %v2152 = vld [vmem:[%s4 + $0x14] sm:$0xf]
  %v2153 = vld [vmem:[%s4 + $0x18] sm:$0xf]
  %v2154 = vld [vmem:[%s4 + $0x1c] sm:$0xf]
  %v2155 = vld [vmem:[%s4 + $0x20] sm:$0xf]
  %v2156 = vld [vmem:[%s4 + $0x24] sm:$0xf]
  %v2157 = vld [vmem:[%s4 + $0x28] sm:$0xf]
  %v2158 = vld [vmem:[%s4 + $0x2c] sm:$0xf]
  %v2159 = vld [vmem:[%s4 + $0x30] sm:$0xf]
  %v2160 = vld [vmem:[%s4 + $0x34] sm:$0xf]
  %v2161 = vld [vmem:[%s4 + $0x38] sm:$0xf]
  %v2162 = vld [vmem:[%s4 + $0x3c] sm:$0xf]
  %v2163 = vld [vmem:[%s4 + $0x40] sm:$0xf]
  %v2164 = vld [vmem:[%s4 + $0x44] sm:$0xf]
  %v2165 = vld [vmem:[%s4 + $0x48] sm:$0xf]
  %v2166 = vld [vmem:[%s4 + $0x4c] sm:$0xf]
  %v2167 = vld [vmem:[%s4 + $0x50] sm:$0xf]
  %v2168 = vld [vmem:[%s4 + $0x54] sm:$0xf]
  %v2169 = vld [vmem:[%s4 + $0x58] sm:$0xf]
  %v2170 = vld [vmem:[%s4 + $0x5c] sm:$0xf]
  %v2171 = vld [vmem:[%s4 + $0x60] sm:$0xf]
  %v2172 = vld [vmem:[%s4 + $0x64] sm:$0xf]
  %v2173 = vld [vmem:[%s4 + $0x68] sm:$0xf]
  %v2174 = vld [vmem:[%s4 + $0x6c] sm:$0xf]
  %v2175 = vld [vmem:[%s4 + $0x70] sm:$0xf]
  %v2176 = vld [vmem:[%s4 + $0x74] sm:$0xf]
  %v2177 = vld [vmem:[%s4 + $0x78] sm:$0xf]
  %v2178 = vld [vmem:[%s4 + $0x7c] sm:$0xf]
  %v2179 = vld [vmem:[%s4 + $0x80] sm:$0xf]
  %v2180 = vld [vmem:[%s4 + $0x84] sm:$0xf]
  %v2181 = vld [vmem:[%s4 + $0x88] sm:$0xf]
  %v2182 = vld [vmem:[%s4 + $0x8c] sm:$0xf]
  %v2183 = vld [vmem:[%s4 + $0x90] sm:$0xf]
  %v2184 = vld [vmem:[%s4 + $0x94] sm:$0xf]
  %v2185 = vld [vmem:[%s4 + $0x98] sm:$0xf]
  %v2186 = vld [vmem:[%s4 + $0x9c] sm:$0xf]
  %v2187 = vld [vmem:[%s4 + $0xa0] sm:$0xf]
  %v2188 = vld [vmem:[%s4 + $0xa4] sm:$0xf]
  %v2189 = vld [vmem:[%s4 + $0xa8] sm:$0xf]
  %v2190 = vld [vmem:[%s4 + $0xac] sm:$0xf]
  %v2191 = vld [vmem:[%s4 + $0xb0] sm:$0xf]
  %v2192 = vld [vmem:[%s4 + $0xb4] sm:$0xf]
  %v2193 = vld [vmem:[%s4 + $0xb8] sm:$0xf]
  %v2194 = vld [vmem:[%s4 + $0xbc] sm:$0xf]
  %v2195 = vld [vmem:[%s4 + $0xc0] sm:$0xf]
  %v2196 = vld [vmem:[%s4 + $0xc4] sm:$0xf]
  %v2197 = vld [vmem:[%s4 + $0xc8] sm:$0xf]
  %v2198 = vld [vmem:[%s4 + $0xcc] sm:$0xf]
  %v2199 = vld [vmem:[%s4 + $0xd0] sm:$0xf]
  %v2200 = vld [vmem:[%s4 + $0xd4] sm:$0xf]
  %v2201 = vld [vmem:[%s4 + $0xd8] sm:$0xf]
  %v2202 = vld [vmem:[%s4 + $0xdc] sm:$0xf]
  %v2203 = vld [vmem:[%s4 + $0xe0] sm:$0xf]
  %v2204 = vld [vmem:[%s4 + $0xe4] sm:$0xf]
  %v2205 = vld [vmem:[%s4 + $0xe8] sm:$0xf]
  %v2206 = vld [vmem:[%s4 + $0xec] sm:$0xf]
  %v2207 = vld [vmem:[%s4 + $0xf0] sm:$0xf]
  %v2208 = vld [vmem:[%s4 + $0xf4] sm:$0xf]
  %v2209 = vld [vmem:[%s4 + $0xf8] sm:$0xf]
  %v2210 = vld [vmem:[%s4 + $0xfc] sm:$0xf]
  %v2211 = vld [vmem:[%s10] sm:$0xf]
  %v2276 = vunpack.c.l.b16 %v2147
  %v2277 = vunpack.c.l.b16 %v2148
  %v2278 = vunpack.c.l.b16 %v2149
  %v2279 = vunpack.c.l.b16 %v2150
  %v2280 = vunpack.c.l.b16 %v2151
  %v2281 = vunpack.c.l.b16 %v2152
  %v2282 = vunpack.c.l.b16 %v2153
  %v2283 = vunpack.c.l.b16 %v2154
  %v2284 = vunpack.c.l.b16 %v2155
  %v2285 = vunpack.c.l.b16 %v2156
  %v2286 = vunpack.c.l.b16 %v2157
  %v2287 = vunpack.c.l.b16 %v2158
  %v2288 = vunpack.c.l.b16 %v2159
  %v2289 = vunpack.c.l.b16 %v2160
  %v2290 = vunpack.c.l.b16 %v2161
  %v2291 = vunpack.c.l.b16 %v2162
  %v2292 = vunpack.c.l.b16 %v2163
  %v2293 = vunpack.c.l.b16 %v2164
  %v2294 = vunpack.c.l.b16 %v2165
  %v2295 = vunpack.c.l.b16 %v2166
  %v2296 = vunpack.c.l.b16 %v2167
  %v2297 = vunpack.c.l.b16 %v2168
  %v2298 = vunpack.c.l.b16 %v2169
  %v2299 = vunpack.c.l.b16 %v2170
  %v2300 = vunpack.c.l.b16 %v2171
  %v2301 = vunpack.c.l.b16 %v2172
  %v2302 = vunpack.c.l.b16 %v2173
  %v2303 = vunpack.c.l.b16 %v2174
  %v2304 = vunpack.c.l.b16 %v2175
  %v2305 = vunpack.c.l.b16 %v2176
  %v2306 = vunpack.c.l.b16 %v2177
  %v2307 = vunpack.c.l.b16 %v2178
  %v2308 = vunpack.c.l.b16 %v2179
  %v2309 = vunpack.c.l.b16 %v2180
  %v2310 = vunpack.c.l.b16 %v2181
  %v2311 = vunpack.c.l.b16 %v2182
  %v2312 = vunpack.c.l.b16 %v2183
  %v2313 = vunpack.c.l.b16 %v2184
  %v2314 = vunpack.c.l.b16 %v2185
  %v2315 = vunpack.c.l.b16 %v2186
  %v2316 = vunpack.c.l.b16 %v2187
  %v2317 = vunpack.c.l.b16 %v2188
  %v2318 = vunpack.c.l.b16 %v2189
  %v2319 = vunpack.c.l.b16 %v2190
  %v2320 = vunpack.c.l.b16 %v2191
  %v2321 = vunpack.c.l.b16 %v2192
  %v2322 = vunpack.c.l.b16 %v2193
  %v2323 = vunpack.c.l.b16 %v2194
  %v2324 = vunpack.c.l.b16 %v2195
  %v2325 = vunpack.c.l.b16 %v2196
  %v2326 = vunpack.c.l.b16 %v2197
  %v2327 = vunpack.c.l.b16 %v2198
  %v2328 = vunpack.c.l.b16 %v2199
  %v2329 = vunpack.c.l.b16 %v2200
  %v2330 = vunpack.c.l.b16 %v2201
  %v2331 = vunpack.c.l.b16 %v2202
  %v2332 = vunpack.c.l.b16 %v2203
  %v2333 = vunpack.c.l.b16 %v2204
  %v2334 = vunpack.c.l.b16 %v2205
  %v2335 = vunpack.c.l.b16 %v2206
  %v2336 = vunpack.c.l.b16 %v2207
  %v2337 = vunpack.c.l.b16 %v2208
  %v2338 = vunpack.c.l.b16 %v2209
  %v2339 = vunpack.c.l.b16 %v2210
  %v2340 = vpack.c.b16 %v2277, %v2276
  %v2341 = vpack.c.b16 %v2279, %v2278
  %v2342 = vpack.c.b16 %v2281, %v2280
  %v2343 = vpack.c.b16 %v2283, %v2282
  %v2344 = vpack.c.b16 %v2285, %v2284
  %v2345 = vpack.c.b16 %v2287, %v2286
  %v2346 = vpack.c.b16 %v2289, %v2288
  %v2347 = vpack.c.b16 %v2291, %v2290
  %v2348 = vpack.c.b16 %v2293, %v2292
  %v2349 = vpack.c.b16 %v2295, %v2294
  %v2350 = vpack.c.b16 %v2297, %v2296
  %v2351 = vpack.c.b16 %v2299, %v2298
  %v2352 = vpack.c.b16 %v2301, %v2300
  %v2353 = vpack.c.b16 %v2303, %v2302
  %v2354 = vpack.c.b16 %v2305, %v2304
  %v2355 = vpack.c.b16 %v2307, %v2306
  %v2356 = vpack.c.b16 %v2309, %v2308
  %v2357 = vpack.c.b16 %v2311, %v2310
  %v2358 = vpack.c.b16 %v2313, %v2312
  %v2359 = vpack.c.b16 %v2315, %v2314
  %v2360 = vpack.c.b16 %v2317, %v2316
  %v2361 = vpack.c.b16 %v2319, %v2318
  %v2362 = vpack.c.b16 %v2321, %v2320
  %v2363 = vpack.c.b16 %v2323, %v2322
  %v2364 = vpack.c.b16 %v2325, %v2324
  %v2365 = vpack.c.b16 %v2327, %v2326
  %v2366 = vpack.c.b16 %v2329, %v2328
  %v2367 = vpack.c.b16 %v2331, %v2330
  %v2368 = vpack.c.b16 %v2333, %v2332
  %v2369 = vpack.c.b16 %v2335, %v2334
  %v2370 = vpack.c.b16 %v2337, %v2336
  %v2371 = vpack.c.b16 %v2339, %v2338
  %vm2372 = vcmask 64512
  %v2374 = vsel %vm2372, %v2340, 0
  %v2377 = vsel %vm2372, %v2341, 0
  %v2380 = vsel %vm2372, %v2342, 0
  %v2383 = vsel %vm2372, %v2343, 0
  %v2386 = vsel %vm2372, %v2344, 0
  %v2389 = vsel %vm2372, %v2345, 0
  %v2392 = vsel %vm2372, %v2346, 0
  %v2395 = vsel %vm2372, %v2347, 0
  %v2398 = vsel %vm2372, %v2348, 0
  %v2401 = vsel %vm2372, %v2349, 0
  %v2404 = vsel %vm2372, %v2350, 0
  %v2407 = vsel %vm2372, %v2351, 0
  %v2410 = vsel %vm2372, %v2352, 0
  %v2413 = vsel %vm2372, %v2353, 0
  %v2416 = vsel %vm2372, %v2354, 0
  %v2419 = vsel %vm2372, %v2355, 0
  %v2422 = vsel %vm2372, %v2356, 0
  %v2425 = vsel %vm2372, %v2357, 0
  %v2428 = vsel %vm2372, %v2358, 0
  %v2431 = vsel %vm2372, %v2359, 0
  %v2434 = vsel %vm2372, %v2360, 0
  %v2437 = vsel %vm2372, %v2361, 0
  %v2440 = vsel %vm2372, %v2362, 0
  %v2443 = vsel %vm2372, %v2363, 0
  %v2446 = vsel %vm2372, %v2364, 0
  %v2449 = vsel %vm2372, %v2365, 0
  %v2452 = vsel %vm2372, %v2366, 0
  %v2455 = vsel %vm2372, %v2367, 0
  %v2458 = vsel %vm2372, %v2368, 0
  %v2461 = vsel %vm2372, %v2369, 0
  %v2464 = vsel %vm2372, %v2370, 0
  %v2467 = vsel %vm2372, %v2371, 0
  %vm2469 = vcmask 1043456
  %v2471 = vsel %vm2469, %v2211, 0
  %2473 = vmatpush.bf16.msra.mxu0 0
  %2474 = vmatpush.bf16.msra.mxu0 0
  %2475 = vmatpush.bf16.msra.mxu0 0
  %2476 = vmatpush.bf16.msra.mxu0 0
  %2477 = vmatpush.bf16.msra.mxu0 0
  %2478 = vmatpush.bf16.msra.mxu0 0
  %2479 = vmatpush.bf16.msra.mxu0 0
  %2480 = vmatpush.bf16.msra.mxu0 %v2471
  %2481 = vmatmul.bf16.gmra.mxu0 %v2374
  %v2482 = vpop.f32.mrf.mxu0
  %v2483 = vadd.f32 0.0, %v2482
  %v2484 = vpop.f32.mrf.mxu0
  %v2485 = vadd.f32 0.0, %v2484
  %2486 = vmatmul.bf16.gmra.mxu0 %v2377
  %v2487 = vpop.f32.mrf.mxu0
  %v2488 = vadd.f32 0.0, %v2487
  %v2489 = vpop.f32.mrf.mxu0
  %v2490 = vadd.f32 0.0, %v2489
  %2491 = vmatmul.bf16.gmra.mxu0 %v2380
  %v2492 = vpop.f32.mrf.mxu0
  %v2493 = vadd.f32 0.0, %v2492
  %v2494 = vpop.f32.mrf.mxu0
  %v2495 = vadd.f32 0.0, %v2494
  %2496 = vmatmul.bf16.gmra.mxu0 %v2383
  %v2497 = vpop.f32.mrf.mxu0
  %v2498 = vadd.f32 0.0, %v2497
  %v2499 = vpop.f32.mrf.mxu0
  %v2500 = vadd.f32 0.0, %v2499
  %2501 = vmatmul.bf16.gmra.mxu0 %v2386
  %v2502 = vpop.f32.mrf.mxu0
  %v2503 = vadd.f32 0.0, %v2502
  %v2504 = vpop.f32.mrf.mxu0
  %v2505 = vadd.f32 0.0, %v2504
  %2506 = vmatmul.bf16.gmra.mxu0 %v2389
  %v2507 = vpop.f32.mrf.mxu0
  %v2508 = vadd.f32 0.0, %v2507
  %v2509 = vpop.f32.mrf.mxu0
  %v2510 = vadd.f32 0.0, %v2509
  %2511 = vmatmul.bf16.gmra.mxu0 %v2392
  %v2512 = vpop.f32.mrf.mxu0
  %v2513 = vadd.f32 0.0, %v2512
  %v2514 = vpop.f32.mrf.mxu0
  %v2515 = vadd.f32 0.0, %v2514
  %2516 = vmatmul.bf16.gmra.mxu0 %v2395
  %v2517 = vpop.f32.mrf.mxu0
  %v2518 = vadd.f32 0.0, %v2517
  %v2519 = vpop.f32.mrf.mxu0
  %v2520 = vadd.f32 0.0, %v2519
  %2521 = vmatmul.bf16.gmra.mxu0 %v2398
  %v2522 = vpop.f32.mrf.mxu0
  %v2523 = vadd.f32 0.0, %v2522
  %v2524 = vpop.f32.mrf.mxu0
  %v2525 = vadd.f32 0.0, %v2524
  %2526 = vmatmul.bf16.gmra.mxu0 %v2401
  %v2527 = vpop.f32.mrf.mxu0
  %v2528 = vadd.f32 0.0, %v2527
  %v2529 = vpop.f32.mrf.mxu0
  %v2530 = vadd.f32 0.0, %v2529
  %2531 = vmatmul.bf16.gmra.mxu0 %v2404
  %v2532 = vpop.f32.mrf.mxu0
  %v2533 = vadd.f32 0.0, %v2532
  %v2534 = vpop.f32.mrf.mxu0
  %v2535 = vadd.f32 0.0, %v2534
  %2536 = vmatmul.bf16.gmra.mxu0 %v2407
  %v2537 = vpop.f32.mrf.mxu0
  %v2538 = vadd.f32 0.0, %v2537
  %v2539 = vpop.f32.mrf.mxu0
  %v2540 = vadd.f32 0.0, %v2539
  %2541 = vmatmul.bf16.gmra.mxu0 %v2410
  %v2542 = vpop.f32.mrf.mxu0
  %v2543 = vadd.f32 0.0, %v2542
  %v2544 = vpop.f32.mrf.mxu0
  %v2545 = vadd.f32 0.0, %v2544
  %2546 = vmatmul.bf16.gmra.mxu0 %v2413
  %v2547 = vpop.f32.mrf.mxu0
  %v2548 = vadd.f32 0.0, %v2547
  %v2549 = vpop.f32.mrf.mxu0
  %v2550 = vadd.f32 0.0, %v2549
  %2551 = vmatmul.bf16.gmra.mxu0 %v2416
  %v2552 = vpop.f32.mrf.mxu0
  %v2553 = vadd.f32 0.0, %v2552
  %v2554 = vpop.f32.mrf.mxu0
  %v2555 = vadd.f32 0.0, %v2554
  %2556 = vmatmul.bf16.gmra.mxu0 %v2419
  %v2557 = vpop.f32.mrf.mxu0
  %v2558 = vadd.f32 0.0, %v2557
  %v2559 = vpop.f32.mrf.mxu0
  %v2560 = vadd.f32 0.0, %v2559
  %2561 = vmatmul.bf16.gmra.mxu0 %v2422
  %v2562 = vpop.f32.mrf.mxu0
  %v2563 = vadd.f32 0.0, %v2562
  %v2564 = vpop.f32.mrf.mxu0
  %v2565 = vadd.f32 0.0, %v2564
  %2566 = vmatmul.bf16.gmra.mxu0 %v2425
  %v2567 = vpop.f32.mrf.mxu0
  %v2568 = vadd.f32 0.0, %v2567
  %v2569 = vpop.f32.mrf.mxu0
  %v2570 = vadd.f32 0.0, %v2569
  %2571 = vmatmul.bf16.gmra.mxu0 %v2428
  %v2572 = vpop.f32.mrf.mxu0
  %v2573 = vadd.f32 0.0, %v2572
  %v2574 = vpop.f32.mrf.mxu0
  %v2575 = vadd.f32 0.0, %v2574
  %2576 = vmatmul.bf16.gmra.mxu0 %v2431
  %v2577 = vpop.f32.mrf.mxu0
  %v2578 = vadd.f32 0.0, %v2577
  %v2579 = vpop.f32.mrf.mxu0
  %v2580 = vadd.f32 0.0, %v2579
  %2581 = vmatmul.bf16.gmra.mxu0 %v2434
  %v2582 = vpop.f32.mrf.mxu0
  %v2583 = vadd.f32 0.0, %v2582
  %v2584 = vpop.f32.mrf.mxu0
  %v2585 = vadd.f32 0.0, %v2584
  %2586 = vmatmul.bf16.gmra.mxu0 %v2437
  %v2587 = vpop.f32.mrf.mxu0
  %v2588 = vadd.f32 0.0, %v2587
  %v2589 = vpop.f32.mrf.mxu0
  %v2590 = vadd.f32 0.0, %v2589
  %2591 = vmatmul.bf16.gmra.mxu0 %v2440
  %v2592 = vpop.f32.mrf.mxu0
  %v2593 = vadd.f32 0.0, %v2592
  %v2594 = vpop.f32.mrf.mxu0
  %v2595 = vadd.f32 0.0, %v2594
  %2596 = vmatmul.bf16.gmra.mxu0 %v2443
  %v2597 = vpop.f32.mrf.mxu0
  %v2598 = vadd.f32 0.0, %v2597
  %v2599 = vpop.f32.mrf.mxu0
  %v2600 = vadd.f32 0.0, %v2599
  %2601 = vmatmul.bf16.gmra.mxu0 %v2446
  %v2602 = vpop.f32.mrf.mxu0
  %v2603 = vadd.f32 0.0, %v2602
  %v2604 = vpop.f32.mrf.mxu0
  %v2605 = vadd.f32 0.0, %v2604
  %2606 = vmatmul.bf16.gmra.mxu0 %v2449
  %v2607 = vpop.f32.mrf.mxu0
  %v2608 = vadd.f32 0.0, %v2607
  %v2609 = vpop.f32.mrf.mxu0
  %v2610 = vadd.f32 0.0, %v2609
  %2611 = vmatmul.bf16.gmra.mxu0 %v2452
  %v2612 = vpop.f32.mrf.mxu0
  %v2613 = vadd.f32 0.0, %v2612
  %v2614 = vpop.f32.mrf.mxu0
  %v2615 = vadd.f32 0.0, %v2614
  %2616 = vmatmul.bf16.gmra.mxu0 %v2455
  %v2617 = vpop.f32.mrf.mxu0
  %v2618 = vadd.f32 0.0, %v2617
  %v2619 = vpop.f32.mrf.mxu0
  %v2620 = vadd.f32 0.0, %v2619
  %2621 = vmatmul.bf16.gmra.mxu0 %v2458
  %v2622 = vpop.f32.mrf.mxu0
  %v2623 = vadd.f32 0.0, %v2622
  %v2624 = vpop.f32.mrf.mxu0
  %v2625 = vadd.f32 0.0, %v2624
  %2626 = vmatmul.bf16.gmra.mxu0 %v2461
  %v2627 = vpop.f32.mrf.mxu0
  %v2628 = vadd.f32 0.0, %v2627
  %v2629 = vpop.f32.mrf.mxu0
  %v2630 = vadd.f32 0.0, %v2629
  %2631 = vmatmul.bf16.gmra.mxu0 %v2464
  %v2632 = vpop.f32.mrf.mxu0
  %v2633 = vadd.f32 0.0, %v2632
  %v2634 = vpop.f32.mrf.mxu0
  %v2635 = vadd.f32 0.0, %v2634
  %2636 = vmatmul.bf16.gmra.mxu0 %v2467
  %v2637 = vpop.f32.mrf.mxu0
  %v2638 = vadd.f32 0.0, %v2637
  %v2639 = vpop.f32.mrf.mxu0
  %v2640 = vadd.f32 0.0, %v2639
  %2641 = vdwg.mxu0
  %v2642 = vadd.f32 %v2083, %v2483
  %v2643 = vadd.f32 %v2084, %v2485
  %v2644 = vadd.f32 %v2085, %v2488
  %v2645 = vadd.f32 %v2086, %v2490
  %v2646 = vadd.f32 %v2087, %v2493
  %v2647 = vadd.f32 %v2088, %v2495
  %v2648 = vadd.f32 %v2089, %v2498
  %v2649 = vadd.f32 %v2090, %v2500
  %v2650 = vadd.f32 %v2091, %v2503
  %v2651 = vadd.f32 %v2092, %v2505
  %v2652 = vadd.f32 %v2093, %v2508
  %v2653 = vadd.f32 %v2094, %v2510
  %v2654 = vadd.f32 %v2095, %v2513
  %v2655 = vadd.f32 %v2096, %v2515
  %v2656 = vadd.f32 %v2097, %v2518
  %v2657 = vadd.f32 %v2098, %v2520
  %v2658 = vadd.f32 %v2099, %v2523
  %v2659 = vadd.f32 %v2100, %v2525
  %v2660 = vadd.f32 %v2101, %v2528
  %v2661 = vadd.f32 %v2102, %v2530
  %v2662 = vadd.f32 %v2103, %v2533
  %v2663 = vadd.f32 %v2104, %v2535
  %v2664 = vadd.f32 %v2105, %v2538
  %v2665 = vadd.f32 %v2106, %v2540
  %v2666 = vadd.f32 %v2107, %v2543
  %v2667 = vadd.f32 %v2108, %v2545
  %v2668 = vadd.f32 %v2109, %v2548
  %v2669 = vadd.f32 %v2110, %v2550
  %v2670 = vadd.f32 %v2111, %v2553
  %v2671 = vadd.f32 %v2112, %v2555
  %v2672 = vadd.f32 %v2113, %v2558
  %v2673 = vadd.f32 %v2114, %v2560
  %v2674 = vadd.f32 %v2115, %v2563
  %v2675 = vadd.f32 %v2116, %v2565
  %v2676 = vadd.f32 %v2117, %v2568
  %v2677 = vadd.f32 %v2118, %v2570
  %v2678 = vadd.f32 %v2119, %v2573
  %v2679 = vadd.f32 %v2120, %v2575
  %v2680 = vadd.f32 %v2121, %v2578
  %v2681 = vadd.f32 %v2122, %v2580
  %v2682 = vadd.f32 %v2123, %v2583
  %v2683 = vadd.f32 %v2124, %v2585
  %v2684 = vadd.f32 %v2125, %v2588
  %v2685 = vadd.f32 %v2126, %v2590
  %v2686 = vadd.f32 %v2127, %v2593
  %v2687 = vadd.f32 %v2128, %v2595
  %v2688 = vadd.f32 %v2129, %v2598
  %v2689 = vadd.f32 %v2130, %v2600
  %v2690 = vadd.f32 %v2131, %v2603
  %v2691 = vadd.f32 %v2132, %v2605
  %v2692 = vadd.f32 %v2133, %v2608
  %v2693 = vadd.f32 %v2134, %v2610
  %v2694 = vadd.f32 %v2135, %v2613
  %v2695 = vadd.f32 %v2136, %v2615
  %v2696 = vadd.f32 %v2137, %v2618
  %v2697 = vadd.f32 %v2138, %v2620
  %v2698 = vadd.f32 %v2139, %v2623
  %v2699 = vadd.f32 %v2140, %v2625
  %v2700 = vadd.f32 %v2141, %v2628
  %v2701 = vadd.f32 %v2142, %v2630
  %v2702 = vadd.f32 %v2143, %v2633
  %v2703 = vadd.f32 %v2144, %v2635
  %v2704 = vadd.f32 %v2145, %v2638
  %v2705 = vadd.f32 %v2146, %v2640
  %v2706 = vld [vmem:[%s5] sm:$0xf]
  %v2707 = vld [vmem:[%s5 + $0x4] sm:$0xf]
  %v2708 = vld [vmem:[%s5 + $0x8] sm:$0xf]
  %v2709 = vld [vmem:[%s5 + $0xc] sm:$0xf]
  %v2710 = vld [vmem:[%s5 + $0x10] sm:$0xf]
  %v2711 = vld [vmem:[%s5 + $0x14] sm:$0xf]
  %v2712 = vld [vmem:[%s5 + $0x18] sm:$0xf]
  %v2713 = vld [vmem:[%s5 + $0x1c] sm:$0xf]
  %v2714 = vld [vmem:[%s5 + $0x20] sm:$0xf]
  %v2715 = vld [vmem:[%s5 + $0x24] sm:$0xf]
  %v2716 = vld [vmem:[%s5 + $0x28] sm:$0xf]
  %v2717 = vld [vmem:[%s5 + $0x2c] sm:$0xf]
  %v2718 = vld [vmem:[%s5 + $0x30] sm:$0xf]
  %v2719 = vld [vmem:[%s5 + $0x34] sm:$0xf]
  %v2720 = vld [vmem:[%s5 + $0x38] sm:$0xf]
  %v2721 = vld [vmem:[%s5 + $0x3c] sm:$0xf]
  %v2722 = vld [vmem:[%s5 + $0x40] sm:$0xf]
  %v2723 = vld [vmem:[%s5 + $0x44] sm:$0xf]
  %v2724 = vld [vmem:[%s5 + $0x48] sm:$0xf]
  %v2725 = vld [vmem:[%s5 + $0x4c] sm:$0xf]
  %v2726 = vld [vmem:[%s5 + $0x50] sm:$0xf]
  %v2727 = vld [vmem:[%s5 + $0x54] sm:$0xf]
  %v2728 = vld [vmem:[%s5 + $0x58] sm:$0xf]
  %v2729 = vld [vmem:[%s5 + $0x5c] sm:$0xf]
  %v2730 = vld [vmem:[%s5 + $0x60] sm:$0xf]
  %v2731 = vld [vmem:[%s5 + $0x64] sm:$0xf]
  %v2732 = vld [vmem:[%s5 + $0x68] sm:$0xf]
  %v2733 = vld [vmem:[%s5 + $0x6c] sm:$0xf]
  %v2734 = vld [vmem:[%s5 + $0x70] sm:$0xf]
  %v2735 = vld [vmem:[%s5 + $0x74] sm:$0xf]
  %v2736 = vld [vmem:[%s5 + $0x78] sm:$0xf]
  %v2737 = vld [vmem:[%s5 + $0x7c] sm:$0xf]
  %v2738 = vld [vmem:[%s5 + $0x80] sm:$0xf]
  %v2739 = vld [vmem:[%s5 + $0x84] sm:$0xf]
  %v2740 = vld [vmem:[%s5 + $0x88] sm:$0xf]
  %v2741 = vld [vmem:[%s5 + $0x8c] sm:$0xf]
  %v2742 = vld [vmem:[%s5 + $0x90] sm:$0xf]
  %v2743 = vld [vmem:[%s5 + $0x94] sm:$0xf]
  %v2744 = vld [vmem:[%s5 + $0x98] sm:$0xf]
  %v2745 = vld [vmem:[%s5 + $0x9c] sm:$0xf]
  %v2746 = vld [vmem:[%s5 + $0xa0] sm:$0xf]
  %v2747 = vld [vmem:[%s5 + $0xa4] sm:$0xf]
  %v2748 = vld [vmem:[%s5 + $0xa8] sm:$0xf]
  %v2749 = vld [vmem:[%s5 + $0xac] sm:$0xf]
  %v2750 = vld [vmem:[%s5 + $0xb0] sm:$0xf]
  %v2751 = vld [vmem:[%s5 + $0xb4] sm:$0xf]
  %v2752 = vld [vmem:[%s5 + $0xb8] sm:$0xf]
  %v2753 = vld [vmem:[%s5 + $0xbc] sm:$0xf]
  %v2754 = vld [vmem:[%s5 + $0xc0] sm:$0xf]
  %v2755 = vld [vmem:[%s5 + $0xc4] sm:$0xf]
  %v2756 = vld [vmem:[%s5 + $0xc8] sm:$0xf]
  %v2757 = vld [vmem:[%s5 + $0xcc] sm:$0xf]
  %v2758 = vld [vmem:[%s5 + $0xd0] sm:$0xf]
  %v2759 = vld [vmem:[%s5 + $0xd4] sm:$0xf]
  %v2760 = vld [vmem:[%s5 + $0xd8] sm:$0xf]
  %v2761 = vld [vmem:[%s5 + $0xdc] sm:$0xf]
  %v2762 = vld [vmem:[%s5 + $0xe0] sm:$0xf]
  %v2763 = vld [vmem:[%s5 + $0xe4] sm:$0xf]
  %v2764 = vld [vmem:[%s5 + $0xe8] sm:$0xf]
  %v2765 = vld [vmem:[%s5 + $0xec] sm:$0xf]
  %v2766 = vld [vmem:[%s5 + $0xf0] sm:$0xf]
  %v2767 = vld [vmem:[%s5 + $0xf4] sm:$0xf]
  %v2768 = vld [vmem:[%s5 + $0xf8] sm:$0xf]
  %v2769 = vld [vmem:[%s5 + $0xfc] sm:$0xf]
  %v2770 = vld [vmem:[%s11] sm:$0xf]
  %v2835 = vunpack.c.l.b16 %v2706
  %v2836 = vunpack.c.l.b16 %v2707
  %v2837 = vunpack.c.l.b16 %v2708
  %v2838 = vunpack.c.l.b16 %v2709
  %v2839 = vunpack.c.l.b16 %v2710
  %v2840 = vunpack.c.l.b16 %v2711
  %v2841 = vunpack.c.l.b16 %v2712
  %v2842 = vunpack.c.l.b16 %v2713
  %v2843 = vunpack.c.l.b16 %v2714
  %v2844 = vunpack.c.l.b16 %v2715
  %v2845 = vunpack.c.l.b16 %v2716
  %v2846 = vunpack.c.l.b16 %v2717
  %v2847 = vunpack.c.l.b16 %v2718
  %v2848 = vunpack.c.l.b16 %v2719
  %v2849 = vunpack.c.l.b16 %v2720
  %v2850 = vunpack.c.l.b16 %v2721
  %v2851 = vunpack.c.l.b16 %v2722
  %v2852 = vunpack.c.l.b16 %v2723
  %v2853 = vunpack.c.l.b16 %v2724
  %v2854 = vunpack.c.l.b16 %v2725
  %v2855 = vunpack.c.l.b16 %v2726
  %v2856 = vunpack.c.l.b16 %v2727
  %v2857 = vunpack.c.l.b16 %v2728
  %v2858 = vunpack.c.l.b16 %v2729
  %v2859 = vunpack.c.l.b16 %v2730
  %v2860 = vunpack.c.l.b16 %v2731
  %v2861 = vunpack.c.l.b16 %v2732
  %v2862 = vunpack.c.l.b16 %v2733
  %v2863 = vunpack.c.l.b16 %v2734
  %v2864 = vunpack.c.l.b16 %v2735
  %v2865 = vunpack.c.l.b16 %v2736
  %v2866 = vunpack.c.l.b16 %v2737
  %v2867 = vunpack.c.l.b16 %v2738
  %v2868 = vunpack.c.l.b16 %v2739
  %v2869 = vunpack.c.l.b16 %v2740
  %v2870 = vunpack.c.l.b16 %v2741
  %v2871 = vunpack.c.l.b16 %v2742
  %v2872 = vunpack.c.l.b16 %v2743
  %v2873 = vunpack.c.l.b16 %v2744
  %v2874 = vunpack.c.l.b16 %v2745
  %v2875 = vunpack.c.l.b16 %v2746
  %v2876 = vunpack.c.l.b16 %v2747
  %v2877 = vunpack.c.l.b16 %v2748
  %v2878 = vunpack.c.l.b16 %v2749
  %v2879 = vunpack.c.l.b16 %v2750
  %v2880 = vunpack.c.l.b16 %v2751
  %v2881 = vunpack.c.l.b16 %v2752
  %v2882 = vunpack.c.l.b16 %v2753
  %v2883 = vunpack.c.l.b16 %v2754
  %v2884 = vunpack.c.l.b16 %v2755
  %v2885 = vunpack.c.l.b16 %v2756
  %v2886 = vunpack.c.l.b16 %v2757
  %v2887 = vunpack.c.l.b16 %v2758
  %v2888 = vunpack.c.l.b16 %v2759
  %v2889 = vunpack.c.l.b16 %v2760
  %v2890 = vunpack.c.l.b16 %v2761
  %v2891 = vunpack.c.l.b16 %v2762
  %v2892 = vunpack.c.l.b16 %v2763
  %v2893 = vunpack.c.l.b16 %v2764
  %v2894 = vunpack.c.l.b16 %v2765
  %v2895 = vunpack.c.l.b16 %v2766
  %v2896 = vunpack.c.l.b16 %v2767
  %v2897 = vunpack.c.l.b16 %v2768
  %v2898 = vunpack.c.l.b16 %v2769
  %v2899 = vpack.c.b16 %v2836, %v2835
  %v2900 = vpack.c.b16 %v2838, %v2837
  %v2901 = vpack.c.b16 %v2840, %v2839
  %v2902 = vpack.c.b16 %v2842, %v2841
  %v2903 = vpack.c.b16 %v2844, %v2843
  %v2904 = vpack.c.b16 %v2846, %v2845
  %v2905 = vpack.c.b16 %v2848, %v2847
  %v2906 = vpack.c.b16 %v2850, %v2849
  %v2907 = vpack.c.b16 %v2852, %v2851
  %v2908 = vpack.c.b16 %v2854, %v2853
  %v2909 = vpack.c.b16 %v2856, %v2855
  %v2910 = vpack.c.b16 %v2858, %v2857
  %v2911 = vpack.c.b16 %v2860, %v2859
  %v2912 = vpack.c.b16 %v2862, %v2861
  %v2913 = vpack.c.b16 %v2864, %v2863
  %v2914 = vpack.c.b16 %v2866, %v2865
  %v2915 = vpack.c.b16 %v2868, %v2867
  %v2916 = vpack.c.b16 %v2870, %v2869
  %v2917 = vpack.c.b16 %v2872, %v2871
  %v2918 = vpack.c.b16 %v2874, %v2873
  %v2919 = vpack.c.b16 %v2876, %v2875
  %v2920 = vpack.c.b16 %v2878, %v2877
  %v2921 = vpack.c.b16 %v2880, %v2879
  %v2922 = vpack.c.b16 %v2882, %v2881
  %v2923 = vpack.c.b16 %v2884, %v2883
  %v2924 = vpack.c.b16 %v2886, %v2885
  %v2925 = vpack.c.b16 %v2888, %v2887
  %v2926 = vpack.c.b16 %v2890, %v2889
  %v2927 = vpack.c.b16 %v2892, %v2891
  %v2928 = vpack.c.b16 %v2894, %v2893
  %v2929 = vpack.c.b16 %v2896, %v2895
  %v2930 = vpack.c.b16 %v2898, %v2897
  %v2932 = vsel %vm2372, %v2899, 0
  %v2935 = vsel %vm2372, %v2900, 0
  %v2938 = vsel %vm2372, %v2901, 0
  %v2941 = vsel %vm2372, %v2902, 0
  %v2944 = vsel %vm2372, %v2903, 0
  %v2947 = vsel %vm2372, %v2904, 0
  %v2950 = vsel %vm2372, %v2905, 0
  %v2953 = vsel %vm2372, %v2906, 0
  %v2956 = vsel %vm2372, %v2907, 0
  %v2959 = vsel %vm2372, %v2908, 0
  %v2962 = vsel %vm2372, %v2909, 0
  %v2965 = vsel %vm2372, %v2910, 0
  %v2968 = vsel %vm2372, %v2911, 0
  %v2971 = vsel %vm2372, %v2912, 0
  %v2974 = vsel %vm2372, %v2913, 0
  %v2977 = vsel %vm2372, %v2914, 0
  %v2980 = vsel %vm2372, %v2915, 0
  %v2983 = vsel %vm2372, %v2916, 0
  %v2986 = vsel %vm2372, %v2917, 0
  %v2989 = vsel %vm2372, %v2918, 0
  %v2992 = vsel %vm2372, %v2919, 0
  %v2995 = vsel %vm2372, %v2920, 0
  %v2998 = vsel %vm2372, %v2921, 0
  %v3001 = vsel %vm2372, %v2922, 0
  %v3004 = vsel %vm2372, %v2923, 0
  %v3007 = vsel %vm2372, %v2924, 0
  %v3010 = vsel %vm2372, %v2925, 0
  %v3013 = vsel %vm2372, %v2926, 0
  %v3016 = vsel %vm2372, %v2927, 0
  %v3019 = vsel %vm2372, %v2928, 0
  %v3022 = vsel %vm2372, %v2929, 0
  %v3025 = vsel %vm2372, %v2930, 0
  %v3028 = vsel %vm2469, %v2770, 0
  %3030 = vmatpush.bf16.msra.mxu0 0
  %3031 = vmatpush.bf16.msra.mxu0 0
  %3032 = vmatpush.bf16.msra.mxu0 0
  %3033 = vmatpush.bf16.msra.mxu0 0
  %3034 = vmatpush.bf16.msra.mxu0 0
  %3035 = vmatpush.bf16.msra.mxu0 0
  %3036 = vmatpush.bf16.msra.mxu0 0
  %3037 = vmatpush.bf16.msra.mxu0 %v3028
  %3038 = vmatmul.bf16.gmra.mxu0 %v2932
  %v3039 = vpop.f32.mrf.mxu0
  %v3040 = vadd.f32 0.0, %v3039
  %v3041 = vpop.f32.mrf.mxu0
  %v3042 = vadd.f32 0.0, %v3041
  %3043 = vmatmul.bf16.gmra.mxu0 %v2935
  %v3044 = vpop.f32.mrf.mxu0
  %v3045 = vadd.f32 0.0, %v3044
  %v3046 = vpop.f32.mrf.mxu0
  %v3047 = vadd.f32 0.0, %v3046
  %3048 = vmatmul.bf16.gmra.mxu0 %v2938
  %v3049 = vpop.f32.mrf.mxu0
  %v3050 = vadd.f32 0.0, %v3049
  %v3051 = vpop.f32.mrf.mxu0
  %v3052 = vadd.f32 0.0, %v3051
  %3053 = vmatmul.bf16.gmra.mxu0 %v2941
  %v3054 = vpop.f32.mrf.mxu0
  %v3055 = vadd.f32 0.0, %v3054
  %v3056 = vpop.f32.mrf.mxu0
  %v3057 = vadd.f32 0.0, %v3056
  %3058 = vmatmul.bf16.gmra.mxu0 %v2944
  %v3059 = vpop.f32.mrf.mxu0
  %v3060 = vadd.f32 0.0, %v3059
  %v3061 = vpop.f32.mrf.mxu0
  %v3062 = vadd.f32 0.0, %v3061
  %3063 = vmatmul.bf16.gmra.mxu0 %v2947
  %v3064 = vpop.f32.mrf.mxu0
  %v3065 = vadd.f32 0.0, %v3064
  %v3066 = vpop.f32.mrf.mxu0
  %v3067 = vadd.f32 0.0, %v3066
  %3068 = vmatmul.bf16.gmra.mxu0 %v2950
  %v3069 = vpop.f32.mrf.mxu0
  %v3070 = vadd.f32 0.0, %v3069
  %v3071 = vpop.f32.mrf.mxu0
  %v3072 = vadd.f32 0.0, %v3071
  %3073 = vmatmul.bf16.gmra.mxu0 %v2953
  %v3074 = vpop.f32.mrf.mxu0
  %v3075 = vadd.f32 0.0, %v3074
  %v3076 = vpop.f32.mrf.mxu0
  %v3077 = vadd.f32 0.0, %v3076
  %3078 = vmatmul.bf16.gmra.mxu0 %v2956
  %v3079 = vpop.f32.mrf.mxu0
  %v3080 = vadd.f32 0.0, %v3079
  %v3081 = vpop.f32.mrf.mxu0
  %v3082 = vadd.f32 0.0, %v3081
  %3083 = vmatmul.bf16.gmra.mxu0 %v2959
  %v3084 = vpop.f32.mrf.mxu0
  %v3085 = vadd.f32 0.0, %v3084
  %v3086 = vpop.f32.mrf.mxu0
  %v3087 = vadd.f32 0.0, %v3086
  %3088 = vmatmul.bf16.gmra.mxu0 %v2962
  %v3089 = vpop.f32.mrf.mxu0
  %v3090 = vadd.f32 0.0, %v3089
  %v3091 = vpop.f32.mrf.mxu0
  %v3092 = vadd.f32 0.0, %v3091
  %3093 = vmatmul.bf16.gmra.mxu0 %v2965
  %v3094 = vpop.f32.mrf.mxu0
  %v3095 = vadd.f32 0.0, %v3094
  %v3096 = vpop.f32.mrf.mxu0
  %v3097 = vadd.f32 0.0, %v3096
  %3098 = vmatmul.bf16.gmra.mxu0 %v2968
  %v3099 = vpop.f32.mrf.mxu0
  %v3100 = vadd.f32 0.0, %v3099
  %v3101 = vpop.f32.mrf.mxu0
  %v3102 = vadd.f32 0.0, %v3101
  %3103 = vmatmul.bf16.gmra.mxu0 %v2971
  %v3104 = vpop.f32.mrf.mxu0
  %v3105 = vadd.f32 0.0, %v3104
  %v3106 = vpop.f32.mrf.mxu0
  %v3107 = vadd.f32 0.0, %v3106
  %3108 = vmatmul.bf16.gmra.mxu0 %v2974
  %v3109 = vpop.f32.mrf.mxu0
  %v3110 = vadd.f32 0.0, %v3109
  %v3111 = vpop.f32.mrf.mxu0
  %v3112 = vadd.f32 0.0, %v3111
  %3113 = vmatmul.bf16.gmra.mxu0 %v2977
  %v3114 = vpop.f32.mrf.mxu0
  %v3115 = vadd.f32 0.0, %v3114
  %v3116 = vpop.f32.mrf.mxu0
  %v3117 = vadd.f32 0.0, %v3116
  %3118 = vmatmul.bf16.gmra.mxu0 %v2980
  %v3119 = vpop.f32.mrf.mxu0
  %v3120 = vadd.f32 0.0, %v3119
  %v3121 = vpop.f32.mrf.mxu0
  %v3122 = vadd.f32 0.0, %v3121
  %3123 = vmatmul.bf16.gmra.mxu0 %v2983
  %v3124 = vpop.f32.mrf.mxu0
  %v3125 = vadd.f32 0.0, %v3124
  %v3126 = vpop.f32.mrf.mxu0
  %v3127 = vadd.f32 0.0, %v3126
  %3128 = vmatmul.bf16.gmra.mxu0 %v2986
  %v3129 = vpop.f32.mrf.mxu0
  %v3130 = vadd.f32 0.0, %v3129
  %v3131 = vpop.f32.mrf.mxu0
  %v3132 = vadd.f32 0.0, %v3131
  %3133 = vmatmul.bf16.gmra.mxu0 %v2989
  %v3134 = vpop.f32.mrf.mxu0
  %v3135 = vadd.f32 0.0, %v3134
  %v3136 = vpop.f32.mrf.mxu0
  %v3137 = vadd.f32 0.0, %v3136
  %3138 = vmatmul.bf16.gmra.mxu0 %v2992
  %v3139 = vpop.f32.mrf.mxu0
  %v3140 = vadd.f32 0.0, %v3139
  %v3141 = vpop.f32.mrf.mxu0
  %v3142 = vadd.f32 0.0, %v3141
  %3143 = vmatmul.bf16.gmra.mxu0 %v2995
  %v3144 = vpop.f32.mrf.mxu0
  %v3145 = vadd.f32 0.0, %v3144
  %v3146 = vpop.f32.mrf.mxu0
  %v3147 = vadd.f32 0.0, %v3146
  %3148 = vmatmul.bf16.gmra.mxu0 %v2998
  %v3149 = vpop.f32.mrf.mxu0
  %v3150 = vadd.f32 0.0, %v3149
  %v3151 = vpop.f32.mrf.mxu0
  %v3152 = vadd.f32 0.0, %v3151
  %3153 = vmatmul.bf16.gmra.mxu0 %v3001
  %v3154 = vpop.f32.mrf.mxu0
  %v3155 = vadd.f32 0.0, %v3154
  %v3156 = vpop.f32.mrf.mxu0
  %v3157 = vadd.f32 0.0, %v3156
  %3158 = vmatmul.bf16.gmra.mxu0 %v3004
  %v3159 = vpop.f32.mrf.mxu0
  %v3160 = vadd.f32 0.0, %v3159
  %v3161 = vpop.f32.mrf.mxu0
  %v3162 = vadd.f32 0.0, %v3161
  %3163 = vmatmul.bf16.gmra.mxu0 %v3007
  %v3164 = vpop.f32.mrf.mxu0
  %v3165 = vadd.f32 0.0, %v3164
  %v3166 = vpop.f32.mrf.mxu0
  %v3167 = vadd.f32 0.0, %v3166
  %3168 = vmatmul.bf16.gmra.mxu0 %v3010
  %v3169 = vpop.f32.mrf.mxu0
  %v3170 = vadd.f32 0.0, %v3169
  %v3171 = vpop.f32.mrf.mxu0
  %v3172 = vadd.f32 0.0, %v3171
  %3173 = vmatmul.bf16.gmra.mxu0 %v3013
  %v3174 = vpop.f32.mrf.mxu0
  %v3175 = vadd.f32 0.0, %v3174
  %v3176 = vpop.f32.mrf.mxu0
  %v3177 = vadd.f32 0.0, %v3176
  %3178 = vmatmul.bf16.gmra.mxu0 %v3016
  %v3179 = vpop.f32.mrf.mxu0
  %v3180 = vadd.f32 0.0, %v3179
  %v3181 = vpop.f32.mrf.mxu0
  %v3182 = vadd.f32 0.0, %v3181
  %3183 = vmatmul.bf16.gmra.mxu0 %v3019
  %v3184 = vpop.f32.mrf.mxu0
  %v3185 = vadd.f32 0.0, %v3184
  %v3186 = vpop.f32.mrf.mxu0
  %v3187 = vadd.f32 0.0, %v3186
  %3188 = vmatmul.bf16.gmra.mxu0 %v3022
  %v3189 = vpop.f32.mrf.mxu0
  %v3190 = vadd.f32 0.0, %v3189
  %v3191 = vpop.f32.mrf.mxu0
  %v3192 = vadd.f32 0.0, %v3191
  %3193 = vmatmul.bf16.gmra.mxu0 %v3025
  %v3194 = vpop.f32.mrf.mxu0
  %v3195 = vadd.f32 0.0, %v3194
  %v3196 = vpop.f32.mrf.mxu0
  %v3197 = vadd.f32 0.0, %v3196
  %3198 = vdwg.mxu0
  %v3199 = vadd.f32 %v2642, %v3040
  %v3200 = vadd.f32 %v2643, %v3042
  %v3201 = vadd.f32 %v2644, %v3045
  %v3202 = vadd.f32 %v2645, %v3047
  %v3203 = vadd.f32 %v2646, %v3050
  %v3204 = vadd.f32 %v2647, %v3052
  %v3205 = vadd.f32 %v2648, %v3055
  %v3206 = vadd.f32 %v2649, %v3057
  %v3207 = vadd.f32 %v2650, %v3060
  %v3208 = vadd.f32 %v2651, %v3062
  %v3209 = vadd.f32 %v2652, %v3065
  %v3210 = vadd.f32 %v2653, %v3067
  %v3211 = vadd.f32 %v2654, %v3070
  %v3212 = vadd.f32 %v2655, %v3072
  %v3213 = vadd.f32 %v2656, %v3075
  %v3214 = vadd.f32 %v2657, %v3077
  %v3215 = vadd.f32 %v2658, %v3080
  %v3216 = vadd.f32 %v2659, %v3082
  %v3217 = vadd.f32 %v2660, %v3085
  %v3218 = vadd.f32 %v2661, %v3087
  %v3219 = vadd.f32 %v2662, %v3090
  %v3220 = vadd.f32 %v2663, %v3092
  %v3221 = vadd.f32 %v2664, %v3095
  %v3222 = vadd.f32 %v2665, %v3097
  %v3223 = vadd.f32 %v2666, %v3100
  %v3224 = vadd.f32 %v2667, %v3102
  %v3225 = vadd.f32 %v2668, %v3105
  %v3226 = vadd.f32 %v2669, %v3107
  %v3227 = vadd.f32 %v2670, %v3110
  %v3228 = vadd.f32 %v2671, %v3112
  %v3229 = vadd.f32 %v2672, %v3115
  %v3230 = vadd.f32 %v2673, %v3117
  %v3231 = vadd.f32 %v2674, %v3120
  %v3232 = vadd.f32 %v2675, %v3122
  %v3233 = vadd.f32 %v2676, %v3125
  %v3234 = vadd.f32 %v2677, %v3127
  %v3235 = vadd.f32 %v2678, %v3130
  %v3236 = vadd.f32 %v2679, %v3132
  %v3237 = vadd.f32 %v2680, %v3135
  %v3238 = vadd.f32 %v2681, %v3137
  %v3239 = vadd.f32 %v2682, %v3140
  %v3240 = vadd.f32 %v2683, %v3142
  %v3241 = vadd.f32 %v2684, %v3145
  %v3242 = vadd.f32 %v2685, %v3147
  %v3243 = vadd.f32 %v2686, %v3150
  %v3244 = vadd.f32 %v2687, %v3152
  %v3245 = vadd.f32 %v2688, %v3155
  %v3246 = vadd.f32 %v2689, %v3157
  %v3247 = vadd.f32 %v2690, %v3160
  %v3248 = vadd.f32 %v2691, %v3162
  %v3249 = vadd.f32 %v2692, %v3165
  %v3250 = vadd.f32 %v2693, %v3167
  %v3251 = vadd.f32 %v2694, %v3170
  %v3252 = vadd.f32 %v2695, %v3172
  %v3253 = vadd.f32 %v2696, %v3175
  %v3254 = vadd.f32 %v2697, %v3177
  %v3255 = vadd.f32 %v2698, %v3180
  %v3256 = vadd.f32 %v2699, %v3182
  %v3257 = vadd.f32 %v2700, %v3185
  %v3258 = vadd.f32 %v2701, %v3187
  %v3259 = vadd.f32 %v2702, %v3190
  %v3260 = vadd.f32 %v2703, %v3192
  %v3261 = vadd.f32 %v2704, %v3195
  %v3262 = vadd.f32 %v2705, %v3197
  %v3263 = vld [vmem:[%s12] sm:$0x1]
  %v3265 = vperm.slane %v3263, 0
  %v3267 = vadd.f32 %v3199, %v3265
  %v3268 = vadd.f32 %v3200, %v3265
  %v3269 = vadd.f32 %v3201, %v3265
  %v3270 = vadd.f32 %v3202, %v3265
  %v3271 = vadd.f32 %v3203, %v3265
  %v3272 = vadd.f32 %v3204, %v3265
  %v3273 = vadd.f32 %v3205, %v3265
  %v3274 = vadd.f32 %v3206, %v3265
  %v3275 = vadd.f32 %v3207, %v3265
  %v3276 = vadd.f32 %v3208, %v3265
  %v3277 = vadd.f32 %v3209, %v3265
  %v3278 = vadd.f32 %v3210, %v3265
  %v3279 = vadd.f32 %v3211, %v3265
  %v3280 = vadd.f32 %v3212, %v3265
  %v3281 = vadd.f32 %v3213, %v3265
  %v3282 = vadd.f32 %v3214, %v3265
  %v3283 = vadd.f32 %v3215, %v3265
  %v3284 = vadd.f32 %v3216, %v3265
  %v3285 = vadd.f32 %v3217, %v3265
  %v3286 = vadd.f32 %v3218, %v3265
  %v3287 = vadd.f32 %v3219, %v3265
  %v3288 = vadd.f32 %v3220, %v3265
  %v3289 = vadd.f32 %v3221, %v3265
  %v3290 = vadd.f32 %v3222, %v3265
  %v3291 = vadd.f32 %v3223, %v3265
  %v3292 = vadd.f32 %v3224, %v3265
  %v3293 = vadd.f32 %v3225, %v3265
  %v3294 = vadd.f32 %v3226, %v3265
  %v3295 = vadd.f32 %v3227, %v3265
  %v3296 = vadd.f32 %v3228, %v3265
  %v3297 = vadd.f32 %v3229, %v3265
  %v3298 = vadd.f32 %v3230, %v3265
  %v3299 = vadd.f32 %v3231, %v3265
  %v3300 = vadd.f32 %v3232, %v3265
  %v3301 = vadd.f32 %v3233, %v3265
  %v3302 = vadd.f32 %v3234, %v3265
  %v3303 = vadd.f32 %v3235, %v3265
  %v3304 = vadd.f32 %v3236, %v3265
  %v3305 = vadd.f32 %v3237, %v3265
  %v3306 = vadd.f32 %v3238, %v3265
  %v3307 = vadd.f32 %v3239, %v3265
  %v3308 = vadd.f32 %v3240, %v3265
  %v3309 = vadd.f32 %v3241, %v3265
  %v3310 = vadd.f32 %v3242, %v3265
  %v3311 = vadd.f32 %v3243, %v3265
  %v3312 = vadd.f32 %v3244, %v3265
  %v3313 = vadd.f32 %v3245, %v3265
  %v3314 = vadd.f32 %v3246, %v3265
  %v3315 = vadd.f32 %v3247, %v3265
  %v3316 = vadd.f32 %v3248, %v3265
  %v3317 = vadd.f32 %v3249, %v3265
  %v3318 = vadd.f32 %v3250, %v3265
  %v3319 = vadd.f32 %v3251, %v3265
  %v3320 = vadd.f32 %v3252, %v3265
  %v3321 = vadd.f32 %v3253, %v3265
  %v3322 = vadd.f32 %v3254, %v3265
  %v3323 = vadd.f32 %v3255, %v3265
  %v3324 = vadd.f32 %v3256, %v3265
  %v3325 = vadd.f32 %v3257, %v3265
  %v3326 = vadd.f32 %v3258, %v3265
  %v3327 = vadd.f32 %v3259, %v3265
  %v3328 = vadd.f32 %v3260, %v3265
  %v3329 = vadd.f32 %v3261, %v3265
  %v3330 = vadd.f32 %v3262, %v3265
  %v3331 = vsub.f32 0.0, %v3267
  %v3332 = vsub.f32 0.0, %v3268
  %v3333 = vsub.f32 0.0, %v3269
  %v3334 = vsub.f32 0.0, %v3270
  %v3335 = vsub.f32 0.0, %v3271
  %v3336 = vsub.f32 0.0, %v3272
  %v3337 = vsub.f32 0.0, %v3273
  %v3338 = vsub.f32 0.0, %v3274
  %v3339 = vsub.f32 0.0, %v3275
  %v3340 = vsub.f32 0.0, %v3276
  %v3341 = vsub.f32 0.0, %v3277
  %v3342 = vsub.f32 0.0, %v3278
  %v3343 = vsub.f32 0.0, %v3279
  %v3344 = vsub.f32 0.0, %v3280
  %v3345 = vsub.f32 0.0, %v3281
  %v3346 = vsub.f32 0.0, %v3282
  %v3347 = vsub.f32 0.0, %v3283
  %v3348 = vsub.f32 0.0, %v3284
  %v3349 = vsub.f32 0.0, %v3285
  %v3350 = vsub.f32 0.0, %v3286
  %v3351 = vsub.f32 0.0, %v3287
  %v3352 = vsub.f32 0.0, %v3288
  %v3353 = vsub.f32 0.0, %v3289
  %v3354 = vsub.f32 0.0, %v3290
  %v3355 = vsub.f32 0.0, %v3291
  %v3356 = vsub.f32 0.0, %v3292
  %v3357 = vsub.f32 0.0, %v3293
  %v3358 = vsub.f32 0.0, %v3294
  %v3359 = vsub.f32 0.0, %v3295
  %v3360 = vsub.f32 0.0, %v3296
  %v3361 = vsub.f32 0.0, %v3297
  %v3362 = vsub.f32 0.0, %v3298
  %v3363 = vsub.f32 0.0, %v3299
  %v3364 = vsub.f32 0.0, %v3300
  %v3365 = vsub.f32 0.0, %v3301
  %v3366 = vsub.f32 0.0, %v3302
  %v3367 = vsub.f32 0.0, %v3303
  %v3368 = vsub.f32 0.0, %v3304
  %v3369 = vsub.f32 0.0, %v3305
  %v3370 = vsub.f32 0.0, %v3306
  %v3371 = vsub.f32 0.0, %v3307
  %v3372 = vsub.f32 0.0, %v3308
  %v3373 = vsub.f32 0.0, %v3309
  %v3374 = vsub.f32 0.0, %v3310
  %v3375 = vsub.f32 0.0, %v3311
  %v3376 = vsub.f32 0.0, %v3312
  %v3377 = vsub.f32 0.0, %v3313
  %v3378 = vsub.f32 0.0, %v3314
  %v3379 = vsub.f32 0.0, %v3315
  %v3380 = vsub.f32 0.0, %v3316
  %v3381 = vsub.f32 0.0, %v3317
  %v3382 = vsub.f32 0.0, %v3318
  %v3383 = vsub.f32 0.0, %v3319
  %v3384 = vsub.f32 0.0, %v3320
  %v3385 = vsub.f32 0.0, %v3321
  %v3386 = vsub.f32 0.0, %v3322
  %v3387 = vsub.f32 0.0, %v3323
  %v3388 = vsub.f32 0.0, %v3324
  %v3389 = vsub.f32 0.0, %v3325
  %v3390 = vsub.f32 0.0, %v3326
  %v3391 = vsub.f32 0.0, %v3327
  %v3392 = vsub.f32 0.0, %v3328
  %v3393 = vsub.f32 0.0, %v3329
  %v3394 = vsub.f32 0.0, %v3330
  %v3395 = vmul.f32 %v3331, 1.442695
  %v3396 = vpow.pop %v3395
  %v3397 = vmul.f32 %v3332, 1.442695
  %v3398 = vpow.pop %v3397
  %v3399 = vmul.f32 %v3333, 1.442695
  %v3400 = vpow.pop %v3399
  %v3401 = vmul.f32 %v3334, 1.442695
  %v3402 = vpow.pop %v3401
  %v3403 = vmul.f32 %v3335, 1.442695
  %v3404 = vpow.pop %v3403
  %v3405 = vmul.f32 %v3336, 1.442695
  %v3406 = vpow.pop %v3405
  %v3407 = vmul.f32 %v3337, 1.442695
  %v3408 = vpow.pop %v3407
  %v3409 = vmul.f32 %v3338, 1.442695
  %v3410 = vpow.pop %v3409
  %v3411 = vmul.f32 %v3339, 1.442695
  %v3412 = vpow.pop %v3411
  %v3413 = vmul.f32 %v3340, 1.442695
  %v3414 = vpow.pop %v3413
  %v3415 = vmul.f32 %v3341, 1.442695
  %v3416 = vpow.pop %v3415
  %v3417 = vmul.f32 %v3342, 1.442695
  %v3418 = vpow.pop %v3417
  %v3419 = vmul.f32 %v3343, 1.442695
  %v3420 = vpow.pop %v3419
  %v3421 = vmul.f32 %v3344, 1.442695
  %v3422 = vpow.pop %v3421
  %v3423 = vmul.f32 %v3345, 1.442695
  %v3424 = vpow.pop %v3423
  %v3425 = vmul.f32 %v3346, 1.442695
  %v3426 = vpow.pop %v3425
  %v3427 = vmul.f32 %v3347, 1.442695
  %v3428 = vpow.pop %v3427
  %v3429 = vmul.f32 %v3348, 1.442695
  %v3430 = vpow.pop %v3429
  %v3431 = vmul.f32 %v3349, 1.442695
  %v3432 = vpow.pop %v3431
  %v3433 = vmul.f32 %v3350, 1.442695
  %v3434 = vpow.pop %v3433
  %v3435 = vmul.f32 %v3351, 1.442695
  %v3436 = vpow.pop %v3435
  %v3437 = vmul.f32 %v3352, 1.442695
  %v3438 = vpow.pop %v3437
  %v3439 = vmul.f32 %v3353, 1.442695
  %v3440 = vpow.pop %v3439
  %v3441 = vmul.f32 %v3354, 1.442695
  %v3442 = vpow.pop %v3441
  %v3443 = vmul.f32 %v3355, 1.442695
  %v3444 = vpow.pop %v3443
  %v3445 = vmul.f32 %v3356, 1.442695
  %v3446 = vpow.pop %v3445
  %v3447 = vmul.f32 %v3357, 1.442695
  %v3448 = vpow.pop %v3447
  %v3449 = vmul.f32 %v3358, 1.442695
  %v3450 = vpow.pop %v3449
  %v3451 = vmul.f32 %v3359, 1.442695
  %v3452 = vpow.pop %v3451
  %v3453 = vmul.f32 %v3360, 1.442695
  %v3454 = vpow.pop %v3453
  %v3455 = vmul.f32 %v3361, 1.442695
  %v3456 = vpow.pop %v3455
  %v3457 = vmul.f32 %v3362, 1.442695
  %v3458 = vpow.pop %v3457
  %v3459 = vmul.f32 %v3363, 1.442695
  %v3460 = vpow.pop %v3459
  %v3461 = vmul.f32 %v3364, 1.442695
  %v3462 = vpow.pop %v3461
  %v3463 = vmul.f32 %v3365, 1.442695
  %v3464 = vpow.pop %v3463
  %v3465 = vmul.f32 %v3366, 1.442695
  %v3466 = vpow.pop %v3465
  %v3467 = vmul.f32 %v3367, 1.442695
  %v3468 = vpow.pop %v3467
  %v3469 = vmul.f32 %v3368, 1.442695
  %v3470 = vpow.pop %v3469
  %v3471 = vmul.f32 %v3369, 1.442695
  %v3472 = vpow.pop %v3471
  %v3473 = vmul.f32 %v3370, 1.442695
  %v3474 = vpow.pop %v3473
  %v3475 = vmul.f32 %v3371, 1.442695
  %v3476 = vpow.pop %v3475
  %v3477 = vmul.f32 %v3372, 1.442695
  %v3478 = vpow.pop %v3477
  %v3479 = vmul.f32 %v3373, 1.442695
  %v3480 = vpow.pop %v3479
  %v3481 = vmul.f32 %v3374, 1.442695
  %v3482 = vpow.pop %v3481
  %v3483 = vmul.f32 %v3375, 1.442695
  %v3484 = vpow.pop %v3483
  %v3485 = vmul.f32 %v3376, 1.442695
  %v3486 = vpow.pop %v3485
  %v3487 = vmul.f32 %v3377, 1.442695
  %v3488 = vpow.pop %v3487
  %v3489 = vmul.f32 %v3378, 1.442695
  %v3490 = vpow.pop %v3489
  %v3491 = vmul.f32 %v3379, 1.442695
  %v3492 = vpow.pop %v3491
  %v3493 = vmul.f32 %v3380, 1.442695
  %v3494 = vpow.pop %v3493
  %v3495 = vmul.f32 %v3381, 1.442695
  %v3496 = vpow.pop %v3495
  %v3497 = vmul.f32 %v3382, 1.442695
  %v3498 = vpow.pop %v3497
  %v3499 = vmul.f32 %v3383, 1.442695
  %v3500 = vpow.pop %v3499
  %v3501 = vmul.f32 %v3384, 1.442695
  %v3502 = vpow.pop %v3501
  %v3503 = vmul.f32 %v3385, 1.442695
  %v3504 = vpow.pop %v3503
  %v3505 = vmul.f32 %v3386, 1.442695
  %v3506 = vpow.pop %v3505
  %v3507 = vmul.f32 %v3387, 1.442695
  %v3508 = vpow.pop %v3507
  %v3509 = vmul.f32 %v3388, 1.442695
  %v3510 = vpow.pop %v3509
  %v3511 = vmul.f32 %v3389, 1.442695
  %v3512 = vpow.pop %v3511
  %v3513 = vmul.f32 %v3390, 1.442695
  %v3514 = vpow.pop %v3513
  %v3515 = vmul.f32 %v3391, 1.442695
  %v3516 = vpow.pop %v3515
  %v3517 = vmul.f32 %v3392, 1.442695
  %v3518 = vpow.pop %v3517
  %v3519 = vmul.f32 %v3393, 1.442695
  %v3520 = vpow.pop %v3519
  %v3521 = vmul.f32 %v3394, 1.442695
  %v3522 = vpow.pop %v3521
  %v3523 = vadd.f32 %v3396, 1.0
  %v3524 = vadd.f32 %v3398, 1.0
  %v3525 = vadd.f32 %v3400, 1.0
  %v3526 = vadd.f32 %v3402, 1.0
  %v3527 = vadd.f32 %v3404, 1.0
  %v3528 = vadd.f32 %v3406, 1.0
  %v3529 = vadd.f32 %v3408, 1.0
  %v3530 = vadd.f32 %v3410, 1.0
  %v3531 = vadd.f32 %v3412, 1.0
  %v3532 = vadd.f32 %v3414, 1.0
  %v3533 = vadd.f32 %v3416, 1.0
  %v3534 = vadd.f32 %v3418, 1.0
  %v3535 = vadd.f32 %v3420, 1.0
  %v3536 = vadd.f32 %v3422, 1.0
  %v3537 = vadd.f32 %v3424, 1.0
  %v3538 = vadd.f32 %v3426, 1.0
  %v3539 = vadd.f32 %v3428, 1.0
  %v3540 = vadd.f32 %v3430, 1.0
  %v3541 = vadd.f32 %v3432, 1.0
  %v3542 = vadd.f32 %v3434, 1.0
  %v3543 = vadd.f32 %v3436, 1.0
  %v3544 = vadd.f32 %v3438, 1.0
  %v3545 = vadd.f32 %v3440, 1.0
  %v3546 = vadd.f32 %v3442, 1.0
  %v3547 = vadd.f32 %v3444, 1.0
  %v3548 = vadd.f32 %v3446, 1.0
  %v3549 = vadd.f32 %v3448, 1.0
  %v3550 = vadd.f32 %v3450, 1.0
  %v3551 = vadd.f32 %v3452, 1.0
  %v3552 = vadd.f32 %v3454, 1.0
  %v3553 = vadd.f32 %v3456, 1.0
  %v3554 = vadd.f32 %v3458, 1.0
  %v3555 = vadd.f32 %v3460, 1.0
  %v3556 = vadd.f32 %v3462, 1.0
  %v3557 = vadd.f32 %v3464, 1.0
  %v3558 = vadd.f32 %v3466, 1.0
  %v3559 = vadd.f32 %v3468, 1.0
  %v3560 = vadd.f32 %v3470, 1.0
  %v3561 = vadd.f32 %v3472, 1.0
  %v3562 = vadd.f32 %v3474, 1.0
  %v3563 = vadd.f32 %v3476, 1.0
  %v3564 = vadd.f32 %v3478, 1.0
  %v3565 = vadd.f32 %v3480, 1.0
  %v3566 = vadd.f32 %v3482, 1.0
  %v3567 = vadd.f32 %v3484, 1.0
  %v3568 = vadd.f32 %v3486, 1.0
  %v3569 = vadd.f32 %v3488, 1.0
  %v3570 = vadd.f32 %v3490, 1.0
  %v3571 = vadd.f32 %v3492, 1.0
  %v3572 = vadd.f32 %v3494, 1.0
  %v3573 = vadd.f32 %v3496, 1.0
  %v3574 = vadd.f32 %v3498, 1.0
  %v3575 = vadd.f32 %v3500, 1.0
  %v3576 = vadd.f32 %v3502, 1.0
  %v3577 = vadd.f32 %v3504, 1.0
  %v3578 = vadd.f32 %v3506, 1.0
  %v3579 = vadd.f32 %v3508, 1.0
  %v3580 = vadd.f32 %v3510, 1.0
  %v3581 = vadd.f32 %v3512, 1.0
  %v3582 = vadd.f32 %v3514, 1.0
  %v3583 = vadd.f32 %v3516, 1.0
  %v3584 = vadd.f32 %v3518, 1.0
  %v3585 = vadd.f32 %v3520, 1.0
  %v3586 = vadd.f32 %v3522, 1.0
  %v3587 = vrcp.pop %v3523
  %v3588 = vrcp.pop %v3524
  %v3589 = vrcp.pop %v3525
  %v3590 = vrcp.pop %v3526
  %v3591 = vrcp.pop %v3527
  %v3592 = vrcp.pop %v3528
  %v3593 = vrcp.pop %v3529
  %v3594 = vrcp.pop %v3530
  %v3595 = vrcp.pop %v3531
  %v3596 = vrcp.pop %v3532
  %v3597 = vrcp.pop %v3533
  %v3598 = vrcp.pop %v3534
  %v3599 = vrcp.pop %v3535
  %v3600 = vrcp.pop %v3536
  %v3601 = vrcp.pop %v3537
  %v3602 = vrcp.pop %v3538
  %v3603 = vrcp.pop %v3539
  %v3604 = vrcp.pop %v3540
  %v3605 = vrcp.pop %v3541
  %v3606 = vrcp.pop %v3542
  %v3607 = vrcp.pop %v3543
  %v3608 = vrcp.pop %v3544
  %v3609 = vrcp.pop %v3545
  %v3610 = vrcp.pop %v3546
  %v3611 = vrcp.pop %v3547
  %v3612 = vrcp.pop %v3548
  %v3613 = vrcp.pop %v3549
  %v3614 = vrcp.pop %v3550
  %v3615 = vrcp.pop %v3551
  %v3616 = vrcp.pop %v3552
  %v3617 = vrcp.pop %v3553
  %v3618 = vrcp.pop %v3554
  %v3619 = vrcp.pop %v3555
  %v3620 = vrcp.pop %v3556
  %v3621 = vrcp.pop %v3557
  %v3622 = vrcp.pop %v3558
  %v3623 = vrcp.pop %v3559
  %v3624 = vrcp.pop %v3560
  %v3625 = vrcp.pop %v3561
  %v3626 = vrcp.pop %v3562
  %v3627 = vrcp.pop %v3563
  %v3628 = vrcp.pop %v3564
  %v3629 = vrcp.pop %v3565
  %v3630 = vrcp.pop %v3566
  %v3631 = vrcp.pop %v3567
  %v3632 = vrcp.pop %v3568
  %v3633 = vrcp.pop %v3569
  %v3634 = vrcp.pop %v3570
  %v3635 = vrcp.pop %v3571
  %v3636 = vrcp.pop %v3572
  %v3637 = vrcp.pop %v3573
  %v3638 = vrcp.pop %v3574
  %v3639 = vrcp.pop %v3575
  %v3640 = vrcp.pop %v3576
  %v3641 = vrcp.pop %v3577
  %v3642 = vrcp.pop %v3578
  %v3643 = vrcp.pop %v3579
  %v3644 = vrcp.pop %v3580
  %v3645 = vrcp.pop %v3581
  %v3646 = vrcp.pop %v3582
  %v3647 = vrcp.pop %v3583
  %v3648 = vrcp.pop %v3584
  %v3649 = vrcp.pop %v3585
  %v3650 = vrcp.pop %v3586
  %v3651 = vmul.f32 %v3267, %v3587
  %v3652 = vmul.f32 %v3268, %v3588
  %v3653 = vmul.f32 %v3269, %v3589
  %v3654 = vmul.f32 %v3270, %v3590
  %v3655 = vmul.f32 %v3271, %v3591
  %v3656 = vmul.f32 %v3272, %v3592
  %v3657 = vmul.f32 %v3273, %v3593
  %v3658 = vmul.f32 %v3274, %v3594
  %v3659 = vmul.f32 %v3275, %v3595
  %v3660 = vmul.f32 %v3276, %v3596
  %v3661 = vmul.f32 %v3277, %v3597
  %v3662 = vmul.f32 %v3278, %v3598
  %v3663 = vmul.f32 %v3279, %v3599
  %v3664 = vmul.f32 %v3280, %v3600
  %v3665 = vmul.f32 %v3281, %v3601
  %v3666 = vmul.f32 %v3282, %v3602
  %v3667 = vmul.f32 %v3283, %v3603
  %v3668 = vmul.f32 %v3284, %v3604
  %v3669 = vmul.f32 %v3285, %v3605
  %v3670 = vmul.f32 %v3286, %v3606
  %v3671 = vmul.f32 %v3287, %v3607
  %v3672 = vmul.f32 %v3288, %v3608
  %v3673 = vmul.f32 %v3289, %v3609
  %v3674 = vmul.f32 %v3290, %v3610
  %v3675 = vmul.f32 %v3291, %v3611
  %v3676 = vmul.f32 %v3292, %v3612
  %v3677 = vmul.f32 %v3293, %v3613
  %v3678 = vmul.f32 %v3294, %v3614
  %v3679 = vmul.f32 %v3295, %v3615
  %v3680 = vmul.f32 %v3296, %v3616
  %v3681 = vmul.f32 %v3297, %v3617
  %v3682 = vmul.f32 %v3298, %v3618
  %v3683 = vmul.f32 %v3299, %v3619
  %v3684 = vmul.f32 %v3300, %v3620
  %v3685 = vmul.f32 %v3301, %v3621
  %v3686 = vmul.f32 %v3302, %v3622
  %v3687 = vmul.f32 %v3303, %v3623
  %v3688 = vmul.f32 %v3304, %v3624
  %v3689 = vmul.f32 %v3305, %v3625
  %v3690 = vmul.f32 %v3306, %v3626
  %v3691 = vmul.f32 %v3307, %v3627
  %v3692 = vmul.f32 %v3308, %v3628
  %v3693 = vmul.f32 %v3309, %v3629
  %v3694 = vmul.f32 %v3310, %v3630
  %v3695 = vmul.f32 %v3311, %v3631
  %v3696 = vmul.f32 %v3312, %v3632
  %v3697 = vmul.f32 %v3313, %v3633
  %v3698 = vmul.f32 %v3314, %v3634
  %v3699 = vmul.f32 %v3315, %v3635
  %v3700 = vmul.f32 %v3316, %v3636
  %v3701 = vmul.f32 %v3317, %v3637
  %v3702 = vmul.f32 %v3318, %v3638
  %v3703 = vmul.f32 %v3319, %v3639
  %v3704 = vmul.f32 %v3320, %v3640
  %v3705 = vmul.f32 %v3321, %v3641
  %v3706 = vmul.f32 %v3322, %v3642
  %v3707 = vmul.f32 %v3323, %v3643
  %v3708 = vmul.f32 %v3324, %v3644
  %v3709 = vmul.f32 %v3325, %v3645
  %v3710 = vmul.f32 %v3326, %v3646
  %v3711 = vmul.f32 %v3327, %v3647
  %v3712 = vmul.f32 %v3328, %v3648
  %v3713 = vmul.f32 %v3329, %v3649
  %v3714 = vmul.f32 %v3330, %v3650
  %3715 = vst.msk [vmem:[%s13] sm:$0xff] %vm2372, %v3651
  %3716 = vst.msk [vmem:[%s13 + $0x8] sm:$0xff] %vm2372, %v3652
  %3717 = vst.msk [vmem:[%s13 + $0x10] sm:$0xff] %vm2372, %v3653
  %3718 = vst.msk [vmem:[%s13 + $0x18] sm:$0xff] %vm2372, %v3654
  %3719 = vst.msk [vmem:[%s13 + $0x20] sm:$0xff] %vm2372, %v3655
  %3720 = vst.msk [vmem:[%s13 + $0x28] sm:$0xff] %vm2372, %v3656
  %3721 = vst.msk [vmem:[%s13 + $0x30] sm:$0xff] %vm2372, %v3657
  %3722 = vst.msk [vmem:[%s13 + $0x38] sm:$0xff] %vm2372, %v3658
  %3723 = vst.msk [vmem:[%s13 + $0x40] sm:$0xff] %vm2372, %v3659
  %3724 = vst.msk [vmem:[%s13 + $0x48] sm:$0xff] %vm2372, %v3660
  %3725 = vst.msk [vmem:[%s13 + $0x50] sm:$0xff] %vm2372, %v3661
  %3726 = vst.msk [vmem:[%s13 + $0x58] sm:$0xff] %vm2372, %v3662
  %3727 = vst.msk [vmem:[%s13 + $0x60] sm:$0xff] %vm2372, %v3663
  %3728 = vst.msk [vmem:[%s13 + $0x68] sm:$0xff] %vm2372, %v3664
  %3729 = vst.msk [vmem:[%s13 + $0x70] sm:$0xff] %vm2372, %v3665
  %3730 = vst.msk [vmem:[%s13 + $0x78] sm:$0xff] %vm2372, %v3666
  %3731 = vst.msk [vmem:[%s13 + $0x80] sm:$0xff] %vm2372, %v3667
  %3732 = vst.msk [vmem:[%s13 + $0x88] sm:$0xff] %vm2372, %v3668
  %3733 = vst.msk [vmem:[%s13 + $0x90] sm:$0xff] %vm2372, %v3669
  %3734 = vst.msk [vmem:[%s13 + $0x98] sm:$0xff] %vm2372, %v3670
  %3735 = vst.msk [vmem:[%s13 + $0xa0] sm:$0xff] %vm2372, %v3671
  %3736 = vst.msk [vmem:[%s13 + $0xa8] sm:$0xff] %vm2372, %v3672
  %3737 = vst.msk [vmem:[%s13 + $0xb0] sm:$0xff] %vm2372, %v3673
  %3738 = vst.msk [vmem:[%s13 + $0xb8] sm:$0xff] %vm2372, %v3674
  %3739 = vst.msk [vmem:[%s13 + $0xc0] sm:$0xff] %vm2372, %v3675
  %3740 = vst.msk [vmem:[%s13 + $0xc8] sm:$0xff] %vm2372, %v3676
  %3741 = vst.msk [vmem:[%s13 + $0xd0] sm:$0xff] %vm2372, %v3677
  %3742 = vst.msk [vmem:[%s13 + $0xd8] sm:$0xff] %vm2372, %v3678
  %3743 = vst.msk [vmem:[%s13 + $0xe0] sm:$0xff] %vm2372, %v3679
  %3744 = vst.msk [vmem:[%s13 + $0xe8] sm:$0xff] %vm2372, %v3680
  %3745 = vst.msk [vmem:[%s13 + $0xf0] sm:$0xff] %vm2372, %v3681
  %3746 = vst.msk [vmem:[%s13 + $0xf8] sm:$0xff] %vm2372, %v3682
  %3747 = vst.msk [vmem:[%s13 + $0x100] sm:$0xff] %vm2372, %v3683
  %3748 = vst.msk [vmem:[%s13 + $0x108] sm:$0xff] %vm2372, %v3684
  %3749 = vst.msk [vmem:[%s13 + $0x110] sm:$0xff] %vm2372, %v3685
  %3750 = vst.msk [vmem:[%s13 + $0x118] sm:$0xff] %vm2372, %v3686
  %3751 = vst.msk [vmem:[%s13 + $0x120] sm:$0xff] %vm2372, %v3687
  %3752 = vst.msk [vmem:[%s13 + $0x128] sm:$0xff] %vm2372, %v3688
  %3753 = vst.msk [vmem:[%s13 + $0x130] sm:$0xff] %vm2372, %v3689
  %3754 = vst.msk [vmem:[%s13 + $0x138] sm:$0xff] %vm2372, %v3690
  %3755 = vst.msk [vmem:[%s13 + $0x140] sm:$0xff] %vm2372, %v3691
  %3756 = vst.msk [vmem:[%s13 + $0x148] sm:$0xff] %vm2372, %v3692
  %3757 = vst.msk [vmem:[%s13 + $0x150] sm:$0xff] %vm2372, %v3693
  %3758 = vst.msk [vmem:[%s13 + $0x158] sm:$0xff] %vm2372, %v3694
  %3759 = vst.msk [vmem:[%s13 + $0x160] sm:$0xff] %vm2372, %v3695
  %3760 = vst.msk [vmem:[%s13 + $0x168] sm:$0xff] %vm2372, %v3696
  %3761 = vst.msk [vmem:[%s13 + $0x170] sm:$0xff] %vm2372, %v3697
  %3762 = vst.msk [vmem:[%s13 + $0x178] sm:$0xff] %vm2372, %v3698
  %3763 = vst.msk [vmem:[%s13 + $0x180] sm:$0xff] %vm2372, %v3699
  %3764 = vst.msk [vmem:[%s13 + $0x188] sm:$0xff] %vm2372, %v3700
  %3765 = vst.msk [vmem:[%s13 + $0x190] sm:$0xff] %vm2372, %v3701
  %3766 = vst.msk [vmem:[%s13 + $0x198] sm:$0xff] %vm2372, %v3702
  %3767 = vst.msk [vmem:[%s13 + $0x1a0] sm:$0xff] %vm2372, %v3703
  %3768 = vst.msk [vmem:[%s13 + $0x1a8] sm:$0xff] %vm2372, %v3704
  %3769 = vst.msk [vmem:[%s13 + $0x1b0] sm:$0xff] %vm2372, %v3705
  %3770 = vst.msk [vmem:[%s13 + $0x1b8] sm:$0xff] %vm2372, %v3706
  %3771 = vst.msk [vmem:[%s13 + $0x1c0] sm:$0xff] %vm2372, %v3707
  %3772 = vst.msk [vmem:[%s13 + $0x1c8] sm:$0xff] %vm2372, %v3708
  %3773 = vst.msk [vmem:[%s13 + $0x1d0] sm:$0xff] %vm2372, %v3709
  %3774 = vst.msk [vmem:[%s13 + $0x1d8] sm:$0xff] %vm2372, %v3710
  %3775 = vst.msk [vmem:[%s13 + $0x1e0] sm:$0xff] %vm2372, %v3711
  %3776 = vst.msk [vmem:[%s13 + $0x1e8] sm:$0xff] %vm2372, %v3712
  %3777 = vst.msk [vmem:[%s13 + $0x1f0] sm:$0xff] %vm2372, %v3713
  %3778 = vst.msk [vmem:[%s13 + $0x1f8] sm:$0xff] %vm2372, %v3714
  // Predicated region
  $region54: #{elan_neck_forward.11} parent=0 // pred_check
    _
  $region55: #{elan_neck_forward.11} parent=0 // pred_check_branch
    %3780 = sbr.rel (0) target = $region57
  $region56: #{elan_neck_forward.11} parent=0 // pred_region
    _
  $region57: #{elan_neck_forward.11} parent=0 // pred_fallthru
    _
  // Predicated region
  $region58: #{elan_neck_forward.11} parent=0 // pred_check
    _
  $region59: #{elan_neck_forward.11} parent=0 // pred_check_branch
    %3782 = sbr.rel (0) target = $region61
  $region60: #{elan_neck_forward.11} parent=0 // pred_region
    _
  $region61: #{elan_neck_forward.11} parent=0 // pred_fallthru
    _

</llo_original>
